<compile_context>
chip_gen: v6e
topology: v6e:2x2x1
jax: 0.10.0
libtpu: 0.0.40
codegen_flags: <defaults>
</compile_context>

<pallas_src>
import functools

import jax
import jax.numpy as jnp
from jax.experimental import pallas as pl
from jax.experimental.pallas import tpu as pltpu  # noqa: F401  (TPU backend assumed)

BN_EPS = 1e-5
LEAKY_SLOPE = 0.2


def _leaky(z):
    return jnp.where(z >= 0, z, LEAKY_SLOPE * z)


# ----------------------------------------------------------------------------
# Kernel 1: encoder block  --  matmul -> BatchNorm(train) -> LeakyReLU, fused
# ----------------------------------------------------------------------------
def _conv_bn_lrelu_kernel(a_ref, w_ref, g_ref, b_ref, o_ref):
    # whole-array blocks (M, K) @ (K, C); K/N are NOT padded to 128 — Mosaic
    # handles arbitrary shapes in-register.
    y = jnp.dot(a_ref[...], w_ref[...], preferred_element_type=jnp.float32)
    mean = jnp.mean(y, axis=0, keepdims=True)
    var = jnp.mean((y - mean) ** 2, axis=0, keepdims=True)  # biased, torch train-mode
    scale = g_ref[...] * jax.lax.rsqrt(var + BN_EPS)
    shift = b_ref[...] - mean * scale
    o_ref[...] = _leaky(y * scale + shift).astype(o_ref.dtype)


def _conv_bn_lrelu_call(a, w_mat, gamma, beta):
    M = a.shape[0]
    C = w_mat.shape[1]
    return pl.pallas_call(
        _conv_bn_lrelu_kernel,
        out_shape=jax.ShapeDtypeStruct((M, C), jnp.float32),
    )(a, w_mat, gamma.reshape(1, C), beta.reshape(1, C))


# ----------------------------------------------------------------------------
# Kernel 2: latent head -- fc_mu + fc_var + reparameterize + decoder_input
# ----------------------------------------------------------------------------
def _latent_kernel(h_ref, wmu_ref, bmu_ref, wlv_ref, blv_ref, eps_ref,
                   wd_ref, bd_ref, mu_ref, lv_ref, d_ref):
    h = h_ref[...]
    mu = jnp.dot(h, wmu_ref[...], preferred_element_type=jnp.float32) + bmu_ref[...]
    lv = jnp.dot(h, wlv_ref[...], preferred_element_type=jnp.float32) + blv_ref[...]
    z = eps_ref[...] * jnp.exp(0.5 * lv) + mu                 # reparameterize
    d = jnp.dot(z, wd_ref[...], preferred_element_type=jnp.float32) + bd_ref[...]
    mu_ref[...] = mu
    lv_ref[...] = lv
    d_ref[...] = d


def _latent_call(h2d, w_mu, b_mu, w_lv, b_lv, eps2d, w_dec, b_dec):
    M = h2d.shape[0]
    L = w_mu.shape[1]
    D = w_dec.shape[1]
    return pl.pallas_call(
        _latent_kernel,
        out_shape=(jax.ShapeDtypeStruct((M, L), jnp.float32),
                   jax.ShapeDtypeStruct((M, L), jnp.float32),
                   jax.ShapeDtypeStruct((M, D), jnp.float32)),
    )(h2d, w_mu, b_mu.reshape(1, L), w_lv, b_lv.reshape(1, L),
      eps2d, w_dec, b_dec.reshape(1, D))


# ----------------------------------------------------------------------------
# Kernel 3: decoder block -- 4-phase ConvTranspose + shared BN + LeakyReLU(+tanh)
# ----------------------------------------------------------------------------
def _convT_bn_act_kernel(a00_ref, a01_ref, a10_ref, a11_ref,
                         w00_ref, w01_ref, w10_ref, w11_ref,
                         g_ref, b_ref,
                         o00_ref, o01_ref, o10_ref, o11_ref, *, final_tanh):
    ys = [jnp.dot(a_ref[...], w_ref[...], preferred_element_type=jnp.float32)
          for a_ref, w_ref in ((a00_ref, w00_ref), (a01_ref, w01_ref),
                               (a10_ref, w10_ref), (a11_ref, w11_ref))]
    n_rows = 4.0 * ys[0].shape[0]
    # BatchNorm statistics over the union of all four output phases
    mean = (ys[0].sum(0, keepdims=True) + ys[1].sum(0, keepdims=True) +
            ys[2].sum(0, keepdims=True) + ys[3].sum(0, keepdims=True)) / n_rows
    var = (((ys[0] - mean) ** 2).sum(0, keepdims=True) +
           ((ys[1] - mean) ** 2).sum(0, keepdims=True) +
           ((ys[2] - mean) ** 2).sum(0, keepdims=True) +
           ((ys[3] - mean) ** 2).sum(0, keepdims=True)) / n_rows
    scale = g_ref[...] * jax.lax.rsqrt(var + BN_EPS)
    shift = b_ref[...] - mean * scale
    for y, o_ref in zip(ys, (o00_ref, o01_ref, o10_ref, o11_ref)):
        z = _leaky(y * scale + shift)
        if final_tanh:
            z = jnp.tanh(z)
        o_ref[...] = z.astype(o_ref.dtype)


# ----------------------------------------------------------------------------
# Glue (tiny JAX ops on <=32 KiB intermediates)
# ----------------------------------------------------------------------------
def _im2col(x_nhwc, k, stride, pad):
    """Patches in natural (kh, kw, Cin) order — no big activation transpose."""
    N, H, W, C = x_nhwc.shape
    xp = jnp.pad(x_nhwc, ((0, 0), (pad, pad), (pad, pad), (0, 0)))
    Ho = (H + 2 * pad - k) // stride + 1
    Wo = (W + 2 * pad - k) // stride + 1
    cols = []
    for i in range(k):
        for j in range(k):
            cols.append(xp[:, i:i + stride * (Ho - 1) + 1:stride,
                           j:j + stride * (Wo - 1) + 1:stride, :])
    patches = jnp.concatenate(cols, axis=-1)           # (N,Ho,Wo, k*k*C)
    return patches.reshape(N * Ho * Wo, k * k * C), (N, Ho, Wo)


def conv_block(x_nhwc, w, gamma, beta):
    """Conv2d(k=3,s=2,p=1) -> BN(train) -> LeakyReLU(0.2).  w: (Cout,Cin,3,3).
    Conv bias omitted: exactly cancelled by train-mode BatchNorm."""
    a, (N, Ho, Wo) = _im2col(x_nhwc, k=3, stride=2, pad=1)
    Cout = w.shape[0]
    # reorder the (small) weight instead of transposing the patch matrix
    w_mat = w.transpose(2, 3, 1, 0).reshape(-1, Cout)  # (kh*kw*Cin, Cout)
    y = _conv_bn_lrelu_call(a, w_mat, gamma, beta)
    return y.reshape(N, Ho, Wo, Cout)


def conv_transpose_block(x_nhwc, w, gamma, beta, final_tanh=False):
    """ConvTranspose2d(k=3,s=2,p=1,op=1) -> BN(train) -> LeakyReLU [-> tanh].

    Sub-pixel (4-phase) decomposition of the stride-2 transposed conv:
      out[2i  ,2j  ] = x[i,j]   @ w[:,:,1,1]
      out[2i  ,2j+1] = x[i,j]   @ w[:,:,1,2] + x[i,j+1]   @ w[:,:,1,0]
      out[2i+1,2j  ] = x[i,j]   @ w[:,:,2,1] + x[i+1,j]   @ w[:,:,0,1]
      out[2i+1,2j+1] = x[i,j]   @ w[:,:,2,2] + x[i,j+1]   @ w[:,:,2,0]
                     + x[i+1,j] @ w[:,:,0,2] + x[i+1,j+1] @ w[:,:,0,0]
    w: (Cin, Cout, 3, 3).  ConvT bias omitted: cancelled by train-mode BN.
    """
    N, H, W, C = x_nhwc.shape
    Cout = w.shape[1]
    M = N * H * W
    xp = jnp.pad(x_nhwc, ((0, 0), (0, 1), (0, 1), (0, 0)))
    x00 = x_nhwc
    x01 = xp[:, :H, 1:W + 1, :]
    x10 = xp[:, 1:H + 1, :W, :]
    x11 = xp[:, 1:H + 1, 1:W + 1, :]
    a00 = x00.reshape(M, C)
    a01 = jnp.concatenate([x00, x01], axis=-1).reshape(M, 2 * C)
    a10 = jnp.concatenate([x00, x10], axis=-1).reshape(M, 2 * C)
    a11 = jnp.concatenate([x00, x01, x10, x11], axis=-1).reshape(M, 4 * C)
    w00m = w[:, :, 1, 1]                                                 # (C, Cout)
    w01m = jnp.concatenate([w[:, :, 1, 2], w[:, :, 1, 0]], axis=0)       # (2C, Cout)
    w10m = jnp.concatenate([w[:, :, 2, 1], w[:, :, 0, 1]], axis=0)       # (2C, Cout)
    w11m = jnp.concatenate([w[:, :, 2, 2], w[:, :, 2, 0],
                            w[:, :, 0, 2], w[:, :, 0, 0]], axis=0)       # (4C, Cout)

    outs = pl.pallas_call(
        functools.partial(_convT_bn_act_kernel, final_tanh=final_tanh),
        out_shape=tuple(jax.ShapeDtypeStruct((M, Cout), jnp.float32)
                        for _ in range(4)),
    )(a00, a01, a10, a11, w00m, w01m, w10m, w11m,
      gamma.reshape(1, Cout), beta.reshape(1, Cout))

    # interleave the 4 phases into the 2x-upsampled output (tiny XLA glue)
    y = jnp.stack(outs, axis=1).reshape(N, H, W, 2, 2, Cout)
    y = y.transpose(0, 1, 3, 2, 4, 5).reshape(N, 2 * H, 2 * W, Cout)
    return y


# ----------------------------------------------------------------------------
# Parameter initialization (deterministic, synthetic)
# ----------------------------------------------------------------------------
def init_params(key, in_channels=3, latent_dim=4):
    ks = iter(jax.random.split(key, 32))

    def conv_w(cout, cin, k):
        return 0.05 * jax.random.normal(next(ks), (cout, cin, k, k), jnp.float32)

    def convT_w(cin, cout, k):
        return 0.05 * jax.random.normal(next(ks), (cin, cout, k, k), jnp.float32)

    def bias(c):
        return 0.01 * jax.random.normal(next(ks), (c,), jnp.float32)

    def bn(c):
        return jnp.ones((c,), jnp.float32), jnp.zeros((c,), jnp.float32)

    p = {}
    # NOTE: conv/convT biases that feed directly into train-mode BatchNorm are
    # not created — they cancel exactly (batch mean absorbs them).
    p["enc1"] = (conv_w(64, in_channels, 3), *bn(64))
    p["enc2"] = (conv_w(128, 64, 3), *bn(128))
    p["enc3"] = (conv_w(256, 128, 3), *bn(256))
    p["fc_mu"] = (conv_w(latent_dim, 256, 1), bias(latent_dim))
    p["fc_var"] = (conv_w(latent_dim, 256, 1), bias(latent_dim))
    p["dec_in"] = (convT_w(latent_dim, 256, 1), bias(256))
    p["dec1"] = (convT_w(256, 128, 3), *bn(128))
    p["dec2"] = (convT_w(128, 64, 3), *bn(64))
    p["dec3"] = (convT_w(64, in_channels, 3), *bn(in_channels))
    return p


# ----------------------------------------------------------------------------
# Full forward pass: returns (reconstruction, input, mu, log_var) in NCHW
# ----------------------------------------------------------------------------
def vae_forward(params, x_nchw, eps):
    x = jnp.transpose(x_nchw, (0, 2, 3, 1))  # -> NHWC

    # ---- encode ----
    h = conv_block(x, *params["enc1"])
    h = conv_block(h, *params["enc2"])
    h = conv_block(h, *params["enc3"])
    N, Hl, Wl, Ch = h.shape

    # ---- latent head: fc_mu + fc_var + reparameterize + decoder_input (fused) ----
    w_mu, b_mu = params["fc_mu"]
    w_lv, b_lv = params["fc_var"]
    w_di, b_di = params["dec_in"]
    L = w_mu.shape[0]
    mu2d, lv2d, d2d = _latent_call(
        h.reshape(-1, Ch),
        w_mu.reshape(L, Ch).T, b_mu,
        w_lv.reshape(L, Ch).T, b_lv,
        eps.reshape(-1, L),
        w_di.reshape(L, -1), b_di)
    mu = mu2d.reshape(N, Hl, Wl, L)
    log_var = lv2d.reshape(N, Hl, Wl, L)
    d = d2d.reshape(N, Hl, Wl, -1)

    # ---- decode ----
    d = conv_transpose_block(d, *params["dec1"])
    d = conv_transpose_block(d, *params["dec2"])
    recon = conv_transpose_block(d, *params["dec3"], final_tanh=True)

    to_nchw = lambda t: jnp.transpose(t, (0, 3, 1, 2))
    return to_nchw(recon), x_nchw, to_nchw(mu), to_nchw(log_var)


# ----------------------------------------------------------------------------
if __name__ == "__main__":
    in_channels, latent_dim, image_size, batch = 3, 4, 16, 2

    root = jax.random.PRNGKey(0)
    k_params, k_x, k_eps = jax.random.split(root, 3)

    params = init_params(k_params, in_channels, latent_dim)
    x = jax.random.normal(k_x, (batch, in_channels, image_size, image_size),
                          jnp.float32)
    latent_hw = image_size // 8
    # eps for reparameterize (torch.randn_like drawn host-side)
    eps = jax.random.normal(k_eps, (batch, latent_hw, latent_hw, latent_dim),
                            jnp.float32)

    fwd = jax.jit(vae_forward)
    recon, x_out, mu, log_var = fwd(params, x, eps)
    jax.block_until_ready((recon, x_out, mu, log_var))

    assert recon.shape == (batch, in_channels, image_size, image_size)
    assert mu.shape == (batch, latent_dim, latent_hw, latent_hw)
    assert log_var.shape == (batch, latent_dim, latent_hw, latent_hw)
    assert bool(jnp.all(jnp.isfinite(recon)))
    assert bool(jnp.all(jnp.isfinite(mu)))
    assert bool(jnp.all(jnp.isfinite(log_var)))
    assert bool(jnp.all(jnp.abs(recon) <= 1.0))  # tanh output range

    print("KERNEL_OK")
</pallas_src>

<mosaic_0001>
module attributes {stable_mosaic.version = 11 : i64} {
  func.func @_conv_bn_lrelu_kernel(%arg0: memref<128x27xf32, #tpu.memory_space<vmem>>, %arg1: memref<27x64xf32, #tpu.memory_space<vmem>>, %arg2: memref<1x64xf32, #tpu.memory_space<vmem>>, %arg3: memref<1x64xf32, #tpu.memory_space<vmem>>, %arg4: memref<128x64xf32, #tpu.memory_space<vmem>>) attributes {dimension_semantics = [], scalar_prefetch = 0 : i64, scratch_operands = 0 : i64, tpu.core_type = #tpu.core_type<tc>} {
    %c0 = arith.constant 0 : index
    %c0_0 = arith.constant 0 : index
    %0 = vector.load %arg0[%c0, %c0_0] : memref<128x27xf32, #tpu.memory_space<vmem>>, vector<128x27xf32>
    %c0_1 = arith.constant 0 : index
    %c0_2 = arith.constant 0 : index
    %1 = vector.load %arg1[%c0_1, %c0_2] : memref<27x64xf32, #tpu.memory_space<vmem>>, vector<27x64xf32>
    %cst = arith.constant dense<0.000000e+00> : vector<128x64xf32>
    %2 = tpu.matmul %0, %1, %cst {dimension_numbers = #tpu.dot_dimension_numbers<[1], [0], [0], [1], [0, 0, 1, 1], [], []>} : vector<128x27xf32>, vector<27x64xf32>, vector<128x64xf32> -> vector<128x64xf32>
    %cst_3 = arith.constant dense<0.000000e+00> : vector<64xf32>
    %3 = vector.multi_reduction <add>, %2, %cst_3 [0] : vector<128x64xf32> to vector<64xf32>
    %4 = vector.shape_cast %3 : vector<64xf32> to vector<1x64xf32>
    %cst_4 = arith.constant 1.280000e+02 : f32
    %5 = vector.broadcast %cst_4 : f32 to vector<1x64xf32>
    %6 = arith.divf %4, %5 : vector<1x64xf32>
    %7 = vector.broadcast %6 : vector<1x64xf32> to vector<128x64xf32>
    %8 = arith.subf %2, %7 : vector<128x64xf32>
    %9 = arith.mulf %8, %8 : vector<128x64xf32>
    %cst_5 = arith.constant dense<0.000000e+00> : vector<64xf32>
    %10 = vector.multi_reduction <add>, %9, %cst_5 [0] : vector<128x64xf32> to vector<64xf32>
    %11 = vector.shape_cast %10 : vector<64xf32> to vector<1x64xf32>
    %cst_6 = arith.constant 1.280000e+02 : f32
    %12 = vector.broadcast %cst_6 : f32 to vector<1x64xf32>
    %13 = arith.divf %11, %12 : vector<1x64xf32>
    %c0_7 = arith.constant 0 : index
    %c0_8 = arith.constant 0 : index
    %14 = vector.load %arg2[%c0_7, %c0_8] : memref<1x64xf32, #tpu.memory_space<vmem>>, vector<1x64xf32>
    %cst_9 = arith.constant 9.99999974E-6 : f32
    %15 = vector.broadcast %cst_9 : f32 to vector<1x64xf32>
    %16 = arith.addf %13, %15 : vector<1x64xf32>
    %17 = math.rsqrt %16 : vector<1x64xf32>
    %18 = arith.mulf %14, %17 : vector<1x64xf32>
    %c0_10 = arith.constant 0 : index
    %c0_11 = arith.constant 0 : index
    %19 = vector.load %arg3[%c0_10, %c0_11] : memref<1x64xf32, #tpu.memory_space<vmem>>, vector<1x64xf32>
    %20 = arith.mulf %6, %18 : vector<1x64xf32>
    %21 = arith.subf %19, %20 : vector<1x64xf32>
    %22 = vector.broadcast %18 : vector<1x64xf32> to vector<128x64xf32>
    %23 = arith.mulf %2, %22 : vector<128x64xf32>
    %24 = vector.broadcast %21 : vector<1x64xf32> to vector<128x64xf32>
    %25 = arith.addf %23, %24 : vector<128x64xf32>
    %cst_12 = arith.constant 0.000000e+00 : f32
    %26 = vector.broadcast %cst_12 : f32 to vector<128x64xf32>
    %27 = arith.cmpf oge, %25, %26 : vector<128x64xf32>
    %cst_13 = arith.constant 2.000000e-01 : f32
    %28 = vector.broadcast %cst_13 : f32 to vector<128x64xf32>
    %29 = arith.mulf %28, %25 : vector<128x64xf32>
    %30 = arith.select %27, %25, %29 : vector<128x64xi1>, vector<128x64xf32>
    %c0_14 = arith.constant 0 : index
    %c0_15 = arith.constant 0 : index
    %31 = vector.load %arg4[%c0_14, %c0_15] : memref<128x64xf32, #tpu.memory_space<vmem>>, vector<128x64xf32>
    tpu.vector_store %arg4[%c0_14, %c0_15], %30 {strides = array<i32>} : memref<128x64xf32, #tpu.memory_space<vmem>>, vector<128x64xf32>,
    return
  }
}

module attributes {stable_mosaic.version = 11 : i64} {
  func.func @_conv_bn_lrelu_kernel(%arg0: memref<32x576xf32, #tpu.memory_space<vmem>>, %arg1: memref<576x128xf32, #tpu.memory_space<vmem>>, %arg2: memref<1x128xf32, #tpu.memory_space<vmem>>, %arg3: memref<1x128xf32, #tpu.memory_space<vmem>>, %arg4: memref<32x128xf32, #tpu.memory_space<vmem>>) attributes {dimension_semantics = [], scalar_prefetch = 0 : i64, scratch_operands = 0 : i64, tpu.core_type = #tpu.core_type<tc>} {
    %c0 = arith.constant 0 : index
    %c0_0 = arith.constant 0 : index
    %0 = vector.load %arg0[%c0, %c0_0] : memref<32x576xf32, #tpu.memory_space<vmem>>, vector<32x576xf32>
    %c0_1 = arith.constant 0 : index
    %c0_2 = arith.constant 0 : index
    %1 = vector.load %arg1[%c0_1, %c0_2] : memref<576x128xf32, #tpu.memory_space<vmem>>, vector<576x128xf32>
    %cst = arith.constant dense<0.000000e+00> : vector<32x128xf32>
    %2 = tpu.matmul %0, %1, %cst {dimension_numbers = #tpu.dot_dimension_numbers<[1], [0], [0], [1], [0, 0, 1, 1], [], []>} : vector<32x576xf32>, vector<576x128xf32>, vector<32x128xf32> -> vector<32x128xf32>
    %cst_3 = arith.constant dense<0.000000e+00> : vector<128xf32>
    %3 = vector.multi_reduction <add>, %2, %cst_3 [0] : vector<32x128xf32> to vector<128xf32>
    %4 = vector.shape_cast %3 : vector<128xf32> to vector<1x128xf32>
    %cst_4 = arith.constant 3.200000e+01 : f32
    %5 = vector.broadcast %cst_4 : f32 to vector<1x128xf32>
    %6 = arith.divf %4, %5 : vector<1x128xf32>
    %7 = vector.broadcast %6 : vector<1x128xf32> to vector<32x128xf32>
    %8 = arith.subf %2, %7 : vector<32x128xf32>
    %9 = arith.mulf %8, %8 : vector<32x128xf32>
    %cst_5 = arith.constant dense<0.000000e+00> : vector<128xf32>
    %10 = vector.multi_reduction <add>, %9, %cst_5 [0] : vector<32x128xf32> to vector<128xf32>
    %11 = vector.shape_cast %10 : vector<128xf32> to vector<1x128xf32>
    %cst_6 = arith.constant 3.200000e+01 : f32
    %12 = vector.broadcast %cst_6 : f32 to vector<1x128xf32>
    %13 = arith.divf %11, %12 : vector<1x128xf32>
    %c0_7 = arith.constant 0 : index
    %c0_8 = arith.constant 0 : index
    %14 = vector.load %arg2[%c0_7, %c0_8] : memref<1x128xf32, #tpu.memory_space<vmem>>, vector<1x128xf32>
    %cst_9 = arith.constant 9.99999974E-6 : f32
    %15 = vector.broadcast %cst_9 : f32 to vector<1x128xf32>
    %16 = arith.addf %13, %15 : vector<1x128xf32>
    %17 = math.rsqrt %16 : vector<1x128xf32>
    %18 = arith.mulf %14, %17 : vector<1x128xf32>
    %c0_10 = arith.constant 0 : index
    %c0_11 = arith.constant 0 : index
    %19 = vector.load %arg3[%c0_10, %c0_11] : memref<1x128xf32, #tpu.memory_space<vmem>>, vector<1x128xf32>
    %20 = arith.mulf %6, %18 : vector<1x128xf32>
    %21 = arith.subf %19, %20 : vector<1x128xf32>
    %22 = vector.broadcast %18 : vector<1x128xf32> to vector<32x128xf32>
    %23 = arith.mulf %2, %22 : vector<32x128xf32>
    %24 = vector.broadcast %21 : vector<1x128xf32> to vector<32x128xf32>
    %25 = arith.addf %23, %24 : vector<32x128xf32>
    %cst_12 = arith.constant 0.000000e+00 : f32
    %26 = vector.broadcast %cst_12 : f32 to vector<32x128xf32>
    %27 = arith.cmpf oge, %25, %26 : vector<32x128xf32>
    %cst_13 = arith.constant 2.000000e-01 : f32
    %28 = vector.broadcast %cst_13 : f32 to vector<32x128xf32>
    %29 = arith.mulf %28, %25 : vector<32x128xf32>
    %30 = arith.select %27, %25, %29 : vector<32x128xi1>, vector<32x128xf32>
    %c0_14 = arith.constant 0 : index
    %c0_15 = arith.constant 0 : index
    %31 = vector.load %arg4[%c0_14, %c0_15] : memref<32x128xf32, #tpu.memory_space<vmem>>, vector<32x128xf32>
    tpu.vector_store %arg4[%c0_14, %c0_15], %30 {strides = array<i32>} : memref<32x128xf32, #tpu.memory_space<vmem>>, vector<32x128xf32>,
    return
  }
}

module attributes {stable_mosaic.version = 11 : i64} {
  func.func @_conv_bn_lrelu_kernel(%arg0: memref<8x1152xf32, #tpu.memory_space<vmem>>, %arg1: memref<1152x256xf32, #tpu.memory_space<vmem>>, %arg2: memref<1x256xf32, #tpu.memory_space<vmem>>, %arg3: memref<1x256xf32, #tpu.memory_space<vmem>>, %arg4: memref<8x256xf32, #tpu.memory_space<vmem>>) attributes {dimension_semantics = [], scalar_prefetch = 0 : i64, scratch_operands = 0 : i64, tpu.core_type = #tpu.core_type<tc>} {
    %c0 = arith.constant 0 : index
    %c0_0 = arith.constant 0 : index
    %0 = vector.load %arg0[%c0, %c0_0] : memref<8x1152xf32, #tpu.memory_space<vmem>>, vector<8x1152xf32>
    %c0_1 = arith.constant 0 : index
    %c0_2 = arith.constant 0 : index
    %1 = vector.load %arg1[%c0_1, %c0_2] : memref<1152x256xf32, #tpu.memory_space<vmem>>, vector<1152x256xf32>
    %cst = arith.constant dense<0.000000e+00> : vector<8x256xf32>
    %2 = tpu.matmul %0, %1, %cst {dimension_numbers = #tpu.dot_dimension_numbers<[1], [0], [0], [1], [0, 0, 1, 1], [], []>} : vector<8x1152xf32>, vector<1152x256xf32>, vector<8x256xf32> -> vector<8x256xf32>
    %cst_3 = arith.constant dense<0.000000e+00> : vector<256xf32>
    %3 = vector.multi_reduction <add>, %2, %cst_3 [0] : vector<8x256xf32> to vector<256xf32>
    %4 = vector.shape_cast %3 : vector<256xf32> to vector<1x256xf32>
    %cst_4 = arith.constant 8.000000e+00 : f32
    %5 = vector.broadcast %cst_4 : f32 to vector<1x256xf32>
    %6 = arith.divf %4, %5 : vector<1x256xf32>
    %7 = vector.broadcast %6 : vector<1x256xf32> to vector<8x256xf32>
    %8 = arith.subf %2, %7 : vector<8x256xf32>
    %9 = arith.mulf %8, %8 : vector<8x256xf32>
    %cst_5 = arith.constant dense<0.000000e+00> : vector<256xf32>
    %10 = vector.multi_reduction <add>, %9, %cst_5 [0] : vector<8x256xf32> to vector<256xf32>
    %11 = vector.shape_cast %10 : vector<256xf32> to vector<1x256xf32>
    %cst_6 = arith.constant 8.000000e+00 : f32
    %12 = vector.broadcast %cst_6 : f32 to vector<1x256xf32>
    %13 = arith.divf %11, %12 : vector<1x256xf32>
    %c0_7 = arith.constant 0 : index
    %c0_8 = arith.constant 0 : index
    %14 = vector.load %arg2[%c0_7, %c0_8] : memref<1x256xf32, #tpu.memory_space<vmem>>, vector<1x256xf32>
    %cst_9 = arith.constant 9.99999974E-6 : f32
    %15 = vector.broadcast %cst_9 : f32 to vector<1x256xf32>
    %16 = arith.addf %13, %15 : vector<1x256xf32>
    %17 = math.rsqrt %16 : vector<1x256xf32>
    %18 = arith.mulf %14, %17 : vector<1x256xf32>
    %c0_10 = arith.constant 0 : index
    %c0_11 = arith.constant 0 : index
    %19 = vector.load %arg3[%c0_10, %c0_11] : memref<1x256xf32, #tpu.memory_space<vmem>>, vector<1x256xf32>
    %20 = arith.mulf %6, %18 : vector<1x256xf32>
    %21 = arith.subf %19, %20 : vector<1x256xf32>
    %22 = vector.broadcast %18 : vector<1x256xf32> to vector<8x256xf32>
    %23 = arith.mulf %2, %22 : vector<8x256xf32>
    %24 = vector.broadcast %21 : vector<1x256xf32> to vector<8x256xf32>
    %25 = arith.addf %23, %24 : vector<8x256xf32>
    %cst_12 = arith.constant 0.000000e+00 : f32
    %26 = vector.broadcast %cst_12 : f32 to vector<8x256xf32>
    %27 = arith.cmpf oge, %25, %26 : vector<8x256xf32>
    %cst_13 = arith.constant 2.000000e-01 : f32
    %28 = vector.broadcast %cst_13 : f32 to vector<8x256xf32>
    %29 = arith.mulf %28, %25 : vector<8x256xf32>
    %30 = arith.select %27, %25, %29 : vector<8x256xi1>, vector<8x256xf32>
    %c0_14 = arith.constant 0 : index
    %c0_15 = arith.constant 0 : index
    %31 = vector.load %arg4[%c0_14, %c0_15] : memref<8x256xf32, #tpu.memory_space<vmem>>, vector<8x256xf32>
    tpu.vector_store %arg4[%c0_14, %c0_15], %30 {strides = array<i32>} : memref<8x256xf32, #tpu.memory_space<vmem>>, vector<8x256xf32>,
    return
  }
}

module attributes {stable_mosaic.version = 11 : i64} {
  func.func @_latent_kernel(%arg0: memref<8x256xf32, #tpu.memory_space<vmem>>, %arg1: memref<256x4xf32, #tpu.memory_space<vmem>>, %arg2: memref<1x4xf32, #tpu.memory_space<vmem>>, %arg3: memref<256x4xf32, #tpu.memory_space<vmem>>, %arg4: memref<1x4xf32, #tpu.memory_space<vmem>>, %arg5: memref<8x4xf32, #tpu.memory_space<vmem>>, %arg6: memref<4x256xf32, #tpu.memory_space<vmem>>, %arg7: memref<1x256xf32, #tpu.memory_space<vmem>>, %arg8: memref<8x4xf32, #tpu.memory_space<vmem>>, %arg9: memref<8x4xf32, #tpu.memory_space<vmem>>, %arg10: memref<8x256xf32, #tpu.memory_space<vmem>>) attributes {dimension_semantics = [], scalar_prefetch = 0 : i64, scratch_operands = 0 : i64, tpu.core_type = #tpu.core_type<tc>} {
    %c0 = arith.constant 0 : index
    %c0_0 = arith.constant 0 : index
    %0 = vector.load %arg0[%c0, %c0_0] : memref<8x256xf32, #tpu.memory_space<vmem>>, vector<8x256xf32>
    %c0_1 = arith.constant 0 : index
    %c0_2 = arith.constant 0 : index
    %1 = vector.load %arg1[%c0_1, %c0_2] : memref<256x4xf32, #tpu.memory_space<vmem>>, vector<256x4xf32>
    %cst = arith.constant dense<0.000000e+00> : vector<8x4xf32>
    %2 = tpu.matmul %0, %1, %cst {dimension_numbers = #tpu.dot_dimension_numbers<[1], [0], [0], [1], [0, 0, 1, 1], [], []>} : vector<8x256xf32>, vector<256x4xf32>, vector<8x4xf32> -> vector<8x4xf32>
    %c0_3 = arith.constant 0 : index
    %c0_4 = arith.constant 0 : index
    %3 = vector.load %arg2[%c0_3, %c0_4] : memref<1x4xf32, #tpu.memory_space<vmem>>, vector<1x4xf32>
    %4 = vector.broadcast %3 : vector<1x4xf32> to vector<8x4xf32>
    %5 = arith.addf %2, %4 : vector<8x4xf32>
    %c0_5 = arith.constant 0 : index
    %c0_6 = arith.constant 0 : index
    %6 = vector.load %arg3[%c0_5, %c0_6] : memref<256x4xf32, #tpu.memory_space<vmem>>, vector<256x4xf32>
    %cst_7 = arith.constant dense<0.000000e+00> : vector<8x4xf32>
    %7 = tpu.matmul %0, %6, %cst_7 {dimension_numbers = #tpu.dot_dimension_numbers<[1], [0], [0], [1], [0, 0, 1, 1], [], []>} : vector<8x256xf32>, vector<256x4xf32>, vector<8x4xf32> -> vector<8x4xf32>
    %c0_8 = arith.constant 0 : index
    %c0_9 = arith.constant 0 : index
    %8 = vector.load %arg4[%c0_8, %c0_9] : memref<1x4xf32, #tpu.memory_space<vmem>>, vector<1x4xf32>
    %9 = vector.broadcast %8 : vector<1x4xf32> to vector<8x4xf32>
    %10 = arith.addf %7, %9 : vector<8x4xf32>
    %c0_10 = arith.constant 0 : index
    %c0_11 = arith.constant 0 : index
    %11 = vector.load %arg5[%c0_10, %c0_11] : memref<8x4xf32, #tpu.memory_space<vmem>>, vector<8x4xf32>
    %cst_12 = arith.constant 5.000000e-01 : f32
    %12 = vector.broadcast %cst_12 : f32 to vector<8x4xf32>
    %13 = arith.mulf %12, %10 : vector<8x4xf32>
    %14 = math.exp %13 : vector<8x4xf32>
    %15 = arith.mulf %11, %14 : vector<8x4xf32>
    %16 = arith.addf %15, %5 : vector<8x4xf32>
    %c0_13 = arith.constant 0 : index
    %c0_14 = arith.constant 0 : index
    %17 = vector.load %arg6[%c0_13, %c0_14] : memref<4x256xf32, #tpu.memory_space<vmem>>, vector<4x256xf32>
    %cst_15 = arith.constant dense<0.000000e+00> : vector<8x256xf32>
    %18 = tpu.matmul %16, %17, %cst_15 {dimension_numbers = #tpu.dot_dimension_numbers<[1], [0], [0], [1], [0, 0, 1, 1], [], []>} : vector<8x4xf32>, vector<4x256xf32>, vector<8x256xf32> -> vector<8x256xf32>
    %c0_16 = arith.constant 0 : index
    %c0_17 = arith.constant 0 : index
    %19 = vector.load %arg7[%c0_16, %c0_17] : memref<1x256xf32, #tpu.memory_space<vmem>>, vector<1x256xf32>
    %20 = vector.broadcast %19 : vector<1x256xf32> to vector<8x256xf32>
    %21 = arith.addf %18, %20 : vector<8x256xf32>
    %c0_18 = arith.constant 0 : index
    %c0_19 = arith.constant 0 : index
    %22 = vector.load %arg8[%c0_18, %c0_19] : memref<8x4xf32, #tpu.memory_space<vmem>>, vector<8x4xf32>
    tpu.vector_store %arg8[%c0_18, %c0_19], %5 {strides = array<i32>} : memref<8x4xf32, #tpu.memory_space<vmem>>, vector<8x4xf32>,
    %c0_20 = arith.constant 0 : index
    %c0_21 = arith.constant 0 : index
    %23 = vector.load %arg9[%c0_20, %c0_21] : memref<8x4xf32, #tpu.memory_space<vmem>>, vector<8x4xf32>
    tpu.vector_store %arg9[%c0_20, %c0_21], %10 {strides = array<i32>} : memref<8x4xf32, #tpu.memory_space<vmem>>, vector<8x4xf32>,
    %c0_22 = arith.constant 0 : index
    %c0_23 = arith.constant 0 : index
    %24 = vector.load %arg10[%c0_22, %c0_23] : memref<8x256xf32, #tpu.memory_space<vmem>>, vector<8x256xf32>
    tpu.vector_store %arg10[%c0_22, %c0_23], %21 {strides = array<i32>} : memref<8x256xf32, #tpu.memory_space<vmem>>, vector<8x256xf32>,
    return
  }
}

module attributes {stable_mosaic.version = 11 : i64} {
  func.func @_convT_bn_act_kernel(%arg0: memref<8x256xf32, #tpu.memory_space<vmem>>, %arg1: memref<8x512xf32, #tpu.memory_space<vmem>>, %arg2: memref<8x512xf32, #tpu.memory_space<vmem>>, %arg3: memref<8x1024xf32, #tpu.memory_space<vmem>>, %arg4: memref<256x128xf32, #tpu.memory_space<vmem>>, %arg5: memref<512x128xf32, #tpu.memory_space<vmem>>, %arg6: memref<512x128xf32, #tpu.memory_space<vmem>>, %arg7: memref<1024x128xf32, #tpu.memory_space<vmem>>, %arg8: memref<1x128xf32, #tpu.memory_space<vmem>>, %arg9: memref<1x128xf32, #tpu.memory_space<vmem>>, %arg10: memref<8x128xf32, #tpu.memory_space<vmem>>, %arg11: memref<8x128xf32, #tpu.memory_space<vmem>>, %arg12: memref<8x128xf32, #tpu.memory_space<vmem>>, %arg13: memref<8x128xf32, #tpu.memory_space<vmem>>) attributes {dimension_semantics = [], scalar_prefetch = 0 : i64, scratch_operands = 0 : i64, tpu.core_type = #tpu.core_type<tc>} {
    %c0 = arith.constant 0 : index
    %c0_0 = arith.constant 0 : index
    %0 = vector.load %arg0[%c0, %c0_0] : memref<8x256xf32, #tpu.memory_space<vmem>>, vector<8x256xf32>
    %c0_1 = arith.constant 0 : index
    %c0_2 = arith.constant 0 : index
    %1 = vector.load %arg4[%c0_1, %c0_2] : memref<256x128xf32, #tpu.memory_space<vmem>>, vector<256x128xf32>
    %cst = arith.constant dense<0.000000e+00> : vector<8x128xf32>
    %2 = tpu.matmul %0, %1, %cst {dimension_numbers = #tpu.dot_dimension_numbers<[1], [0], [0], [1], [0, 0, 1, 1], [], []>} : vector<8x256xf32>, vector<256x128xf32>, vector<8x128xf32> -> vector<8x128xf32>
    %c0_3 = arith.constant 0 : index
    %c0_4 = arith.constant 0 : index
    %3 = vector.load %arg1[%c0_3, %c0_4] : memref<8x512xf32, #tpu.memory_space<vmem>>, vector<8x512xf32>
    %c0_5 = arith.constant 0 : index
    %c0_6 = arith.constant 0 : index
    %4 = vector.load %arg5[%c0_5, %c0_6] : memref<512x128xf32, #tpu.memory_space<vmem>>, vector<512x128xf32>
    %cst_7 = arith.constant dense<0.000000e+00> : vector<8x128xf32>
    %5 = tpu.matmul %3, %4, %cst_7 {dimension_numbers = #tpu.dot_dimension_numbers<[1], [0], [0], [1], [0, 0, 1, 1], [], []>} : vector<8x512xf32>, vector<512x128xf32>, vector<8x128xf32> -> vector<8x128xf32>
    %c0_8 = arith.constant 0 : index
    %c0_9 = arith.constant 0 : index
    %6 = vector.load %arg2[%c0_8, %c0_9] : memref<8x512xf32, #tpu.memory_space<vmem>>, vector<8x512xf32>
    %c0_10 = arith.constant 0 : index
    %c0_11 = arith.constant 0 : index
    %7 = vector.load %arg6[%c0_10, %c0_11] : memref<512x128xf32, #tpu.memory_space<vmem>>, vector<512x128xf32>
    %cst_12 = arith.constant dense<0.000000e+00> : vector<8x128xf32>
    %8 = tpu.matmul %6, %7, %cst_12 {dimension_numbers = #tpu.dot_dimension_numbers<[1], [0], [0], [1], [0, 0, 1, 1], [], []>} : vector<8x512xf32>, vector<512x128xf32>, vector<8x128xf32> -> vector<8x128xf32>
    %c0_13 = arith.constant 0 : index
    %c0_14 = arith.constant 0 : index
    %9 = vector.load %arg3[%c0_13, %c0_14] : memref<8x1024xf32, #tpu.memory_space<vmem>>, vector<8x1024xf32>
    %c0_15 = arith.constant 0 : index
    %c0_16 = arith.constant 0 : index
    %10 = vector.load %arg7[%c0_15, %c0_16] : memref<1024x128xf32, #tpu.memory_space<vmem>>, vector<1024x128xf32>
    %cst_17 = arith.constant dense<0.000000e+00> : vector<8x128xf32>
    %11 = tpu.matmul %9, %10, %cst_17 {dimension_numbers = #tpu.dot_dimension_numbers<[1], [0], [0], [1], [0, 0, 1, 1], [], []>} : vector<8x1024xf32>, vector<1024x128xf32>, vector<8x128xf32> -> vector<8x128xf32>
    %cst_18 = arith.constant dense<0.000000e+00> : vector<128xf32>
    %12 = vector.multi_reduction <add>, %2, %cst_18 [0] : vector<8x128xf32> to vector<128xf32>
    %13 = vector.shape_cast %12 : vector<128xf32> to vector<1x128xf32>
    %cst_19 = arith.constant dense<0.000000e+00> : vector<128xf32>
    %14 = vector.multi_reduction <add>, %5, %cst_19 [0] : vector<8x128xf32> to vector<128xf32>
    %15 = vector.shape_cast %14 : vector<128xf32> to vector<1x128xf32>
    %16 = arith.addf %13, %15 : vector<1x128xf32>
    %cst_20 = arith.constant dense<0.000000e+00> : vector<128xf32>
    %17 = vector.multi_reduction <add>, %8, %cst_20 [0] : vector<8x128xf32> to vector<128xf32>
    %18 = vector.shape_cast %17 : vector<128xf32> to vector<1x128xf32>
    %19 = arith.addf %16, %18 : vector<1x128xf32>
    %cst_21 = arith.constant dense<0.000000e+00> : vector<128xf32>
    %20 = vector.multi_reduction <add>, %11, %cst_21 [0] : vector<8x128xf32> to vector<128xf32>
    %21 = vector.shape_cast %20 : vector<128xf32> to vector<1x128xf32>
    %22 = arith.addf %19, %21 : vector<1x128xf32>
    %cst_22 = arith.constant 3.200000e+01 : f32
    %23 = vector.broadcast %cst_22 : f32 to vector<1x128xf32>
    %24 = arith.divf %22, %23 : vector<1x128xf32>
    %25 = vector.broadcast %24 : vector<1x128xf32> to vector<8x128xf32>
    %26 = arith.subf %2, %25 : vector<8x128xf32>
    %27 = arith.mulf %26, %26 : vector<8x128xf32>
    %cst_23 = arith.constant dense<0.000000e+00> : vector<128xf32>
    %28 = vector.multi_reduction <add>, %27, %cst_23 [0] : vector<8x128xf32> to vector<128xf32>
    %29 = vector.shape_cast %28 : vector<128xf32> to vector<1x128xf32>
    %30 = vector.broadcast %24 : vector<1x128xf32> to vector<8x128xf32>
    %31 = arith.subf %5, %30 : vector<8x128xf32>
    %32 = arith.mulf %31, %31 : vector<8x128xf32>
    %cst_24 = arith.constant dense<0.000000e+00> : vector<128xf32>
    %33 = vector.multi_reduction <add>, %32, %cst_24 [0] : vector<8x128xf32> to vector<128xf32>
    %34 = vector.shape_cast %33 : vector<128xf32> to vector<1x128xf32>
    %35 = arith.addf %29, %34 : vector<1x128xf32>
    %36 = vector.broadcast %24 : vector<1x128xf32> to vector<8x128xf32>
    %37 = arith.subf %8, %36 : vector<8x128xf32>
    %38 = arith.mulf %37, %37 : vector<8x128xf32>
    %cst_25 = arith.constant dense<0.000000e+00> : vector<128xf32>
    %39 = vector.multi_reduction <add>, %38, %cst_25 [0] : vector<8x128xf32> to vector<128xf32>
    %40 = vector.shape_cast %39 : vector<128xf32> to vector<1x128xf32>
    %41 = arith.addf %35, %40 : vector<1x128xf32>
    %42 = vector.broadcast %24 : vector<1x128xf32> to vector<8x128xf32>
    %43 = arith.subf %11, %42 : vector<8x128xf32>
    %44 = arith.mulf %43, %43 : vector<8x128xf32>
    %cst_26 = arith.constant dense<0.000000e+00> : vector<128xf32>
    %45 = vector.multi_reduction <add>, %44, %cst_26 [0] : vector<8x128xf32> to vector<128xf32>
    %46 = vector.shape_cast %45 : vector<128xf32> to vector<1x128xf32>
    %47 = arith.addf %41, %46 : vector<1x128xf32>
    %cst_27 = arith.constant 3.200000e+01 : f32
    %48 = vector.broadcast %cst_27 : f32 to vector<1x128xf32>
    %49 = arith.divf %47, %48 : vector<1x128xf32>
    %c0_28 = arith.constant 0 : index
    %c0_29 = arith.constant 0 : index
    %50 = vector.load %arg8[%c0_28, %c0_29] : memref<1x128xf32, #tpu.memory_space<vmem>>, vector<1x128xf32>
    %cst_30 = arith.constant 9.99999974E-6 : f32
    %51 = vector.broadcast %cst_30 : f32 to vector<1x128xf32>
    %52 = arith.addf %49, %51 : vector<1x128xf32>
    %53 = math.rsqrt %52 : vector<1x128xf32>
    %54 = arith.mulf %50, %53 : vector<1x128xf32>
    %c0_31 = arith.constant 0 : index
    %c0_32 = arith.constant 0 : index
    %55 = vector.load %arg9[%c0_31, %c0_32] : memref<1x128xf32, #tpu.memory_space<vmem>>, vector<1x128xf32>
    %56 = arith.mulf %24, %54 : vector<1x128xf32>
    %57 = arith.subf %55, %56 : vector<1x128xf32>
    %58 = vector.broadcast %54 : vector<1x128xf32> to vector<8x128xf32>
    %59 = arith.mulf %2, %58 : vector<8x128xf32>
    %60 = vector.broadcast %57 : vector<1x128xf32> to vector<8x128xf32>
    %61 = arith.addf %59, %60 : vector<8x128xf32>
    %cst_33 = arith.constant 0.000000e+00 : f32
    %62 = vector.broadcast %cst_33 : f32 to vector<8x128xf32>
    %63 = arith.cmpf oge, %61, %62 : vector<8x128xf32>
    %cst_34 = arith.constant 2.000000e-01 : f32
    %64 = vector.broadcast %cst_34 : f32 to vector<8x128xf32>
    %65 = arith.mulf %64, %61 : vector<8x128xf32>
    %66 = arith.select %63, %61, %65 : vector<8x128xi1>, vector<8x128xf32>
    %c0_35 = arith.constant 0 : index
    %c0_36 = arith.constant 0 : index
    %67 = vector.load %arg10[%c0_35, %c0_36] : memref<8x128xf32, #tpu.memory_space<vmem>>, vector<8x128xf32>
    tpu.vector_store %arg10[%c0_35, %c0_36], %66 {strides = array<i32>} : memref<8x128xf32, #tpu.memory_space<vmem>>, vector<8x128xf32>,
    %68 = vector.broadcast %54 : vector<1x128xf32> to vector<8x128xf32>
    %69 = arith.mulf %5, %68 : vector<8x128xf32>
    %70 = vector.broadcast %57 : vector<1x128xf32> to vector<8x128xf32>
    %71 = arith.addf %69, %70 : vector<8x128xf32>
    %cst_37 = arith.constant 0.000000e+00 : f32
    %72 = vector.broadcast %cst_37 : f32 to vector<8x128xf32>
    %73 = arith.cmpf oge, %71, %72 : vector<8x128xf32>
    %cst_38 = arith.constant 2.000000e-01 : f32
    %74 = vector.broadcast %cst_38 : f32 to vector<8x128xf32>
    %75 = arith.mulf %74, %71 : vector<8x128xf32>
    %76 = arith.select %73, %71, %75 : vector<8x128xi1>, vector<8x128xf32>
    %c0_39 = arith.constant 0 : index
    %c0_40 = arith.constant 0 : index
    %77 = vector.load %arg11[%c0_39, %c0_40] : memref<8x128xf32, #tpu.memory_space<vmem>>, vector<8x128xf32>
    tpu.vector_store %arg11[%c0_39, %c0_40], %76 {strides = array<i32>} : memref<8x128xf32, #tpu.memory_space<vmem>>, vector<8x128xf32>,
    %78 = vector.broadcast %54 : vector<1x128xf32> to vector<8x128xf32>
    %79 = arith.mulf %8, %78 : vector<8x128xf32>
    %80 = vector.broadcast %57 : vector<1x128xf32> to vector<8x128xf32>
    %81 = arith.addf %79, %80 : vector<8x128xf32>
    %cst_41 = arith.constant 0.000000e+00 : f32
    %82 = vector.broadcast %cst_41 : f32 to vector<8x128xf32>
    %83 = arith.cmpf oge, %81, %82 : vector<8x128xf32>
    %cst_42 = arith.constant 2.000000e-01 : f32
    %84 = vector.broadcast %cst_42 : f32 to vector<8x128xf32>
    %85 = arith.mulf %84, %81 : vector<8x128xf32>
    %86 = arith.select %83, %81, %85 : vector<8x128xi1>, vector<8x128xf32>
    %c0_43 = arith.constant 0 : index
    %c0_44 = arith.constant 0 : index
    %87 = vector.load %arg12[%c0_43, %c0_44] : memref<8x128xf32, #tpu.memory_space<vmem>>, vector<8x128xf32>
    tpu.vector_store %arg12[%c0_43, %c0_44], %86 {strides = array<i32>} : memref<8x128xf32, #tpu.memory_space<vmem>>, vector<8x128xf32>,
    %88 = vector.broadcast %54 : vector<1x128xf32> to vector<8x128xf32>
    %89 = arith.mulf %11, %88 : vector<8x128xf32>
    %90 = vector.broadcast %57 : vector<1x128xf32> to vector<8x128xf32>
    %91 = arith.addf %89, %90 : vector<8x128xf32>
    %cst_45 = arith.constant 0.000000e+00 : f32
    %92 = vector.broadcast %cst_45 : f32 to vector<8x128xf32>
    %93 = arith.cmpf oge, %91, %92 : vector<8x128xf32>
    %cst_46 = arith.constant 2.000000e-01 : f32
    %94 = vector.broadcast %cst_46 : f32 to vector<8x128xf32>
    %95 = arith.mulf %94, %91 : vector<8x128xf32>
    %96 = arith.select %93, %91, %95 : vector<8x128xi1>, vector<8x128xf32>
    %c0_47 = arith.constant 0 : index
    %c0_48 = arith.constant 0 : index
    %97 = vector.load %arg13[%c0_47, %c0_48] : memref<8x128xf32, #tpu.memory_space<vmem>>, vector<8x128xf32>
    tpu.vector_store %arg13[%c0_47, %c0_48], %96 {strides = array<i32>} : memref<8x128xf32, #tpu.memory_space<vmem>>, vector<8x128xf32>,
    return
  }
}

module attributes {stable_mosaic.version = 11 : i64} {
  func.func @_convT_bn_act_kernel(%arg0: memref<32x128xf32, #tpu.memory_space<vmem>>, %arg1: memref<32x256xf32, #tpu.memory_space<vmem>>, %arg2: memref<32x256xf32, #tpu.memory_space<vmem>>, %arg3: memref<32x512xf32, #tpu.memory_space<vmem>>, %arg4: memref<128x64xf32, #tpu.memory_space<vmem>>, %arg5: memref<256x64xf32, #tpu.memory_space<vmem>>, %arg6: memref<256x64xf32, #tpu.memory_space<vmem>>, %arg7: memref<512x64xf32, #tpu.memory_space<vmem>>, %arg8: memref<1x64xf32, #tpu.memory_space<vmem>>, %arg9: memref<1x64xf32, #tpu.memory_space<vmem>>, %arg10: memref<32x64xf32, #tpu.memory_space<vmem>>, %arg11: memref<32x64xf32, #tpu.memory_space<vmem>>, %arg12: memref<32x64xf32, #tpu.memory_space<vmem>>, %arg13: memref<32x64xf32, #tpu.memory_space<vmem>>) attributes {dimension_semantics = [], scalar_prefetch = 0 : i64, scratch_operands = 0 : i64, tpu.core_type = #tpu.core_type<tc>} {
    %c0 = arith.constant 0 : index
    %c0_0 = arith.constant 0 : index
    %0 = vector.load %arg0[%c0, %c0_0] : memref<32x128xf32, #tpu.memory_space<vmem>>, vector<32x128xf32>
    %c0_1 = arith.constant 0 : index
    %c0_2 = arith.constant 0 : index
    %1 = vector.load %arg4[%c0_1, %c0_2] : memref<128x64xf32, #tpu.memory_space<vmem>>, vector<128x64xf32>
    %cst = arith.constant dense<0.000000e+00> : vector<32x64xf32>
    %2 = tpu.matmul %0, %1, %cst {dimension_numbers = #tpu.dot_dimension_numbers<[1], [0], [0], [1], [0, 0, 1, 1], [], []>} : vector<32x128xf32>, vector<128x64xf32>, vector<32x64xf32> -> vector<32x64xf32>
    %c0_3 = arith.constant 0 : index
    %c0_4 = arith.constant 0 : index
    %3 = vector.load %arg1[%c0_3, %c0_4] : memref<32x256xf32, #tpu.memory_space<vmem>>, vector<32x256xf32>
    %c0_5 = arith.constant 0 : index
    %c0_6 = arith.constant 0 : index
    %4 = vector.load %arg5[%c0_5, %c0_6] : memref<256x64xf32, #tpu.memory_space<vmem>>, vector<256x64xf32>
    %cst_7 = arith.constant dense<0.000000e+00> : vector<32x64xf32>
    %5 = tpu.matmul %3, %4, %cst_7 {dimension_numbers = #tpu.dot_dimension_numbers<[1], [0], [0], [1], [0, 0, 1, 1], [], []>} : vector<32x256xf32>, vector<256x64xf32>, vector<32x64xf32> -> vector<32x64xf32>
    %c0_8 = arith.constant 0 : index
    %c0_9 = arith.constant 0 : index
    %6 = vector.load %arg2[%c0_8, %c0_9] : memref<32x256xf32, #tpu.memory_space<vmem>>, vector<32x256xf32>
    %c0_10 = arith.constant 0 : index
    %c0_11 = arith.constant 0 : index
    %7 = vector.load %arg6[%c0_10, %c0_11] : memref<256x64xf32, #tpu.memory_space<vmem>>, vector<256x64xf32>
    %cst_12 = arith.constant dense<0.000000e+00> : vector<32x64xf32>
    %8 = tpu.matmul %6, %7, %cst_12 {dimension_numbers = #tpu.dot_dimension_numbers<[1], [0], [0], [1], [0, 0, 1, 1], [], []>} : vector<32x256xf32>, vector<256x64xf32>, vector<32x64xf32> -> vector<32x64xf32>
    %c0_13 = arith.constant 0 : index
    %c0_14 = arith.constant 0 : index
    %9 = vector.load %arg3[%c0_13, %c0_14] : memref<32x512xf32, #tpu.memory_space<vmem>>, vector<32x512xf32>
    %c0_15 = arith.constant 0 : index
    %c0_16 = arith.constant 0 : index
    %10 = vector.load %arg7[%c0_15, %c0_16] : memref<512x64xf32, #tpu.memory_space<vmem>>, vector<512x64xf32>
    %cst_17 = arith.constant dense<0.000000e+00> : vector<32x64xf32>
    %11 = tpu.matmul %9, %10, %cst_17 {dimension_numbers = #tpu.dot_dimension_numbers<[1], [0], [0], [1], [0, 0, 1, 1], [], []>} : vector<32x512xf32>, vector<512x64xf32>, vector<32x64xf32> -> vector<32x64xf32>
    %cst_18 = arith.constant dense<0.000000e+00> : vector<64xf32>
    %12 = vector.multi_reduction <add>, %2, %cst_18 [0] : vector<32x64xf32> to vector<64xf32>
    %13 = vector.shape_cast %12 : vector<64xf32> to vector<1x64xf32>
    %cst_19 = arith.constant dense<0.000000e+00> : vector<64xf32>
    %14 = vector.multi_reduction <add>, %5, %cst_19 [0] : vector<32x64xf32> to vector<64xf32>
    %15 = vector.shape_cast %14 : vector<64xf32> to vector<1x64xf32>
    %16 = arith.addf %13, %15 : vector<1x64xf32>
    %cst_20 = arith.constant dense<0.000000e+00> : vector<64xf32>
    %17 = vector.multi_reduction <add>, %8, %cst_20 [0] : vector<32x64xf32> to vector<64xf32>
    %18 = vector.shape_cast %17 : vector<64xf32> to vector<1x64xf32>
    %19 = arith.addf %16, %18 : vector<1x64xf32>
    %cst_21 = arith.constant dense<0.000000e+00> : vector<64xf32>
    %20 = vector.multi_reduction <add>, %11, %cst_21 [0] : vector<32x64xf32> to vector<64xf32>
    %21 = vector.shape_cast %20 : vector<64xf32> to vector<1x64xf32>
    %22 = arith.addf %19, %21 : vector<1x64xf32>
    %cst_22 = arith.constant 1.280000e+02 : f32
    %23 = vector.broadcast %cst_22 : f32 to vector<1x64xf32>
    %24 = arith.divf %22, %23 : vector<1x64xf32>
    %25 = vector.broadcast %24 : vector<1x64xf32> to vector<32x64xf32>
    %26 = arith.subf %2, %25 : vector<32x64xf32>
    %27 = arith.mulf %26, %26 : vector<32x64xf32>
    %cst_23 = arith.constant dense<0.000000e+00> : vector<64xf32>
    %28 = vector.multi_reduction <add>, %27, %cst_23 [0] : vector<32x64xf32> to vector<64xf32>
    %29 = vector.shape_cast %28 : vector<64xf32> to vector<1x64xf32>
    %30 = vector.broadcast %24 : vector<1x64xf32> to vector<32x64xf32>
    %31 = arith.subf %5, %30 : vector<32x64xf32>
    %32 = arith.mulf %31, %31 : vector<32x64xf32>
    %cst_24 = arith.constant dense<0.000000e+00> : vector<64xf32>
    %33 = vector.multi_reduction <add>, %32, %cst_24 [0] : vector<32x64xf32> to vector<64xf32>
    %34 = vector.shape_cast %33 : vector<64xf32> to vector<1x64xf32>
    %35 = arith.addf %29, %34 : vector<1x64xf32>
    %36 = vector.broadcast %24 : vector<1x64xf32> to vector<32x64xf32>
    %37 = arith.subf %8, %36 : vector<32x64xf32>
    %38 = arith.mulf %37, %37 : vector<32x64xf32>
    %cst_25 = arith.constant dense<0.000000e+00> : vector<64xf32>
    %39 = vector.multi_reduction <add>, %38, %cst_25 [0] : vector<32x64xf32> to vector<64xf32>
    %40 = vector.shape_cast %39 : vector<64xf32> to vector<1x64xf32>
    %41 = arith.addf %35, %40 : vector<1x64xf32>
    %42 = vector.broadcast %24 : vector<1x64xf32> to vector<32x64xf32>
    %43 = arith.subf %11, %42 : vector<32x64xf32>
    %44 = arith.mulf %43, %43 : vector<32x64xf32>
    %cst_26 = arith.constant dense<0.000000e+00> : vector<64xf32>
    %45 = vector.multi_reduction <add>, %44, %cst_26 [0] : vector<32x64xf32> to vector<64xf32>
    %46 = vector.shape_cast %45 : vector<64xf32> to vector<1x64xf32>
    %47 = arith.addf %41, %46 : vector<1x64xf32>
    %cst_27 = arith.constant 1.280000e+02 : f32
    %48 = vector.broadcast %cst_27 : f32 to vector<1x64xf32>
    %49 = arith.divf %47, %48 : vector<1x64xf32>
    %c0_28 = arith.constant 0 : index
    %c0_29 = arith.constant 0 : index
    %50 = vector.load %arg8[%c0_28, %c0_29] : memref<1x64xf32, #tpu.memory_space<vmem>>, vector<1x64xf32>
    %cst_30 = arith.constant 9.99999974E-6 : f32
    %51 = vector.broadcast %cst_30 : f32 to vector<1x64xf32>
    %52 = arith.addf %49, %51 : vector<1x64xf32>
    %53 = math.rsqrt %52 : vector<1x64xf32>
    %54 = arith.mulf %50, %53 : vector<1x64xf32>
    %c0_31 = arith.constant 0 : index
    %c0_32 = arith.constant 0 : index
    %55 = vector.load %arg9[%c0_31, %c0_32] : memref<1x64xf32, #tpu.memory_space<vmem>>, vector<1x64xf32>
    %56 = arith.mulf %24, %54 : vector<1x64xf32>
    %57 = arith.subf %55, %56 : vector<1x64xf32>
    %58 = vector.broadcast %54 : vector<1x64xf32> to vector<32x64xf32>
    %59 = arith.mulf %2, %58 : vector<32x64xf32>
    %60 = vector.broadcast %57 : vector<1x64xf32> to vector<32x64xf32>
    %61 = arith.addf %59, %60 : vector<32x64xf32>
    %cst_33 = arith.constant 0.000000e+00 : f32
    %62 = vector.broadcast %cst_33 : f32 to vector<32x64xf32>
    %63 = arith.cmpf oge, %61, %62 : vector<32x64xf32>
    %cst_34 = arith.constant 2.000000e-01 : f32
    %64 = vector.broadcast %cst_34 : f32 to vector<32x64xf32>
    %65 = arith.mulf %64, %61 : vector<32x64xf32>
    %66 = arith.select %63, %61, %65 : vector<32x64xi1>, vector<32x64xf32>
    %c0_35 = arith.constant 0 : index
    %c0_36 = arith.constant 0 : index
    %67 = vector.load %arg10[%c0_35, %c0_36] : memref<32x64xf32, #tpu.memory_space<vmem>>, vector<32x64xf32>
    tpu.vector_store %arg10[%c0_35, %c0_36], %66 {strides = array<i32>} : memref<32x64xf32, #tpu.memory_space<vmem>>, vector<32x64xf32>,
    %68 = vector.broadcast %54 : vector<1x64xf32> to vector<32x64xf32>
    %69 = arith.mulf %5, %68 : vector<32x64xf32>
    %70 = vector.broadcast %57 : vector<1x64xf32> to vector<32x64xf32>
    %71 = arith.addf %69, %70 : vector<32x64xf32>
    %cst_37 = arith.constant 0.000000e+00 : f32
    %72 = vector.broadcast %cst_37 : f32 to vector<32x64xf32>
    %73 = arith.cmpf oge, %71, %72 : vector<32x64xf32>
    %cst_38 = arith.constant 2.000000e-01 : f32
    %74 = vector.broadcast %cst_38 : f32 to vector<32x64xf32>
    %75 = arith.mulf %74, %71 : vector<32x64xf32>
    %76 = arith.select %73, %71, %75 : vector<32x64xi1>, vector<32x64xf32>
    %c0_39 = arith.constant 0 : index
    %c0_40 = arith.constant 0 : index
    %77 = vector.load %arg11[%c0_39, %c0_40] : memref<32x64xf32, #tpu.memory_space<vmem>>, vector<32x64xf32>
    tpu.vector_store %arg11[%c0_39, %c0_40], %76 {strides = array<i32>} : memref<32x64xf32, #tpu.memory_space<vmem>>, vector<32x64xf32>,
    %78 = vector.broadcast %54 : vector<1x64xf32> to vector<32x64xf32>
    %79 = arith.mulf %8, %78 : vector<32x64xf32>
    %80 = vector.broadcast %57 : vector<1x64xf32> to vector<32x64xf32>
    %81 = arith.addf %79, %80 : vector<32x64xf32>
    %cst_41 = arith.constant 0.000000e+00 : f32
    %82 = vector.broadcast %cst_41 : f32 to vector<32x64xf32>
    %83 = arith.cmpf oge, %81, %82 : vector<32x64xf32>
    %cst_42 = arith.constant 2.000000e-01 : f32
    %84 = vector.broadcast %cst_42 : f32 to vector<32x64xf32>
    %85 = arith.mulf %84, %81 : vector<32x64xf32>
    %86 = arith.select %83, %81, %85 : vector<32x64xi1>, vector<32x64xf32>
    %c0_43 = arith.constant 0 : index
    %c0_44 = arith.constant 0 : index
    %87 = vector.load %arg12[%c0_43, %c0_44] : memref<32x64xf32, #tpu.memory_space<vmem>>, vector<32x64xf32>
    tpu.vector_store %arg12[%c0_43, %c0_44], %86 {strides = array<i32>} : memref<32x64xf32, #tpu.memory_space<vmem>>, vector<32x64xf32>,
    %88 = vector.broadcast %54 : vector<1x64xf32> to vector<32x64xf32>
    %89 = arith.mulf %11, %88 : vector<32x64xf32>
    %90 = vector.broadcast %57 : vector<1x64xf32> to vector<32x64xf32>
    %91 = arith.addf %89, %90 : vector<32x64xf32>
    %cst_45 = arith.constant 0.000000e+00 : f32
    %92 = vector.broadcast %cst_45 : f32 to vector<32x64xf32>
    %93 = arith.cmpf oge, %91, %92 : vector<32x64xf32>
    %cst_46 = arith.constant 2.000000e-01 : f32
    %94 = vector.broadcast %cst_46 : f32 to vector<32x64xf32>
    %95 = arith.mulf %94, %91 : vector<32x64xf32>
    %96 = arith.select %93, %91, %95 : vector<32x64xi1>, vector<32x64xf32>
    %c0_47 = arith.constant 0 : index
    %c0_48 = arith.constant 0 : index
    %97 = vector.load %arg13[%c0_47, %c0_48] : memref<32x64xf32, #tpu.memory_space<vmem>>, vector<32x64xf32>
    tpu.vector_store %arg13[%c0_47, %c0_48], %96 {strides = array<i32>} : memref<32x64xf32, #tpu.memory_space<vmem>>, vector<32x64xf32>,
    return
  }
}

module attributes {stable_mosaic.version = 11 : i64} {
  func.func @_convT_bn_act_kernel(%arg0: memref<128x64xf32, #tpu.memory_space<vmem>>, %arg1: memref<128x128xf32, #tpu.memory_space<vmem>>, %arg2: memref<128x128xf32, #tpu.memory_space<vmem>>, %arg3: memref<128x256xf32, #tpu.memory_space<vmem>>, %arg4: memref<64x3xf32, #tpu.memory_space<vmem>>, %arg5: memref<128x3xf32, #tpu.memory_space<vmem>>, %arg6: memref<128x3xf32, #tpu.memory_space<vmem>>, %arg7: memref<256x3xf32, #tpu.memory_space<vmem>>, %arg8: memref<1x3xf32, #tpu.memory_space<vmem>>, %arg9: memref<1x3xf32, #tpu.memory_space<vmem>>, %arg10: memref<128x3xf32, #tpu.memory_space<vmem>>, %arg11: memref<128x3xf32, #tpu.memory_space<vmem>>, %arg12: memref<128x3xf32, #tpu.memory_space<vmem>>, %arg13: memref<128x3xf32, #tpu.memory_space<vmem>>) attributes {dimension_semantics = [], scalar_prefetch = 0 : i64, scratch_operands = 0 : i64, tpu.core_type = #tpu.core_type<tc>} {
    %c0 = arith.constant 0 : index
    %c0_0 = arith.constant 0 : index
    %0 = vector.load %arg0[%c0, %c0_0] : memref<128x64xf32, #tpu.memory_space<vmem>>, vector<128x64xf32>
    %c0_1 = arith.constant 0 : index
    %c0_2 = arith.constant 0 : index
    %1 = vector.load %arg4[%c0_1, %c0_2] : memref<64x3xf32, #tpu.memory_space<vmem>>, vector<64x3xf32>
    %cst = arith.constant dense<0.000000e+00> : vector<128x3xf32>
    %2 = tpu.matmul %0, %1, %cst {dimension_numbers = #tpu.dot_dimension_numbers<[1], [0], [0], [1], [0, 0, 1, 1], [], []>} : vector<128x64xf32>, vector<64x3xf32>, vector<128x3xf32> -> vector<128x3xf32>
    %c0_3 = arith.constant 0 : index
    %c0_4 = arith.constant 0 : index
    %3 = vector.load %arg1[%c0_3, %c0_4] : memref<128x128xf32, #tpu.memory_space<vmem>>, vector<128x128xf32>
    %c0_5 = arith.constant 0 : index
    %c0_6 = arith.constant 0 : index
    %4 = vector.load %arg5[%c0_5, %c0_6] : memref<128x3xf32, #tpu.memory_space<vmem>>, vector<128x3xf32>
    %cst_7 = arith.constant dense<0.000000e+00> : vector<128x3xf32>
    %5 = tpu.matmul %3, %4, %cst_7 {dimension_numbers = #tpu.dot_dimension_numbers<[1], [0], [0], [1], [0, 0, 1, 1], [], []>} : vector<128x128xf32>, vector<128x3xf32>, vector<128x3xf32> -> vector<128x3xf32>
    %c0_8 = arith.constant 0 : index
    %c0_9 = arith.constant 0 : index
    %6 = vector.load %arg2[%c0_8, %c0_9] : memref<128x128xf32, #tpu.memory_space<vmem>>, vector<128x128xf32>
    %c0_10 = arith.constant 0 : index
    %c0_11 = arith.constant 0 : index
    %7 = vector.load %arg6[%c0_10, %c0_11] : memref<128x3xf32, #tpu.memory_space<vmem>>, vector<128x3xf32>
    %cst_12 = arith.constant dense<0.000000e+00> : vector<128x3xf32>
    %8 = tpu.matmul %6, %7, %cst_12 {dimension_numbers = #tpu.dot_dimension_numbers<[1], [0], [0], [1], [0, 0, 1, 1], [], []>} : vector<128x128xf32>, vector<128x3xf32>, vector<128x3xf32> -> vector<128x3xf32>
    %c0_13 = arith.constant 0 : index
    %c0_14 = arith.constant 0 : index
    %9 = vector.load %arg3[%c0_13, %c0_14] : memref<128x256xf32, #tpu.memory_space<vmem>>, vector<128x256xf32>
    %c0_15 = arith.constant 0 : index
    %c0_16 = arith.constant 0 : index
    %10 = vector.load %arg7[%c0_15, %c0_16] : memref<256x3xf32, #tpu.memory_space<vmem>>, vector<256x3xf32>
    %cst_17 = arith.constant dense<0.000000e+00> : vector<128x3xf32>
    %11 = tpu.matmul %9, %10, %cst_17 {dimension_numbers = #tpu.dot_dimension_numbers<[1], [0], [0], [1], [0, 0, 1, 1], [], []>} : vector<128x256xf32>, vector<256x3xf32>, vector<128x3xf32> -> vector<128x3xf32>
    %cst_18 = arith.constant dense<0.000000e+00> : vector<3xf32>
    %12 = vector.multi_reduction <add>, %2, %cst_18 [0] : vector<128x3xf32> to vector<3xf32>
    %13 = vector.shape_cast %12 : vector<3xf32> to vector<1x3xf32>
    %cst_19 = arith.constant dense<0.000000e+00> : vector<3xf32>
    %14 = vector.multi_reduction <add>, %5, %cst_19 [0] : vector<128x3xf32> to vector<3xf32>
    %15 = vector.shape_cast %14 : vector<3xf32> to vector<1x3xf32>
    %16 = arith.addf %13, %15 : vector<1x3xf32>
    %cst_20 = arith.constant dense<0.000000e+00> : vector<3xf32>
    %17 = vector.multi_reduction <add>, %8, %cst_20 [0] : vector<128x3xf32> to vector<3xf32>
    %18 = vector.shape_cast %17 : vector<3xf32> to vector<1x3xf32>
    %19 = arith.addf %16, %18 : vector<1x3xf32>
    %cst_21 = arith.constant dense<0.000000e+00> : vector<3xf32>
    %20 = vector.multi_reduction <add>, %11, %cst_21 [0] : vector<128x3xf32> to vector<3xf32>
    %21 = vector.shape_cast %20 : vector<3xf32> to vector<1x3xf32>
    %22 = arith.addf %19, %21 : vector<1x3xf32>
    %cst_22 = arith.constant 5.120000e+02 : f32
    %23 = vector.broadcast %cst_22 : f32 to vector<1x3xf32>
    %24 = arith.divf %22, %23 : vector<1x3xf32>
    %25 = vector.broadcast %24 : vector<1x3xf32> to vector<128x3xf32>
    %26 = arith.subf %2, %25 : vector<128x3xf32>
    %27 = arith.mulf %26, %26 : vector<128x3xf32>
    %cst_23 = arith.constant dense<0.000000e+00> : vector<3xf32>
    %28 = vector.multi_reduction <add>, %27, %cst_23 [0] : vector<128x3xf32> to vector<3xf32>
    %29 = vector.shape_cast %28 : vector<3xf32> to vector<1x3xf32>
    %30 = vector.broadcast %24 : vector<1x3xf32> to vector<128x3xf32>
    %31 = arith.subf %5, %30 : vector<128x3xf32>
    %32 = arith.mulf %31, %31 : vector<128x3xf32>
    %cst_24 = arith.constant dense<0.000000e+00> : vector<3xf32>
    %33 = vector.multi_reduction <add>, %32, %cst_24 [0] : vector<128x3xf32> to vector<3xf32>
    %34 = vector.shape_cast %33 : vector<3xf32> to vector<1x3xf32>
    %35 = arith.addf %29, %34 : vector<1x3xf32>
    %36 = vector.broadcast %24 : vector<1x3xf32> to vector<128x3xf32>
    %37 = arith.subf %8, %36 : vector<128x3xf32>
    %38 = arith.mulf %37, %37 : vector<128x3xf32>
    %cst_25 = arith.constant dense<0.000000e+00> : vector<3xf32>
    %39 = vector.multi_reduction <add>, %38, %cst_25 [0] : vector<128x3xf32> to vector<3xf32>
    %40 = vector.shape_cast %39 : vector<3xf32> to vector<1x3xf32>
    %41 = arith.addf %35, %40 : vector<1x3xf32>
    %42 = vector.broadcast %24 : vector<1x3xf32> to vector<128x3xf32>
    %43 = arith.subf %11, %42 : vector<128x3xf32>
    %44 = arith.mulf %43, %43 : vector<128x3xf32>
    %cst_26 = arith.constant dense<0.000000e+00> : vector<3xf32>
    %45 = vector.multi_reduction <add>, %44, %cst_26 [0] : vector<128x3xf32> to vector<3xf32>
    %46 = vector.shape_cast %45 : vector<3xf32> to vector<1x3xf32>
    %47 = arith.addf %41, %46 : vector<1x3xf32>
    %cst_27 = arith.constant 5.120000e+02 : f32
    %48 = vector.broadcast %cst_27 : f32 to vector<1x3xf32>
    %49 = arith.divf %47, %48 : vector<1x3xf32>
    %c0_28 = arith.constant 0 : index
    %c0_29 = arith.constant 0 : index
    %50 = vector.load %arg8[%c0_28, %c0_29] : memref<1x3xf32, #tpu.memory_space<vmem>>, vector<1x3xf32>
    %cst_30 = arith.constant 9.99999974E-6 : f32
    %51 = vector.broadcast %cst_30 : f32 to vector<1x3xf32>
    %52 = arith.addf %49, %51 : vector<1x3xf32>
    %53 = math.rsqrt %52 : vector<1x3xf32>
    %54 = arith.mulf %50, %53 : vector<1x3xf32>
    %c0_31 = arith.constant 0 : index
    %c0_32 = arith.constant 0 : index
    %55 = vector.load %arg9[%c0_31, %c0_32] : memref<1x3xf32, #tpu.memory_space<vmem>>, vector<1x3xf32>
    %56 = arith.mulf %24, %54 : vector<1x3xf32>
    %57 = arith.subf %55, %56 : vector<1x3xf32>
    %58 = vector.broadcast %54 : vector<1x3xf32> to vector<128x3xf32>
    %59 = arith.mulf %2, %58 : vector<128x3xf32>
    %60 = vector.broadcast %57 : vector<1x3xf32> to vector<128x3xf32>
    %61 = arith.addf %59, %60 : vector<128x3xf32>
    %cst_33 = arith.constant 0.000000e+00 : f32
    %62 = vector.broadcast %cst_33 : f32 to vector<128x3xf32>
    %63 = arith.cmpf oge, %61, %62 : vector<128x3xf32>
    %cst_34 = arith.constant 2.000000e-01 : f32
    %64 = vector.broadcast %cst_34 : f32 to vector<128x3xf32>
    %65 = arith.mulf %64, %61 : vector<128x3xf32>
    %66 = arith.select %63, %61, %65 : vector<128x3xi1>, vector<128x3xf32>
    %67 = math.tanh %66 : vector<128x3xf32>
    %c0_35 = arith.constant 0 : index
    %c0_36 = arith.constant 0 : index
    %68 = vector.load %arg10[%c0_35, %c0_36] : memref<128x3xf32, #tpu.memory_space<vmem>>, vector<128x3xf32>
    tpu.vector_store %arg10[%c0_35, %c0_36], %67 {strides = array<i32>} : memref<128x3xf32, #tpu.memory_space<vmem>>, vector<128x3xf32>,
    %69 = vector.broadcast %54 : vector<1x3xf32> to vector<128x3xf32>
    %70 = arith.mulf %5, %69 : vector<128x3xf32>
    %71 = vector.broadcast %57 : vector<1x3xf32> to vector<128x3xf32>
    %72 = arith.addf %70, %71 : vector<128x3xf32>
    %cst_37 = arith.constant 0.000000e+00 : f32
    %73 = vector.broadcast %cst_37 : f32 to vector<128x3xf32>
    %74 = arith.cmpf oge, %72, %73 : vector<128x3xf32>
    %cst_38 = arith.constant 2.000000e-01 : f32
    %75 = vector.broadcast %cst_38 : f32 to vector<128x3xf32>
    %76 = arith.mulf %75, %72 : vector<128x3xf32>
    %77 = arith.select %74, %72, %76 : vector<128x3xi1>, vector<128x3xf32>
    %78 = math.tanh %77 : vector<128x3xf32>
    %c0_39 = arith.constant 0 : index
    %c0_40 = arith.constant 0 : index
    %79 = vector.load %arg11[%c0_39, %c0_40] : memref<128x3xf32, #tpu.memory_space<vmem>>, vector<128x3xf32>
    tpu.vector_store %arg11[%c0_39, %c0_40], %78 {strides = array<i32>} : memref<128x3xf32, #tpu.memory_space<vmem>>, vector<128x3xf32>,
    %80 = vector.broadcast %54 : vector<1x3xf32> to vector<128x3xf32>
    %81 = arith.mulf %8, %80 : vector<128x3xf32>
    %82 = vector.broadcast %57 : vector<1x3xf32> to vector<128x3xf32>
    %83 = arith.addf %81, %82 : vector<128x3xf32>
    %cst_41 = arith.constant 0.000000e+00 : f32
    %84 = vector.broadcast %cst_41 : f32 to vector<128x3xf32>
    %85 = arith.cmpf oge, %83, %84 : vector<128x3xf32>
    %cst_42 = arith.constant 2.000000e-01 : f32
    %86 = vector.broadcast %cst_42 : f32 to vector<128x3xf32>
    %87 = arith.mulf %86, %83 : vector<128x3xf32>
    %88 = arith.select %85, %83, %87 : vector<128x3xi1>, vector<128x3xf32>
    %89 = math.tanh %88 : vector<128x3xf32>
    %c0_43 = arith.constant 0 : index
    %c0_44 = arith.constant 0 : index
    %90 = vector.load %arg12[%c0_43, %c0_44] : memref<128x3xf32, #tpu.memory_space<vmem>>, vector<128x3xf32>
    tpu.vector_store %arg12[%c0_43, %c0_44], %89 {strides = array<i32>} : memref<128x3xf32, #tpu.memory_space<vmem>>, vector<128x3xf32>,
    %91 = vector.broadcast %54 : vector<1x3xf32> to vector<128x3xf32>
    %92 = arith.mulf %11, %91 : vector<128x3xf32>
    %93 = vector.broadcast %57 : vector<1x3xf32> to vector<128x3xf32>
    %94 = arith.addf %92, %93 : vector<128x3xf32>
    %cst_45 = arith.constant 0.000000e+00 : f32
    %95 = vector.broadcast %cst_45 : f32 to vector<128x3xf32>
    %96 = arith.cmpf oge, %94, %95 : vector<128x3xf32>
    %cst_46 = arith.constant 2.000000e-01 : f32
    %97 = vector.broadcast %cst_46 : f32 to vector<128x3xf32>
    %98 = arith.mulf %97, %94 : vector<128x3xf32>
    %99 = arith.select %96, %94, %98 : vector<128x3xi1>, vector<128x3xf32>
    %100 = math.tanh %99 : vector<128x3xf32>
    %c0_47 = arith.constant 0 : index
    %c0_48 = arith.constant 0 : index
    %101 = vector.load %arg13[%c0_47, %c0_48] : memref<128x3xf32, #tpu.memory_space<vmem>>, vector<128x3xf32>
    tpu.vector_store %arg13[%c0_47, %c0_48], %100 {strides = array<i32>} : memref<128x3xf32, #tpu.memory_space<vmem>>, vector<128x3xf32>,
    return
  }
}

</mosaic_0001>

<llo_original>
// kernel: vae_forward.7
$region0: #{vae_forward.7}
  #allocation0 [shape = 'u32[]', space=smem, size = 0x4, offset = 0x4, fixed_abs, tag = 'smem constant byte address 0x4 - core index']
  #allocation1 [shape = 'u32[144,128]{1,0:T(1,128)}', space=vmem, size = 0x12000, scoped, tag = 'internal scratch']
  %s0 = inlined_call_operand.vmem [shape: f32[128,27], index: 0, kind: input, shape index: {}]
  %s1 = inlined_call_operand.vmem [shape: f32[27,64], index: 1, kind: input, shape index: {}]
  %s2 = inlined_call_operand.vmem [shape: f32[1,64], index: 2, kind: input, shape index: {}]
  %s3 = inlined_call_operand.vmem [shape: f32[1,64], index: 3, kind: input, shape index: {}]
  %s4 = inlined_call_operand.vmem [shape: f32[128,64], index: 4, kind: output, shape index: {}]
  %s5 = sld [smem:[#allocation0]]
  $region26: #{vae_forward.7} parent=0
    _
  %s7 = ssub.s32 1, %s5
  %s8 = scalar_select 0, %s7, %s5
  // Predicated region
  $region2: #{vae_forward.7} parent=0 // pred_check
    _
  $region3: #{vae_forward.7} parent=0 // pred_check_branch
    %10 = sbr.rel (0) target = $region5
  $region4: #{vae_forward.7} parent=0 // pred_region
    _
  $region5: #{vae_forward.7} parent=0 // pred_fallthru
    _
  // Predicated region
  $region6: #{vae_forward.7} parent=0 // pred_check
    _
  $region7: #{vae_forward.7} parent=0 // pred_check_branch
    %12 = sbr.rel (0) target = $region9
  $region8: #{vae_forward.7} parent=0 // pred_region
    _
  $region9: #{vae_forward.7} parent=0 // pred_fallthru
    _
  // Predicated region
  $region10: #{vae_forward.7} parent=0 // pred_check
    _
  $region11: #{vae_forward.7} parent=0 // pred_check_branch
    %14 = sbr.rel (0) target = $region13
  $region12: #{vae_forward.7} parent=0 // pred_region
    _
  $region13: #{vae_forward.7} parent=0 // pred_fallthru
    _
  // Predicated region
  $region14: #{vae_forward.7} parent=0 // pred_check
    _
  $region15: #{vae_forward.7} parent=0 // pred_check_branch
    %16 = sbr.rel (0) target = $region17
  $region16: #{vae_forward.7} parent=0 // pred_region
    _
  $region17: #{vae_forward.7} parent=0 // pred_fallthru
    _
  %v17 = vld [vmem:[%s0] sm:$0xff]
  %v18 = vld [vmem:[%s0 + $0x8] sm:$0xff]
  %v19 = vld [vmem:[%s0 + $0x10] sm:$0xff]
  %v20 = vld [vmem:[%s0 + $0x18] sm:$0xff]
  %v21 = vld [vmem:[%s0 + $0x20] sm:$0xff]
  %v22 = vld [vmem:[%s0 + $0x28] sm:$0xff]
  %v23 = vld [vmem:[%s0 + $0x30] sm:$0xff]
  %v24 = vld [vmem:[%s0 + $0x38] sm:$0xff]
  %v25 = vld [vmem:[%s0 + $0x40] sm:$0xff]
  %v26 = vld [vmem:[%s0 + $0x48] sm:$0xff]
  %v27 = vld [vmem:[%s0 + $0x50] sm:$0xff]
  %v28 = vld [vmem:[%s0 + $0x58] sm:$0xff]
  %v29 = vld [vmem:[%s0 + $0x60] sm:$0xff]
  %v30 = vld [vmem:[%s0 + $0x68] sm:$0xff]
  %v31 = vld [vmem:[%s0 + $0x70] sm:$0xff]
  %v32 = vld [vmem:[%s0 + $0x78] sm:$0xff]
  %v33 = vld [vmem:[%s1] sm:$0xff]
  %v34 = vld [vmem:[%s1 + $0x8] sm:$0xff]
  %v35 = vld [vmem:[%s1 + $0x10] sm:$0xff]
  %v36 = vld [vmem:[%s1 + $0x18] sm:$0x7]
  %vm37 = vcmask 220160
  %v39 = vsel %vm37, %v17, 0
  %v42 = vsel %vm37, %v18, 0
  %v45 = vsel %vm37, %v19, 0
  %v48 = vsel %vm37, %v20, 0
  %v51 = vsel %vm37, %v21, 0
  %v54 = vsel %vm37, %v22, 0
  %v57 = vsel %vm37, %v23, 0
  %v60 = vsel %vm37, %v24, 0
  %v63 = vsel %vm37, %v25, 0
  %v66 = vsel %vm37, %v26, 0
  %v69 = vsel %vm37, %v27, 0
  %v72 = vsel %vm37, %v28, 0
  %v75 = vsel %vm37, %v29, 0
  %v78 = vsel %vm37, %v30, 0
  %v81 = vsel %vm37, %v31, 0
  %v84 = vsel %vm37, %v32, 0
  %vm86 = vcmask 1042432
  %v88 = vsel %vm86, %v36, 0
  %90 = vmatprep.subr.mxu0 0.0
  %91 = vmatpush1.msra.mxu0 0.0
  %92 = vmatprep.subr.mxu0 0.0
  %93 = vmatpush1.msra.mxu0 0.0
  %94 = vmatprep.subr.mxu0 0.0
  %95 = vmatpush1.msra.mxu0 0.0
  %96 = vmatprep.subr.mxu0 0.0
  %97 = vmatpush1.msra.mxu0 0.0
  %98 = vmatprep.subr.mxu0 0.0
  %99 = vmatpush1.msra.mxu0 0.0
  %100 = vmatprep.subr.mxu0 0.0
  %101 = vmatpush1.msra.mxu0 0.0
  %102 = vmatprep.subr.mxu0 0.0
  %103 = vmatpush1.msra.mxu0 0.0
  %104 = vmatprep.subr.mxu0 0.0
  %105 = vmatpush1.msra.mxu0 0.0
  %106 = vmatprep.subr.mxu0 0.0
  %107 = vmatpush1.msra.mxu0 0.0
  %108 = vmatprep.subr.mxu0 0.0
  %109 = vmatpush1.msra.mxu0 0.0
  %110 = vmatprep.subr.mxu0 0.0
  %111 = vmatpush1.msra.mxu0 0.0
  %112 = vmatprep.subr.mxu0 0.0
  %113 = vmatpush1.msra.mxu0 0.0
  %114 = vmatprep.subr.mxu0 0.0
  %115 = vmatpush1.msra.mxu0 %v88
  %116 = vmatprep.subr.mxu0 0.0
  %117 = vmatpush1.msra.mxu0 %v35
  %118 = vmatprep.subr.mxu0 0.0
  %119 = vmatpush1.msra.mxu0 %v34
  %120 = vmatprep.subr.mxu0 0.0
  %121 = vmatpush1.msra.mxu0 %v33
  %122 = vmatprep.subr.mxu0 0.0
  %123 = vmatpush2.msra.mxu0 0.0
  %124 = vmatprep.subr.mxu0 0.0
  %125 = vmatpush2.msra.mxu0 0.0
  %126 = vmatprep.subr.mxu0 0.0
  %127 = vmatpush2.msra.mxu0 0.0
  %128 = vmatprep.subr.mxu0 0.0
  %129 = vmatpush2.msra.mxu0 0.0
  %130 = vmatprep.subr.mxu0 0.0
  %131 = vmatpush2.msra.mxu0 0.0
  %132 = vmatprep.subr.mxu0 0.0
  %133 = vmatpush2.msra.mxu0 0.0
  %134 = vmatprep.subr.mxu0 0.0
  %135 = vmatpush2.msra.mxu0 0.0
  %136 = vmatprep.subr.mxu0 0.0
  %137 = vmatpush2.msra.mxu0 0.0
  %138 = vmatprep.subr.mxu0 0.0
  %139 = vmatpush2.msra.mxu0 0.0
  %140 = vmatprep.subr.mxu0 0.0
  %141 = vmatpush2.msra.mxu0 0.0
  %142 = vmatprep.subr.mxu0 0.0
  %143 = vmatpush2.msra.mxu0 0.0
  %144 = vmatprep.subr.mxu0 0.0
  %145 = vmatpush2.msra.mxu0 0.0
  %146 = vmatprep.subr.mxu0 0.0
  %147 = vmatpush2.msra.mxu0 0.0
  %148 = vmatprep.subr.mxu0 0.0
  %149 = vmatpush2.msra.mxu0 0.0
  %150 = vmatprep.subr.mxu0 0.0
  %151 = vmatpush2.msra.mxu0 0.0
  %152 = vmatprep.subr.mxu0 0.0
  %153 = vmatpush2.msra.mxu0 0.0
  %154 = vmatprep.mubr.f32.mxu0 0.0
  %155 = vmatmul.mubr.f32.gmra.mxu0 %v39
  %v156 = vpop.f32.mrf.mxu0
  %v157 = vadd.f32 0.0, %v156
  %v158 = vpop.f32.mrf.mxu0
  %159 = vmatprep.mubr.f32.mxu0 0.0
  %160 = vmatmul.mubr.f32.gmra.mxu0 %v42
  %v161 = vpop.f32.mrf.mxu0
  %v162 = vadd.f32 0.0, %v161
  %v163 = vpop.f32.mrf.mxu0
  %164 = vmatprep.mubr.f32.mxu0 0.0
  %165 = vmatmul.mubr.f32.gmra.mxu0 %v45
  %v166 = vpop.f32.mrf.mxu0
  %v167 = vadd.f32 0.0, %v166
  %v168 = vpop.f32.mrf.mxu0
  %169 = vmatprep.mubr.f32.mxu0 0.0
  %170 = vmatmul.mubr.f32.gmra.mxu0 %v48
  %v171 = vpop.f32.mrf.mxu0
  %v172 = vadd.f32 0.0, %v171
  %v173 = vpop.f32.mrf.mxu0
  %174 = vmatprep.mubr.f32.mxu0 0.0
  %175 = vmatmul.mubr.f32.gmra.mxu0 %v51
  %v176 = vpop.f32.mrf.mxu0
  %v177 = vadd.f32 0.0, %v176
  %v178 = vpop.f32.mrf.mxu0
  %179 = vmatprep.mubr.f32.mxu0 0.0
  %180 = vmatmul.mubr.f32.gmra.mxu0 %v54
  %v181 = vpop.f32.mrf.mxu0
  %v182 = vadd.f32 0.0, %v181
  %v183 = vpop.f32.mrf.mxu0
  %184 = vmatprep.mubr.f32.mxu0 0.0
  %185 = vmatmul.mubr.f32.gmra.mxu0 %v57
  %v186 = vpop.f32.mrf.mxu0
  %v187 = vadd.f32 0.0, %v186
  %v188 = vpop.f32.mrf.mxu0
  %189 = vmatprep.mubr.f32.mxu0 0.0
  %190 = vmatmul.mubr.f32.gmra.mxu0 %v60
  %v191 = vpop.f32.mrf.mxu0
  %v192 = vadd.f32 0.0, %v191
  %v193 = vpop.f32.mrf.mxu0
  %194 = vmatprep.mubr.f32.mxu0 0.0
  %195 = vmatmul.mubr.f32.gmra.mxu0 %v63
  %v196 = vpop.f32.mrf.mxu0
  %v197 = vadd.f32 0.0, %v196
  %v198 = vpop.f32.mrf.mxu0
  %199 = vmatprep.mubr.f32.mxu0 0.0
  %200 = vmatmul.mubr.f32.gmra.mxu0 %v66
  %v201 = vpop.f32.mrf.mxu0
  %v202 = vadd.f32 0.0, %v201
  %v203 = vpop.f32.mrf.mxu0
  %204 = vmatprep.mubr.f32.mxu0 0.0
  %205 = vmatmul.mubr.f32.gmra.mxu0 %v69
  %v206 = vpop.f32.mrf.mxu0
  %v207 = vadd.f32 0.0, %v206
  %v208 = vpop.f32.mrf.mxu0
  %209 = vmatprep.mubr.f32.mxu0 0.0
  %210 = vmatmul.mubr.f32.gmra.mxu0 %v72
  %v211 = vpop.f32.mrf.mxu0
  %v212 = vadd.f32 0.0, %v211
  %v213 = vpop.f32.mrf.mxu0
  %214 = vmatprep.mubr.f32.mxu0 0.0
  %215 = vmatmul.mubr.f32.gmra.mxu0 %v75
  %v216 = vpop.f32.mrf.mxu0
  %v217 = vadd.f32 0.0, %v216
  %v218 = vpop.f32.mrf.mxu0
  %219 = vmatprep.mubr.f32.mxu0 0.0
  %220 = vmatmul.mubr.f32.gmra.mxu0 %v78
  %v221 = vpop.f32.mrf.mxu0
  %v222 = vadd.f32 0.0, %v221
  %v223 = vpop.f32.mrf.mxu0
  %224 = vmatprep.mubr.f32.mxu0 0.0
  %225 = vmatmul.mubr.f32.gmra.mxu0 %v81
  %v226 = vpop.f32.mrf.mxu0
  %v227 = vadd.f32 0.0, %v226
  %v228 = vpop.f32.mrf.mxu0
  %229 = vmatprep.mubr.f32.mxu0 0.0
  %230 = vmatmul.mubr.f32.gmra.mxu0 %v84
  %v231 = vpop.f32.mrf.mxu0
  %v232 = vadd.f32 0.0, %v231
  %v233 = vpop.f32.mrf.mxu0
  %234 = vdwg.mxu0
  %vm235 = vcmask 523264
  %v236 = vsel %vm235, %v157, 0.0
  %v237 = vsel %vm235, %v162, 0.0
  %v238 = vadd.f32 %v236, %v237
  %v239 = vsel %vm235, %v167, 0.0
  %v240 = vadd.f32 %v238, %v239
  %v241 = vsel %vm235, %v172, 0.0
  %v242 = vadd.f32 %v240, %v241
  %v243 = vsel %vm235, %v177, 0.0
  %v244 = vadd.f32 %v242, %v243
  %v245 = vsel %vm235, %v182, 0.0
  %v246 = vadd.f32 %v244, %v245
  %v247 = vsel %vm235, %v187, 0.0
  %v248 = vadd.f32 %v246, %v247
  %v249 = vsel %vm235, %v192, 0.0
  %v250 = vadd.f32 %v248, %v249
  %v251 = vsel %vm235, %v197, 0.0
  %v252 = vadd.f32 %v250, %v251
  %v253 = vsel %vm235, %v202, 0.0
  %v254 = vadd.f32 %v252, %v253
  %v255 = vsel %vm235, %v207, 0.0
  %v256 = vadd.f32 %v254, %v255
  %v257 = vsel %vm235, %v212, 0.0
  %v258 = vadd.f32 %v256, %v257
  %v259 = vsel %vm235, %v217, 0.0
  %v260 = vadd.f32 %v258, %v259
  %v261 = vsel %vm235, %v222, 0.0
  %v262 = vadd.f32 %v260, %v261
  %v263 = vsel %vm235, %v227, 0.0
  %v264 = vadd.f32 %v262, %v263
  %v265 = vsel %vm235, %v232, 0.0
  %v266 = vadd.f32 %v264, %v265
  %v267 = vrot.slane %v266, 4
  %v268 = vadd.f32 %v266, %v267
  %v269 = vrot.slane %v268, 2
  %v270 = vadd.f32 %v268, %v269
  %v271 = vrot.slane %v270, 1
  %v272 = vadd.f32 %v270, %v271
  %v273 = vrcp.pop 128.0
  %v274 = vmul.f32 %v272, %v273
  %v275 = vsub.f32 %v157, %v274
  %v276 = vsub.f32 %v162, %v274
  %v277 = vsub.f32 %v167, %v274
  %v278 = vsub.f32 %v172, %v274
  %v279 = vsub.f32 %v177, %v274
  %v280 = vsub.f32 %v182, %v274
  %v281 = vsub.f32 %v187, %v274
  %v282 = vsub.f32 %v192, %v274
  %v283 = vsub.f32 %v197, %v274
  %v284 = vsub.f32 %v202, %v274
  %v285 = vsub.f32 %v207, %v274
  %v286 = vsub.f32 %v212, %v274
  %v287 = vsub.f32 %v217, %v274
  %v288 = vsub.f32 %v222, %v274
  %v289 = vsub.f32 %v227, %v274
  %v290 = vsub.f32 %v232, %v274
  %v291 = vmul.f32 %v275, %v275
  %v292 = vmul.f32 %v276, %v276
  %v293 = vmul.f32 %v277, %v277
  %v294 = vmul.f32 %v278, %v278
  %v295 = vmul.f32 %v279, %v279
  %v296 = vmul.f32 %v280, %v280
  %v297 = vmul.f32 %v281, %v281
  %v298 = vmul.f32 %v282, %v282
  %v299 = vmul.f32 %v283, %v283
  %v300 = vmul.f32 %v284, %v284
  %v301 = vmul.f32 %v285, %v285
  %v302 = vmul.f32 %v286, %v286
  %v303 = vmul.f32 %v287, %v287
  %v304 = vmul.f32 %v288, %v288
  %v305 = vmul.f32 %v289, %v289
  %v306 = vmul.f32 %v290, %v290
  %v307 = vsel %vm235, %v291, 0.0
  %v308 = vsel %vm235, %v292, 0.0
  %v309 = vadd.f32 %v307, %v308
  %v310 = vsel %vm235, %v293, 0.0
  %v311 = vadd.f32 %v309, %v310
  %v312 = vsel %vm235, %v294, 0.0
  %v313 = vadd.f32 %v311, %v312
  %v314 = vsel %vm235, %v295, 0.0
  %v315 = vadd.f32 %v313, %v314
  %v316 = vsel %vm235, %v296, 0.0
  %v317 = vadd.f32 %v315, %v316
  %v318 = vsel %vm235, %v297, 0.0
  %v319 = vadd.f32 %v317, %v318
  %v320 = vsel %vm235, %v298, 0.0
  %v321 = vadd.f32 %v319, %v320
  %v322 = vsel %vm235, %v299, 0.0
  %v323 = vadd.f32 %v321, %v322
  %v324 = vsel %vm235, %v300, 0.0
  %v325 = vadd.f32 %v323, %v324
  %v326 = vsel %vm235, %v301, 0.0
  %v327 = vadd.f32 %v325, %v326
  %v328 = vsel %vm235, %v302, 0.0
  %v329 = vadd.f32 %v327, %v328
  %v330 = vsel %vm235, %v303, 0.0
  %v331 = vadd.f32 %v329, %v330
  %v332 = vsel %vm235, %v304, 0.0
  %v333 = vadd.f32 %v331, %v332
  %v334 = vsel %vm235, %v305, 0.0
  %v335 = vadd.f32 %v333, %v334
  %v336 = vsel %vm235, %v306, 0.0
  %v337 = vadd.f32 %v335, %v336
  %v338 = vrot.slane %v337, 4
  %v339 = vadd.f32 %v337, %v338
  %v340 = vrot.slane %v339, 2
  %v341 = vadd.f32 %v339, %v340
  %v342 = vrot.slane %v341, 1
  %v343 = vadd.f32 %v341, %v342
  %v344 = vmul.f32 %v343, %v273
  %v345 = vld [vmem:[%s2] sm:$0x1]
  %v346 = vadd.f32 %v344, 1e-05
  %v347 = vrsqrt.pop %v346
  %v348 = vmul.f32 %v345, %v347
  %v349 = vld [vmem:[%s3] sm:$0x1]
  %v350 = vmul.f32 %v274, %v348
  %v351 = vsub.f32 %v349, %v350
  %v353 = vlaneseq
  %v354 = vshrl.u32 %v353, 7
  %v355 = vsub.s32 0, %v354
  %v356 = vrot.slane %v348, %v355
  %v358 = vmul.f32 %v157, %v356
  %v359 = vmul.f32 %v162, %v356
  %v360 = vmul.f32 %v167, %v356
  %v361 = vmul.f32 %v172, %v356
  %v362 = vmul.f32 %v177, %v356
  %v363 = vmul.f32 %v182, %v356
  %v364 = vmul.f32 %v187, %v356
  %v365 = vmul.f32 %v192, %v356
  %v366 = vmul.f32 %v197, %v356
  %v367 = vmul.f32 %v202, %v356
  %v368 = vmul.f32 %v207, %v356
  %v369 = vmul.f32 %v212, %v356
  %v370 = vmul.f32 %v217, %v356
  %v371 = vmul.f32 %v222, %v356
  %v372 = vmul.f32 %v227, %v356
  %v373 = vmul.f32 %v232, %v356
  %v375 = vlaneseq
  %v376 = vshrl.u32 %v375, 7
  %v377 = vsub.s32 0, %v376
  %v378 = vrot.slane %v351, %v377
  %v380 = vadd.f32 %v358, %v378
  %v381 = vadd.f32 %v359, %v378
  %v382 = vadd.f32 %v360, %v378
  %v383 = vadd.f32 %v361, %v378
  %v384 = vadd.f32 %v362, %v378
  %v385 = vadd.f32 %v363, %v378
  %v386 = vadd.f32 %v364, %v378
  %v387 = vadd.f32 %v365, %v378
  %v388 = vadd.f32 %v366, %v378
  %v389 = vadd.f32 %v367, %v378
  %v390 = vadd.f32 %v368, %v378
  %v391 = vadd.f32 %v369, %v378
  %v392 = vadd.f32 %v370, %v378
  %v393 = vadd.f32 %v371, %v378
  %v394 = vadd.f32 %v372, %v378
  %v395 = vadd.f32 %v373, %v378
  %vm396 = vcmp.ge.f32.partialorder %v380, 0.0
  %vm397 = vcmp.ge.f32.partialorder %v381, 0.0
  %vm398 = vcmp.ge.f32.partialorder %v382, 0.0
  %vm399 = vcmp.ge.f32.partialorder %v383, 0.0
  %vm400 = vcmp.ge.f32.partialorder %v384, 0.0
  %vm401 = vcmp.ge.f32.partialorder %v385, 0.0
  %vm402 = vcmp.ge.f32.partialorder %v386, 0.0
  %vm403 = vcmp.ge.f32.partialorder %v387, 0.0
  %vm404 = vcmp.ge.f32.partialorder %v388, 0.0
  %vm405 = vcmp.ge.f32.partialorder %v389, 0.0
  %vm406 = vcmp.ge.f32.partialorder %v390, 0.0
  %vm407 = vcmp.ge.f32.partialorder %v391, 0.0
  %vm408 = vcmp.ge.f32.partialorder %v392, 0.0
  %vm409 = vcmp.ge.f32.partialorder %v393, 0.0
  %vm410 = vcmp.ge.f32.partialorder %v394, 0.0
  %vm411 = vcmp.ge.f32.partialorder %v395, 0.0
  %v412 = vmul.f32 %v380, 0.2
  %v413 = vmul.f32 %v381, 0.2
  %v414 = vmul.f32 %v382, 0.2
  %v415 = vmul.f32 %v383, 0.2
  %v416 = vmul.f32 %v384, 0.2
  %v417 = vmul.f32 %v385, 0.2
  %v418 = vmul.f32 %v386, 0.2
  %v419 = vmul.f32 %v387, 0.2
  %v420 = vmul.f32 %v388, 0.2
  %v421 = vmul.f32 %v389, 0.2
  %v422 = vmul.f32 %v390, 0.2
  %v423 = vmul.f32 %v391, 0.2
  %v424 = vmul.f32 %v392, 0.2
  %v425 = vmul.f32 %v393, 0.2
  %v426 = vmul.f32 %v394, 0.2
  %v427 = vmul.f32 %v395, 0.2
  %v428 = vsel %vm396, %v380, %v412
  %v429 = vsel %vm397, %v381, %v413
  %v430 = vsel %vm398, %v382, %v414
  %v431 = vsel %vm399, %v383, %v415
  %v432 = vsel %vm400, %v384, %v416
  %v433 = vsel %vm401, %v385, %v417
  %v434 = vsel %vm402, %v386, %v418
  %v435 = vsel %vm403, %v387, %v419
  %v436 = vsel %vm404, %v388, %v420
  %v437 = vsel %vm405, %v389, %v421
  %v438 = vsel %vm406, %v390, %v422
  %v439 = vsel %vm407, %v391, %v423
  %v440 = vsel %vm408, %v392, %v424
  %v441 = vsel %vm409, %v393, %v425
  %v442 = vsel %vm410, %v394, %v426
  %v443 = vsel %vm411, %v395, %v427
  %444 = vst.msk [vmem:[%s4] sm:$0xff] %vm235, %v428
  %445 = vst.msk [vmem:[%s4 + $0x8] sm:$0xff] %vm235, %v429
  %446 = vst.msk [vmem:[%s4 + $0x10] sm:$0xff] %vm235, %v430
  %447 = vst.msk [vmem:[%s4 + $0x18] sm:$0xff] %vm235, %v431
  %448 = vst.msk [vmem:[%s4 + $0x20] sm:$0xff] %vm235, %v432
  %449 = vst.msk [vmem:[%s4 + $0x28] sm:$0xff] %vm235, %v433
  %450 = vst.msk [vmem:[%s4 + $0x30] sm:$0xff] %vm235, %v434
  %451 = vst.msk [vmem:[%s4 + $0x38] sm:$0xff] %vm235, %v435
  %452 = vst.msk [vmem:[%s4 + $0x40] sm:$0xff] %vm235, %v436
  %453 = vst.msk [vmem:[%s4 + $0x48] sm:$0xff] %vm235, %v437
  %454 = vst.msk [vmem:[%s4 + $0x50] sm:$0xff] %vm235, %v438
  %455 = vst.msk [vmem:[%s4 + $0x58] sm:$0xff] %vm235, %v439
  %456 = vst.msk [vmem:[%s4 + $0x60] sm:$0xff] %vm235, %v440
  %457 = vst.msk [vmem:[%s4 + $0x68] sm:$0xff] %vm235, %v441
  %458 = vst.msk [vmem:[%s4 + $0x70] sm:$0xff] %vm235, %v442
  %459 = vst.msk [vmem:[%s4 + $0x78] sm:$0xff] %vm235, %v443
  // Predicated region
  $region18: #{vae_forward.7} parent=0 // pred_check
    _
  $region19: #{vae_forward.7} parent=0 // pred_check_branch
    %461 = sbr.rel (0) target = $region21
  $region20: #{vae_forward.7} parent=0 // pred_region
    _
  $region21: #{vae_forward.7} parent=0 // pred_fallthru
    _
  // Predicated region
  $region22: #{vae_forward.7} parent=0 // pred_check
    _
  $region23: #{vae_forward.7} parent=0 // pred_check_branch
    %463 = sbr.rel (0) target = $region25
  $region24: #{vae_forward.7} parent=0 // pred_region
    _
  $region25: #{vae_forward.7} parent=0 // pred_fallthru
    _

// kernel: vae_forward.8
$region0: #{vae_forward.8}
  #allocation0 [shape = 'u32[]', space=smem, size = 0x4, offset = 0x4, fixed_abs, tag = 'smem constant byte address 0x4 - core index']
  #allocation1 [shape = 'u32[144,128]{1,0:T(1,128)}', space=vmem, size = 0x12000, scoped, tag = 'internal scratch']
  %s0 = inlined_call_operand.vmem [shape: f32[32,576], index: 0, kind: input, shape index: {}]
  %s1 = inlined_call_operand.vmem [shape: f32[576,128], index: 1, kind: input, shape index: {}]
  %s2 = inlined_call_operand.vmem [shape: f32[1,128], index: 2, kind: input, shape index: {}]
  %s3 = inlined_call_operand.vmem [shape: f32[1,128], index: 3, kind: input, shape index: {}]
  %s4 = inlined_call_operand.vmem [shape: f32[32,128], index: 4, kind: output, shape index: {}]
  %s5 = sld [smem:[#allocation0]]
  $region26: #{vae_forward.8} parent=0
    _
  %s7 = ssub.s32 1, %s5
  %s8 = scalar_select 0, %s7, %s5
  // Predicated region
  $region2: #{vae_forward.8} parent=0 // pred_check
    _
  $region3: #{vae_forward.8} parent=0 // pred_check_branch
    %10 = sbr.rel (0) target = $region5
  $region4: #{vae_forward.8} parent=0 // pred_region
    _
  $region5: #{vae_forward.8} parent=0 // pred_fallthru
    _
  // Predicated region
  $region6: #{vae_forward.8} parent=0 // pred_check
    _
  $region7: #{vae_forward.8} parent=0 // pred_check_branch
    %12 = sbr.rel (0) target = $region9
  $region8: #{vae_forward.8} parent=0 // pred_region
    _
  $region9: #{vae_forward.8} parent=0 // pred_fallthru
    _
  // Predicated region
  $region10: #{vae_forward.8} parent=0 // pred_check
    _
  $region11: #{vae_forward.8} parent=0 // pred_check_branch
    %14 = sbr.rel (0) target = $region13
  $region12: #{vae_forward.8} parent=0 // pred_region
    _
  $region13: #{vae_forward.8} parent=0 // pred_fallthru
    _
  // Predicated region
  $region14: #{vae_forward.8} parent=0 // pred_check
    _
  $region15: #{vae_forward.8} parent=0 // pred_check_branch
    %16 = sbr.rel (0) target = $region17
  $region16: #{vae_forward.8} parent=0 // pred_region
    _
  $region17: #{vae_forward.8} parent=0 // pred_fallthru
    _
  %v17 = vld [vmem:[%s0] sm:$0xff]
  %v18 = vld [vmem:[%s0 + $0x8] sm:$0xff]
  %v19 = vld [vmem:[%s0 + $0x10] sm:$0xff]
  %v20 = vld [vmem:[%s0 + $0x18] sm:$0xff]
  %v21 = vld [vmem:[%s0 + $0x20] sm:$0xff]
  %v22 = vld [vmem:[%s0 + $0x28] sm:$0xff]
  %v23 = vld [vmem:[%s0 + $0x30] sm:$0xff]
  %v24 = vld [vmem:[%s0 + $0x38] sm:$0xff]
  %v25 = vld [vmem:[%s0 + $0x40] sm:$0xff]
  %v26 = vld [vmem:[%s0 + $0x48] sm:$0xff]
  %v27 = vld [vmem:[%s0 + $0x50] sm:$0xff]
  %v28 = vld [vmem:[%s0 + $0x58] sm:$0xff]
  %v29 = vld [vmem:[%s0 + $0x60] sm:$0xff]
  %v30 = vld [vmem:[%s0 + $0x68] sm:$0xff]
  %v31 = vld [vmem:[%s0 + $0x70] sm:$0xff]
  %v32 = vld [vmem:[%s0 + $0x78] sm:$0xff]
  %v33 = vld [vmem:[%s0 + $0x80] sm:$0xff]
  %v34 = vld [vmem:[%s0 + $0x88] sm:$0xff]
  %v35 = vld [vmem:[%s0 + $0x90] sm:$0xff]
  %v36 = vld [vmem:[%s0 + $0x98] sm:$0xff]
  %v37 = vld [vmem:[%s1] sm:$0xff]
  %v38 = vld [vmem:[%s1 + $0x8] sm:$0xff]
  %v39 = vld [vmem:[%s1 + $0x10] sm:$0xff]
  %v40 = vld [vmem:[%s1 + $0x18] sm:$0xff]
  %v41 = vld [vmem:[%s1 + $0x20] sm:$0xff]
  %v42 = vld [vmem:[%s1 + $0x28] sm:$0xff]
  %v43 = vld [vmem:[%s1 + $0x30] sm:$0xff]
  %v44 = vld [vmem:[%s1 + $0x38] sm:$0xff]
  %v45 = vld [vmem:[%s1 + $0x40] sm:$0xff]
  %v46 = vld [vmem:[%s1 + $0x48] sm:$0xff]
  %v47 = vld [vmem:[%s1 + $0x50] sm:$0xff]
  %v48 = vld [vmem:[%s1 + $0x58] sm:$0xff]
  %v49 = vld [vmem:[%s1 + $0x60] sm:$0xff]
  %v50 = vld [vmem:[%s1 + $0x68] sm:$0xff]
  %v51 = vld [vmem:[%s1 + $0x70] sm:$0xff]
  %v52 = vld [vmem:[%s1 + $0x78] sm:$0xff]
  %v53 = vld [vmem:[%s1 + $0x80] sm:$0xff]
  %v54 = vld [vmem:[%s1 + $0x88] sm:$0xff]
  %v55 = vld [vmem:[%s1 + $0x90] sm:$0xff]
  %v56 = vld [vmem:[%s1 + $0x98] sm:$0xff]
  %v57 = vld [vmem:[%s1 + $0xa0] sm:$0xff]
  %v58 = vld [vmem:[%s1 + $0xa8] sm:$0xff]
  %v59 = vld [vmem:[%s1 + $0xb0] sm:$0xff]
  %v60 = vld [vmem:[%s1 + $0xb8] sm:$0xff]
  %v61 = vld [vmem:[%s1 + $0xc0] sm:$0xff]
  %v62 = vld [vmem:[%s1 + $0xc8] sm:$0xff]
  %v63 = vld [vmem:[%s1 + $0xd0] sm:$0xff]
  %v64 = vld [vmem:[%s1 + $0xd8] sm:$0xff]
  %v65 = vld [vmem:[%s1 + $0xe0] sm:$0xff]
  %v66 = vld [vmem:[%s1 + $0xe8] sm:$0xff]
  %v67 = vld [vmem:[%s1 + $0xf0] sm:$0xff]
  %v68 = vld [vmem:[%s1 + $0xf8] sm:$0xff]
  %v69 = vld [vmem:[%s1 + $0x100] sm:$0xff]
  %v70 = vld [vmem:[%s1 + $0x108] sm:$0xff]
  %v71 = vld [vmem:[%s1 + $0x110] sm:$0xff]
  %v72 = vld [vmem:[%s1 + $0x118] sm:$0xff]
  %v73 = vld [vmem:[%s1 + $0x120] sm:$0xff]
  %v74 = vld [vmem:[%s1 + $0x128] sm:$0xff]
  %v75 = vld [vmem:[%s1 + $0x130] sm:$0xff]
  %v76 = vld [vmem:[%s1 + $0x138] sm:$0xff]
  %v77 = vld [vmem:[%s1 + $0x140] sm:$0xff]
  %v78 = vld [vmem:[%s1 + $0x148] sm:$0xff]
  %v79 = vld [vmem:[%s1 + $0x150] sm:$0xff]
  %v80 = vld [vmem:[%s1 + $0x158] sm:$0xff]
  %v81 = vld [vmem:[%s1 + $0x160] sm:$0xff]
  %v82 = vld [vmem:[%s1 + $0x168] sm:$0xff]
  %v83 = vld [vmem:[%s1 + $0x170] sm:$0xff]
  %v84 = vld [vmem:[%s1 + $0x178] sm:$0xff]
  %v85 = vld [vmem:[%s1 + $0x180] sm:$0xff]
  %v86 = vld [vmem:[%s1 + $0x188] sm:$0xff]
  %v87 = vld [vmem:[%s1 + $0x190] sm:$0xff]
  %v88 = vld [vmem:[%s1 + $0x198] sm:$0xff]
  %v89 = vld [vmem:[%s1 + $0x1a0] sm:$0xff]
  %v90 = vld [vmem:[%s1 + $0x1a8] sm:$0xff]
  %v91 = vld [vmem:[%s1 + $0x1b0] sm:$0xff]
  %v92 = vld [vmem:[%s1 + $0x1b8] sm:$0xff]
  %v93 = vld [vmem:[%s1 + $0x1c0] sm:$0xff]
  %v94 = vld [vmem:[%s1 + $0x1c8] sm:$0xff]
  %v95 = vld [vmem:[%s1 + $0x1d0] sm:$0xff]
  %v96 = vld [vmem:[%s1 + $0x1d8] sm:$0xff]
  %v97 = vld [vmem:[%s1 + $0x1e0] sm:$0xff]
  %v98 = vld [vmem:[%s1 + $0x1e8] sm:$0xff]
  %v99 = vld [vmem:[%s1 + $0x1f0] sm:$0xff]
  %v100 = vld [vmem:[%s1 + $0x1f8] sm:$0xff]
  %v101 = vld [vmem:[%s1 + $0x200] sm:$0xff]
  %v102 = vld [vmem:[%s1 + $0x208] sm:$0xff]
  %v103 = vld [vmem:[%s1 + $0x210] sm:$0xff]
  %v104 = vld [vmem:[%s1 + $0x218] sm:$0xff]
  %v105 = vld [vmem:[%s1 + $0x220] sm:$0xff]
  %v106 = vld [vmem:[%s1 + $0x228] sm:$0xff]
  %v107 = vld [vmem:[%s1 + $0x230] sm:$0xff]
  %v108 = vld [vmem:[%s1 + $0x238] sm:$0xff]
  %vm109 = vcmask 523264
  %v111 = vsel %vm109, %v21, 0
  %v114 = vsel %vm109, %v26, 0
  %v117 = vsel %vm109, %v31, 0
  %v120 = vsel %vm109, %v36, 0
  %122 = vmatprep.subr.mxu0 0.0
  %123 = vmatpush1.msra.mxu0 %v52
  %124 = vmatprep.subr.mxu0 0.0
  %125 = vmatpush1.msra.mxu0 %v51
  %126 = vmatprep.subr.mxu0 0.0
  %127 = vmatpush1.msra.mxu0 %v50
  %128 = vmatprep.subr.mxu0 0.0
  %129 = vmatpush1.msra.mxu0 %v49
  %130 = vmatprep.subr.mxu0 0.0
  %131 = vmatpush1.msra.mxu0 %v48
  %132 = vmatprep.subr.mxu0 0.0
  %133 = vmatpush1.msra.mxu0 %v47
  %134 = vmatprep.subr.mxu0 0.0
  %135 = vmatpush1.msra.mxu0 %v46
  %136 = vmatprep.subr.mxu0 0.0
  %137 = vmatpush1.msra.mxu0 %v45
  %138 = vmatprep.subr.mxu0 0.0
  %139 = vmatpush1.msra.mxu0 %v44
  %140 = vmatprep.subr.mxu0 0.0
  %141 = vmatpush1.msra.mxu0 %v43
  %142 = vmatprep.subr.mxu0 0.0
  %143 = vmatpush1.msra.mxu0 %v42
  %144 = vmatprep.subr.mxu0 0.0
  %145 = vmatpush1.msra.mxu0 %v41
  %146 = vmatprep.subr.mxu0 0.0
  %147 = vmatpush1.msra.mxu0 %v40
  %148 = vmatprep.subr.mxu0 0.0
  %149 = vmatpush1.msra.mxu0 %v39
  %150 = vmatprep.subr.mxu0 0.0
  %151 = vmatpush1.msra.mxu0 %v38
  %152 = vmatprep.subr.mxu0 0.0
  %153 = vmatpush1.msra.mxu0 %v37
  %154 = vmatprep.subr.mxu0 0.0
  %155 = vmatpush2.msra.mxu0 %v68
  %156 = vmatprep.subr.mxu0 0.0
  %157 = vmatpush2.msra.mxu0 %v67
  %158 = vmatprep.subr.mxu0 0.0
  %159 = vmatpush2.msra.mxu0 %v66
  %160 = vmatprep.subr.mxu0 0.0
  %161 = vmatpush2.msra.mxu0 %v65
  %162 = vmatprep.subr.mxu0 0.0
  %163 = vmatpush2.msra.mxu0 %v64
  %164 = vmatprep.subr.mxu0 0.0
  %165 = vmatpush2.msra.mxu0 %v63
  %166 = vmatprep.subr.mxu0 0.0
  %167 = vmatpush2.msra.mxu0 %v62
  %168 = vmatprep.subr.mxu0 0.0
  %169 = vmatpush2.msra.mxu0 %v61
  %170 = vmatprep.subr.mxu0 0.0
  %171 = vmatpush2.msra.mxu0 %v60
  %172 = vmatprep.subr.mxu0 0.0
  %173 = vmatpush2.msra.mxu0 %v59
  %174 = vmatprep.subr.mxu0 0.0
  %175 = vmatpush2.msra.mxu0 %v58
  %176 = vmatprep.subr.mxu0 0.0
  %177 = vmatpush2.msra.mxu0 %v57
  %178 = vmatprep.subr.mxu0 0.0
  %179 = vmatpush2.msra.mxu0 %v56
  %180 = vmatprep.subr.mxu0 0.0
  %181 = vmatpush2.msra.mxu0 %v55
  %182 = vmatprep.subr.mxu0 0.0
  %183 = vmatpush2.msra.mxu0 %v54
  %184 = vmatprep.subr.mxu0 0.0
  %185 = vmatpush2.msra.mxu0 %v53
  %186 = vmatprep.mubr.f32.mxu0 %v18
  %187 = vmatmul.mubr.f32.gmra.mxu0 %v17
  %v188 = vpop.f32.mrf.mxu0
  %v189 = vadd.f32 0.0, %v188
  %v190 = vpop.f32.mrf.mxu0
  %191 = vmatprep.mubr.f32.mxu0 %v23
  %192 = vmatmul.mubr.f32.gmra.mxu0 %v22
  %v193 = vpop.f32.mrf.mxu0
  %v194 = vadd.f32 0.0, %v193
  %v195 = vpop.f32.mrf.mxu0
  %196 = vmatprep.mubr.f32.mxu0 %v28
  %197 = vmatmul.mubr.f32.gmra.mxu0 %v27
  %v198 = vpop.f32.mrf.mxu0
  %v199 = vadd.f32 0.0, %v198
  %v200 = vpop.f32.mrf.mxu0
  %201 = vmatprep.mubr.f32.mxu0 %v33
  %202 = vmatmul.mubr.f32.gmra.mxu0 %v32
  %v203 = vpop.f32.mrf.mxu0
  %v204 = vadd.f32 0.0, %v203
  %v205 = vpop.f32.mrf.mxu0
  %206 = vdwg.mxu0
  %207 = vmatprep.subr.mxu0 0.0
  %208 = vmatpush1.msra.mxu0 %v84
  %209 = vmatprep.subr.mxu0 0.0
  %210 = vmatpush1.msra.mxu0 %v83
  %211 = vmatprep.subr.mxu0 0.0
  %212 = vmatpush1.msra.mxu0 %v82
  %213 = vmatprep.subr.mxu0 0.0
  %214 = vmatpush1.msra.mxu0 %v81
  %215 = vmatprep.subr.mxu0 0.0
  %216 = vmatpush1.msra.mxu0 %v80
  %217 = vmatprep.subr.mxu0 0.0
  %218 = vmatpush1.msra.mxu0 %v79
  %219 = vmatprep.subr.mxu0 0.0
  %220 = vmatpush1.msra.mxu0 %v78
  %221 = vmatprep.subr.mxu0 0.0
  %222 = vmatpush1.msra.mxu0 %v77
  %223 = vmatprep.subr.mxu0 0.0
  %224 = vmatpush1.msra.mxu0 %v76
  %225 = vmatprep.subr.mxu0 0.0
  %226 = vmatpush1.msra.mxu0 %v75
  %227 = vmatprep.subr.mxu0 0.0
  %228 = vmatpush1.msra.mxu0 %v74
  %229 = vmatprep.subr.mxu0 0.0
  %230 = vmatpush1.msra.mxu0 %v73
  %231 = vmatprep.subr.mxu0 0.0
  %232 = vmatpush1.msra.mxu0 %v72
  %233 = vmatprep.subr.mxu0 0.0
  %234 = vmatpush1.msra.mxu0 %v71
  %235 = vmatprep.subr.mxu0 0.0
  %236 = vmatpush1.msra.mxu0 %v70
  %237 = vmatprep.subr.mxu0 0.0
  %238 = vmatpush1.msra.mxu0 %v69
  %239 = vmatprep.subr.mxu0 0.0
  %240 = vmatpush2.msra.mxu0 %v100
  %241 = vmatprep.subr.mxu0 0.0
  %242 = vmatpush2.msra.mxu0 %v99
  %243 = vmatprep.subr.mxu0 0.0
  %244 = vmatpush2.msra.mxu0 %v98
  %245 = vmatprep.subr.mxu0 0.0
  %246 = vmatpush2.msra.mxu0 %v97
  %247 = vmatprep.subr.mxu0 0.0
  %248 = vmatpush2.msra.mxu0 %v96
  %249 = vmatprep.subr.mxu0 0.0
  %250 = vmatpush2.msra.mxu0 %v95
  %251 = vmatprep.subr.mxu0 0.0
  %252 = vmatpush2.msra.mxu0 %v94
  %253 = vmatprep.subr.mxu0 0.0
  %254 = vmatpush2.msra.mxu0 %v93
  %255 = vmatprep.subr.mxu0 0.0
  %256 = vmatpush2.msra.mxu0 %v92
  %257 = vmatprep.subr.mxu0 0.0
  %258 = vmatpush2.msra.mxu0 %v91
  %259 = vmatprep.subr.mxu0 0.0
  %260 = vmatpush2.msra.mxu0 %v90
  %261 = vmatprep.subr.mxu0 0.0
  %262 = vmatpush2.msra.mxu0 %v89
  %263 = vmatprep.subr.mxu0 0.0
  %264 = vmatpush2.msra.mxu0 %v88
  %265 = vmatprep.subr.mxu0 0.0
  %266 = vmatpush2.msra.mxu0 %v87
  %267 = vmatprep.subr.mxu0 0.0
  %268 = vmatpush2.msra.mxu0 %v86
  %269 = vmatprep.subr.mxu0 0.0
  %270 = vmatpush2.msra.mxu0 %v85
  %271 = vmatprep.mubr.f32.mxu0 %v20
  %272 = vmatmul.mubr.f32.gmra.mxu0 %v19
  %v273 = vpop.f32.mrf.mxu0
  %v274 = vadd.f32 %v189, %v273
  %v275 = vpop.f32.mrf.mxu0
  %276 = vmatprep.mubr.f32.mxu0 %v25
  %277 = vmatmul.mubr.f32.gmra.mxu0 %v24
  %v278 = vpop.f32.mrf.mxu0
  %v279 = vadd.f32 %v194, %v278
  %v280 = vpop.f32.mrf.mxu0
  %281 = vmatprep.mubr.f32.mxu0 %v30
  %282 = vmatmul.mubr.f32.gmra.mxu0 %v29
  %v283 = vpop.f32.mrf.mxu0
  %v284 = vadd.f32 %v199, %v283
  %v285 = vpop.f32.mrf.mxu0
  %286 = vmatprep.mubr.f32.mxu0 %v35
  %287 = vmatmul.mubr.f32.gmra.mxu0 %v34
  %v288 = vpop.f32.mrf.mxu0
  %v289 = vadd.f32 %v204, %v288
  %v290 = vpop.f32.mrf.mxu0
  %291 = vdwg.mxu0
  %292 = vmatprep.subr.mxu0 0.0
  %293 = vmatpush1.msra.mxu0 0.0
  %294 = vmatprep.subr.mxu0 0.0
  %295 = vmatpush1.msra.mxu0 0.0
  %296 = vmatprep.subr.mxu0 0.0
  %297 = vmatpush1.msra.mxu0 0.0
  %298 = vmatprep.subr.mxu0 0.0
  %299 = vmatpush1.msra.mxu0 0.0
  %300 = vmatprep.subr.mxu0 0.0
  %301 = vmatpush1.msra.mxu0 0.0
  %302 = vmatprep.subr.mxu0 0.0
  %303 = vmatpush1.msra.mxu0 0.0
  %304 = vmatprep.subr.mxu0 0.0
  %305 = vmatpush1.msra.mxu0 0.0
  %306 = vmatprep.subr.mxu0 0.0
  %307 = vmatpush1.msra.mxu0 0.0
  %308 = vmatprep.subr.mxu0 0.0
  %309 = vmatpush1.msra.mxu0 %v108
  %310 = vmatprep.subr.mxu0 0.0
  %311 = vmatpush1.msra.mxu0 %v107
  %312 = vmatprep.subr.mxu0 0.0
  %313 = vmatpush1.msra.mxu0 %v106
  %314 = vmatprep.subr.mxu0 0.0
  %315 = vmatpush1.msra.mxu0 %v105
  %316 = vmatprep.subr.mxu0 0.0
  %317 = vmatpush1.msra.mxu0 %v104
  %318 = vmatprep.subr.mxu0 0.0
  %319 = vmatpush1.msra.mxu0 %v103
  %320 = vmatprep.subr.mxu0 0.0
  %321 = vmatpush1.msra.mxu0 %v102
  %322 = vmatprep.subr.mxu0 0.0
  %323 = vmatpush1.msra.mxu0 %v101
  %324 = vmatprep.subr.mxu0 0.0
  %325 = vmatpush2.msra.mxu0 0.0
  %326 = vmatprep.subr.mxu0 0.0
  %327 = vmatpush2.msra.mxu0 0.0
  %328 = vmatprep.subr.mxu0 0.0
  %329 = vmatpush2.msra.mxu0 0.0
  %330 = vmatprep.subr.mxu0 0.0
  %331 = vmatpush2.msra.mxu0 0.0
  %332 = vmatprep.subr.mxu0 0.0
  %333 = vmatpush2.msra.mxu0 0.0
  %334 = vmatprep.subr.mxu0 0.0
  %335 = vmatpush2.msra.mxu0 0.0
  %336 = vmatprep.subr.mxu0 0.0
  %337 = vmatpush2.msra.mxu0 0.0
  %338 = vmatprep.subr.mxu0 0.0
  %339 = vmatpush2.msra.mxu0 0.0
  %340 = vmatprep.subr.mxu0 0.0
  %341 = vmatpush2.msra.mxu0 0.0
  %342 = vmatprep.subr.mxu0 0.0
  %343 = vmatpush2.msra.mxu0 0.0
  %344 = vmatprep.subr.mxu0 0.0
  %345 = vmatpush2.msra.mxu0 0.0
  %346 = vmatprep.subr.mxu0 0.0
  %347 = vmatpush2.msra.mxu0 0.0
  %348 = vmatprep.subr.mxu0 0.0
  %349 = vmatpush2.msra.mxu0 0.0
  %350 = vmatprep.subr.mxu0 0.0
  %351 = vmatpush2.msra.mxu0 0.0
  %352 = vmatprep.subr.mxu0 0.0
  %353 = vmatpush2.msra.mxu0 0.0
  %354 = vmatprep.subr.mxu0 0.0
  %355 = vmatpush2.msra.mxu0 0.0
  %356 = vmatprep.mubr.f32.mxu0 0.0
  %357 = vmatmul.mubr.f32.gmra.mxu0 %v111
  %v358 = vpop.f32.mrf.mxu0
  %v359 = vadd.f32 %v274, %v358
  %v360 = vpop.f32.mrf.mxu0
  %361 = vmatprep.mubr.f32.mxu0 0.0
  %362 = vmatmul.mubr.f32.gmra.mxu0 %v114
  %v363 = vpop.f32.mrf.mxu0
  %v364 = vadd.f32 %v279, %v363
  %v365 = vpop.f32.mrf.mxu0
  %366 = vmatprep.mubr.f32.mxu0 0.0
  %367 = vmatmul.mubr.f32.gmra.mxu0 %v117
  %v368 = vpop.f32.mrf.mxu0
  %v369 = vadd.f32 %v284, %v368
  %v370 = vpop.f32.mrf.mxu0
  %371 = vmatprep.mubr.f32.mxu0 0.0
  %372 = vmatmul.mubr.f32.gmra.mxu0 %v120
  %v373 = vpop.f32.mrf.mxu0
  %v374 = vadd.f32 %v289, %v373
  %v375 = vpop.f32.mrf.mxu0
  %376 = vdwg.mxu0
  %v377 = vadd.f32 %v359, %v364
  %v378 = vadd.f32 %v377, %v369
  %v379 = vadd.f32 %v378, %v374
  %v380 = vrot.slane %v379, 4
  %v381 = vadd.f32 %v379, %v380
  %v382 = vrot.slane %v381, 2
  %v383 = vadd.f32 %v381, %v382
  %v384 = vrot.slane %v383, 1
  %v385 = vadd.f32 %v383, %v384
  %v386 = vrcp.pop 32.0
  %v387 = vmul.f32 %v385, %v386
  %v388 = vsub.f32 %v359, %v387
  %v389 = vsub.f32 %v364, %v387
  %v390 = vsub.f32 %v369, %v387
  %v391 = vsub.f32 %v374, %v387
  %v392 = vmul.f32 %v388, %v388
  %v393 = vmul.f32 %v389, %v389
  %v394 = vmul.f32 %v390, %v390
  %v395 = vmul.f32 %v391, %v391
  %v396 = vadd.f32 %v392, %v393
  %v397 = vadd.f32 %v396, %v394
  %v398 = vadd.f32 %v397, %v395
  %v399 = vrot.slane %v398, 4
  %v400 = vadd.f32 %v398, %v399
  %v401 = vrot.slane %v400, 2
  %v402 = vadd.f32 %v400, %v401
  %v403 = vrot.slane %v402, 1
  %v404 = vadd.f32 %v402, %v403
  %v405 = vmul.f32 %v404, %v386
  %v406 = vld [vmem:[%s2] sm:$0x1]
  %v407 = vadd.f32 %v405, 1e-05
  %v408 = vrsqrt.pop %v407
  %v409 = vmul.f32 %v406, %v408
  %v410 = vld [vmem:[%s3] sm:$0x1]
  %v411 = vmul.f32 %v387, %v409
  %v412 = vsub.f32 %v410, %v411
  %v414 = vlaneseq
  %v415 = vshrl.u32 %v414, 7
  %v416 = vsub.s32 0, %v415
  %v417 = vrot.slane %v409, %v416
  %v419 = vmul.f32 %v359, %v417
  %v420 = vmul.f32 %v364, %v417
  %v421 = vmul.f32 %v369, %v417
  %v422 = vmul.f32 %v374, %v417
  %v424 = vlaneseq
  %v425 = vshrl.u32 %v424, 7
  %v426 = vsub.s32 0, %v425
  %v427 = vrot.slane %v412, %v426
  %v429 = vadd.f32 %v419, %v427
  %v430 = vadd.f32 %v420, %v427
  %v431 = vadd.f32 %v421, %v427
  %v432 = vadd.f32 %v422, %v427
  %vm433 = vcmp.ge.f32.partialorder %v429, 0.0
  %vm434 = vcmp.ge.f32.partialorder %v430, 0.0
  %vm435 = vcmp.ge.f32.partialorder %v431, 0.0
  %vm436 = vcmp.ge.f32.partialorder %v432, 0.0
  %v437 = vmul.f32 %v429, 0.2
  %v438 = vmul.f32 %v430, 0.2
  %v439 = vmul.f32 %v431, 0.2
  %v440 = vmul.f32 %v432, 0.2
  %v441 = vsel %vm433, %v429, %v437
  %v442 = vsel %vm434, %v430, %v438
  %v443 = vsel %vm435, %v431, %v439
  %v444 = vsel %vm436, %v432, %v440
  %445 = vst [vmem:[%s4] sm:$0xff] %v441
  %446 = vst [vmem:[%s4 + $0x8] sm:$0xff] %v442
  %447 = vst [vmem:[%s4 + $0x10] sm:$0xff] %v443
  %448 = vst [vmem:[%s4 + $0x18] sm:$0xff] %v444
  // Predicated region
  $region18: #{vae_forward.8} parent=0 // pred_check
    _
  $region19: #{vae_forward.8} parent=0 // pred_check_branch
    %450 = sbr.rel (0) target = $region21
  $region20: #{vae_forward.8} parent=0 // pred_region
    _
  $region21: #{vae_forward.8} parent=0 // pred_fallthru
    _
  // Predicated region
  $region22: #{vae_forward.8} parent=0 // pred_check
    _
  $region23: #{vae_forward.8} parent=0 // pred_check_branch
    %452 = sbr.rel (0) target = $region25
  $region24: #{vae_forward.8} parent=0 // pred_region
    _
  $region25: #{vae_forward.8} parent=0 // pred_fallthru
    _

// kernel: vae_forward.10
$region0: #{vae_forward.10}
  #allocation0 [shape = 'u32[]', space=smem, size = 0x4, offset = 0x4, fixed_abs, tag = 'smem constant byte address 0x4 - core index']
  #allocation1 [shape = 'u32[144,128]{1,0:T(1,128)}', space=vmem, size = 0x12000, scoped, tag = 'internal scratch']
  %s0 = inlined_call_operand.vmem [shape: f32[8,256], index: 0, kind: input, shape index: {}]
  %s1 = inlined_call_operand.vmem [shape: f32[256,4], index: 1, kind: input, shape index: {}]
  %s2 = inlined_call_operand.vmem [shape: f32[1,4], index: 2, kind: input, shape index: {}]
  %s3 = inlined_call_operand.vmem [shape: f32[256,4], index: 3, kind: input, shape index: {}]
  %s4 = inlined_call_operand.vmem [shape: f32[1,4], index: 4, kind: input, shape index: {}]
  %s5 = inlined_call_operand.vmem [shape: f32[8,4], index: 5, kind: input, shape index: {}]
  %s6 = inlined_call_operand.vmem [shape: f32[4,256], index: 6, kind: input, shape index: {}]
  %s7 = inlined_call_operand.vmem [shape: f32[1,256], index: 7, kind: input, shape index: {}]
  %s8 = inlined_call_operand.hbm [shape: f32[8,4], index: 8, kind: output, shape index: {0}]
  %s9 = inlined_call_operand.hbm [shape: f32[8,4], index: 9, kind: output, shape index: {1}]
  %s10 = inlined_call_operand.vmem [shape: f32[8,256], index: 10, kind: output, shape index: {2}]
  %11 = xla_tuple %s8, %s9, %s10
  %s12 = sld [smem:[#allocation0]]
  $region58: #{vae_forward.10} parent=0
    _
  %s14 = ssub.s32 1, %s12
  %s15 = scalar_select 0, %s14, %s12
  $region1: #{vae_forward.10} parent=0
    #allocation2 [shape = 'u8[4096]{0}', space=vmem, size = 0x1000, scoped, tag = 'output window, operand 0, single buffered']
    #allocation3 [shape = 's32[1]{0}', space=sflag, size = 0x4, scoped, tag = 'scoped memory for vae_forward.10']
    #allocation4 [shape = 'u8[4096]{0}', space=vmem, size = 0x1000, scoped, tag = 'output window, operand 1, single buffered']
    #allocation5 [shape = 's32[1]{0}', space=sflag, size = 0x4, scoped, tag = 'scoped memory for vae_forward.10']
    %16 = vsyncpa [#allocation3], 0
    %17 = vsyncpa [#allocation5], 0
    // Predicated region
    $region2: #{vae_forward.10} parent=1 // pred_check
      _
    $region3: #{vae_forward.10} parent=1 // pred_check_branch
      %19 = sbr.rel (0) target = $region5
    $region4: #{vae_forward.10} parent=1 // pred_region
      _
    $region5: #{vae_forward.10} parent=1 // pred_fallthru
      _
    // Predicated region
    $region6: #{vae_forward.10} parent=1 // pred_check
      _
    $region7: #{vae_forward.10} parent=1 // pred_check_branch
      %21 = sbr.rel (0) target = $region9
    $region8: #{vae_forward.10} parent=1 // pred_region
      _
    $region9: #{vae_forward.10} parent=1 // pred_fallthru
      _
    // Predicated region
    $region10: #{vae_forward.10} parent=1 // pred_check
      _
    $region11: #{vae_forward.10} parent=1 // pred_check_branch
      %23 = sbr.rel (0) target = $region13
    $region12: #{vae_forward.10} parent=1 // pred_region
      _
    $region13: #{vae_forward.10} parent=1 // pred_fallthru
      _
    // Predicated region
    $region14: #{vae_forward.10} parent=1 // pred_check
      _
    $region15: #{vae_forward.10} parent=1 // pred_check_branch
      %25 = sbr.rel (0) target = $region17
    $region16: #{vae_forward.10} parent=1 // pred_region
      _
    $region17: #{vae_forward.10} parent=1 // pred_fallthru
      _
    // Predicated region
    $region18: #{vae_forward.10} parent=1 // pred_check
      _
    $region19: #{vae_forward.10} parent=1 // pred_check_branch
      %27 = sbr.rel (0) target = $region21
    $region20: #{vae_forward.10} parent=1 // pred_region
      _
    $region21: #{vae_forward.10} parent=1 // pred_fallthru
      _
    // Predicated region
    $region22: #{vae_forward.10} parent=1 // pred_check
      _
    $region23: #{vae_forward.10} parent=1 // pred_check_branch
      %29 = sbr.rel (0) target = $region25
    $region24: #{vae_forward.10} parent=1 // pred_region
      _
    $region25: #{vae_forward.10} parent=1 // pred_fallthru
      _
    // Predicated region
    $region26: #{vae_forward.10} parent=1 // pred_check
      _
    $region27: #{vae_forward.10} parent=1 // pred_check_branch
      %31 = sbr.rel (0) target = $region29
    $region28: #{vae_forward.10} parent=1 // pred_region
      _
    $region29: #{vae_forward.10} parent=1 // pred_fallthru
      _
    // Predicated region
    $region30: #{vae_forward.10} parent=1 // pred_check
      _
    $region31: #{vae_forward.10} parent=1 // pred_check_branch
      %33 = sbr.rel (0) target = $region33
    $region32: #{vae_forward.10} parent=1 // pred_region
      _
    $region33: #{vae_forward.10} parent=1 // pred_fallthru
      _
    %v34 = vld [vmem:[%s0] sm:$0xff]
    %v35 = vld [vmem:[%s0 + $0x8] sm:$0xff]
    %v36 = vld [vmem:[%s1] sm:$0xff]
    %v37 = vld [vmem:[%s1 + $0x8] sm:$0xff]
    %v38 = vld [vmem:[%s1 + $0x10] sm:$0xff]
    %v39 = vld [vmem:[%s1 + $0x18] sm:$0xff]
    %v40 = vld [vmem:[%s1 + $0x20] sm:$0xff]
    %v41 = vld [vmem:[%s1 + $0x28] sm:$0xff]
    %v42 = vld [vmem:[%s1 + $0x30] sm:$0xff]
    %v43 = vld [vmem:[%s1 + $0x38] sm:$0xff]
    %v44 = vld [vmem:[%s1 + $0x40] sm:$0xff]
    %v45 = vld [vmem:[%s1 + $0x48] sm:$0xff]
    %v46 = vld [vmem:[%s1 + $0x50] sm:$0xff]
    %v47 = vld [vmem:[%s1 + $0x58] sm:$0xff]
    %v48 = vld [vmem:[%s1 + $0x60] sm:$0xff]
    %v49 = vld [vmem:[%s1 + $0x68] sm:$0xff]
    %v50 = vld [vmem:[%s1 + $0x70] sm:$0xff]
    %v51 = vld [vmem:[%s1 + $0x78] sm:$0xff]
    %v52 = vld [vmem:[%s1 + $0x80] sm:$0xff]
    %v53 = vld [vmem:[%s1 + $0x88] sm:$0xff]
    %v54 = vld [vmem:[%s1 + $0x90] sm:$0xff]
    %v55 = vld [vmem:[%s1 + $0x98] sm:$0xff]
    %v56 = vld [vmem:[%s1 + $0xa0] sm:$0xff]
    %v57 = vld [vmem:[%s1 + $0xa8] sm:$0xff]
    %v58 = vld [vmem:[%s1 + $0xb0] sm:$0xff]
    %v59 = vld [vmem:[%s1 + $0xb8] sm:$0xff]
    %v60 = vld [vmem:[%s1 + $0xc0] sm:$0xff]
    %v61 = vld [vmem:[%s1 + $0xc8] sm:$0xff]
    %v62 = vld [vmem:[%s1 + $0xd0] sm:$0xff]
    %v63 = vld [vmem:[%s1 + $0xd8] sm:$0xff]
    %v64 = vld [vmem:[%s1 + $0xe0] sm:$0xff]
    %v65 = vld [vmem:[%s1 + $0xe8] sm:$0xff]
    %v66 = vld [vmem:[%s1 + $0xf0] sm:$0xff]
    %v67 = vld [vmem:[%s1 + $0xf8] sm:$0xff]
    %v68 = vld [vmem:[%s2] sm:$0x1]
    %v70 = vlaneseq
    %v71 = vshrl.u32 %v70, 7
    %v72 = vsub.s32 0, %v71
    %v73 = vrot.slane %v68, %v72
    %75 = vmatprep.subr.mxu0 0.0
    %76 = vmatpush1.msra.mxu0 %v51
    %77 = vmatprep.subr.mxu0 0.0
    %78 = vmatpush1.msra.mxu0 %v50
    %79 = vmatprep.subr.mxu0 0.0
    %80 = vmatpush1.msra.mxu0 %v49
    %81 = vmatprep.subr.mxu0 0.0
    %82 = vmatpush1.msra.mxu0 %v48
    %83 = vmatprep.subr.mxu0 0.0
    %84 = vmatpush1.msra.mxu0 %v47
    %85 = vmatprep.subr.mxu0 0.0
    %86 = vmatpush1.msra.mxu0 %v46
    %87 = vmatprep.subr.mxu0 0.0
    %88 = vmatpush1.msra.mxu0 %v45
    %89 = vmatprep.subr.mxu0 0.0
    %90 = vmatpush1.msra.mxu0 %v44
    %91 = vmatprep.subr.mxu0 0.0
    %92 = vmatpush1.msra.mxu0 %v43
    %93 = vmatprep.subr.mxu0 0.0
    %94 = vmatpush1.msra.mxu0 %v42
    %95 = vmatprep.subr.mxu0 0.0
    %96 = vmatpush1.msra.mxu0 %v41
    %97 = vmatprep.subr.mxu0 0.0
    %98 = vmatpush1.msra.mxu0 %v40
    %99 = vmatprep.subr.mxu0 0.0
    %100 = vmatpush1.msra.mxu0 %v39
    %101 = vmatprep.subr.mxu0 0.0
    %102 = vmatpush1.msra.mxu0 %v38
    %103 = vmatprep.subr.mxu0 0.0
    %104 = vmatpush1.msra.mxu0 %v37
    %105 = vmatprep.subr.mxu0 0.0
    %106 = vmatpush1.msra.mxu0 %v36
    %107 = vmatprep.subr.mxu0 0.0
    %108 = vmatpush2.msra.mxu0 %v67
    %109 = vmatprep.subr.mxu0 0.0
    %110 = vmatpush2.msra.mxu0 %v66
    %111 = vmatprep.subr.mxu0 0.0
    %112 = vmatpush2.msra.mxu0 %v65
    %113 = vmatprep.subr.mxu0 0.0
    %114 = vmatpush2.msra.mxu0 %v64
    %115 = vmatprep.subr.mxu0 0.0
    %116 = vmatpush2.msra.mxu0 %v63
    %117 = vmatprep.subr.mxu0 0.0
    %118 = vmatpush2.msra.mxu0 %v62
    %119 = vmatprep.subr.mxu0 0.0
    %120 = vmatpush2.msra.mxu0 %v61
    %121 = vmatprep.subr.mxu0 0.0
    %122 = vmatpush2.msra.mxu0 %v60
    %123 = vmatprep.subr.mxu0 0.0
    %124 = vmatpush2.msra.mxu0 %v59
    %125 = vmatprep.subr.mxu0 0.0
    %126 = vmatpush2.msra.mxu0 %v58
    %127 = vmatprep.subr.mxu0 0.0
    %128 = vmatpush2.msra.mxu0 %v57
    %129 = vmatprep.subr.mxu0 0.0
    %130 = vmatpush2.msra.mxu0 %v56
    %131 = vmatprep.subr.mxu0 0.0
    %132 = vmatpush2.msra.mxu0 %v55
    %133 = vmatprep.subr.mxu0 0.0
    %134 = vmatpush2.msra.mxu0 %v54
    %135 = vmatprep.subr.mxu0 0.0
    %136 = vmatpush2.msra.mxu0 %v53
    %137 = vmatprep.subr.mxu0 0.0
    %138 = vmatpush2.msra.mxu0 %v52
    %139 = vmatprep.mubr.f32.mxu0 %v35
    %140 = vmatmul.mubr.f32.gmra.mxu0 %v34
    %v141 = vpop.f32.mrf.mxu0
    %v142 = vadd.f32 %v73, %v141
    %v143 = vpop.f32.mrf.mxu0
    %144 = vdwg.mxu0
    %v145 = vld [vmem:[%s3] sm:$0xff]
    %v146 = vld [vmem:[%s3 + $0x8] sm:$0xff]
    %v147 = vld [vmem:[%s3 + $0x10] sm:$0xff]
    %v148 = vld [vmem:[%s3 + $0x18] sm:$0xff]
    %v149 = vld [vmem:[%s3 + $0x20] sm:$0xff]
    %v150 = vld [vmem:[%s3 + $0x28] sm:$0xff]
    %v151 = vld [vmem:[%s3 + $0x30] sm:$0xff]
    %v152 = vld [vmem:[%s3 + $0x38] sm:$0xff]
    %v153 = vld [vmem:[%s3 + $0x40] sm:$0xff]
    %v154 = vld [vmem:[%s3 + $0x48] sm:$0xff]
    %v155 = vld [vmem:[%s3 + $0x50] sm:$0xff]
    %v156 = vld [vmem:[%s3 + $0x58] sm:$0xff]
    %v157 = vld [vmem:[%s3 + $0x60] sm:$0xff]
    %v158 = vld [vmem:[%s3 + $0x68] sm:$0xff]
    %v159 = vld [vmem:[%s3 + $0x70] sm:$0xff]
    %v160 = vld [vmem:[%s3 + $0x78] sm:$0xff]
    %v161 = vld [vmem:[%s3 + $0x80] sm:$0xff]
    %v162 = vld [vmem:[%s3 + $0x88] sm:$0xff]
    %v163 = vld [vmem:[%s3 + $0x90] sm:$0xff]
    %v164 = vld [vmem:[%s3 + $0x98] sm:$0xff]
    %v165 = vld [vmem:[%s3 + $0xa0] sm:$0xff]
    %v166 = vld [vmem:[%s3 + $0xa8] sm:$0xff]
    %v167 = vld [vmem:[%s3 + $0xb0] sm:$0xff]
    %v168 = vld [vmem:[%s3 + $0xb8] sm:$0xff]
    %v169 = vld [vmem:[%s3 + $0xc0] sm:$0xff]
    %v170 = vld [vmem:[%s3 + $0xc8] sm:$0xff]
    %v171 = vld [vmem:[%s3 + $0xd0] sm:$0xff]
    %v172 = vld [vmem:[%s3 + $0xd8] sm:$0xff]
    %v173 = vld [vmem:[%s3 + $0xe0] sm:$0xff]
    %v174 = vld [vmem:[%s3 + $0xe8] sm:$0xff]
    %v175 = vld [vmem:[%s3 + $0xf0] sm:$0xff]
    %v176 = vld [vmem:[%s3 + $0xf8] sm:$0xff]
    %v177 = vld [vmem:[%s4] sm:$0x1]
    %v179 = vlaneseq
    %v180 = vshrl.u32 %v179, 7
    %v181 = vsub.s32 0, %v180
    %v182 = vrot.slane %v177, %v181
    %184 = vmatprep.subr.mxu0 0.0
    %185 = vmatpush1.msra.mxu0 %v160
    %186 = vmatprep.subr.mxu0 0.0
    %187 = vmatpush1.msra.mxu0 %v159
    %188 = vmatprep.subr.mxu0 0.0
    %189 = vmatpush1.msra.mxu0 %v158
    %190 = vmatprep.subr.mxu0 0.0
    %191 = vmatpush1.msra.mxu0 %v157
    %192 = vmatprep.subr.mxu0 0.0
    %193 = vmatpush1.msra.mxu0 %v156
    %194 = vmatprep.subr.mxu0 0.0
    %195 = vmatpush1.msra.mxu0 %v155
    %196 = vmatprep.subr.mxu0 0.0
    %197 = vmatpush1.msra.mxu0 %v154
    %198 = vmatprep.subr.mxu0 0.0
    %199 = vmatpush1.msra.mxu0 %v153
    %200 = vmatprep.subr.mxu0 0.0
    %201 = vmatpush1.msra.mxu0 %v152
    %202 = vmatprep.subr.mxu0 0.0
    %203 = vmatpush1.msra.mxu0 %v151
    %204 = vmatprep.subr.mxu0 0.0
    %205 = vmatpush1.msra.mxu0 %v150
    %206 = vmatprep.subr.mxu0 0.0
    %207 = vmatpush1.msra.mxu0 %v149
    %208 = vmatprep.subr.mxu0 0.0
    %209 = vmatpush1.msra.mxu0 %v148
    %210 = vmatprep.subr.mxu0 0.0
    %211 = vmatpush1.msra.mxu0 %v147
    %212 = vmatprep.subr.mxu0 0.0
    %213 = vmatpush1.msra.mxu0 %v146
    %214 = vmatprep.subr.mxu0 0.0
    %215 = vmatpush1.msra.mxu0 %v145
    %216 = vmatprep.subr.mxu0 0.0
    %217 = vmatpush2.msra.mxu0 %v176
    %218 = vmatprep.subr.mxu0 0.0
    %219 = vmatpush2.msra.mxu0 %v175
    %220 = vmatprep.subr.mxu0 0.0
    %221 = vmatpush2.msra.mxu0 %v174
    %222 = vmatprep.subr.mxu0 0.0
    %223 = vmatpush2.msra.mxu0 %v173
    %224 = vmatprep.subr.mxu0 0.0
    %225 = vmatpush2.msra.mxu0 %v172
    %226 = vmatprep.subr.mxu0 0.0
    %227 = vmatpush2.msra.mxu0 %v171
    %228 = vmatprep.subr.mxu0 0.0
    %229 = vmatpush2.msra.mxu0 %v170
    %230 = vmatprep.subr.mxu0 0.0
    %231 = vmatpush2.msra.mxu0 %v169
    %232 = vmatprep.subr.mxu0 0.0
    %233 = vmatpush2.msra.mxu0 %v168
    %234 = vmatprep.subr.mxu0 0.0
    %235 = vmatpush2.msra.mxu0 %v167
    %236 = vmatprep.subr.mxu0 0.0
    %237 = vmatpush2.msra.mxu0 %v166
    %238 = vmatprep.subr.mxu0 0.0
    %239 = vmatpush2.msra.mxu0 %v165
    %240 = vmatprep.subr.mxu0 0.0
    %241 = vmatpush2.msra.mxu0 %v164
    %242 = vmatprep.subr.mxu0 0.0
    %243 = vmatpush2.msra.mxu0 %v163
    %244 = vmatprep.subr.mxu0 0.0
    %245 = vmatpush2.msra.mxu0 %v162
    %246 = vmatprep.subr.mxu0 0.0
    %247 = vmatpush2.msra.mxu0 %v161
    %248 = vmatprep.mubr.f32.mxu0 %v35
    %249 = vmatmul.mubr.f32.gmra.mxu0 %v34
    %v250 = vpop.f32.mrf.mxu0
    %v251 = vadd.f32 %v182, %v250
    %v252 = vpop.f32.mrf.mxu0
    %253 = vdwg.mxu0
    %v254 = vld [vmem:[%s5] sm:$0xff]
    %v255 = vmul.f32 %v251, 0.5
    %v256 = vmul.f32 %v255, 1.442695
    %v257 = vpow.pop %v256
    %v258 = vmul.f32 %v254, %v257
    %v259 = vadd.f32 %v258, %v142
    %v260 = vld [vmem:[%s6] sm:$0xff]
    %v261 = vld [vmem:[%s7] sm:$0x3]
    %v263 = vlaneseq
    %v264 = vshrl.u32 %v263, 7
    %v265 = vsub.s32 0, %v264
    %v266 = vrot.slane %v261, %v265
    %v267 = vlaneseq
    %v268 = vshrl.u32 %v267, 7
    %v269 = vsub.s32 1, %v268
    %v270 = vrot.slane %v261, %v269
    %v274 = vcombine.high %v260, %v260
    %vm275 = vcmask 31744
    %v277 = vsel %vm275, %v259, 0
    %vm279 = vcmask 1043456
    %v280 = vsel %vm279, %v260, 0
    %v282 = vsel %vm279, %v274, 0
    %284 = vmatprep.subr.mxu0 0.0
    %285 = vmatpush1.msra.mxu0 0.0
    %286 = vmatprep.subr.mxu0 0.0
    %287 = vmatpush1.msra.mxu0 0.0
    %288 = vmatprep.subr.mxu0 0.0
    %289 = vmatpush1.msra.mxu0 0.0
    %290 = vmatprep.subr.mxu0 0.0
    %291 = vmatpush1.msra.mxu0 0.0
    %292 = vmatprep.subr.mxu0 0.0
    %293 = vmatpush1.msra.mxu0 0.0
    %294 = vmatprep.subr.mxu0 0.0
    %295 = vmatpush1.msra.mxu0 0.0
    %296 = vmatprep.subr.mxu0 0.0
    %297 = vmatpush1.msra.mxu0 0.0
    %298 = vmatprep.subr.mxu0 0.0
    %299 = vmatpush1.msra.mxu0 0.0
    %300 = vmatprep.subr.mxu0 0.0
    %301 = vmatpush1.msra.mxu0 0.0
    %302 = vmatprep.subr.mxu0 0.0
    %303 = vmatpush1.msra.mxu0 0.0
    %304 = vmatprep.subr.mxu0 0.0
    %305 = vmatpush1.msra.mxu0 0.0
    %306 = vmatprep.subr.mxu0 0.0
    %307 = vmatpush1.msra.mxu0 0.0
    %308 = vmatprep.subr.mxu0 0.0
    %309 = vmatpush1.msra.mxu0 0.0
    %310 = vmatprep.subr.mxu0 0.0
    %311 = vmatpush1.msra.mxu0 0.0
    %312 = vmatprep.subr.mxu0 0.0
    %313 = vmatpush1.msra.mxu0 0.0
    %314 = vmatprep.subr.mxu0 %v282
    %315 = vmatpush1.msra.mxu0 %v280
    %316 = vmatprep.subr.mxu0 0.0
    %317 = vmatpush2.msra.mxu0 0.0
    %318 = vmatprep.subr.mxu0 0.0
    %319 = vmatpush2.msra.mxu0 0.0
    %320 = vmatprep.subr.mxu0 0.0
    %321 = vmatpush2.msra.mxu0 0.0
    %322 = vmatprep.subr.mxu0 0.0
    %323 = vmatpush2.msra.mxu0 0.0
    %324 = vmatprep.subr.mxu0 0.0
    %325 = vmatpush2.msra.mxu0 0.0
    %326 = vmatprep.subr.mxu0 0.0
    %327 = vmatpush2.msra.mxu0 0.0
    %328 = vmatprep.subr.mxu0 0.0
    %329 = vmatpush2.msra.mxu0 0.0
    %330 = vmatprep.subr.mxu0 0.0
    %331 = vmatpush2.msra.mxu0 0.0
    %332 = vmatprep.subr.mxu0 0.0
    %333 = vmatpush2.msra.mxu0 0.0
    %334 = vmatprep.subr.mxu0 0.0
    %335 = vmatpush2.msra.mxu0 0.0
    %336 = vmatprep.subr.mxu0 0.0
    %337 = vmatpush2.msra.mxu0 0.0
    %338 = vmatprep.subr.mxu0 0.0
    %339 = vmatpush2.msra.mxu0 0.0
    %340 = vmatprep.subr.mxu0 0.0
    %341 = vmatpush2.msra.mxu0 0.0
    %342 = vmatprep.subr.mxu0 0.0
    %343 = vmatpush2.msra.mxu0 0.0
    %344 = vmatprep.subr.mxu0 0.0
    %345 = vmatpush2.msra.mxu0 0.0
    %346 = vmatprep.subr.mxu0 0.0
    %347 = vmatpush2.msra.mxu0 0.0
    %348 = vmatprep.mubr.f32.mxu0 0.0
    %349 = vmatmul.mubr.f32.gmra.mxu0 %v277
    %v350 = vpop.f32.mrf.mxu0
    %v351 = vadd.f32 %v266, %v350
    %v352 = vpop.f32.mrf.mxu0
    %v353 = vadd.f32 %v270, %v352
    %354 = vdwg.mxu0
    %355 = vst.msk [vmem:[#allocation2] sm:$0xff] %vm275, %v142
    %356 = vst.msk [vmem:[#allocation4] sm:$0xff] %vm275, %v251
    %357 = vst [vmem:[%s10] sm:$0xff] %v351
    %358 = vst [vmem:[%s10 + $0x8] sm:$0xff] %v353
    // Predicated region
    $region34: #{vae_forward.10} parent=1 // pred_check
      _
    $region35: #{vae_forward.10} parent=1 // pred_check_branch
      %360 = sbr.rel (0) target = $region37
    $region36: #{vae_forward.10} parent=1 // pred_region
      %s362 = ssub.s32 128, 128
      %363 = vsyncadd [#allocation3], %s362
      %s365 = sshll.u32 [#allocation2], 4
      %s366 = int_to_ptr.vmem [resolvable:$true] %s365
      %368 = dma.vmem_to_hbm [thread:$0]  %s366, 128, %s8, [#allocation3]
    $region37: #{vae_forward.10} parent=1 // pred_fallthru
      _
    // Predicated region
    $region38: #{vae_forward.10} parent=1 // pred_check
      _
    $region39: #{vae_forward.10} parent=1 // pred_check_branch
      %370 = sbr.rel (0) target = $region41
    $region40: #{vae_forward.10} parent=1 // pred_region
      %s372 = ssub.s32 128, 128
      %373 = vsyncadd [#allocation5], %s372
      %s375 = sshll.u32 [#allocation4], 4
      %s376 = int_to_ptr.vmem [resolvable:$true] %s375
      %378 = dma.vmem_to_hbm [thread:$0]  %s376, 128, %s9, [#allocation5]
    $region41: #{vae_forward.10} parent=1 // pred_fallthru
      _
    // Predicated region
    $region42: #{vae_forward.10} parent=1 // pred_check
      _
    $region43: #{vae_forward.10} parent=1 // pred_check_branch
      %380 = sbr.rel (0) target = $region45
    $region44: #{vae_forward.10} parent=1 // pred_region
      _
    $region45: #{vae_forward.10} parent=1 // pred_fallthru
      _
    // Predicated region
    $region46: #{vae_forward.10} parent=1 // pred_check
      _
    $region47: #{vae_forward.10} parent=1 // pred_check_branch
      %382 = sbr.rel (0) target = $region49
    $region48: #{vae_forward.10} parent=1 // pred_region
      %383 = dma.done [#allocation3], 128
    $region49: #{vae_forward.10} parent=1 // pred_fallthru
      _
    // Predicated region
    $region50: #{vae_forward.10} parent=1 // pred_check
      _
    $region51: #{vae_forward.10} parent=1 // pred_check_branch
      %385 = sbr.rel (0) target = $region53
    $region52: #{vae_forward.10} parent=1 // pred_region
      %386 = dma.done [#allocation5], 128
    $region53: #{vae_forward.10} parent=1 // pred_fallthru
      _
    // Predicated region
    $region54: #{vae_forward.10} parent=1 // pred_check
      _
    $region55: #{vae_forward.10} parent=1 // pred_check_branch
      %388 = sbr.rel (0) target = $region57
    $region56: #{vae_forward.10} parent=1 // pred_region
      _
    $region57: #{vae_forward.10} parent=1 // pred_fallthru
      _
    %389 = vsyncpa [#allocation3], 1
    %390 = vsyncpa [#allocation5], 1

// kernel: vae_forward.9
$region0: #{vae_forward.9}
  #allocation0 [shape = 'u32[]', space=smem, size = 0x4, offset = 0x4, fixed_abs, tag = 'smem constant byte address 0x4 - core index']
  #allocation1 [shape = 'u32[144,128]{1,0:T(1,128)}', space=vmem, size = 0x12000, scoped, tag = 'internal scratch']
  %s0 = inlined_call_operand.vmem [shape: f32[8,1152], index: 0, kind: input, shape index: {}]
  %s1 = inlined_call_operand.vmem [shape: f32[1152,256], index: 1, kind: input, shape index: {}]
  %s2 = inlined_call_operand.vmem [shape: f32[1,256], index: 2, kind: input, shape index: {}]
  %s3 = inlined_call_operand.vmem [shape: f32[1,256], index: 3, kind: input, shape index: {}]
  %s4 = inlined_call_operand.vmem [shape: f32[8,256], index: 4, kind: output, shape index: {}]
  %s5 = sld [smem:[#allocation0]]
  $region26: #{vae_forward.9} parent=0
    _
  %s7 = ssub.s32 1, %s5
  %s8 = scalar_select 0, %s7, %s5
  // Predicated region
  $region2: #{vae_forward.9} parent=0 // pred_check
    _
  $region3: #{vae_forward.9} parent=0 // pred_check_branch
    %10 = sbr.rel (0) target = $region5
  $region4: #{vae_forward.9} parent=0 // pred_region
    _
  $region5: #{vae_forward.9} parent=0 // pred_fallthru
    _
  // Predicated region
  $region6: #{vae_forward.9} parent=0 // pred_check
    _
  $region7: #{vae_forward.9} parent=0 // pred_check_branch
    %12 = sbr.rel (0) target = $region9
  $region8: #{vae_forward.9} parent=0 // pred_region
    _
  $region9: #{vae_forward.9} parent=0 // pred_fallthru
    _
  // Predicated region
  $region10: #{vae_forward.9} parent=0 // pred_check
    _
  $region11: #{vae_forward.9} parent=0 // pred_check_branch
    %14 = sbr.rel (0) target = $region13
  $region12: #{vae_forward.9} parent=0 // pred_region
    _
  $region13: #{vae_forward.9} parent=0 // pred_fallthru
    _
  // Predicated region
  $region14: #{vae_forward.9} parent=0 // pred_check
    _
  $region15: #{vae_forward.9} parent=0 // pred_check_branch
    %16 = sbr.rel (0) target = $region17
  $region16: #{vae_forward.9} parent=0 // pred_region
    _
  $region17: #{vae_forward.9} parent=0 // pred_fallthru
    _
  %v17 = vld [vmem:[%s0] sm:$0xff]
  %v18 = vld [vmem:[%s0 + $0x8] sm:$0xff]
  %v19 = vld [vmem:[%s0 + $0x10] sm:$0xff]
  %v20 = vld [vmem:[%s0 + $0x18] sm:$0xff]
  %v21 = vld [vmem:[%s0 + $0x20] sm:$0xff]
  %v22 = vld [vmem:[%s0 + $0x28] sm:$0xff]
  %v23 = vld [vmem:[%s0 + $0x30] sm:$0xff]
  %v24 = vld [vmem:[%s0 + $0x38] sm:$0xff]
  %v25 = vld [vmem:[%s0 + $0x40] sm:$0xff]
  %v26 = vld [vmem:[%s1] sm:$0xff]
  %v27 = vld [vmem:[%s1 + $0x8] sm:$0xff]
  %v28 = vld [vmem:[%s1 + $0x10] sm:$0xff]
  %v29 = vld [vmem:[%s1 + $0x18] sm:$0xff]
  %v30 = vld [vmem:[%s1 + $0x20] sm:$0xff]
  %v31 = vld [vmem:[%s1 + $0x28] sm:$0xff]
  %v32 = vld [vmem:[%s1 + $0x30] sm:$0xff]
  %v33 = vld [vmem:[%s1 + $0x38] sm:$0xff]
  %v34 = vld [vmem:[%s1 + $0x40] sm:$0xff]
  %v35 = vld [vmem:[%s1 + $0x48] sm:$0xff]
  %v36 = vld [vmem:[%s1 + $0x50] sm:$0xff]
  %v37 = vld [vmem:[%s1 + $0x58] sm:$0xff]
  %v38 = vld [vmem:[%s1 + $0x60] sm:$0xff]
  %v39 = vld [vmem:[%s1 + $0x68] sm:$0xff]
  %v40 = vld [vmem:[%s1 + $0x70] sm:$0xff]
  %v41 = vld [vmem:[%s1 + $0x78] sm:$0xff]
  %v42 = vld [vmem:[%s1 + $0x80] sm:$0xff]
  %v43 = vld [vmem:[%s1 + $0x88] sm:$0xff]
  %v44 = vld [vmem:[%s1 + $0x90] sm:$0xff]
  %v45 = vld [vmem:[%s1 + $0x98] sm:$0xff]
  %v46 = vld [vmem:[%s1 + $0xa0] sm:$0xff]
  %v47 = vld [vmem:[%s1 + $0xa8] sm:$0xff]
  %v48 = vld [vmem:[%s1 + $0xb0] sm:$0xff]
  %v49 = vld [vmem:[%s1 + $0xb8] sm:$0xff]
  %v50 = vld [vmem:[%s1 + $0xc0] sm:$0xff]
  %v51 = vld [vmem:[%s1 + $0xc8] sm:$0xff]
  %v52 = vld [vmem:[%s1 + $0xd0] sm:$0xff]
  %v53 = vld [vmem:[%s1 + $0xd8] sm:$0xff]
  %v54 = vld [vmem:[%s1 + $0xe0] sm:$0xff]
  %v55 = vld [vmem:[%s1 + $0xe8] sm:$0xff]
  %v56 = vld [vmem:[%s1 + $0xf0] sm:$0xff]
  %v57 = vld [vmem:[%s1 + $0xf8] sm:$0xff]
  %v58 = vld [vmem:[%s1 + $0x100] sm:$0xff]
  %v59 = vld [vmem:[%s1 + $0x108] sm:$0xff]
  %v60 = vld [vmem:[%s1 + $0x110] sm:$0xff]
  %v61 = vld [vmem:[%s1 + $0x118] sm:$0xff]
  %v62 = vld [vmem:[%s1 + $0x120] sm:$0xff]
  %v63 = vld [vmem:[%s1 + $0x128] sm:$0xff]
  %v64 = vld [vmem:[%s1 + $0x130] sm:$0xff]
  %v65 = vld [vmem:[%s1 + $0x138] sm:$0xff]
  %v66 = vld [vmem:[%s1 + $0x140] sm:$0xff]
  %v67 = vld [vmem:[%s1 + $0x148] sm:$0xff]
  %v68 = vld [vmem:[%s1 + $0x150] sm:$0xff]
  %v69 = vld [vmem:[%s1 + $0x158] sm:$0xff]
  %v70 = vld [vmem:[%s1 + $0x160] sm:$0xff]
  %v71 = vld [vmem:[%s1 + $0x168] sm:$0xff]
  %v72 = vld [vmem:[%s1 + $0x170] sm:$0xff]
  %v73 = vld [vmem:[%s1 + $0x178] sm:$0xff]
  %v74 = vld [vmem:[%s1 + $0x180] sm:$0xff]
  %v75 = vld [vmem:[%s1 + $0x188] sm:$0xff]
  %v76 = vld [vmem:[%s1 + $0x190] sm:$0xff]
  %v77 = vld [vmem:[%s1 + $0x198] sm:$0xff]
  %v78 = vld [vmem:[%s1 + $0x1a0] sm:$0xff]
  %v79 = vld [vmem:[%s1 + $0x1a8] sm:$0xff]
  %v80 = vld [vmem:[%s1 + $0x1b0] sm:$0xff]
  %v81 = vld [vmem:[%s1 + $0x1b8] sm:$0xff]
  %v82 = vld [vmem:[%s1 + $0x1c0] sm:$0xff]
  %v83 = vld [vmem:[%s1 + $0x1c8] sm:$0xff]
  %v84 = vld [vmem:[%s1 + $0x1d0] sm:$0xff]
  %v85 = vld [vmem:[%s1 + $0x1d8] sm:$0xff]
  %v86 = vld [vmem:[%s1 + $0x1e0] sm:$0xff]
  %v87 = vld [vmem:[%s1 + $0x1e8] sm:$0xff]
  %v88 = vld [vmem:[%s1 + $0x1f0] sm:$0xff]
  %v89 = vld [vmem:[%s1 + $0x1f8] sm:$0xff]
  %v90 = vld [vmem:[%s1 + $0x200] sm:$0xff]
  %v91 = vld [vmem:[%s1 + $0x208] sm:$0xff]
  %v92 = vld [vmem:[%s1 + $0x210] sm:$0xff]
  %v93 = vld [vmem:[%s1 + $0x218] sm:$0xff]
  %v94 = vld [vmem:[%s1 + $0x220] sm:$0xff]
  %v95 = vld [vmem:[%s1 + $0x228] sm:$0xff]
  %v96 = vld [vmem:[%s1 + $0x230] sm:$0xff]
  %v97 = vld [vmem:[%s1 + $0x238] sm:$0xff]
  %v98 = vld [vmem:[%s1 + $0x240] sm:$0xff]
  %v99 = vld [vmem:[%s1 + $0x248] sm:$0xff]
  %v100 = vld [vmem:[%s1 + $0x250] sm:$0xff]
  %v101 = vld [vmem:[%s1 + $0x258] sm:$0xff]
  %v102 = vld [vmem:[%s1 + $0x260] sm:$0xff]
  %v103 = vld [vmem:[%s1 + $0x268] sm:$0xff]
  %v104 = vld [vmem:[%s1 + $0x270] sm:$0xff]
  %v105 = vld [vmem:[%s1 + $0x278] sm:$0xff]
  %v106 = vld [vmem:[%s1 + $0x280] sm:$0xff]
  %v107 = vld [vmem:[%s1 + $0x288] sm:$0xff]
  %v108 = vld [vmem:[%s1 + $0x290] sm:$0xff]
  %v109 = vld [vmem:[%s1 + $0x298] sm:$0xff]
  %v110 = vld [vmem:[%s1 + $0x2a0] sm:$0xff]
  %v111 = vld [vmem:[%s1 + $0x2a8] sm:$0xff]
  %v112 = vld [vmem:[%s1 + $0x2b0] sm:$0xff]
  %v113 = vld [vmem:[%s1 + $0x2b8] sm:$0xff]
  %v114 = vld [vmem:[%s1 + $0x2c0] sm:$0xff]
  %v115 = vld [vmem:[%s1 + $0x2c8] sm:$0xff]
  %v116 = vld [vmem:[%s1 + $0x2d0] sm:$0xff]
  %v117 = vld [vmem:[%s1 + $0x2d8] sm:$0xff]
  %v118 = vld [vmem:[%s1 + $0x2e0] sm:$0xff]
  %v119 = vld [vmem:[%s1 + $0x2e8] sm:$0xff]
  %v120 = vld [vmem:[%s1 + $0x2f0] sm:$0xff]
  %v121 = vld [vmem:[%s1 + $0x2f8] sm:$0xff]
  %v122 = vld [vmem:[%s1 + $0x300] sm:$0xff]
  %v123 = vld [vmem:[%s1 + $0x308] sm:$0xff]
  %v124 = vld [vmem:[%s1 + $0x310] sm:$0xff]
  %v125 = vld [vmem:[%s1 + $0x318] sm:$0xff]
  %v126 = vld [vmem:[%s1 + $0x320] sm:$0xff]
  %v127 = vld [vmem:[%s1 + $0x328] sm:$0xff]
  %v128 = vld [vmem:[%s1 + $0x330] sm:$0xff]
  %v129 = vld [vmem:[%s1 + $0x338] sm:$0xff]
  %v130 = vld [vmem:[%s1 + $0x340] sm:$0xff]
  %v131 = vld [vmem:[%s1 + $0x348] sm:$0xff]
  %v132 = vld [vmem:[%s1 + $0x350] sm:$0xff]
  %v133 = vld [vmem:[%s1 + $0x358] sm:$0xff]
  %v134 = vld [vmem:[%s1 + $0x360] sm:$0xff]
  %v135 = vld [vmem:[%s1 + $0x368] sm:$0xff]
  %v136 = vld [vmem:[%s1 + $0x370] sm:$0xff]
  %v137 = vld [vmem:[%s1 + $0x378] sm:$0xff]
  %v138 = vld [vmem:[%s1 + $0x380] sm:$0xff]
  %v139 = vld [vmem:[%s1 + $0x388] sm:$0xff]
  %v140 = vld [vmem:[%s1 + $0x390] sm:$0xff]
  %v141 = vld [vmem:[%s1 + $0x398] sm:$0xff]
  %v142 = vld [vmem:[%s1 + $0x3a0] sm:$0xff]
  %v143 = vld [vmem:[%s1 + $0x3a8] sm:$0xff]
  %v144 = vld [vmem:[%s1 + $0x3b0] sm:$0xff]
  %v145 = vld [vmem:[%s1 + $0x3b8] sm:$0xff]
  %v146 = vld [vmem:[%s1 + $0x3c0] sm:$0xff]
  %v147 = vld [vmem:[%s1 + $0x3c8] sm:$0xff]
  %v148 = vld [vmem:[%s1 + $0x3d0] sm:$0xff]
  %v149 = vld [vmem:[%s1 + $0x3d8] sm:$0xff]
  %v150 = vld [vmem:[%s1 + $0x3e0] sm:$0xff]
  %v151 = vld [vmem:[%s1 + $0x3e8] sm:$0xff]
  %v152 = vld [vmem:[%s1 + $0x3f0] sm:$0xff]
  %v153 = vld [vmem:[%s1 + $0x3f8] sm:$0xff]
  %v154 = vld [vmem:[%s1 + $0x400] sm:$0xff]
  %v155 = vld [vmem:[%s1 + $0x408] sm:$0xff]
  %v156 = vld [vmem:[%s1 + $0x410] sm:$0xff]
  %v157 = vld [vmem:[%s1 + $0x418] sm:$0xff]
  %v158 = vld [vmem:[%s1 + $0x420] sm:$0xff]
  %v159 = vld [vmem:[%s1 + $0x428] sm:$0xff]
  %v160 = vld [vmem:[%s1 + $0x430] sm:$0xff]
  %v161 = vld [vmem:[%s1 + $0x438] sm:$0xff]
  %v162 = vld [vmem:[%s1 + $0x440] sm:$0xff]
  %v163 = vld [vmem:[%s1 + $0x448] sm:$0xff]
  %v164 = vld [vmem:[%s1 + $0x450] sm:$0xff]
  %v165 = vld [vmem:[%s1 + $0x458] sm:$0xff]
  %v166 = vld [vmem:[%s1 + $0x460] sm:$0xff]
  %v167 = vld [vmem:[%s1 + $0x468] sm:$0xff]
  %v168 = vld [vmem:[%s1 + $0x470] sm:$0xff]
  %v169 = vld [vmem:[%s1 + $0x478] sm:$0xff]
  %v170 = vld [vmem:[%s1 + $0x480] sm:$0xff]
  %v171 = vld [vmem:[%s1 + $0x488] sm:$0xff]
  %v172 = vld [vmem:[%s1 + $0x490] sm:$0xff]
  %v173 = vld [vmem:[%s1 + $0x498] sm:$0xff]
  %v174 = vld [vmem:[%s1 + $0x4a0] sm:$0xff]
  %v175 = vld [vmem:[%s1 + $0x4a8] sm:$0xff]
  %v176 = vld [vmem:[%s1 + $0x4b0] sm:$0xff]
  %v177 = vld [vmem:[%s1 + $0x4b8] sm:$0xff]
  %v178 = vld [vmem:[%s1 + $0x4c0] sm:$0xff]
  %v179 = vld [vmem:[%s1 + $0x4c8] sm:$0xff]
  %v180 = vld [vmem:[%s1 + $0x4d0] sm:$0xff]
  %v181 = vld [vmem:[%s1 + $0x4d8] sm:$0xff]
  %v182 = vld [vmem:[%s1 + $0x4e0] sm:$0xff]
  %v183 = vld [vmem:[%s1 + $0x4e8] sm:$0xff]
  %v184 = vld [vmem:[%s1 + $0x4f0] sm:$0xff]
  %v185 = vld [vmem:[%s1 + $0x4f8] sm:$0xff]
  %v186 = vld [vmem:[%s1 + $0x500] sm:$0xff]
  %v187 = vld [vmem:[%s1 + $0x508] sm:$0xff]
  %v188 = vld [vmem:[%s1 + $0x510] sm:$0xff]
  %v189 = vld [vmem:[%s1 + $0x518] sm:$0xff]
  %v190 = vld [vmem:[%s1 + $0x520] sm:$0xff]
  %v191 = vld [vmem:[%s1 + $0x528] sm:$0xff]
  %v192 = vld [vmem:[%s1 + $0x530] sm:$0xff]
  %v193 = vld [vmem:[%s1 + $0x538] sm:$0xff]
  %v194 = vld [vmem:[%s1 + $0x540] sm:$0xff]
  %v195 = vld [vmem:[%s1 + $0x548] sm:$0xff]
  %v196 = vld [vmem:[%s1 + $0x550] sm:$0xff]
  %v197 = vld [vmem:[%s1 + $0x558] sm:$0xff]
  %v198 = vld [vmem:[%s1 + $0x560] sm:$0xff]
  %v199 = vld [vmem:[%s1 + $0x568] sm:$0xff]
  %v200 = vld [vmem:[%s1 + $0x570] sm:$0xff]
  %v201 = vld [vmem:[%s1 + $0x578] sm:$0xff]
  %v202 = vld [vmem:[%s1 + $0x580] sm:$0xff]
  %v203 = vld [vmem:[%s1 + $0x588] sm:$0xff]
  %v204 = vld [vmem:[%s1 + $0x590] sm:$0xff]
  %v205 = vld [vmem:[%s1 + $0x598] sm:$0xff]
  %v206 = vld [vmem:[%s1 + $0x5a0] sm:$0xff]
  %v207 = vld [vmem:[%s1 + $0x5a8] sm:$0xff]
  %v208 = vld [vmem:[%s1 + $0x5b0] sm:$0xff]
  %v209 = vld [vmem:[%s1 + $0x5b8] sm:$0xff]
  %v210 = vld [vmem:[%s1 + $0x5c0] sm:$0xff]
  %v211 = vld [vmem:[%s1 + $0x5c8] sm:$0xff]
  %v212 = vld [vmem:[%s1 + $0x5d0] sm:$0xff]
  %v213 = vld [vmem:[%s1 + $0x5d8] sm:$0xff]
  %v214 = vld [vmem:[%s1 + $0x5e0] sm:$0xff]
  %v215 = vld [vmem:[%s1 + $0x5e8] sm:$0xff]
  %v216 = vld [vmem:[%s1 + $0x5f0] sm:$0xff]
  %v217 = vld [vmem:[%s1 + $0x5f8] sm:$0xff]
  %v218 = vld [vmem:[%s1 + $0x600] sm:$0xff]
  %v219 = vld [vmem:[%s1 + $0x608] sm:$0xff]
  %v220 = vld [vmem:[%s1 + $0x610] sm:$0xff]
  %v221 = vld [vmem:[%s1 + $0x618] sm:$0xff]
  %v222 = vld [vmem:[%s1 + $0x620] sm:$0xff]
  %v223 = vld [vmem:[%s1 + $0x628] sm:$0xff]
  %v224 = vld [vmem:[%s1 + $0x630] sm:$0xff]
  %v225 = vld [vmem:[%s1 + $0x638] sm:$0xff]
  %v226 = vld [vmem:[%s1 + $0x640] sm:$0xff]
  %v227 = vld [vmem:[%s1 + $0x648] sm:$0xff]
  %v228 = vld [vmem:[%s1 + $0x650] sm:$0xff]
  %v229 = vld [vmem:[%s1 + $0x658] sm:$0xff]
  %v230 = vld [vmem:[%s1 + $0x660] sm:$0xff]
  %v231 = vld [vmem:[%s1 + $0x668] sm:$0xff]
  %v232 = vld [vmem:[%s1 + $0x670] sm:$0xff]
  %v233 = vld [vmem:[%s1 + $0x678] sm:$0xff]
  %v234 = vld [vmem:[%s1 + $0x680] sm:$0xff]
  %v235 = vld [vmem:[%s1 + $0x688] sm:$0xff]
  %v236 = vld [vmem:[%s1 + $0x690] sm:$0xff]
  %v237 = vld [vmem:[%s1 + $0x698] sm:$0xff]
  %v238 = vld [vmem:[%s1 + $0x6a0] sm:$0xff]
  %v239 = vld [vmem:[%s1 + $0x6a8] sm:$0xff]
  %v240 = vld [vmem:[%s1 + $0x6b0] sm:$0xff]
  %v241 = vld [vmem:[%s1 + $0x6b8] sm:$0xff]
  %v242 = vld [vmem:[%s1 + $0x6c0] sm:$0xff]
  %v243 = vld [vmem:[%s1 + $0x6c8] sm:$0xff]
  %v244 = vld [vmem:[%s1 + $0x6d0] sm:$0xff]
  %v245 = vld [vmem:[%s1 + $0x6d8] sm:$0xff]
  %v246 = vld [vmem:[%s1 + $0x6e0] sm:$0xff]
  %v247 = vld [vmem:[%s1 + $0x6e8] sm:$0xff]
  %v248 = vld [vmem:[%s1 + $0x6f0] sm:$0xff]
  %v249 = vld [vmem:[%s1 + $0x6f8] sm:$0xff]
  %v250 = vld [vmem:[%s1 + $0x700] sm:$0xff]
  %v251 = vld [vmem:[%s1 + $0x708] sm:$0xff]
  %v252 = vld [vmem:[%s1 + $0x710] sm:$0xff]
  %v253 = vld [vmem:[%s1 + $0x718] sm:$0xff]
  %v254 = vld [vmem:[%s1 + $0x720] sm:$0xff]
  %v255 = vld [vmem:[%s1 + $0x728] sm:$0xff]
  %v256 = vld [vmem:[%s1 + $0x730] sm:$0xff]
  %v257 = vld [vmem:[%s1 + $0x738] sm:$0xff]
  %v258 = vld [vmem:[%s1 + $0x740] sm:$0xff]
  %v259 = vld [vmem:[%s1 + $0x748] sm:$0xff]
  %v260 = vld [vmem:[%s1 + $0x750] sm:$0xff]
  %v261 = vld [vmem:[%s1 + $0x758] sm:$0xff]
  %v262 = vld [vmem:[%s1 + $0x760] sm:$0xff]
  %v263 = vld [vmem:[%s1 + $0x768] sm:$0xff]
  %v264 = vld [vmem:[%s1 + $0x770] sm:$0xff]
  %v265 = vld [vmem:[%s1 + $0x778] sm:$0xff]
  %v266 = vld [vmem:[%s1 + $0x780] sm:$0xff]
  %v267 = vld [vmem:[%s1 + $0x788] sm:$0xff]
  %v268 = vld [vmem:[%s1 + $0x790] sm:$0xff]
  %v269 = vld [vmem:[%s1 + $0x798] sm:$0xff]
  %v270 = vld [vmem:[%s1 + $0x7a0] sm:$0xff]
  %v271 = vld [vmem:[%s1 + $0x7a8] sm:$0xff]
  %v272 = vld [vmem:[%s1 + $0x7b0] sm:$0xff]
  %v273 = vld [vmem:[%s1 + $0x7b8] sm:$0xff]
  %v274 = vld [vmem:[%s1 + $0x7c0] sm:$0xff]
  %v275 = vld [vmem:[%s1 + $0x7c8] sm:$0xff]
  %v276 = vld [vmem:[%s1 + $0x7d0] sm:$0xff]
  %v277 = vld [vmem:[%s1 + $0x7d8] sm:$0xff]
  %v278 = vld [vmem:[%s1 + $0x7e0] sm:$0xff]
  %v279 = vld [vmem:[%s1 + $0x7e8] sm:$0xff]
  %v280 = vld [vmem:[%s1 + $0x7f0] sm:$0xff]
  %v281 = vld [vmem:[%s1 + $0x7f8] sm:$0xff]
  %v282 = vld [vmem:[%s1 + $0x800] sm:$0xff]
  %v283 = vld [vmem:[%s1 + $0x808] sm:$0xff]
  %v284 = vld [vmem:[%s1 + $0x810] sm:$0xff]
  %v285 = vld [vmem:[%s1 + $0x818] sm:$0xff]
  %v286 = vld [vmem:[%s1 + $0x820] sm:$0xff]
  %v287 = vld [vmem:[%s1 + $0x828] sm:$0xff]
  %v288 = vld [vmem:[%s1 + $0x830] sm:$0xff]
  %v289 = vld [vmem:[%s1 + $0x838] sm:$0xff]
  %v290 = vld [vmem:[%s1 + $0x840] sm:$0xff]
  %v291 = vld [vmem:[%s1 + $0x848] sm:$0xff]
  %v292 = vld [vmem:[%s1 + $0x850] sm:$0xff]
  %v293 = vld [vmem:[%s1 + $0x858] sm:$0xff]
  %v294 = vld [vmem:[%s1 + $0x860] sm:$0xff]
  %v295 = vld [vmem:[%s1 + $0x868] sm:$0xff]
  %v296 = vld [vmem:[%s1 + $0x870] sm:$0xff]
  %v297 = vld [vmem:[%s1 + $0x878] sm:$0xff]
  %v298 = vld [vmem:[%s1 + $0x880] sm:$0xff]
  %v299 = vld [vmem:[%s1 + $0x888] sm:$0xff]
  %v300 = vld [vmem:[%s1 + $0x890] sm:$0xff]
  %v301 = vld [vmem:[%s1 + $0x898] sm:$0xff]
  %v302 = vld [vmem:[%s1 + $0x8a0] sm:$0xff]
  %v303 = vld [vmem:[%s1 + $0x8a8] sm:$0xff]
  %v304 = vld [vmem:[%s1 + $0x8b0] sm:$0xff]
  %v305 = vld [vmem:[%s1 + $0x8b8] sm:$0xff]
  %v306 = vld [vmem:[%s1 + $0x8c0] sm:$0xff]
  %v307 = vld [vmem:[%s1 + $0x8c8] sm:$0xff]
  %v308 = vld [vmem:[%s1 + $0x8d0] sm:$0xff]
  %v309 = vld [vmem:[%s1 + $0x8d8] sm:$0xff]
  %v310 = vld [vmem:[%s1 + $0x8e0] sm:$0xff]
  %v311 = vld [vmem:[%s1 + $0x8e8] sm:$0xff]
  %v312 = vld [vmem:[%s1 + $0x8f0] sm:$0xff]
  %v313 = vld [vmem:[%s1 + $0x8f8] sm:$0xff]
  %314 = vmatprep.subr.mxu0 %v57
  %315 = vmatpush1.msra.mxu0 %v56
  %316 = vmatprep.subr.mxu0 %v55
  %317 = vmatpush1.msra.mxu0 %v54
  %318 = vmatprep.subr.mxu0 %v53
  %319 = vmatpush1.msra.mxu0 %v52
  %320 = vmatprep.subr.mxu0 %v51
  %321 = vmatpush1.msra.mxu0 %v50
  %322 = vmatprep.subr.mxu0 %v49
  %323 = vmatpush1.msra.mxu0 %v48
  %324 = vmatprep.subr.mxu0 %v47
  %325 = vmatpush1.msra.mxu0 %v46
  %326 = vmatprep.subr.mxu0 %v45
  %327 = vmatpush1.msra.mxu0 %v44
  %328 = vmatprep.subr.mxu0 %v43
  %329 = vmatpush1.msra.mxu0 %v42
  %330 = vmatprep.subr.mxu0 %v41
  %331 = vmatpush1.msra.mxu0 %v40
  %332 = vmatprep.subr.mxu0 %v39
  %333 = vmatpush1.msra.mxu0 %v38
  %334 = vmatprep.subr.mxu0 %v37
  %335 = vmatpush1.msra.mxu0 %v36
  %336 = vmatprep.subr.mxu0 %v35
  %337 = vmatpush1.msra.mxu0 %v34
  %338 = vmatprep.subr.mxu0 %v33
  %339 = vmatpush1.msra.mxu0 %v32
  %340 = vmatprep.subr.mxu0 %v31
  %341 = vmatpush1.msra.mxu0 %v30
  %342 = vmatprep.subr.mxu0 %v29
  %343 = vmatpush1.msra.mxu0 %v28
  %344 = vmatprep.subr.mxu0 %v27
  %345 = vmatpush1.msra.mxu0 %v26
  %346 = vmatprep.subr.mxu0 %v89
  %347 = vmatpush2.msra.mxu0 %v88
  %348 = vmatprep.subr.mxu0 %v87
  %349 = vmatpush2.msra.mxu0 %v86
  %350 = vmatprep.subr.mxu0 %v85
  %351 = vmatpush2.msra.mxu0 %v84
  %352 = vmatprep.subr.mxu0 %v83
  %353 = vmatpush2.msra.mxu0 %v82
  %354 = vmatprep.subr.mxu0 %v81
  %355 = vmatpush2.msra.mxu0 %v80
  %356 = vmatprep.subr.mxu0 %v79
  %357 = vmatpush2.msra.mxu0 %v78
  %358 = vmatprep.subr.mxu0 %v77
  %359 = vmatpush2.msra.mxu0 %v76
  %360 = vmatprep.subr.mxu0 %v75
  %361 = vmatpush2.msra.mxu0 %v74
  %362 = vmatprep.subr.mxu0 %v73
  %363 = vmatpush2.msra.mxu0 %v72
  %364 = vmatprep.subr.mxu0 %v71
  %365 = vmatpush2.msra.mxu0 %v70
  %366 = vmatprep.subr.mxu0 %v69
  %367 = vmatpush2.msra.mxu0 %v68
  %368 = vmatprep.subr.mxu0 %v67
  %369 = vmatpush2.msra.mxu0 %v66
  %370 = vmatprep.subr.mxu0 %v65
  %371 = vmatpush2.msra.mxu0 %v64
  %372 = vmatprep.subr.mxu0 %v63
  %373 = vmatpush2.msra.mxu0 %v62
  %374 = vmatprep.subr.mxu0 %v61
  %375 = vmatpush2.msra.mxu0 %v60
  %376 = vmatprep.subr.mxu0 %v59
  %377 = vmatpush2.msra.mxu0 %v58
  %378 = vmatprep.mubr.f32.mxu0 %v18
  %379 = vmatmul.mubr.f32.gmra.mxu0 %v17
  %v380 = vpop.f32.mrf.mxu0
  %v381 = vadd.f32 0.0, %v380
  %v382 = vpop.f32.mrf.mxu0
  %v383 = vadd.f32 0.0, %v382
  %384 = vdwg.mxu0
  %385 = vmatprep.subr.mxu0 %v121
  %386 = vmatpush1.msra.mxu0 %v120
  %387 = vmatprep.subr.mxu0 %v119
  %388 = vmatpush1.msra.mxu0 %v118
  %389 = vmatprep.subr.mxu0 %v117
  %390 = vmatpush1.msra.mxu0 %v116
  %391 = vmatprep.subr.mxu0 %v115
  %392 = vmatpush1.msra.mxu0 %v114
  %393 = vmatprep.subr.mxu0 %v113
  %394 = vmatpush1.msra.mxu0 %v112
  %395 = vmatprep.subr.mxu0 %v111
  %396 = vmatpush1.msra.mxu0 %v110
  %397 = vmatprep.subr.mxu0 %v109
  %398 = vmatpush1.msra.mxu0 %v108
  %399 = vmatprep.subr.mxu0 %v107
  %400 = vmatpush1.msra.mxu0 %v106
  %401 = vmatprep.subr.mxu0 %v105
  %402 = vmatpush1.msra.mxu0 %v104
  %403 = vmatprep.subr.mxu0 %v103
  %404 = vmatpush1.msra.mxu0 %v102
  %405 = vmatprep.subr.mxu0 %v101
  %406 = vmatpush1.msra.mxu0 %v100
  %407 = vmatprep.subr.mxu0 %v99
  %408 = vmatpush1.msra.mxu0 %v98
  %409 = vmatprep.subr.mxu0 %v97
  %410 = vmatpush1.msra.mxu0 %v96
  %411 = vmatprep.subr.mxu0 %v95
  %412 = vmatpush1.msra.mxu0 %v94
  %413 = vmatprep.subr.mxu0 %v93
  %414 = vmatpush1.msra.mxu0 %v92
  %415 = vmatprep.subr.mxu0 %v91
  %416 = vmatpush1.msra.mxu0 %v90
  %417 = vmatprep.subr.mxu0 %v153
  %418 = vmatpush2.msra.mxu0 %v152
  %419 = vmatprep.subr.mxu0 %v151
  %420 = vmatpush2.msra.mxu0 %v150
  %421 = vmatprep.subr.mxu0 %v149
  %422 = vmatpush2.msra.mxu0 %v148
  %423 = vmatprep.subr.mxu0 %v147
  %424 = vmatpush2.msra.mxu0 %v146
  %425 = vmatprep.subr.mxu0 %v145
  %426 = vmatpush2.msra.mxu0 %v144
  %427 = vmatprep.subr.mxu0 %v143
  %428 = vmatpush2.msra.mxu0 %v142
  %429 = vmatprep.subr.mxu0 %v141
  %430 = vmatpush2.msra.mxu0 %v140
  %431 = vmatprep.subr.mxu0 %v139
  %432 = vmatpush2.msra.mxu0 %v138
  %433 = vmatprep.subr.mxu0 %v137
  %434 = vmatpush2.msra.mxu0 %v136
  %435 = vmatprep.subr.mxu0 %v135
  %436 = vmatpush2.msra.mxu0 %v134
  %437 = vmatprep.subr.mxu0 %v133
  %438 = vmatpush2.msra.mxu0 %v132
  %439 = vmatprep.subr.mxu0 %v131
  %440 = vmatpush2.msra.mxu0 %v130
  %441 = vmatprep.subr.mxu0 %v129
  %442 = vmatpush2.msra.mxu0 %v128
  %443 = vmatprep.subr.mxu0 %v127
  %444 = vmatpush2.msra.mxu0 %v126
  %445 = vmatprep.subr.mxu0 %v125
  %446 = vmatpush2.msra.mxu0 %v124
  %447 = vmatprep.subr.mxu0 %v123
  %448 = vmatpush2.msra.mxu0 %v122
  %449 = vmatprep.mubr.f32.mxu0 %v20
  %450 = vmatmul.mubr.f32.gmra.mxu0 %v19
  %v451 = vpop.f32.mrf.mxu0
  %v452 = vadd.f32 %v381, %v451
  %v453 = vpop.f32.mrf.mxu0
  %v454 = vadd.f32 %v383, %v453
  %455 = vdwg.mxu0
  %456 = vmatprep.subr.mxu0 %v185
  %457 = vmatpush1.msra.mxu0 %v184
  %458 = vmatprep.subr.mxu0 %v183
  %459 = vmatpush1.msra.mxu0 %v182
  %460 = vmatprep.subr.mxu0 %v181
  %461 = vmatpush1.msra.mxu0 %v180
  %462 = vmatprep.subr.mxu0 %v179
  %463 = vmatpush1.msra.mxu0 %v178
  %464 = vmatprep.subr.mxu0 %v177
  %465 = vmatpush1.msra.mxu0 %v176
  %466 = vmatprep.subr.mxu0 %v175
  %467 = vmatpush1.msra.mxu0 %v174
  %468 = vmatprep.subr.mxu0 %v173
  %469 = vmatpush1.msra.mxu0 %v172
  %470 = vmatprep.subr.mxu0 %v171
  %471 = vmatpush1.msra.mxu0 %v170
  %472 = vmatprep.subr.mxu0 %v169
  %473 = vmatpush1.msra.mxu0 %v168
  %474 = vmatprep.subr.mxu0 %v167
  %475 = vmatpush1.msra.mxu0 %v166
  %476 = vmatprep.subr.mxu0 %v165
  %477 = vmatpush1.msra.mxu0 %v164
  %478 = vmatprep.subr.mxu0 %v163
  %479 = vmatpush1.msra.mxu0 %v162
  %480 = vmatprep.subr.mxu0 %v161
  %481 = vmatpush1.msra.mxu0 %v160
  %482 = vmatprep.subr.mxu0 %v159
  %483 = vmatpush1.msra.mxu0 %v158
  %484 = vmatprep.subr.mxu0 %v157
  %485 = vmatpush1.msra.mxu0 %v156
  %486 = vmatprep.subr.mxu0 %v155
  %487 = vmatpush1.msra.mxu0 %v154
  %488 = vmatprep.subr.mxu0 %v217
  %489 = vmatpush2.msra.mxu0 %v216
  %490 = vmatprep.subr.mxu0 %v215
  %491 = vmatpush2.msra.mxu0 %v214
  %492 = vmatprep.subr.mxu0 %v213
  %493 = vmatpush2.msra.mxu0 %v212
  %494 = vmatprep.subr.mxu0 %v211
  %495 = vmatpush2.msra.mxu0 %v210
  %496 = vmatprep.subr.mxu0 %v209
  %497 = vmatpush2.msra.mxu0 %v208
  %498 = vmatprep.subr.mxu0 %v207
  %499 = vmatpush2.msra.mxu0 %v206
  %500 = vmatprep.subr.mxu0 %v205
  %501 = vmatpush2.msra.mxu0 %v204
  %502 = vmatprep.subr.mxu0 %v203
  %503 = vmatpush2.msra.mxu0 %v202
  %504 = vmatprep.subr.mxu0 %v201
  %505 = vmatpush2.msra.mxu0 %v200
  %506 = vmatprep.subr.mxu0 %v199
  %507 = vmatpush2.msra.mxu0 %v198
  %508 = vmatprep.subr.mxu0 %v197
  %509 = vmatpush2.msra.mxu0 %v196
  %510 = vmatprep.subr.mxu0 %v195
  %511 = vmatpush2.msra.mxu0 %v194
  %512 = vmatprep.subr.mxu0 %v193
  %513 = vmatpush2.msra.mxu0 %v192
  %514 = vmatprep.subr.mxu0 %v191
  %515 = vmatpush2.msra.mxu0 %v190
  %516 = vmatprep.subr.mxu0 %v189
  %517 = vmatpush2.msra.mxu0 %v188
  %518 = vmatprep.subr.mxu0 %v187
  %519 = vmatpush2.msra.mxu0 %v186
  %520 = vmatprep.mubr.f32.mxu0 %v22
  %521 = vmatmul.mubr.f32.gmra.mxu0 %v21
  %v522 = vpop.f32.mrf.mxu0
  %v523 = vadd.f32 %v452, %v522
  %v524 = vpop.f32.mrf.mxu0
  %v525 = vadd.f32 %v454, %v524
  %526 = vdwg.mxu0
  %527 = vmatprep.subr.mxu0 %v249
  %528 = vmatpush1.msra.mxu0 %v248
  %529 = vmatprep.subr.mxu0 %v247
  %530 = vmatpush1.msra.mxu0 %v246
  %531 = vmatprep.subr.mxu0 %v245
  %532 = vmatpush1.msra.mxu0 %v244
  %533 = vmatprep.subr.mxu0 %v243
  %534 = vmatpush1.msra.mxu0 %v242
  %535 = vmatprep.subr.mxu0 %v241
  %536 = vmatpush1.msra.mxu0 %v240
  %537 = vmatprep.subr.mxu0 %v239
  %538 = vmatpush1.msra.mxu0 %v238
  %539 = vmatprep.subr.mxu0 %v237
  %540 = vmatpush1.msra.mxu0 %v236
  %541 = vmatprep.subr.mxu0 %v235
  %542 = vmatpush1.msra.mxu0 %v234
  %543 = vmatprep.subr.mxu0 %v233
  %544 = vmatpush1.msra.mxu0 %v232
  %545 = vmatprep.subr.mxu0 %v231
  %546 = vmatpush1.msra.mxu0 %v230
  %547 = vmatprep.subr.mxu0 %v229
  %548 = vmatpush1.msra.mxu0 %v228
  %549 = vmatprep.subr.mxu0 %v227
  %550 = vmatpush1.msra.mxu0 %v226
  %551 = vmatprep.subr.mxu0 %v225
  %552 = vmatpush1.msra.mxu0 %v224
  %553 = vmatprep.subr.mxu0 %v223
  %554 = vmatpush1.msra.mxu0 %v222
  %555 = vmatprep.subr.mxu0 %v221
  %556 = vmatpush1.msra.mxu0 %v220
  %557 = vmatprep.subr.mxu0 %v219
  %558 = vmatpush1.msra.mxu0 %v218
  %559 = vmatprep.subr.mxu0 %v281
  %560 = vmatpush2.msra.mxu0 %v280
  %561 = vmatprep.subr.mxu0 %v279
  %562 = vmatpush2.msra.mxu0 %v278
  %563 = vmatprep.subr.mxu0 %v277
  %564 = vmatpush2.msra.mxu0 %v276
  %565 = vmatprep.subr.mxu0 %v275
  %566 = vmatpush2.msra.mxu0 %v274
  %567 = vmatprep.subr.mxu0 %v273
  %568 = vmatpush2.msra.mxu0 %v272
  %569 = vmatprep.subr.mxu0 %v271
  %570 = vmatpush2.msra.mxu0 %v270
  %571 = vmatprep.subr.mxu0 %v269
  %572 = vmatpush2.msra.mxu0 %v268
  %573 = vmatprep.subr.mxu0 %v267
  %574 = vmatpush2.msra.mxu0 %v266
  %575 = vmatprep.subr.mxu0 %v265
  %576 = vmatpush2.msra.mxu0 %v264
  %577 = vmatprep.subr.mxu0 %v263
  %578 = vmatpush2.msra.mxu0 %v262
  %579 = vmatprep.subr.mxu0 %v261
  %580 = vmatpush2.msra.mxu0 %v260
  %581 = vmatprep.subr.mxu0 %v259
  %582 = vmatpush2.msra.mxu0 %v258
  %583 = vmatprep.subr.mxu0 %v257
  %584 = vmatpush2.msra.mxu0 %v256
  %585 = vmatprep.subr.mxu0 %v255
  %586 = vmatpush2.msra.mxu0 %v254
  %587 = vmatprep.subr.mxu0 %v253
  %588 = vmatpush2.msra.mxu0 %v252
  %589 = vmatprep.subr.mxu0 %v251
  %590 = vmatpush2.msra.mxu0 %v250
  %591 = vmatprep.mubr.f32.mxu0 %v24
  %592 = vmatmul.mubr.f32.gmra.mxu0 %v23
  %v593 = vpop.f32.mrf.mxu0
  %v594 = vadd.f32 %v523, %v593
  %v595 = vpop.f32.mrf.mxu0
  %v596 = vadd.f32 %v525, %v595
  %597 = vdwg.mxu0
  %598 = vmatprep.subr.mxu0 %v313
  %599 = vmatpush1.msra.mxu0 %v312
  %600 = vmatprep.subr.mxu0 %v311
  %601 = vmatpush1.msra.mxu0 %v310
  %602 = vmatprep.subr.mxu0 %v309
  %603 = vmatpush1.msra.mxu0 %v308
  %604 = vmatprep.subr.mxu0 %v307
  %605 = vmatpush1.msra.mxu0 %v306
  %606 = vmatprep.subr.mxu0 %v305
  %607 = vmatpush1.msra.mxu0 %v304
  %608 = vmatprep.subr.mxu0 %v303
  %609 = vmatpush1.msra.mxu0 %v302
  %610 = vmatprep.subr.mxu0 %v301
  %611 = vmatpush1.msra.mxu0 %v300
  %612 = vmatprep.subr.mxu0 %v299
  %613 = vmatpush1.msra.mxu0 %v298
  %614 = vmatprep.subr.mxu0 %v297
  %615 = vmatpush1.msra.mxu0 %v296
  %616 = vmatprep.subr.mxu0 %v295
  %617 = vmatpush1.msra.mxu0 %v294
  %618 = vmatprep.subr.mxu0 %v293
  %619 = vmatpush1.msra.mxu0 %v292
  %620 = vmatprep.subr.mxu0 %v291
  %621 = vmatpush1.msra.mxu0 %v290
  %622 = vmatprep.subr.mxu0 %v289
  %623 = vmatpush1.msra.mxu0 %v288
  %624 = vmatprep.subr.mxu0 %v287
  %625 = vmatpush1.msra.mxu0 %v286
  %626 = vmatprep.subr.mxu0 %v285
  %627 = vmatpush1.msra.mxu0 %v284
  %628 = vmatprep.subr.mxu0 %v283
  %629 = vmatpush1.msra.mxu0 %v282
  %630 = vmatprep.subr.mxu0 0.0
  %631 = vmatpush2.msra.mxu0 0.0
  %632 = vmatprep.subr.mxu0 0.0
  %633 = vmatpush2.msra.mxu0 0.0
  %634 = vmatprep.subr.mxu0 0.0
  %635 = vmatpush2.msra.mxu0 0.0
  %636 = vmatprep.subr.mxu0 0.0
  %637 = vmatpush2.msra.mxu0 0.0
  %638 = vmatprep.subr.mxu0 0.0
  %639 = vmatpush2.msra.mxu0 0.0
  %640 = vmatprep.subr.mxu0 0.0
  %641 = vmatpush2.msra.mxu0 0.0
  %642 = vmatprep.subr.mxu0 0.0
  %643 = vmatpush2.msra.mxu0 0.0
  %644 = vmatprep.subr.mxu0 0.0
  %645 = vmatpush2.msra.mxu0 0.0
  %646 = vmatprep.subr.mxu0 0.0
  %647 = vmatpush2.msra.mxu0 0.0
  %648 = vmatprep.subr.mxu0 0.0
  %649 = vmatpush2.msra.mxu0 0.0
  %650 = vmatprep.subr.mxu0 0.0
  %651 = vmatpush2.msra.mxu0 0.0
  %652 = vmatprep.subr.mxu0 0.0
  %653 = vmatpush2.msra.mxu0 0.0
  %654 = vmatprep.subr.mxu0 0.0
  %655 = vmatpush2.msra.mxu0 0.0
  %656 = vmatprep.subr.mxu0 0.0
  %657 = vmatpush2.msra.mxu0 0.0
  %658 = vmatprep.subr.mxu0 0.0
  %659 = vmatpush2.msra.mxu0 0.0
  %660 = vmatprep.subr.mxu0 0.0
  %661 = vmatpush2.msra.mxu0 0.0
  %662 = vmatprep.mubr.f32.mxu0 0.0
  %663 = vmatmul.mubr.f32.gmra.mxu0 %v25
  %v664 = vpop.f32.mrf.mxu0
  %v665 = vadd.f32 %v594, %v664
  %v666 = vpop.f32.mrf.mxu0
  %v667 = vadd.f32 %v596, %v666
  %668 = vdwg.mxu0
  %v669 = vrot.slane %v665, 4
  %v670 = vadd.f32 %v665, %v669
  %v671 = vrot.slane %v670, 2
  %v672 = vadd.f32 %v670, %v671
  %v673 = vrot.slane %v672, 1
  %v674 = vadd.f32 %v672, %v673
  %v675 = vrot.slane %v667, 4
  %v676 = vadd.f32 %v667, %v675
  %v677 = vrot.slane %v676, 2
  %v678 = vadd.f32 %v676, %v677
  %v679 = vrot.slane %v678, 1
  %v680 = vadd.f32 %v678, %v679
  %v681 = vrcp.pop 8.0
  %v682 = vmul.f32 %v674, %v681
  %v683 = vmul.f32 %v680, %v681
  %v684 = vsub.f32 %v665, %v682
  %v685 = vsub.f32 %v667, %v683
  %v686 = vmul.f32 %v684, %v684
  %v687 = vmul.f32 %v685, %v685
  %v688 = vrot.slane %v686, 4
  %v689 = vadd.f32 %v686, %v688
  %v690 = vrot.slane %v689, 2
  %v691 = vadd.f32 %v689, %v690
  %v692 = vrot.slane %v691, 1
  %v693 = vadd.f32 %v691, %v692
  %v694 = vrot.slane %v687, 4
  %v695 = vadd.f32 %v687, %v694
  %v696 = vrot.slane %v695, 2
  %v697 = vadd.f32 %v695, %v696
  %v698 = vrot.slane %v697, 1
  %v699 = vadd.f32 %v697, %v698
  %v700 = vmul.f32 %v693, %v681
  %v701 = vmul.f32 %v699, %v681
  %v702 = vld [vmem:[%s2] sm:$0x3]
  %v703 = vadd.f32 %v700, 1e-05
  %v704 = vadd.f32 %v701, 1e-05
  %v705 = vrsqrt.pop %v703
  %v706 = vrsqrt.pop %v704
  %v709 = vcombine.low %v705, %v706
  %v711 = vunpack.c.l.s4 1966171168
  %v712 = vunpack.c.0.s8 %v711
  %v713 = vlaneseq
  %v714 = vshrl.u32 %v713, 7
  %v715 = vsub.s32 %v712, %v714
  %v716 = vrot.slane %v709, %v715
  %v718 = vunpack.c.l.s4 1966171168
  %v719 = vunpack.c.0.s8 %v718
  %v720 = vlaneseq
  %v721 = vshrl.u32 %v720, 7
  %v722 = vsub.s32 %v719, %v721
  %v723 = vrot.slane %v716, %v722
  %v725 = vmul.f32 %v702, %v723
  %v726 = vld [vmem:[%s3] sm:$0x3]
  %v728 = vlaneseq
  %v729 = vshrl.u32 %v728, 7
  %v730 = vsub.s32 0, %v729
  %v731 = vrot.slane %v725, %v730
  %v732 = vlaneseq
  %v733 = vshrl.u32 %v732, 7
  %v734 = vsub.s32 1, %v733
  %v735 = vrot.slane %v725, %v734
  %v738 = vmul.f32 %v682, %v731
  %v739 = vmul.f32 %v683, %v735
  %v742 = vcombine.low %v738, %v739
  %v744 = vunpack.c.l.s4 1966171168
  %v745 = vunpack.c.0.s8 %v744
  %v746 = vlaneseq
  %v747 = vshrl.u32 %v746, 7
  %v748 = vsub.s32 %v745, %v747
  %v749 = vrot.slane %v742, %v748
  %v751 = vunpack.c.l.s4 1966171168
  %v752 = vunpack.c.0.s8 %v751
  %v753 = vlaneseq
  %v754 = vshrl.u32 %v753, 7
  %v755 = vsub.s32 %v752, %v754
  %v756 = vrot.slane %v749, %v755
  %v758 = vsub.f32 %v726, %v756
  %v759 = vmul.f32 %v665, %v731
  %v760 = vmul.f32 %v667, %v735
  %v762 = vlaneseq
  %v763 = vshrl.u32 %v762, 7
  %v764 = vsub.s32 0, %v763
  %v765 = vrot.slane %v758, %v764
  %v766 = vlaneseq
  %v767 = vshrl.u32 %v766, 7
  %v768 = vsub.s32 1, %v767
  %v769 = vrot.slane %v758, %v768
  %v772 = vadd.f32 %v759, %v765
  %v773 = vadd.f32 %v760, %v769
  %vm774 = vcmp.ge.f32.partialorder %v772, 0.0
  %vm775 = vcmp.ge.f32.partialorder %v773, 0.0
  %v776 = vmul.f32 %v772, 0.2
  %v777 = vmul.f32 %v773, 0.2
  %v778 = vsel %vm774, %v772, %v776
  %v779 = vsel %vm775, %v773, %v777
  %780 = vst [vmem:[%s4] sm:$0xff] %v778
  %781 = vst [vmem:[%s4 + $0x8] sm:$0xff] %v779
  // Predicated region
  $region18: #{vae_forward.9} parent=0 // pred_check
    _
  $region19: #{vae_forward.9} parent=0 // pred_check_branch
    %783 = sbr.rel (0) target = $region21
  $region20: #{vae_forward.9} parent=0 // pred_region
    _
  $region21: #{vae_forward.9} parent=0 // pred_fallthru
    _
  // Predicated region
  $region22: #{vae_forward.9} parent=0 // pred_check
    _
  $region23: #{vae_forward.9} parent=0 // pred_check_branch
    %785 = sbr.rel (0) target = $region25
  $region24: #{vae_forward.9} parent=0 // pred_region
    _
  $region25: #{vae_forward.9} parent=0 // pred_fallthru
    _

// kernel: vae_forward.11
$region0: #{vae_forward.11}
  #allocation0 [shape = 'u32[]', space=smem, size = 0x4, offset = 0x4, fixed_abs, tag = 'smem constant byte address 0x4 - core index']
  #allocation1 [shape = 'u32[144,128]{1,0:T(1,128)}', space=vmem, size = 0x12000, scoped, tag = 'internal scratch']
  %s0 = inlined_call_operand.vmem [shape: f32[8,256], index: 0, kind: input, shape index: {}]
  %s1 = inlined_call_operand.vmem [shape: f32[8,512], index: 1, kind: input, shape index: {}]
  %s2 = inlined_call_operand.vmem [shape: f32[8,512], index: 2, kind: input, shape index: {}]
  %s3 = inlined_call_operand.vmem [shape: f32[8,1024], index: 3, kind: input, shape index: {}]
  %s4 = inlined_call_operand.vmem [shape: f32[256,128], index: 4, kind: input, shape index: {}]
  %s5 = inlined_call_operand.vmem [shape: f32[512,128], index: 5, kind: input, shape index: {}]
  %s6 = inlined_call_operand.vmem [shape: f32[512,128], index: 6, kind: input, shape index: {}]
  %s7 = inlined_call_operand.vmem [shape: f32[1024,128], index: 7, kind: input, shape index: {}]
  %s8 = inlined_call_operand.vmem [shape: f32[1,128], index: 8, kind: input, shape index: {}]
  %s9 = inlined_call_operand.vmem [shape: f32[1,128], index: 9, kind: input, shape index: {}]
  %s10 = inlined_call_operand.vmem [shape: f32[8,128], index: 10, kind: output, shape index: {0}]
  %s11 = inlined_call_operand.vmem [shape: f32[8,128], index: 11, kind: output, shape index: {1}]
  %s12 = inlined_call_operand.vmem [shape: f32[8,128], index: 12, kind: output, shape index: {2}]
  %s13 = inlined_call_operand.vmem [shape: f32[8,128], index: 13, kind: output, shape index: {3}]
  %14 = xla_tuple %s10, %s11, %s12, %s13
  %s15 = sld [smem:[#allocation0]]
  $region74: #{vae_forward.11} parent=0
    _
  %s17 = ssub.s32 1, %s15
  %s18 = scalar_select 0, %s17, %s15
  // Predicated region
  $region2: #{vae_forward.11} parent=0 // pred_check
    _
  $region3: #{vae_forward.11} parent=0 // pred_check_branch
    %20 = sbr.rel (0) target = $region5
  $region4: #{vae_forward.11} parent=0 // pred_region
    _
  $region5: #{vae_forward.11} parent=0 // pred_fallthru
    _
  // Predicated region
  $region6: #{vae_forward.11} parent=0 // pred_check
    _
  $region7: #{vae_forward.11} parent=0 // pred_check_branch
    %22 = sbr.rel (0) target = $region9
  $region8: #{vae_forward.11} parent=0 // pred_region
    _
  $region9: #{vae_forward.11} parent=0 // pred_fallthru
    _
  // Predicated region
  $region10: #{vae_forward.11} parent=0 // pred_check
    _
  $region11: #{vae_forward.11} parent=0 // pred_check_branch
    %24 = sbr.rel (0) target = $region13
  $region12: #{vae_forward.11} parent=0 // pred_region
    _
  $region13: #{vae_forward.11} parent=0 // pred_fallthru
    _
  // Predicated region
  $region14: #{vae_forward.11} parent=0 // pred_check
    _
  $region15: #{vae_forward.11} parent=0 // pred_check_branch
    %26 = sbr.rel (0) target = $region17
  $region16: #{vae_forward.11} parent=0 // pred_region
    _
  $region17: #{vae_forward.11} parent=0 // pred_fallthru
    _
  // Predicated region
  $region18: #{vae_forward.11} parent=0 // pred_check
    _
  $region19: #{vae_forward.11} parent=0 // pred_check_branch
    %28 = sbr.rel (0) target = $region21
  $region20: #{vae_forward.11} parent=0 // pred_region
    _
  $region21: #{vae_forward.11} parent=0 // pred_fallthru
    _
  // Predicated region
  $region22: #{vae_forward.11} parent=0 // pred_check
    _
  $region23: #{vae_forward.11} parent=0 // pred_check_branch
    %30 = sbr.rel (0) target = $region25
  $region24: #{vae_forward.11} parent=0 // pred_region
    _
  $region25: #{vae_forward.11} parent=0 // pred_fallthru
    _
  // Predicated region
  $region26: #{vae_forward.11} parent=0 // pred_check
    _
  $region27: #{vae_forward.11} parent=0 // pred_check_branch
    %32 = sbr.rel (0) target = $region29
  $region28: #{vae_forward.11} parent=0 // pred_region
    _
  $region29: #{vae_forward.11} parent=0 // pred_fallthru
    _
  // Predicated region
  $region30: #{vae_forward.11} parent=0 // pred_check
    _
  $region31: #{vae_forward.11} parent=0 // pred_check_branch
    %34 = sbr.rel (0) target = $region33
  $region32: #{vae_forward.11} parent=0 // pred_region
    _
  $region33: #{vae_forward.11} parent=0 // pred_fallthru
    _
  // Predicated region
  $region34: #{vae_forward.11} parent=0 // pred_check
    _
  $region35: #{vae_forward.11} parent=0 // pred_check_branch
    %36 = sbr.rel (0) target = $region37
  $region36: #{vae_forward.11} parent=0 // pred_region
    _
  $region37: #{vae_forward.11} parent=0 // pred_fallthru
    _
  // Predicated region
  $region38: #{vae_forward.11} parent=0 // pred_check
    _
  $region39: #{vae_forward.11} parent=0 // pred_check_branch
    %38 = sbr.rel (0) target = $region41
  $region40: #{vae_forward.11} parent=0 // pred_region
    _
  $region41: #{vae_forward.11} parent=0 // pred_fallthru
    _
  %v39 = vld [vmem:[%s0] sm:$0xff]
  %v40 = vld [vmem:[%s0 + $0x8] sm:$0xff]
  %v41 = vld [vmem:[%s4] sm:$0xff]
  %v42 = vld [vmem:[%s4 + $0x8] sm:$0xff]
  %v43 = vld [vmem:[%s4 + $0x10] sm:$0xff]
  %v44 = vld [vmem:[%s4 + $0x18] sm:$0xff]
  %v45 = vld [vmem:[%s4 + $0x20] sm:$0xff]
  %v46 = vld [vmem:[%s4 + $0x28] sm:$0xff]
  %v47 = vld [vmem:[%s4 + $0x30] sm:$0xff]
  %v48 = vld [vmem:[%s4 + $0x38] sm:$0xff]
  %v49 = vld [vmem:[%s4 + $0x40] sm:$0xff]
  %v50 = vld [vmem:[%s4 + $0x48] sm:$0xff]
  %v51 = vld [vmem:[%s4 + $0x50] sm:$0xff]
  %v52 = vld [vmem:[%s4 + $0x58] sm:$0xff]
  %v53 = vld [vmem:[%s4 + $0x60] sm:$0xff]
  %v54 = vld [vmem:[%s4 + $0x68] sm:$0xff]
  %v55 = vld [vmem:[%s4 + $0x70] sm:$0xff]
  %v56 = vld [vmem:[%s4 + $0x78] sm:$0xff]
  %v57 = vld [vmem:[%s4 + $0x80] sm:$0xff]
  %v58 = vld [vmem:[%s4 + $0x88] sm:$0xff]
  %v59 = vld [vmem:[%s4 + $0x90] sm:$0xff]
  %v60 = vld [vmem:[%s4 + $0x98] sm:$0xff]
  %v61 = vld [vmem:[%s4 + $0xa0] sm:$0xff]
  %v62 = vld [vmem:[%s4 + $0xa8] sm:$0xff]
  %v63 = vld [vmem:[%s4 + $0xb0] sm:$0xff]
  %v64 = vld [vmem:[%s4 + $0xb8] sm:$0xff]
  %v65 = vld [vmem:[%s4 + $0xc0] sm:$0xff]
  %v66 = vld [vmem:[%s4 + $0xc8] sm:$0xff]
  %v67 = vld [vmem:[%s4 + $0xd0] sm:$0xff]
  %v68 = vld [vmem:[%s4 + $0xd8] sm:$0xff]
  %v69 = vld [vmem:[%s4 + $0xe0] sm:$0xff]
  %v70 = vld [vmem:[%s4 + $0xe8] sm:$0xff]
  %v71 = vld [vmem:[%s4 + $0xf0] sm:$0xff]
  %v72 = vld [vmem:[%s4 + $0xf8] sm:$0xff]
  %73 = vmatprep.subr.mxu0 0.0
  %74 = vmatpush1.msra.mxu0 %v56
  %75 = vmatprep.subr.mxu0 0.0
  %76 = vmatpush1.msra.mxu0 %v55
  %77 = vmatprep.subr.mxu0 0.0
  %78 = vmatpush1.msra.mxu0 %v54
  %79 = vmatprep.subr.mxu0 0.0
  %80 = vmatpush1.msra.mxu0 %v53
  %81 = vmatprep.subr.mxu0 0.0
  %82 = vmatpush1.msra.mxu0 %v52
  %83 = vmatprep.subr.mxu0 0.0
  %84 = vmatpush1.msra.mxu0 %v51
  %85 = vmatprep.subr.mxu0 0.0
  %86 = vmatpush1.msra.mxu0 %v50
  %87 = vmatprep.subr.mxu0 0.0
  %88 = vmatpush1.msra.mxu0 %v49
  %89 = vmatprep.subr.mxu0 0.0
  %90 = vmatpush1.msra.mxu0 %v48
  %91 = vmatprep.subr.mxu0 0.0
  %92 = vmatpush1.msra.mxu0 %v47
  %93 = vmatprep.subr.mxu0 0.0
  %94 = vmatpush1.msra.mxu0 %v46
  %95 = vmatprep.subr.mxu0 0.0
  %96 = vmatpush1.msra.mxu0 %v45
  %97 = vmatprep.subr.mxu0 0.0
  %98 = vmatpush1.msra.mxu0 %v44
  %99 = vmatprep.subr.mxu0 0.0
  %100 = vmatpush1.msra.mxu0 %v43
  %101 = vmatprep.subr.mxu0 0.0
  %102 = vmatpush1.msra.mxu0 %v42
  %103 = vmatprep.subr.mxu0 0.0
  %104 = vmatpush1.msra.mxu0 %v41
  %105 = vmatprep.subr.mxu0 0.0
  %106 = vmatpush2.msra.mxu0 %v72
  %107 = vmatprep.subr.mxu0 0.0
  %108 = vmatpush2.msra.mxu0 %v71
  %109 = vmatprep.subr.mxu0 0.0
  %110 = vmatpush2.msra.mxu0 %v70
  %111 = vmatprep.subr.mxu0 0.0
  %112 = vmatpush2.msra.mxu0 %v69
  %113 = vmatprep.subr.mxu0 0.0
  %114 = vmatpush2.msra.mxu0 %v68
  %115 = vmatprep.subr.mxu0 0.0
  %116 = vmatpush2.msra.mxu0 %v67
  %117 = vmatprep.subr.mxu0 0.0
  %118 = vmatpush2.msra.mxu0 %v66
  %119 = vmatprep.subr.mxu0 0.0
  %120 = vmatpush2.msra.mxu0 %v65
  %121 = vmatprep.subr.mxu0 0.0
  %122 = vmatpush2.msra.mxu0 %v64
  %123 = vmatprep.subr.mxu0 0.0
  %124 = vmatpush2.msra.mxu0 %v63
  %125 = vmatprep.subr.mxu0 0.0
  %126 = vmatpush2.msra.mxu0 %v62
  %127 = vmatprep.subr.mxu0 0.0
  %128 = vmatpush2.msra.mxu0 %v61
  %129 = vmatprep.subr.mxu0 0.0
  %130 = vmatpush2.msra.mxu0 %v60
  %131 = vmatprep.subr.mxu0 0.0
  %132 = vmatpush2.msra.mxu0 %v59
  %133 = vmatprep.subr.mxu0 0.0
  %134 = vmatpush2.msra.mxu0 %v58
  %135 = vmatprep.subr.mxu0 0.0
  %136 = vmatpush2.msra.mxu0 %v57
  %137 = vmatprep.mubr.f32.mxu0 %v40
  %138 = vmatmul.mubr.f32.gmra.mxu0 %v39
  %v139 = vpop.f32.mrf.mxu0
  %v140 = vadd.f32 0.0, %v139
  %v141 = vpop.f32.mrf.mxu0
  %142 = vdwg.mxu0
  %v143 = vld [vmem:[%s1] sm:$0xff]
  %v144 = vld [vmem:[%s1 + $0x8] sm:$0xff]
  %v145 = vld [vmem:[%s1 + $0x10] sm:$0xff]
  %v146 = vld [vmem:[%s1 + $0x18] sm:$0xff]
  %v147 = vld [vmem:[%s5] sm:$0xff]
  %v148 = vld [vmem:[%s5 + $0x8] sm:$0xff]
  %v149 = vld [vmem:[%s5 + $0x10] sm:$0xff]
  %v150 = vld [vmem:[%s5 + $0x18] sm:$0xff]
  %v151 = vld [vmem:[%s5 + $0x20] sm:$0xff]
  %v152 = vld [vmem:[%s5 + $0x28] sm:$0xff]
  %v153 = vld [vmem:[%s5 + $0x30] sm:$0xff]
  %v154 = vld [vmem:[%s5 + $0x38] sm:$0xff]
  %v155 = vld [vmem:[%s5 + $0x40] sm:$0xff]
  %v156 = vld [vmem:[%s5 + $0x48] sm:$0xff]
  %v157 = vld [vmem:[%s5 + $0x50] sm:$0xff]
  %v158 = vld [vmem:[%s5 + $0x58] sm:$0xff]
  %v159 = vld [vmem:[%s5 + $0x60] sm:$0xff]
  %v160 = vld [vmem:[%s5 + $0x68] sm:$0xff]
  %v161 = vld [vmem:[%s5 + $0x70] sm:$0xff]
  %v162 = vld [vmem:[%s5 + $0x78] sm:$0xff]
  %v163 = vld [vmem:[%s5 + $0x80] sm:$0xff]
  %v164 = vld [vmem:[%s5 + $0x88] sm:$0xff]
  %v165 = vld [vmem:[%s5 + $0x90] sm:$0xff]
  %v166 = vld [vmem:[%s5 + $0x98] sm:$0xff]
  %v167 = vld [vmem:[%s5 + $0xa0] sm:$0xff]
  %v168 = vld [vmem:[%s5 + $0xa8] sm:$0xff]
  %v169 = vld [vmem:[%s5 + $0xb0] sm:$0xff]
  %v170 = vld [vmem:[%s5 + $0xb8] sm:$0xff]
  %v171 = vld [vmem:[%s5 + $0xc0] sm:$0xff]
  %v172 = vld [vmem:[%s5 + $0xc8] sm:$0xff]
  %v173 = vld [vmem:[%s5 + $0xd0] sm:$0xff]
  %v174 = vld [vmem:[%s5 + $0xd8] sm:$0xff]
  %v175 = vld [vmem:[%s5 + $0xe0] sm:$0xff]
  %v176 = vld [vmem:[%s5 + $0xe8] sm:$0xff]
  %v177 = vld [vmem:[%s5 + $0xf0] sm:$0xff]
  %v178 = vld [vmem:[%s5 + $0xf8] sm:$0xff]
  %v179 = vld [vmem:[%s5 + $0x100] sm:$0xff]
  %v180 = vld [vmem:[%s5 + $0x108] sm:$0xff]
  %v181 = vld [vmem:[%s5 + $0x110] sm:$0xff]
  %v182 = vld [vmem:[%s5 + $0x118] sm:$0xff]
  %v183 = vld [vmem:[%s5 + $0x120] sm:$0xff]
  %v184 = vld [vmem:[%s5 + $0x128] sm:$0xff]
  %v185 = vld [vmem:[%s5 + $0x130] sm:$0xff]
  %v186 = vld [vmem:[%s5 + $0x138] sm:$0xff]
  %v187 = vld [vmem:[%s5 + $0x140] sm:$0xff]
  %v188 = vld [vmem:[%s5 + $0x148] sm:$0xff]
  %v189 = vld [vmem:[%s5 + $0x150] sm:$0xff]
  %v190 = vld [vmem:[%s5 + $0x158] sm:$0xff]
  %v191 = vld [vmem:[%s5 + $0x160] sm:$0xff]
  %v192 = vld [vmem:[%s5 + $0x168] sm:$0xff]
  %v193 = vld [vmem:[%s5 + $0x170] sm:$0xff]
  %v194 = vld [vmem:[%s5 + $0x178] sm:$0xff]
  %v195 = vld [vmem:[%s5 + $0x180] sm:$0xff]
  %v196 = vld [vmem:[%s5 + $0x188] sm:$0xff]
  %v197 = vld [vmem:[%s5 + $0x190] sm:$0xff]
  %v198 = vld [vmem:[%s5 + $0x198] sm:$0xff]
  %v199 = vld [vmem:[%s5 + $0x1a0] sm:$0xff]
  %v200 = vld [vmem:[%s5 + $0x1a8] sm:$0xff]
  %v201 = vld [vmem:[%s5 + $0x1b0] sm:$0xff]
  %v202 = vld [vmem:[%s5 + $0x1b8] sm:$0xff]
  %v203 = vld [vmem:[%s5 + $0x1c0] sm:$0xff]
  %v204 = vld [vmem:[%s5 + $0x1c8] sm:$0xff]
  %v205 = vld [vmem:[%s5 + $0x1d0] sm:$0xff]
  %v206 = vld [vmem:[%s5 + $0x1d8] sm:$0xff]
  %v207 = vld [vmem:[%s5 + $0x1e0] sm:$0xff]
  %v208 = vld [vmem:[%s5 + $0x1e8] sm:$0xff]
  %v209 = vld [vmem:[%s5 + $0x1f0] sm:$0xff]
  %v210 = vld [vmem:[%s5 + $0x1f8] sm:$0xff]
  %211 = vmatprep.subr.mxu0 0.0
  %212 = vmatpush1.msra.mxu0 %v162
  %213 = vmatprep.subr.mxu0 0.0
  %214 = vmatpush1.msra.mxu0 %v161
  %215 = vmatprep.subr.mxu0 0.0
  %216 = vmatpush1.msra.mxu0 %v160
  %217 = vmatprep.subr.mxu0 0.0
  %218 = vmatpush1.msra.mxu0 %v159
  %219 = vmatprep.subr.mxu0 0.0
  %220 = vmatpush1.msra.mxu0 %v158
  %221 = vmatprep.subr.mxu0 0.0
  %222 = vmatpush1.msra.mxu0 %v157
  %223 = vmatprep.subr.mxu0 0.0
  %224 = vmatpush1.msra.mxu0 %v156
  %225 = vmatprep.subr.mxu0 0.0
  %226 = vmatpush1.msra.mxu0 %v155
  %227 = vmatprep.subr.mxu0 0.0
  %228 = vmatpush1.msra.mxu0 %v154
  %229 = vmatprep.subr.mxu0 0.0
  %230 = vmatpush1.msra.mxu0 %v153
  %231 = vmatprep.subr.mxu0 0.0
  %232 = vmatpush1.msra.mxu0 %v152
  %233 = vmatprep.subr.mxu0 0.0
  %234 = vmatpush1.msra.mxu0 %v151
  %235 = vmatprep.subr.mxu0 0.0
  %236 = vmatpush1.msra.mxu0 %v150
  %237 = vmatprep.subr.mxu0 0.0
  %238 = vmatpush1.msra.mxu0 %v149
  %239 = vmatprep.subr.mxu0 0.0
  %240 = vmatpush1.msra.mxu0 %v148
  %241 = vmatprep.subr.mxu0 0.0
  %242 = vmatpush1.msra.mxu0 %v147
  %243 = vmatprep.subr.mxu0 0.0
  %244 = vmatpush2.msra.mxu0 %v178
  %245 = vmatprep.subr.mxu0 0.0
  %246 = vmatpush2.msra.mxu0 %v177
  %247 = vmatprep.subr.mxu0 0.0
  %248 = vmatpush2.msra.mxu0 %v176
  %249 = vmatprep.subr.mxu0 0.0
  %250 = vmatpush2.msra.mxu0 %v175
  %251 = vmatprep.subr.mxu0 0.0
  %252 = vmatpush2.msra.mxu0 %v174
  %253 = vmatprep.subr.mxu0 0.0
  %254 = vmatpush2.msra.mxu0 %v173
  %255 = vmatprep.subr.mxu0 0.0
  %256 = vmatpush2.msra.mxu0 %v172
  %257 = vmatprep.subr.mxu0 0.0
  %258 = vmatpush2.msra.mxu0 %v171
  %259 = vmatprep.subr.mxu0 0.0
  %260 = vmatpush2.msra.mxu0 %v170
  %261 = vmatprep.subr.mxu0 0.0
  %262 = vmatpush2.msra.mxu0 %v169
  %263 = vmatprep.subr.mxu0 0.0
  %264 = vmatpush2.msra.mxu0 %v168
  %265 = vmatprep.subr.mxu0 0.0
  %266 = vmatpush2.msra.mxu0 %v167
  %267 = vmatprep.subr.mxu0 0.0
  %268 = vmatpush2.msra.mxu0 %v166
  %269 = vmatprep.subr.mxu0 0.0
  %270 = vmatpush2.msra.mxu0 %v165
  %271 = vmatprep.subr.mxu0 0.0
  %272 = vmatpush2.msra.mxu0 %v164
  %273 = vmatprep.subr.mxu0 0.0
  %274 = vmatpush2.msra.mxu0 %v163
  %275 = vmatprep.mubr.f32.mxu0 %v144
  %276 = vmatmul.mubr.f32.gmra.mxu0 %v143
  %v277 = vpop.f32.mrf.mxu0
  %v278 = vadd.f32 0.0, %v277
  %v279 = vpop.f32.mrf.mxu0
  %280 = vdwg.mxu0
  %281 = vmatprep.subr.mxu0 0.0
  %282 = vmatpush1.msra.mxu0 %v194
  %283 = vmatprep.subr.mxu0 0.0
  %284 = vmatpush1.msra.mxu0 %v193
  %285 = vmatprep.subr.mxu0 0.0
  %286 = vmatpush1.msra.mxu0 %v192
  %287 = vmatprep.subr.mxu0 0.0
  %288 = vmatpush1.msra.mxu0 %v191
  %289 = vmatprep.subr.mxu0 0.0
  %290 = vmatpush1.msra.mxu0 %v190
  %291 = vmatprep.subr.mxu0 0.0
  %292 = vmatpush1.msra.mxu0 %v189
  %293 = vmatprep.subr.mxu0 0.0
  %294 = vmatpush1.msra.mxu0 %v188
  %295 = vmatprep.subr.mxu0 0.0
  %296 = vmatpush1.msra.mxu0 %v187
  %297 = vmatprep.subr.mxu0 0.0
  %298 = vmatpush1.msra.mxu0 %v186
  %299 = vmatprep.subr.mxu0 0.0
  %300 = vmatpush1.msra.mxu0 %v185
  %301 = vmatprep.subr.mxu0 0.0
  %302 = vmatpush1.msra.mxu0 %v184
  %303 = vmatprep.subr.mxu0 0.0
  %304 = vmatpush1.msra.mxu0 %v183
  %305 = vmatprep.subr.mxu0 0.0
  %306 = vmatpush1.msra.mxu0 %v182
  %307 = vmatprep.subr.mxu0 0.0
  %308 = vmatpush1.msra.mxu0 %v181
  %309 = vmatprep.subr.mxu0 0.0
  %310 = vmatpush1.msra.mxu0 %v180
  %311 = vmatprep.subr.mxu0 0.0
  %312 = vmatpush1.msra.mxu0 %v179
  %313 = vmatprep.subr.mxu0 0.0
  %314 = vmatpush2.msra.mxu0 %v210
  %315 = vmatprep.subr.mxu0 0.0
  %316 = vmatpush2.msra.mxu0 %v209
  %317 = vmatprep.subr.mxu0 0.0
  %318 = vmatpush2.msra.mxu0 %v208
  %319 = vmatprep.subr.mxu0 0.0
  %320 = vmatpush2.msra.mxu0 %v207
  %321 = vmatprep.subr.mxu0 0.0
  %322 = vmatpush2.msra.mxu0 %v206
  %323 = vmatprep.subr.mxu0 0.0
  %324 = vmatpush2.msra.mxu0 %v205
  %325 = vmatprep.subr.mxu0 0.0
  %326 = vmatpush2.msra.mxu0 %v204
  %327 = vmatprep.subr.mxu0 0.0
  %328 = vmatpush2.msra.mxu0 %v203
  %329 = vmatprep.subr.mxu0 0.0
  %330 = vmatpush2.msra.mxu0 %v202
  %331 = vmatprep.subr.mxu0 0.0
  %332 = vmatpush2.msra.mxu0 %v201
  %333 = vmatprep.subr.mxu0 0.0
  %334 = vmatpush2.msra.mxu0 %v200
  %335 = vmatprep.subr.mxu0 0.0
  %336 = vmatpush2.msra.mxu0 %v199
  %337 = vmatprep.subr.mxu0 0.0
  %338 = vmatpush2.msra.mxu0 %v198
  %339 = vmatprep.subr.mxu0 0.0
  %340 = vmatpush2.msra.mxu0 %v197
  %341 = vmatprep.subr.mxu0 0.0
  %342 = vmatpush2.msra.mxu0 %v196
  %343 = vmatprep.subr.mxu0 0.0
  %344 = vmatpush2.msra.mxu0 %v195
  %345 = vmatprep.mubr.f32.mxu0 %v146
  %346 = vmatmul.mubr.f32.gmra.mxu0 %v145
  %v347 = vpop.f32.mrf.mxu0
  %v348 = vadd.f32 %v278, %v347
  %v349 = vpop.f32.mrf.mxu0
  %350 = vdwg.mxu0
  %v351 = vld [vmem:[%s2] sm:$0xff]
  %v352 = vld [vmem:[%s2 + $0x8] sm:$0xff]
  %v353 = vld [vmem:[%s2 + $0x10] sm:$0xff]
  %v354 = vld [vmem:[%s2 + $0x18] sm:$0xff]
  %v355 = vld [vmem:[%s6] sm:$0xff]
  %v356 = vld [vmem:[%s6 + $0x8] sm:$0xff]
  %v357 = vld [vmem:[%s6 + $0x10] sm:$0xff]
  %v358 = vld [vmem:[%s6 + $0x18] sm:$0xff]
  %v359 = vld [vmem:[%s6 + $0x20] sm:$0xff]
  %v360 = vld [vmem:[%s6 + $0x28] sm:$0xff]
  %v361 = vld [vmem:[%s6 + $0x30] sm:$0xff]
  %v362 = vld [vmem:[%s6 + $0x38] sm:$0xff]
  %v363 = vld [vmem:[%s6 + $0x40] sm:$0xff]
  %v364 = vld [vmem:[%s6 + $0x48] sm:$0xff]
  %v365 = vld [vmem:[%s6 + $0x50] sm:$0xff]
  %v366 = vld [vmem:[%s6 + $0x58] sm:$0xff]
  %v367 = vld [vmem:[%s6 + $0x60] sm:$0xff]
  %v368 = vld [vmem:[%s6 + $0x68] sm:$0xff]
  %v369 = vld [vmem:[%s6 + $0x70] sm:$0xff]
  %v370 = vld [vmem:[%s6 + $0x78] sm:$0xff]
  %v371 = vld [vmem:[%s6 + $0x80] sm:$0xff]
  %v372 = vld [vmem:[%s6 + $0x88] sm:$0xff]
  %v373 = vld [vmem:[%s6 + $0x90] sm:$0xff]
  %v374 = vld [vmem:[%s6 + $0x98] sm:$0xff]
  %v375 = vld [vmem:[%s6 + $0xa0] sm:$0xff]
  %v376 = vld [vmem:[%s6 + $0xa8] sm:$0xff]
  %v377 = vld [vmem:[%s6 + $0xb0] sm:$0xff]
  %v378 = vld [vmem:[%s6 + $0xb8] sm:$0xff]
  %v379 = vld [vmem:[%s6 + $0xc0] sm:$0xff]
  %v380 = vld [vmem:[%s6 + $0xc8] sm:$0xff]
  %v381 = vld [vmem:[%s6 + $0xd0] sm:$0xff]
  %v382 = vld [vmem:[%s6 + $0xd8] sm:$0xff]
  %v383 = vld [vmem:[%s6 + $0xe0] sm:$0xff]
  %v384 = vld [vmem:[%s6 + $0xe8] sm:$0xff]
  %v385 = vld [vmem:[%s6 + $0xf0] sm:$0xff]
  %v386 = vld [vmem:[%s6 + $0xf8] sm:$0xff]
  %v387 = vld [vmem:[%s6 + $0x100] sm:$0xff]
  %v388 = vld [vmem:[%s6 + $0x108] sm:$0xff]
  %v389 = vld [vmem:[%s6 + $0x110] sm:$0xff]
  %v390 = vld [vmem:[%s6 + $0x118] sm:$0xff]
  %v391 = vld [vmem:[%s6 + $0x120] sm:$0xff]
  %v392 = vld [vmem:[%s6 + $0x128] sm:$0xff]
  %v393 = vld [vmem:[%s6 + $0x130] sm:$0xff]
  %v394 = vld [vmem:[%s6 + $0x138] sm:$0xff]
  %v395 = vld [vmem:[%s6 + $0x140] sm:$0xff]
  %v396 = vld [vmem:[%s6 + $0x148] sm:$0xff]
  %v397 = vld [vmem:[%s6 + $0x150] sm:$0xff]
  %v398 = vld [vmem:[%s6 + $0x158] sm:$0xff]
  %v399 = vld [vmem:[%s6 + $0x160] sm:$0xff]
  %v400 = vld [vmem:[%s6 + $0x168] sm:$0xff]
  %v401 = vld [vmem:[%s6 + $0x170] sm:$0xff]
  %v402 = vld [vmem:[%s6 + $0x178] sm:$0xff]
  %v403 = vld [vmem:[%s6 + $0x180] sm:$0xff]
  %v404 = vld [vmem:[%s6 + $0x188] sm:$0xff]
  %v405 = vld [vmem:[%s6 + $0x190] sm:$0xff]
  %v406 = vld [vmem:[%s6 + $0x198] sm:$0xff]
  %v407 = vld [vmem:[%s6 + $0x1a0] sm:$0xff]
  %v408 = vld [vmem:[%s6 + $0x1a8] sm:$0xff]
  %v409 = vld [vmem:[%s6 + $0x1b0] sm:$0xff]
  %v410 = vld [vmem:[%s6 + $0x1b8] sm:$0xff]
  %v411 = vld [vmem:[%s6 + $0x1c0] sm:$0xff]
  %v412 = vld [vmem:[%s6 + $0x1c8] sm:$0xff]
  %v413 = vld [vmem:[%s6 + $0x1d0] sm:$0xff]
  %v414 = vld [vmem:[%s6 + $0x1d8] sm:$0xff]
  %v415 = vld [vmem:[%s6 + $0x1e0] sm:$0xff]
  %v416 = vld [vmem:[%s6 + $0x1e8] sm:$0xff]
  %v417 = vld [vmem:[%s6 + $0x1f0] sm:$0xff]
  %v418 = vld [vmem:[%s6 + $0x1f8] sm:$0xff]
  %419 = vmatprep.subr.mxu0 0.0
  %420 = vmatpush1.msra.mxu0 %v370
  %421 = vmatprep.subr.mxu0 0.0
  %422 = vmatpush1.msra.mxu0 %v369
  %423 = vmatprep.subr.mxu0 0.0
  %424 = vmatpush1.msra.mxu0 %v368
  %425 = vmatprep.subr.mxu0 0.0
  %426 = vmatpush1.msra.mxu0 %v367
  %427 = vmatprep.subr.mxu0 0.0
  %428 = vmatpush1.msra.mxu0 %v366
  %429 = vmatprep.subr.mxu0 0.0
  %430 = vmatpush1.msra.mxu0 %v365
  %431 = vmatprep.subr.mxu0 0.0
  %432 = vmatpush1.msra.mxu0 %v364
  %433 = vmatprep.subr.mxu0 0.0
  %434 = vmatpush1.msra.mxu0 %v363
  %435 = vmatprep.subr.mxu0 0.0
  %436 = vmatpush1.msra.mxu0 %v362
  %437 = vmatprep.subr.mxu0 0.0
  %438 = vmatpush1.msra.mxu0 %v361
  %439 = vmatprep.subr.mxu0 0.0
  %440 = vmatpush1.msra.mxu0 %v360
  %441 = vmatprep.subr.mxu0 0.0
  %442 = vmatpush1.msra.mxu0 %v359
  %443 = vmatprep.subr.mxu0 0.0
  %444 = vmatpush1.msra.mxu0 %v358
  %445 = vmatprep.subr.mxu0 0.0
  %446 = vmatpush1.msra.mxu0 %v357
  %447 = vmatprep.subr.mxu0 0.0
  %448 = vmatpush1.msra.mxu0 %v356
  %449 = vmatprep.subr.mxu0 0.0
  %450 = vmatpush1.msra.mxu0 %v355
  %451 = vmatprep.subr.mxu0 0.0
  %452 = vmatpush2.msra.mxu0 %v386
  %453 = vmatprep.subr.mxu0 0.0
  %454 = vmatpush2.msra.mxu0 %v385
  %455 = vmatprep.subr.mxu0 0.0
  %456 = vmatpush2.msra.mxu0 %v384
  %457 = vmatprep.subr.mxu0 0.0
  %458 = vmatpush2.msra.mxu0 %v383
  %459 = vmatprep.subr.mxu0 0.0
  %460 = vmatpush2.msra.mxu0 %v382
  %461 = vmatprep.subr.mxu0 0.0
  %462 = vmatpush2.msra.mxu0 %v381
  %463 = vmatprep.subr.mxu0 0.0
  %464 = vmatpush2.msra.mxu0 %v380
  %465 = vmatprep.subr.mxu0 0.0
  %466 = vmatpush2.msra.mxu0 %v379
  %467 = vmatprep.subr.mxu0 0.0
  %468 = vmatpush2.msra.mxu0 %v378
  %469 = vmatprep.subr.mxu0 0.0
  %470 = vmatpush2.msra.mxu0 %v377
  %471 = vmatprep.subr.mxu0 0.0
  %472 = vmatpush2.msra.mxu0 %v376
  %473 = vmatprep.subr.mxu0 0.0
  %474 = vmatpush2.msra.mxu0 %v375
  %475 = vmatprep.subr.mxu0 0.0
  %476 = vmatpush2.msra.mxu0 %v374
  %477 = vmatprep.subr.mxu0 0.0
  %478 = vmatpush2.msra.mxu0 %v373
  %479 = vmatprep.subr.mxu0 0.0
  %480 = vmatpush2.msra.mxu0 %v372
  %481 = vmatprep.subr.mxu0 0.0
  %482 = vmatpush2.msra.mxu0 %v371
  %483 = vmatprep.mubr.f32.mxu0 %v352
  %484 = vmatmul.mubr.f32.gmra.mxu0 %v351
  %v485 = vpop.f32.mrf.mxu0
  %v486 = vadd.f32 0.0, %v485
  %v487 = vpop.f32.mrf.mxu0
  %488 = vdwg.mxu0
  %489 = vmatprep.subr.mxu0 0.0
  %490 = vmatpush1.msra.mxu0 %v402
  %491 = vmatprep.subr.mxu0 0.0
  %492 = vmatpush1.msra.mxu0 %v401
  %493 = vmatprep.subr.mxu0 0.0
  %494 = vmatpush1.msra.mxu0 %v400
  %495 = vmatprep.subr.mxu0 0.0
  %496 = vmatpush1.msra.mxu0 %v399
  %497 = vmatprep.subr.mxu0 0.0
  %498 = vmatpush1.msra.mxu0 %v398
  %499 = vmatprep.subr.mxu0 0.0
  %500 = vmatpush1.msra.mxu0 %v397
  %501 = vmatprep.subr.mxu0 0.0
  %502 = vmatpush1.msra.mxu0 %v396
  %503 = vmatprep.subr.mxu0 0.0
  %504 = vmatpush1.msra.mxu0 %v395
  %505 = vmatprep.subr.mxu0 0.0
  %506 = vmatpush1.msra.mxu0 %v394
  %507 = vmatprep.subr.mxu0 0.0
  %508 = vmatpush1.msra.mxu0 %v393
  %509 = vmatprep.subr.mxu0 0.0
  %510 = vmatpush1.msra.mxu0 %v392
  %511 = vmatprep.subr.mxu0 0.0
  %512 = vmatpush1.msra.mxu0 %v391
  %513 = vmatprep.subr.mxu0 0.0
  %514 = vmatpush1.msra.mxu0 %v390
  %515 = vmatprep.subr.mxu0 0.0
  %516 = vmatpush1.msra.mxu0 %v389
  %517 = vmatprep.subr.mxu0 0.0
  %518 = vmatpush1.msra.mxu0 %v388
  %519 = vmatprep.subr.mxu0 0.0
  %520 = vmatpush1.msra.mxu0 %v387
  %521 = vmatprep.subr.mxu0 0.0
  %522 = vmatpush2.msra.mxu0 %v418
  %523 = vmatprep.subr.mxu0 0.0
  %524 = vmatpush2.msra.mxu0 %v417
  %525 = vmatprep.subr.mxu0 0.0
  %526 = vmatpush2.msra.mxu0 %v416
  %527 = vmatprep.subr.mxu0 0.0
  %528 = vmatpush2.msra.mxu0 %v415
  %529 = vmatprep.subr.mxu0 0.0
  %530 = vmatpush2.msra.mxu0 %v414
  %531 = vmatprep.subr.mxu0 0.0
  %532 = vmatpush2.msra.mxu0 %v413
  %533 = vmatprep.subr.mxu0 0.0
  %534 = vmatpush2.msra.mxu0 %v412
  %535 = vmatprep.subr.mxu0 0.0
  %536 = vmatpush2.msra.mxu0 %v411
  %537 = vmatprep.subr.mxu0 0.0
  %538 = vmatpush2.msra.mxu0 %v410
  %539 = vmatprep.subr.mxu0 0.0
  %540 = vmatpush2.msra.mxu0 %v409
  %541 = vmatprep.subr.mxu0 0.0
  %542 = vmatpush2.msra.mxu0 %v408
  %543 = vmatprep.subr.mxu0 0.0
  %544 = vmatpush2.msra.mxu0 %v407
  %545 = vmatprep.subr.mxu0 0.0
  %546 = vmatpush2.msra.mxu0 %v406
  %547 = vmatprep.subr.mxu0 0.0
  %548 = vmatpush2.msra.mxu0 %v405
  %549 = vmatprep.subr.mxu0 0.0
  %550 = vmatpush2.msra.mxu0 %v404
  %551 = vmatprep.subr.mxu0 0.0
  %552 = vmatpush2.msra.mxu0 %v403
  %553 = vmatprep.mubr.f32.mxu0 %v354
  %554 = vmatmul.mubr.f32.gmra.mxu0 %v353
  %v555 = vpop.f32.mrf.mxu0
  %v556 = vadd.f32 %v486, %v555
  %v557 = vpop.f32.mrf.mxu0
  %558 = vdwg.mxu0
  %v559 = vld [vmem:[%s3] sm:$0xff]
  %v560 = vld [vmem:[%s3 + $0x8] sm:$0xff]
  %v561 = vld [vmem:[%s3 + $0x10] sm:$0xff]
  %v562 = vld [vmem:[%s3 + $0x18] sm:$0xff]
  %v563 = vld [vmem:[%s3 + $0x20] sm:$0xff]
  %v564 = vld [vmem:[%s3 + $0x28] sm:$0xff]
  %v565 = vld [vmem:[%s3 + $0x30] sm:$0xff]
  %v566 = vld [vmem:[%s3 + $0x38] sm:$0xff]
  %v567 = vld [vmem:[%s7] sm:$0xff]
  %v568 = vld [vmem:[%s7 + $0x8] sm:$0xff]
  %v569 = vld [vmem:[%s7 + $0x10] sm:$0xff]
  %v570 = vld [vmem:[%s7 + $0x18] sm:$0xff]
  %v571 = vld [vmem:[%s7 + $0x20] sm:$0xff]
  %v572 = vld [vmem:[%s7 + $0x28] sm:$0xff]
  %v573 = vld [vmem:[%s7 + $0x30] sm:$0xff]
  %v574 = vld [vmem:[%s7 + $0x38] sm:$0xff]
  %v575 = vld [vmem:[%s7 + $0x40] sm:$0xff]
  %v576 = vld [vmem:[%s7 + $0x48] sm:$0xff]
  %v577 = vld [vmem:[%s7 + $0x50] sm:$0xff]
  %v578 = vld [vmem:[%s7 + $0x58] sm:$0xff]
  %v579 = vld [vmem:[%s7 + $0x60] sm:$0xff]
  %v580 = vld [vmem:[%s7 + $0x68] sm:$0xff]
  %v581 = vld [vmem:[%s7 + $0x70] sm:$0xff]
  %v582 = vld [vmem:[%s7 + $0x78] sm:$0xff]
  %v583 = vld [vmem:[%s7 + $0x80] sm:$0xff]
  %v584 = vld [vmem:[%s7 + $0x88] sm:$0xff]
  %v585 = vld [vmem:[%s7 + $0x90] sm:$0xff]
  %v586 = vld [vmem:[%s7 + $0x98] sm:$0xff]
  %v587 = vld [vmem:[%s7 + $0xa0] sm:$0xff]
  %v588 = vld [vmem:[%s7 + $0xa8] sm:$0xff]
  %v589 = vld [vmem:[%s7 + $0xb0] sm:$0xff]
  %v590 = vld [vmem:[%s7 + $0xb8] sm:$0xff]
  %v591 = vld [vmem:[%s7 + $0xc0] sm:$0xff]
  %v592 = vld [vmem:[%s7 + $0xc8] sm:$0xff]
  %v593 = vld [vmem:[%s7 + $0xd0] sm:$0xff]
  %v594 = vld [vmem:[%s7 + $0xd8] sm:$0xff]
  %v595 = vld [vmem:[%s7 + $0xe0] sm:$0xff]
  %v596 = vld [vmem:[%s7 + $0xe8] sm:$0xff]
  %v597 = vld [vmem:[%s7 + $0xf0] sm:$0xff]
  %v598 = vld [vmem:[%s7 + $0xf8] sm:$0xff]
  %v599 = vld [vmem:[%s7 + $0x100] sm:$0xff]
  %v600 = vld [vmem:[%s7 + $0x108] sm:$0xff]
  %v601 = vld [vmem:[%s7 + $0x110] sm:$0xff]
  %v602 = vld [vmem:[%s7 + $0x118] sm:$0xff]
  %v603 = vld [vmem:[%s7 + $0x120] sm:$0xff]
  %v604 = vld [vmem:[%s7 + $0x128] sm:$0xff]
  %v605 = vld [vmem:[%s7 + $0x130] sm:$0xff]
  %v606 = vld [vmem:[%s7 + $0x138] sm:$0xff]
  %v607 = vld [vmem:[%s7 + $0x140] sm:$0xff]
  %v608 = vld [vmem:[%s7 + $0x148] sm:$0xff]
  %v609 = vld [vmem:[%s7 + $0x150] sm:$0xff]
  %v610 = vld [vmem:[%s7 + $0x158] sm:$0xff]
  %v611 = vld [vmem:[%s7 + $0x160] sm:$0xff]
  %v612 = vld [vmem:[%s7 + $0x168] sm:$0xff]
  %v613 = vld [vmem:[%s7 + $0x170] sm:$0xff]
  %v614 = vld [vmem:[%s7 + $0x178] sm:$0xff]
  %v615 = vld [vmem:[%s7 + $0x180] sm:$0xff]
  %v616 = vld [vmem:[%s7 + $0x188] sm:$0xff]
  %v617 = vld [vmem:[%s7 + $0x190] sm:$0xff]
  %v618 = vld [vmem:[%s7 + $0x198] sm:$0xff]
  %v619 = vld [vmem:[%s7 + $0x1a0] sm:$0xff]
  %v620 = vld [vmem:[%s7 + $0x1a8] sm:$0xff]
  %v621 = vld [vmem:[%s7 + $0x1b0] sm:$0xff]
  %v622 = vld [vmem:[%s7 + $0x1b8] sm:$0xff]
  %v623 = vld [vmem:[%s7 + $0x1c0] sm:$0xff]
  %v624 = vld [vmem:[%s7 + $0x1c8] sm:$0xff]
  %v625 = vld [vmem:[%s7 + $0x1d0] sm:$0xff]
  %v626 = vld [vmem:[%s7 + $0x1d8] sm:$0xff]
  %v627 = vld [vmem:[%s7 + $0x1e0] sm:$0xff]
  %v628 = vld [vmem:[%s7 + $0x1e8] sm:$0xff]
  %v629 = vld [vmem:[%s7 + $0x1f0] sm:$0xff]
  %v630 = vld [vmem:[%s7 + $0x1f8] sm:$0xff]
  %v631 = vld [vmem:[%s7 + $0x200] sm:$0xff]
  %v632 = vld [vmem:[%s7 + $0x208] sm:$0xff]
  %v633 = vld [vmem:[%s7 + $0x210] sm:$0xff]
  %v634 = vld [vmem:[%s7 + $0x218] sm:$0xff]
  %v635 = vld [vmem:[%s7 + $0x220] sm:$0xff]
  %v636 = vld [vmem:[%s7 + $0x228] sm:$0xff]
  %v637 = vld [vmem:[%s7 + $0x230] sm:$0xff]
  %v638 = vld [vmem:[%s7 + $0x238] sm:$0xff]
  %v639 = vld [vmem:[%s7 + $0x240] sm:$0xff]
  %v640 = vld [vmem:[%s7 + $0x248] sm:$0xff]
  %v641 = vld [vmem:[%s7 + $0x250] sm:$0xff]
  %v642 = vld [vmem:[%s7 + $0x258] sm:$0xff]
  %v643 = vld [vmem:[%s7 + $0x260] sm:$0xff]
  %v644 = vld [vmem:[%s7 + $0x268] sm:$0xff]
  %v645 = vld [vmem:[%s7 + $0x270] sm:$0xff]
  %v646 = vld [vmem:[%s7 + $0x278] sm:$0xff]
  %v647 = vld [vmem:[%s7 + $0x280] sm:$0xff]
  %v648 = vld [vmem:[%s7 + $0x288] sm:$0xff]
  %v649 = vld [vmem:[%s7 + $0x290] sm:$0xff]
  %v650 = vld [vmem:[%s7 + $0x298] sm:$0xff]
  %v651 = vld [vmem:[%s7 + $0x2a0] sm:$0xff]
  %v652 = vld [vmem:[%s7 + $0x2a8] sm:$0xff]
  %v653 = vld [vmem:[%s7 + $0x2b0] sm:$0xff]
  %v654 = vld [vmem:[%s7 + $0x2b8] sm:$0xff]
  %v655 = vld [vmem:[%s7 + $0x2c0] sm:$0xff]
  %v656 = vld [vmem:[%s7 + $0x2c8] sm:$0xff]
  %v657 = vld [vmem:[%s7 + $0x2d0] sm:$0xff]
  %v658 = vld [vmem:[%s7 + $0x2d8] sm:$0xff]
  %v659 = vld [vmem:[%s7 + $0x2e0] sm:$0xff]
  %v660 = vld [vmem:[%s7 + $0x2e8] sm:$0xff]
  %v661 = vld [vmem:[%s7 + $0x2f0] sm:$0xff]
  %v662 = vld [vmem:[%s7 + $0x2f8] sm:$0xff]
  %v663 = vld [vmem:[%s7 + $0x300] sm:$0xff]
  %v664 = vld [vmem:[%s7 + $0x308] sm:$0xff]
  %v665 = vld [vmem:[%s7 + $0x310] sm:$0xff]
  %v666 = vld [vmem:[%s7 + $0x318] sm:$0xff]
  %v667 = vld [vmem:[%s7 + $0x320] sm:$0xff]
  %v668 = vld [vmem:[%s7 + $0x328] sm:$0xff]
  %v669 = vld [vmem:[%s7 + $0x330] sm:$0xff]
  %v670 = vld [vmem:[%s7 + $0x338] sm:$0xff]
  %v671 = vld [vmem:[%s7 + $0x340] sm:$0xff]
  %v672 = vld [vmem:[%s7 + $0x348] sm:$0xff]
  %v673 = vld [vmem:[%s7 + $0x350] sm:$0xff]
  %v674 = vld [vmem:[%s7 + $0x358] sm:$0xff]
  %v675 = vld [vmem:[%s7 + $0x360] sm:$0xff]
  %v676 = vld [vmem:[%s7 + $0x368] sm:$0xff]
  %v677 = vld [vmem:[%s7 + $0x370] sm:$0xff]
  %v678 = vld [vmem:[%s7 + $0x378] sm:$0xff]
  %v679 = vld [vmem:[%s7 + $0x380] sm:$0xff]
  %v680 = vld [vmem:[%s7 + $0x388] sm:$0xff]
  %v681 = vld [vmem:[%s7 + $0x390] sm:$0xff]
  %v682 = vld [vmem:[%s7 + $0x398] sm:$0xff]
  %v683 = vld [vmem:[%s7 + $0x3a0] sm:$0xff]
  %v684 = vld [vmem:[%s7 + $0x3a8] sm:$0xff]
  %v685 = vld [vmem:[%s7 + $0x3b0] sm:$0xff]
  %v686 = vld [vmem:[%s7 + $0x3b8] sm:$0xff]
  %v687 = vld [vmem:[%s7 + $0x3c0] sm:$0xff]
  %v688 = vld [vmem:[%s7 + $0x3c8] sm:$0xff]
  %v689 = vld [vmem:[%s7 + $0x3d0] sm:$0xff]
  %v690 = vld [vmem:[%s7 + $0x3d8] sm:$0xff]
  %v691 = vld [vmem:[%s7 + $0x3e0] sm:$0xff]
  %v692 = vld [vmem:[%s7 + $0x3e8] sm:$0xff]
  %v693 = vld [vmem:[%s7 + $0x3f0] sm:$0xff]
  %v694 = vld [vmem:[%s7 + $0x3f8] sm:$0xff]
  %695 = vmatprep.subr.mxu0 0.0
  %696 = vmatpush1.msra.mxu0 %v582
  %697 = vmatprep.subr.mxu0 0.0
  %698 = vmatpush1.msra.mxu0 %v581
  %699 = vmatprep.subr.mxu0 0.0
  %700 = vmatpush1.msra.mxu0 %v580
  %701 = vmatprep.subr.mxu0 0.0
  %702 = vmatpush1.msra.mxu0 %v579
  %703 = vmatprep.subr.mxu0 0.0
  %704 = vmatpush1.msra.mxu0 %v578
  %705 = vmatprep.subr.mxu0 0.0
  %706 = vmatpush1.msra.mxu0 %v577
  %707 = vmatprep.subr.mxu0 0.0
  %708 = vmatpush1.msra.mxu0 %v576
  %709 = vmatprep.subr.mxu0 0.0
  %710 = vmatpush1.msra.mxu0 %v575
  %711 = vmatprep.subr.mxu0 0.0
  %712 = vmatpush1.msra.mxu0 %v574
  %713 = vmatprep.subr.mxu0 0.0
  %714 = vmatpush1.msra.mxu0 %v573
  %715 = vmatprep.subr.mxu0 0.0
  %716 = vmatpush1.msra.mxu0 %v572
  %717 = vmatprep.subr.mxu0 0.0
  %718 = vmatpush1.msra.mxu0 %v571
  %719 = vmatprep.subr.mxu0 0.0
  %720 = vmatpush1.msra.mxu0 %v570
  %721 = vmatprep.subr.mxu0 0.0
  %722 = vmatpush1.msra.mxu0 %v569
  %723 = vmatprep.subr.mxu0 0.0
  %724 = vmatpush1.msra.mxu0 %v568
  %725 = vmatprep.subr.mxu0 0.0
  %726 = vmatpush1.msra.mxu0 %v567
  %727 = vmatprep.subr.mxu0 0.0
  %728 = vmatpush2.msra.mxu0 %v598
  %729 = vmatprep.subr.mxu0 0.0
  %730 = vmatpush2.msra.mxu0 %v597
  %731 = vmatprep.subr.mxu0 0.0
  %732 = vmatpush2.msra.mxu0 %v596
  %733 = vmatprep.subr.mxu0 0.0
  %734 = vmatpush2.msra.mxu0 %v595
  %735 = vmatprep.subr.mxu0 0.0
  %736 = vmatpush2.msra.mxu0 %v594
  %737 = vmatprep.subr.mxu0 0.0
  %738 = vmatpush2.msra.mxu0 %v593
  %739 = vmatprep.subr.mxu0 0.0
  %740 = vmatpush2.msra.mxu0 %v592
  %741 = vmatprep.subr.mxu0 0.0
  %742 = vmatpush2.msra.mxu0 %v591
  %743 = vmatprep.subr.mxu0 0.0
  %744 = vmatpush2.msra.mxu0 %v590
  %745 = vmatprep.subr.mxu0 0.0
  %746 = vmatpush2.msra.mxu0 %v589
  %747 = vmatprep.subr.mxu0 0.0
  %748 = vmatpush2.msra.mxu0 %v588
  %749 = vmatprep.subr.mxu0 0.0
  %750 = vmatpush2.msra.mxu0 %v587
  %751 = vmatprep.subr.mxu0 0.0
  %752 = vmatpush2.msra.mxu0 %v586
  %753 = vmatprep.subr.mxu0 0.0
  %754 = vmatpush2.msra.mxu0 %v585
  %755 = vmatprep.subr.mxu0 0.0
  %756 = vmatpush2.msra.mxu0 %v584
  %757 = vmatprep.subr.mxu0 0.0
  %758 = vmatpush2.msra.mxu0 %v583
  %759 = vmatprep.mubr.f32.mxu0 %v560
  %760 = vmatmul.mubr.f32.gmra.mxu0 %v559
  %v761 = vpop.f32.mrf.mxu0
  %v762 = vadd.f32 0.0, %v761
  %v763 = vpop.f32.mrf.mxu0
  %764 = vdwg.mxu0
  %765 = vmatprep.subr.mxu0 0.0
  %766 = vmatpush1.msra.mxu0 %v614
  %767 = vmatprep.subr.mxu0 0.0
  %768 = vmatpush1.msra.mxu0 %v613
  %769 = vmatprep.subr.mxu0 0.0
  %770 = vmatpush1.msra.mxu0 %v612
  %771 = vmatprep.subr.mxu0 0.0
  %772 = vmatpush1.msra.mxu0 %v611
  %773 = vmatprep.subr.mxu0 0.0
  %774 = vmatpush1.msra.mxu0 %v610
  %775 = vmatprep.subr.mxu0 0.0
  %776 = vmatpush1.msra.mxu0 %v609
  %777 = vmatprep.subr.mxu0 0.0
  %778 = vmatpush1.msra.mxu0 %v608
  %779 = vmatprep.subr.mxu0 0.0
  %780 = vmatpush1.msra.mxu0 %v607
  %781 = vmatprep.subr.mxu0 0.0
  %782 = vmatpush1.msra.mxu0 %v606
  %783 = vmatprep.subr.mxu0 0.0
  %784 = vmatpush1.msra.mxu0 %v605
  %785 = vmatprep.subr.mxu0 0.0
  %786 = vmatpush1.msra.mxu0 %v604
  %787 = vmatprep.subr.mxu0 0.0
  %788 = vmatpush1.msra.mxu0 %v603
  %789 = vmatprep.subr.mxu0 0.0
  %790 = vmatpush1.msra.mxu0 %v602
  %791 = vmatprep.subr.mxu0 0.0
  %792 = vmatpush1.msra.mxu0 %v601
  %793 = vmatprep.subr.mxu0 0.0
  %794 = vmatpush1.msra.mxu0 %v600
  %795 = vmatprep.subr.mxu0 0.0
  %796 = vmatpush1.msra.mxu0 %v599
  %797 = vmatprep.subr.mxu0 0.0
  %798 = vmatpush2.msra.mxu0 %v630
  %799 = vmatprep.subr.mxu0 0.0
  %800 = vmatpush2.msra.mxu0 %v629
  %801 = vmatprep.subr.mxu0 0.0
  %802 = vmatpush2.msra.mxu0 %v628
  %803 = vmatprep.subr.mxu0 0.0
  %804 = vmatpush2.msra.mxu0 %v627
  %805 = vmatprep.subr.mxu0 0.0
  %806 = vmatpush2.msra.mxu0 %v626
  %807 = vmatprep.subr.mxu0 0.0
  %808 = vmatpush2.msra.mxu0 %v625
  %809 = vmatprep.subr.mxu0 0.0
  %810 = vmatpush2.msra.mxu0 %v624
  %811 = vmatprep.subr.mxu0 0.0
  %812 = vmatpush2.msra.mxu0 %v623
  %813 = vmatprep.subr.mxu0 0.0
  %814 = vmatpush2.msra.mxu0 %v622
  %815 = vmatprep.subr.mxu0 0.0
  %816 = vmatpush2.msra.mxu0 %v621
  %817 = vmatprep.subr.mxu0 0.0
  %818 = vmatpush2.msra.mxu0 %v620
  %819 = vmatprep.subr.mxu0 0.0
  %820 = vmatpush2.msra.mxu0 %v619
  %821 = vmatprep.subr.mxu0 0.0
  %822 = vmatpush2.msra.mxu0 %v618
  %823 = vmatprep.subr.mxu0 0.0
  %824 = vmatpush2.msra.mxu0 %v617
  %825 = vmatprep.subr.mxu0 0.0
  %826 = vmatpush2.msra.mxu0 %v616
  %827 = vmatprep.subr.mxu0 0.0
  %828 = vmatpush2.msra.mxu0 %v615
  %829 = vmatprep.mubr.f32.mxu0 %v562
  %830 = vmatmul.mubr.f32.gmra.mxu0 %v561
  %v831 = vpop.f32.mrf.mxu0
  %v832 = vadd.f32 %v762, %v831
  %v833 = vpop.f32.mrf.mxu0
  %834 = vdwg.mxu0
  %835 = vmatprep.subr.mxu0 0.0
  %836 = vmatpush1.msra.mxu0 %v646
  %837 = vmatprep.subr.mxu0 0.0
  %838 = vmatpush1.msra.mxu0 %v645
  %839 = vmatprep.subr.mxu0 0.0
  %840 = vmatpush1.msra.mxu0 %v644
  %841 = vmatprep.subr.mxu0 0.0
  %842 = vmatpush1.msra.mxu0 %v643
  %843 = vmatprep.subr.mxu0 0.0
  %844 = vmatpush1.msra.mxu0 %v642
  %845 = vmatprep.subr.mxu0 0.0
  %846 = vmatpush1.msra.mxu0 %v641
  %847 = vmatprep.subr.mxu0 0.0
  %848 = vmatpush1.msra.mxu0 %v640
  %849 = vmatprep.subr.mxu0 0.0
  %850 = vmatpush1.msra.mxu0 %v639
  %851 = vmatprep.subr.mxu0 0.0
  %852 = vmatpush1.msra.mxu0 %v638
  %853 = vmatprep.subr.mxu0 0.0
  %854 = vmatpush1.msra.mxu0 %v637
  %855 = vmatprep.subr.mxu0 0.0
  %856 = vmatpush1.msra.mxu0 %v636
  %857 = vmatprep.subr.mxu0 0.0
  %858 = vmatpush1.msra.mxu0 %v635
  %859 = vmatprep.subr.mxu0 0.0
  %860 = vmatpush1.msra.mxu0 %v634
  %861 = vmatprep.subr.mxu0 0.0
  %862 = vmatpush1.msra.mxu0 %v633
  %863 = vmatprep.subr.mxu0 0.0
  %864 = vmatpush1.msra.mxu0 %v632
  %865 = vmatprep.subr.mxu0 0.0
  %866 = vmatpush1.msra.mxu0 %v631
  %867 = vmatprep.subr.mxu0 0.0
  %868 = vmatpush2.msra.mxu0 %v662
  %869 = vmatprep.subr.mxu0 0.0
  %870 = vmatpush2.msra.mxu0 %v661
  %871 = vmatprep.subr.mxu0 0.0
  %872 = vmatpush2.msra.mxu0 %v660
  %873 = vmatprep.subr.mxu0 0.0
  %874 = vmatpush2.msra.mxu0 %v659
  %875 = vmatprep.subr.mxu0 0.0
  %876 = vmatpush2.msra.mxu0 %v658
  %877 = vmatprep.subr.mxu0 0.0
  %878 = vmatpush2.msra.mxu0 %v657
  %879 = vmatprep.subr.mxu0 0.0
  %880 = vmatpush2.msra.mxu0 %v656
  %881 = vmatprep.subr.mxu0 0.0
  %882 = vmatpush2.msra.mxu0 %v655
  %883 = vmatprep.subr.mxu0 0.0
  %884 = vmatpush2.msra.mxu0 %v654
  %885 = vmatprep.subr.mxu0 0.0
  %886 = vmatpush2.msra.mxu0 %v653
  %887 = vmatprep.subr.mxu0 0.0
  %888 = vmatpush2.msra.mxu0 %v652
  %889 = vmatprep.subr.mxu0 0.0
  %890 = vmatpush2.msra.mxu0 %v651
  %891 = vmatprep.subr.mxu0 0.0
  %892 = vmatpush2.msra.mxu0 %v650
  %893 = vmatprep.subr.mxu0 0.0
  %894 = vmatpush2.msra.mxu0 %v649
  %895 = vmatprep.subr.mxu0 0.0
  %896 = vmatpush2.msra.mxu0 %v648
  %897 = vmatprep.subr.mxu0 0.0
  %898 = vmatpush2.msra.mxu0 %v647
  %899 = vmatprep.mubr.f32.mxu0 %v564
  %900 = vmatmul.mubr.f32.gmra.mxu0 %v563
  %v901 = vpop.f32.mrf.mxu0
  %v902 = vadd.f32 %v832, %v901
  %v903 = vpop.f32.mrf.mxu0
  %904 = vdwg.mxu0
  %905 = vmatprep.subr.mxu0 0.0
  %906 = vmatpush1.msra.mxu0 %v678
  %907 = vmatprep.subr.mxu0 0.0
  %908 = vmatpush1.msra.mxu0 %v677
  %909 = vmatprep.subr.mxu0 0.0
  %910 = vmatpush1.msra.mxu0 %v676
  %911 = vmatprep.subr.mxu0 0.0
  %912 = vmatpush1.msra.mxu0 %v675
  %913 = vmatprep.subr.mxu0 0.0
  %914 = vmatpush1.msra.mxu0 %v674
  %915 = vmatprep.subr.mxu0 0.0
  %916 = vmatpush1.msra.mxu0 %v673
  %917 = vmatprep.subr.mxu0 0.0
  %918 = vmatpush1.msra.mxu0 %v672
  %919 = vmatprep.subr.mxu0 0.0
  %920 = vmatpush1.msra.mxu0 %v671
  %921 = vmatprep.subr.mxu0 0.0
  %922 = vmatpush1.msra.mxu0 %v670
  %923 = vmatprep.subr.mxu0 0.0
  %924 = vmatpush1.msra.mxu0 %v669
  %925 = vmatprep.subr.mxu0 0.0
  %926 = vmatpush1.msra.mxu0 %v668
  %927 = vmatprep.subr.mxu0 0.0
  %928 = vmatpush1.msra.mxu0 %v667
  %929 = vmatprep.subr.mxu0 0.0
  %930 = vmatpush1.msra.mxu0 %v666
  %931 = vmatprep.subr.mxu0 0.0
  %932 = vmatpush1.msra.mxu0 %v665
  %933 = vmatprep.subr.mxu0 0.0
  %934 = vmatpush1.msra.mxu0 %v664
  %935 = vmatprep.subr.mxu0 0.0
  %936 = vmatpush1.msra.mxu0 %v663
  %937 = vmatprep.subr.mxu0 0.0
  %938 = vmatpush2.msra.mxu0 %v694
  %939 = vmatprep.subr.mxu0 0.0
  %940 = vmatpush2.msra.mxu0 %v693
  %941 = vmatprep.subr.mxu0 0.0
  %942 = vmatpush2.msra.mxu0 %v692
  %943 = vmatprep.subr.mxu0 0.0
  %944 = vmatpush2.msra.mxu0 %v691
  %945 = vmatprep.subr.mxu0 0.0
  %946 = vmatpush2.msra.mxu0 %v690
  %947 = vmatprep.subr.mxu0 0.0
  %948 = vmatpush2.msra.mxu0 %v689
  %949 = vmatprep.subr.mxu0 0.0
  %950 = vmatpush2.msra.mxu0 %v688
  %951 = vmatprep.subr.mxu0 0.0
  %952 = vmatpush2.msra.mxu0 %v687
  %953 = vmatprep.subr.mxu0 0.0
  %954 = vmatpush2.msra.mxu0 %v686
  %955 = vmatprep.subr.mxu0 0.0
  %956 = vmatpush2.msra.mxu0 %v685
  %957 = vmatprep.subr.mxu0 0.0
  %958 = vmatpush2.msra.mxu0 %v684
  %959 = vmatprep.subr.mxu0 0.0
  %960 = vmatpush2.msra.mxu0 %v683
  %961 = vmatprep.subr.mxu0 0.0
  %962 = vmatpush2.msra.mxu0 %v682
  %963 = vmatprep.subr.mxu0 0.0
  %964 = vmatpush2.msra.mxu0 %v681
  %965 = vmatprep.subr.mxu0 0.0
  %966 = vmatpush2.msra.mxu0 %v680
  %967 = vmatprep.subr.mxu0 0.0
  %968 = vmatpush2.msra.mxu0 %v679
  %969 = vmatprep.mubr.f32.mxu0 %v566
  %970 = vmatmul.mubr.f32.gmra.mxu0 %v565
  %v971 = vpop.f32.mrf.mxu0
  %v972 = vadd.f32 %v902, %v971
  %v973 = vpop.f32.mrf.mxu0
  %974 = vdwg.mxu0
  %v975 = vrot.slane %v140, 4
  %v976 = vadd.f32 %v140, %v975
  %v977 = vrot.slane %v976, 2
  %v978 = vadd.f32 %v976, %v977
  %v979 = vrot.slane %v978, 1
  %v980 = vadd.f32 %v978, %v979
  %v981 = vrot.slane %v348, 4
  %v982 = vadd.f32 %v348, %v981
  %v983 = vrot.slane %v982, 2
  %v984 = vadd.f32 %v982, %v983
  %v985 = vrot.slane %v984, 1
  %v986 = vadd.f32 %v984, %v985
  %v987 = vadd.f32 %v980, %v986
  %v988 = vrot.slane %v556, 4
  %v989 = vadd.f32 %v556, %v988
  %v990 = vrot.slane %v989, 2
  %v991 = vadd.f32 %v989, %v990
  %v992 = vrot.slane %v991, 1
  %v993 = vadd.f32 %v991, %v992
  %v994 = vadd.f32 %v987, %v993
  %v995 = vrot.slane %v972, 4
  %v996 = vadd.f32 %v972, %v995
  %v997 = vrot.slane %v996, 2
  %v998 = vadd.f32 %v996, %v997
  %v999 = vrot.slane %v998, 1
  %v1000 = vadd.f32 %v998, %v999
  %v1001 = vadd.f32 %v994, %v1000
  %v1002 = vrcp.pop 32.0
  %v1003 = vmul.f32 %v1001, %v1002
  %v1004 = vsub.f32 %v140, %v1003
  %v1005 = vmul.f32 %v1004, %v1004
  %v1006 = vrot.slane %v1005, 4
  %v1007 = vadd.f32 %v1005, %v1006
  %v1008 = vrot.slane %v1007, 2
  %v1009 = vadd.f32 %v1007, %v1008
  %v1010 = vrot.slane %v1009, 1
  %v1011 = vadd.f32 %v1009, %v1010
  %v1012 = vsub.f32 %v348, %v1003
  %v1013 = vmul.f32 %v1012, %v1012
  %v1014 = vrot.slane %v1013, 4
  %v1015 = vadd.f32 %v1013, %v1014
  %v1016 = vrot.slane %v1015, 2
  %v1017 = vadd.f32 %v1015, %v1016
  %v1018 = vrot.slane %v1017, 1
  %v1019 = vadd.f32 %v1017, %v1018
  %v1020 = vadd.f32 %v1011, %v1019
  %v1021 = vsub.f32 %v556, %v1003
  %v1022 = vmul.f32 %v1021, %v1021
  %v1023 = vrot.slane %v1022, 4
  %v1024 = vadd.f32 %v1022, %v1023
  %v1025 = vrot.slane %v1024, 2
  %v1026 = vadd.f32 %v1024, %v1025
  %v1027 = vrot.slane %v1026, 1
  %v1028 = vadd.f32 %v1026, %v1027
  %v1029 = vadd.f32 %v1020, %v1028
  %v1030 = vsub.f32 %v972, %v1003
  %v1031 = vmul.f32 %v1030, %v1030
  %v1032 = vrot.slane %v1031, 4
  %v1033 = vadd.f32 %v1031, %v1032
  %v1034 = vrot.slane %v1033, 2
  %v1035 = vadd.f32 %v1033, %v1034
  %v1036 = vrot.slane %v1035, 1
  %v1037 = vadd.f32 %v1035, %v1036
  %v1038 = vadd.f32 %v1029, %v1037
  %v1039 = vmul.f32 %v1038, %v1002
  %v1040 = vld [vmem:[%s8] sm:$0x1]
  %v1041 = vadd.f32 %v1039, 1e-05
  %v1042 = vrsqrt.pop %v1041
  %v1043 = vmul.f32 %v1040, %v1042
  %v1044 = vld [vmem:[%s9] sm:$0x1]
  %v1045 = vmul.f32 %v1003, %v1043
  %v1046 = vsub.f32 %v1044, %v1045
  %v1048 = vlaneseq
  %v1049 = vshrl.u32 %v1048, 7
  %v1050 = vsub.s32 0, %v1049
  %v1051 = vrot.slane %v1043, %v1050
  %v1053 = vmul.f32 %v140, %v1051
  %v1055 = vlaneseq
  %v1056 = vshrl.u32 %v1055, 7
  %v1057 = vsub.s32 0, %v1056
  %v1058 = vrot.slane %v1046, %v1057
  %v1060 = vadd.f32 %v1053, %v1058
  %vm1061 = vcmp.ge.f32.partialorder %v1060, 0.0
  %v1062 = vmul.f32 %v1060, 0.2
  %v1063 = vsel %vm1061, %v1060, %v1062
  %1064 = vst [vmem:[%s10] sm:$0xff] %v1063
  %v1065 = vmul.f32 %v348, %v1051
  %v1066 = vadd.f32 %v1065, %v1058
  %vm1067 = vcmp.ge.f32.partialorder %v1066, 0.0
  %v1068 = vmul.f32 %v1066, 0.2
  %v1069 = vsel %vm1067, %v1066, %v1068
  %1070 = vst [vmem:[%s11] sm:$0xff] %v1069
  %v1071 = vmul.f32 %v556, %v1051
  %v1072 = vadd.f32 %v1071, %v1058
  %vm1073 = vcmp.ge.f32.partialorder %v1072, 0.0
  %v1074 = vmul.f32 %v1072, 0.2
  %v1075 = vsel %vm1073, %v1072, %v1074
  %1076 = vst [vmem:[%s12] sm:$0xff] %v1075
  %v1077 = vmul.f32 %v972, %v1051
  %v1078 = vadd.f32 %v1077, %v1058
  %vm1079 = vcmp.ge.f32.partialorder %v1078, 0.0
  %v1080 = vmul.f32 %v1078, 0.2
  %v1081 = vsel %vm1079, %v1078, %v1080
  %1082 = vst [vmem:[%s13] sm:$0xff] %v1081
  // Predicated region
  $region42: #{vae_forward.11} parent=0 // pred_check
    _
  $region43: #{vae_forward.11} parent=0 // pred_check_branch
    %1084 = sbr.rel (0) target = $region45
  $region44: #{vae_forward.11} parent=0 // pred_region
    _
  $region45: #{vae_forward.11} parent=0 // pred_fallthru
    _
  // Predicated region
  $region46: #{vae_forward.11} parent=0 // pred_check
    _
  $region47: #{vae_forward.11} parent=0 // pred_check_branch
    %1086 = sbr.rel (0) target = $region49
  $region48: #{vae_forward.11} parent=0 // pred_region
    _
  $region49: #{vae_forward.11} parent=0 // pred_fallthru
    _
  // Predicated region
  $region50: #{vae_forward.11} parent=0 // pred_check
    _
  $region51: #{vae_forward.11} parent=0 // pred_check_branch
    %1088 = sbr.rel (0) target = $region53
  $region52: #{vae_forward.11} parent=0 // pred_region
    _
  $region53: #{vae_forward.11} parent=0 // pred_fallthru
    _
  // Predicated region
  $region54: #{vae_forward.11} parent=0 // pred_check
    _
  $region55: #{vae_forward.11} parent=0 // pred_check_branch
    %1090 = sbr.rel (0) target = $region57
  $region56: #{vae_forward.11} parent=0 // pred_region
    _
  $region57: #{vae_forward.11} parent=0 // pred_fallthru
    _
  // Predicated region
  $region58: #{vae_forward.11} parent=0 // pred_check
    _
  $region59: #{vae_forward.11} parent=0 // pred_check_branch
    %1092 = sbr.rel (0) target = $region61
  $region60: #{vae_forward.11} parent=0 // pred_region
    _
  $region61: #{vae_forward.11} parent=0 // pred_fallthru
    _
  // Predicated region
  $region62: #{vae_forward.11} parent=0 // pred_check
    _
  $region63: #{vae_forward.11} parent=0 // pred_check_branch
    %1094 = sbr.rel (0) target = $region65
  $region64: #{vae_forward.11} parent=0 // pred_region
    _
  $region65: #{vae_forward.11} parent=0 // pred_fallthru
    _
  // Predicated region
  $region66: #{vae_forward.11} parent=0 // pred_check
    _
  $region67: #{vae_forward.11} parent=0 // pred_check_branch
    %1096 = sbr.rel (0) target = $region69
  $region68: #{vae_forward.11} parent=0 // pred_region
    _
  $region69: #{vae_forward.11} parent=0 // pred_fallthru
    _
  // Predicated region
  $region70: #{vae_forward.11} parent=0 // pred_check
    _
  $region71: #{vae_forward.11} parent=0 // pred_check_branch
    %1098 = sbr.rel (0) target = $region73
  $region72: #{vae_forward.11} parent=0 // pred_region
    _
  $region73: #{vae_forward.11} parent=0 // pred_fallthru
    _

// kernel: vae_forward.12
$region0: #{vae_forward.12}
  #allocation0 [shape = 'u32[]', space=smem, size = 0x4, offset = 0x4, fixed_abs, tag = 'smem constant byte address 0x4 - core index']
  #allocation1 [shape = 'u32[144,128]{1,0:T(1,128)}', space=vmem, size = 0x12000, scoped, tag = 'internal scratch']
  %s0 = inlined_call_operand.vmem [shape: f32[32,128], index: 0, kind: input, shape index: {}]
  %s1 = inlined_call_operand.vmem [shape: f32[32,256], index: 1, kind: input, shape index: {}]
  %s2 = inlined_call_operand.vmem [shape: f32[32,256], index: 2, kind: input, shape index: {}]
  %s3 = inlined_call_operand.vmem [shape: f32[32,512], index: 3, kind: input, shape index: {}]
  %s4 = inlined_call_operand.vmem [shape: f32[128,64], index: 4, kind: input, shape index: {}]
  %s5 = inlined_call_operand.vmem [shape: f32[256,64], index: 5, kind: input, shape index: {}]
  %s6 = inlined_call_operand.vmem [shape: f32[256,64], index: 6, kind: input, shape index: {}]
  %s7 = inlined_call_operand.vmem [shape: f32[512,64], index: 7, kind: input, shape index: {}]
  %s8 = inlined_call_operand.vmem [shape: f32[1,64], index: 8, kind: input, shape index: {}]
  %s9 = inlined_call_operand.vmem [shape: f32[1,64], index: 9, kind: input, shape index: {}]
  %s10 = inlined_call_operand.vmem [shape: f32[32,64], index: 10, kind: output, shape index: {0}]
  %s11 = inlined_call_operand.vmem [shape: f32[32,64], index: 11, kind: output, shape index: {1}]
  %s12 = inlined_call_operand.vmem [shape: f32[32,64], index: 12, kind: output, shape index: {2}]
  %s13 = inlined_call_operand.vmem [shape: f32[32,64], index: 13, kind: output, shape index: {3}]
  %14 = xla_tuple %s10, %s11, %s12, %s13
  %s15 = sld [smem:[#allocation0]]
  $region74: #{vae_forward.12} parent=0
    _
  %s17 = ssub.s32 1, %s15
  %s18 = scalar_select 0, %s17, %s15
  // Predicated region
  $region2: #{vae_forward.12} parent=0 // pred_check
    _
  $region3: #{vae_forward.12} parent=0 // pred_check_branch
    %20 = sbr.rel (0) target = $region5
  $region4: #{vae_forward.12} parent=0 // pred_region
    _
  $region5: #{vae_forward.12} parent=0 // pred_fallthru
    _
  // Predicated region
  $region6: #{vae_forward.12} parent=0 // pred_check
    _
  $region7: #{vae_forward.12} parent=0 // pred_check_branch
    %22 = sbr.rel (0) target = $region9
  $region8: #{vae_forward.12} parent=0 // pred_region
    _
  $region9: #{vae_forward.12} parent=0 // pred_fallthru
    _
  // Predicated region
  $region10: #{vae_forward.12} parent=0 // pred_check
    _
  $region11: #{vae_forward.12} parent=0 // pred_check_branch
    %24 = sbr.rel (0) target = $region13
  $region12: #{vae_forward.12} parent=0 // pred_region
    _
  $region13: #{vae_forward.12} parent=0 // pred_fallthru
    _
  // Predicated region
  $region14: #{vae_forward.12} parent=0 // pred_check
    _
  $region15: #{vae_forward.12} parent=0 // pred_check_branch
    %26 = sbr.rel (0) target = $region17
  $region16: #{vae_forward.12} parent=0 // pred_region
    _
  $region17: #{vae_forward.12} parent=0 // pred_fallthru
    _
  // Predicated region
  $region18: #{vae_forward.12} parent=0 // pred_check
    _
  $region19: #{vae_forward.12} parent=0 // pred_check_branch
    %28 = sbr.rel (0) target = $region21
  $region20: #{vae_forward.12} parent=0 // pred_region
    _
  $region21: #{vae_forward.12} parent=0 // pred_fallthru
    _
  // Predicated region
  $region22: #{vae_forward.12} parent=0 // pred_check
    _
  $region23: #{vae_forward.12} parent=0 // pred_check_branch
    %30 = sbr.rel (0) target = $region25
  $region24: #{vae_forward.12} parent=0 // pred_region
    _
  $region25: #{vae_forward.12} parent=0 // pred_fallthru
    _
  // Predicated region
  $region26: #{vae_forward.12} parent=0 // pred_check
    _
  $region27: #{vae_forward.12} parent=0 // pred_check_branch
    %32 = sbr.rel (0) target = $region29
  $region28: #{vae_forward.12} parent=0 // pred_region
    _
  $region29: #{vae_forward.12} parent=0 // pred_fallthru
    _
  // Predicated region
  $region30: #{vae_forward.12} parent=0 // pred_check
    _
  $region31: #{vae_forward.12} parent=0 // pred_check_branch
    %34 = sbr.rel (0) target = $region33
  $region32: #{vae_forward.12} parent=0 // pred_region
    _
  $region33: #{vae_forward.12} parent=0 // pred_fallthru
    _
  // Predicated region
  $region34: #{vae_forward.12} parent=0 // pred_check
    _
  $region35: #{vae_forward.12} parent=0 // pred_check_branch
    %36 = sbr.rel (0) target = $region37
  $region36: #{vae_forward.12} parent=0 // pred_region
    _
  $region37: #{vae_forward.12} parent=0 // pred_fallthru
    _
  // Predicated region
  $region38: #{vae_forward.12} parent=0 // pred_check
    _
  $region39: #{vae_forward.12} parent=0 // pred_check_branch
    %38 = sbr.rel (0) target = $region41
  $region40: #{vae_forward.12} parent=0 // pred_region
    _
  $region41: #{vae_forward.12} parent=0 // pred_fallthru
    _
  %v39 = vld [vmem:[%s0] sm:$0xff]
  %v40 = vld [vmem:[%s0 + $0x8] sm:$0xff]
  %v41 = vld [vmem:[%s0 + $0x10] sm:$0xff]
  %v42 = vld [vmem:[%s0 + $0x18] sm:$0xff]
  %v43 = vld [vmem:[%s4] sm:$0xff]
  %v44 = vld [vmem:[%s4 + $0x8] sm:$0xff]
  %v45 = vld [vmem:[%s4 + $0x10] sm:$0xff]
  %v46 = vld [vmem:[%s4 + $0x18] sm:$0xff]
  %v47 = vld [vmem:[%s4 + $0x20] sm:$0xff]
  %v48 = vld [vmem:[%s4 + $0x28] sm:$0xff]
  %v49 = vld [vmem:[%s4 + $0x30] sm:$0xff]
  %v50 = vld [vmem:[%s4 + $0x38] sm:$0xff]
  %v51 = vld [vmem:[%s4 + $0x40] sm:$0xff]
  %v52 = vld [vmem:[%s4 + $0x48] sm:$0xff]
  %v53 = vld [vmem:[%s4 + $0x50] sm:$0xff]
  %v54 = vld [vmem:[%s4 + $0x58] sm:$0xff]
  %v55 = vld [vmem:[%s4 + $0x60] sm:$0xff]
  %v56 = vld [vmem:[%s4 + $0x68] sm:$0xff]
  %v57 = vld [vmem:[%s4 + $0x70] sm:$0xff]
  %v58 = vld [vmem:[%s4 + $0x78] sm:$0xff]
  %59 = vmatprep.subr.mxu0 0.0
  %60 = vmatpush1.msra.mxu0 %v58
  %61 = vmatprep.subr.mxu0 0.0
  %62 = vmatpush1.msra.mxu0 %v57
  %63 = vmatprep.subr.mxu0 0.0
  %64 = vmatpush1.msra.mxu0 %v56
  %65 = vmatprep.subr.mxu0 0.0
  %66 = vmatpush1.msra.mxu0 %v55
  %67 = vmatprep.subr.mxu0 0.0
  %68 = vmatpush1.msra.mxu0 %v54
  %69 = vmatprep.subr.mxu0 0.0
  %70 = vmatpush1.msra.mxu0 %v53
  %71 = vmatprep.subr.mxu0 0.0
  %72 = vmatpush1.msra.mxu0 %v52
  %73 = vmatprep.subr.mxu0 0.0
  %74 = vmatpush1.msra.mxu0 %v51
  %75 = vmatprep.subr.mxu0 0.0
  %76 = vmatpush1.msra.mxu0 %v50
  %77 = vmatprep.subr.mxu0 0.0
  %78 = vmatpush1.msra.mxu0 %v49
  %79 = vmatprep.subr.mxu0 0.0
  %80 = vmatpush1.msra.mxu0 %v48
  %81 = vmatprep.subr.mxu0 0.0
  %82 = vmatpush1.msra.mxu0 %v47
  %83 = vmatprep.subr.mxu0 0.0
  %84 = vmatpush1.msra.mxu0 %v46
  %85 = vmatprep.subr.mxu0 0.0
  %86 = vmatpush1.msra.mxu0 %v45
  %87 = vmatprep.subr.mxu0 0.0
  %88 = vmatpush1.msra.mxu0 %v44
  %89 = vmatprep.subr.mxu0 0.0
  %90 = vmatpush1.msra.mxu0 %v43
  %91 = vmatprep.subr.mxu0 0.0
  %92 = vmatpush2.msra.mxu0 0.0
  %93 = vmatprep.subr.mxu0 0.0
  %94 = vmatpush2.msra.mxu0 0.0
  %95 = vmatprep.subr.mxu0 0.0
  %96 = vmatpush2.msra.mxu0 0.0
  %97 = vmatprep.subr.mxu0 0.0
  %98 = vmatpush2.msra.mxu0 0.0
  %99 = vmatprep.subr.mxu0 0.0
  %100 = vmatpush2.msra.mxu0 0.0
  %101 = vmatprep.subr.mxu0 0.0
  %102 = vmatpush2.msra.mxu0 0.0
  %103 = vmatprep.subr.mxu0 0.0
  %104 = vmatpush2.msra.mxu0 0.0
  %105 = vmatprep.subr.mxu0 0.0
  %106 = vmatpush2.msra.mxu0 0.0
  %107 = vmatprep.subr.mxu0 0.0
  %108 = vmatpush2.msra.mxu0 0.0
  %109 = vmatprep.subr.mxu0 0.0
  %110 = vmatpush2.msra.mxu0 0.0
  %111 = vmatprep.subr.mxu0 0.0
  %112 = vmatpush2.msra.mxu0 0.0
  %113 = vmatprep.subr.mxu0 0.0
  %114 = vmatpush2.msra.mxu0 0.0
  %115 = vmatprep.subr.mxu0 0.0
  %116 = vmatpush2.msra.mxu0 0.0
  %117 = vmatprep.subr.mxu0 0.0
  %118 = vmatpush2.msra.mxu0 0.0
  %119 = vmatprep.subr.mxu0 0.0
  %120 = vmatpush2.msra.mxu0 0.0
  %121 = vmatprep.subr.mxu0 0.0
  %122 = vmatpush2.msra.mxu0 0.0
  %123 = vmatprep.mubr.f32.mxu0 0.0
  %124 = vmatmul.mubr.f32.gmra.mxu0 %v39
  %v125 = vpop.f32.mrf.mxu0
  %v126 = vadd.f32 0.0, %v125
  %v127 = vpop.f32.mrf.mxu0
  %128 = vmatprep.mubr.f32.mxu0 0.0
  %129 = vmatmul.mubr.f32.gmra.mxu0 %v40
  %v130 = vpop.f32.mrf.mxu0
  %v131 = vadd.f32 0.0, %v130
  %v132 = vpop.f32.mrf.mxu0
  %133 = vmatprep.mubr.f32.mxu0 0.0
  %134 = vmatmul.mubr.f32.gmra.mxu0 %v41
  %v135 = vpop.f32.mrf.mxu0
  %v136 = vadd.f32 0.0, %v135
  %v137 = vpop.f32.mrf.mxu0
  %138 = vmatprep.mubr.f32.mxu0 0.0
  %139 = vmatmul.mubr.f32.gmra.mxu0 %v42
  %v140 = vpop.f32.mrf.mxu0
  %v141 = vadd.f32 0.0, %v140
  %v142 = vpop.f32.mrf.mxu0
  %143 = vdwg.mxu0
  %v144 = vld [vmem:[%s1] sm:$0xff]
  %v145 = vld [vmem:[%s1 + $0x8] sm:$0xff]
  %v146 = vld [vmem:[%s1 + $0x10] sm:$0xff]
  %v147 = vld [vmem:[%s1 + $0x18] sm:$0xff]
  %v148 = vld [vmem:[%s1 + $0x20] sm:$0xff]
  %v149 = vld [vmem:[%s1 + $0x28] sm:$0xff]
  %v150 = vld [vmem:[%s1 + $0x30] sm:$0xff]
  %v151 = vld [vmem:[%s1 + $0x38] sm:$0xff]
  %v152 = vld [vmem:[%s5] sm:$0xff]
  %v153 = vld [vmem:[%s5 + $0x8] sm:$0xff]
  %v154 = vld [vmem:[%s5 + $0x10] sm:$0xff]
  %v155 = vld [vmem:[%s5 + $0x18] sm:$0xff]
  %v156 = vld [vmem:[%s5 + $0x20] sm:$0xff]
  %v157 = vld [vmem:[%s5 + $0x28] sm:$0xff]
  %v158 = vld [vmem:[%s5 + $0x30] sm:$0xff]
  %v159 = vld [vmem:[%s5 + $0x38] sm:$0xff]
  %v160 = vld [vmem:[%s5 + $0x40] sm:$0xff]
  %v161 = vld [vmem:[%s5 + $0x48] sm:$0xff]
  %v162 = vld [vmem:[%s5 + $0x50] sm:$0xff]
  %v163 = vld [vmem:[%s5 + $0x58] sm:$0xff]
  %v164 = vld [vmem:[%s5 + $0x60] sm:$0xff]
  %v165 = vld [vmem:[%s5 + $0x68] sm:$0xff]
  %v166 = vld [vmem:[%s5 + $0x70] sm:$0xff]
  %v167 = vld [vmem:[%s5 + $0x78] sm:$0xff]
  %v168 = vld [vmem:[%s5 + $0x80] sm:$0xff]
  %v169 = vld [vmem:[%s5 + $0x88] sm:$0xff]
  %v170 = vld [vmem:[%s5 + $0x90] sm:$0xff]
  %v171 = vld [vmem:[%s5 + $0x98] sm:$0xff]
  %v172 = vld [vmem:[%s5 + $0xa0] sm:$0xff]
  %v173 = vld [vmem:[%s5 + $0xa8] sm:$0xff]
  %v174 = vld [vmem:[%s5 + $0xb0] sm:$0xff]
  %v175 = vld [vmem:[%s5 + $0xb8] sm:$0xff]
  %v176 = vld [vmem:[%s5 + $0xc0] sm:$0xff]
  %v177 = vld [vmem:[%s5 + $0xc8] sm:$0xff]
  %v178 = vld [vmem:[%s5 + $0xd0] sm:$0xff]
  %v179 = vld [vmem:[%s5 + $0xd8] sm:$0xff]
  %v180 = vld [vmem:[%s5 + $0xe0] sm:$0xff]
  %v181 = vld [vmem:[%s5 + $0xe8] sm:$0xff]
  %v182 = vld [vmem:[%s5 + $0xf0] sm:$0xff]
  %v183 = vld [vmem:[%s5 + $0xf8] sm:$0xff]
  %184 = vmatprep.subr.mxu0 0.0
  %185 = vmatpush1.msra.mxu0 %v167
  %186 = vmatprep.subr.mxu0 0.0
  %187 = vmatpush1.msra.mxu0 %v166
  %188 = vmatprep.subr.mxu0 0.0
  %189 = vmatpush1.msra.mxu0 %v165
  %190 = vmatprep.subr.mxu0 0.0
  %191 = vmatpush1.msra.mxu0 %v164
  %192 = vmatprep.subr.mxu0 0.0
  %193 = vmatpush1.msra.mxu0 %v163
  %194 = vmatprep.subr.mxu0 0.0
  %195 = vmatpush1.msra.mxu0 %v162
  %196 = vmatprep.subr.mxu0 0.0
  %197 = vmatpush1.msra.mxu0 %v161
  %198 = vmatprep.subr.mxu0 0.0
  %199 = vmatpush1.msra.mxu0 %v160
  %200 = vmatprep.subr.mxu0 0.0
  %201 = vmatpush1.msra.mxu0 %v159
  %202 = vmatprep.subr.mxu0 0.0
  %203 = vmatpush1.msra.mxu0 %v158
  %204 = vmatprep.subr.mxu0 0.0
  %205 = vmatpush1.msra.mxu0 %v157
  %206 = vmatprep.subr.mxu0 0.0
  %207 = vmatpush1.msra.mxu0 %v156
  %208 = vmatprep.subr.mxu0 0.0
  %209 = vmatpush1.msra.mxu0 %v155
  %210 = vmatprep.subr.mxu0 0.0
  %211 = vmatpush1.msra.mxu0 %v154
  %212 = vmatprep.subr.mxu0 0.0
  %213 = vmatpush1.msra.mxu0 %v153
  %214 = vmatprep.subr.mxu0 0.0
  %215 = vmatpush1.msra.mxu0 %v152
  %216 = vmatprep.subr.mxu0 0.0
  %217 = vmatpush2.msra.mxu0 %v183
  %218 = vmatprep.subr.mxu0 0.0
  %219 = vmatpush2.msra.mxu0 %v182
  %220 = vmatprep.subr.mxu0 0.0
  %221 = vmatpush2.msra.mxu0 %v181
  %222 = vmatprep.subr.mxu0 0.0
  %223 = vmatpush2.msra.mxu0 %v180
  %224 = vmatprep.subr.mxu0 0.0
  %225 = vmatpush2.msra.mxu0 %v179
  %226 = vmatprep.subr.mxu0 0.0
  %227 = vmatpush2.msra.mxu0 %v178
  %228 = vmatprep.subr.mxu0 0.0
  %229 = vmatpush2.msra.mxu0 %v177
  %230 = vmatprep.subr.mxu0 0.0
  %231 = vmatpush2.msra.mxu0 %v176
  %232 = vmatprep.subr.mxu0 0.0
  %233 = vmatpush2.msra.mxu0 %v175
  %234 = vmatprep.subr.mxu0 0.0
  %235 = vmatpush2.msra.mxu0 %v174
  %236 = vmatprep.subr.mxu0 0.0
  %237 = vmatpush2.msra.mxu0 %v173
  %238 = vmatprep.subr.mxu0 0.0
  %239 = vmatpush2.msra.mxu0 %v172
  %240 = vmatprep.subr.mxu0 0.0
  %241 = vmatpush2.msra.mxu0 %v171
  %242 = vmatprep.subr.mxu0 0.0
  %243 = vmatpush2.msra.mxu0 %v170
  %244 = vmatprep.subr.mxu0 0.0
  %245 = vmatpush2.msra.mxu0 %v169
  %246 = vmatprep.subr.mxu0 0.0
  %247 = vmatpush2.msra.mxu0 %v168
  %248 = vmatprep.mubr.f32.mxu0 %v145
  %249 = vmatmul.mubr.f32.gmra.mxu0 %v144
  %v250 = vpop.f32.mrf.mxu0
  %v251 = vadd.f32 0.0, %v250
  %v252 = vpop.f32.mrf.mxu0
  %253 = vmatprep.mubr.f32.mxu0 %v147
  %254 = vmatmul.mubr.f32.gmra.mxu0 %v146
  %v255 = vpop.f32.mrf.mxu0
  %v256 = vadd.f32 0.0, %v255
  %v257 = vpop.f32.mrf.mxu0
  %258 = vmatprep.mubr.f32.mxu0 %v149
  %259 = vmatmul.mubr.f32.gmra.mxu0 %v148
  %v260 = vpop.f32.mrf.mxu0
  %v261 = vadd.f32 0.0, %v260
  %v262 = vpop.f32.mrf.mxu0
  %263 = vmatprep.mubr.f32.mxu0 %v151
  %264 = vmatmul.mubr.f32.gmra.mxu0 %v150
  %v265 = vpop.f32.mrf.mxu0
  %v266 = vadd.f32 0.0, %v265
  %v267 = vpop.f32.mrf.mxu0
  %268 = vdwg.mxu0
  %v269 = vld [vmem:[%s2] sm:$0xff]
  %v270 = vld [vmem:[%s2 + $0x8] sm:$0xff]
  %v271 = vld [vmem:[%s2 + $0x10] sm:$0xff]
  %v272 = vld [vmem:[%s2 + $0x18] sm:$0xff]
  %v273 = vld [vmem:[%s2 + $0x20] sm:$0xff]
  %v274 = vld [vmem:[%s2 + $0x28] sm:$0xff]
  %v275 = vld [vmem:[%s2 + $0x30] sm:$0xff]
  %v276 = vld [vmem:[%s2 + $0x38] sm:$0xff]
  %v277 = vld [vmem:[%s6] sm:$0xff]
  %v278 = vld [vmem:[%s6 + $0x8] sm:$0xff]
  %v279 = vld [vmem:[%s6 + $0x10] sm:$0xff]
  %v280 = vld [vmem:[%s6 + $0x18] sm:$0xff]
  %v281 = vld [vmem:[%s6 + $0x20] sm:$0xff]
  %v282 = vld [vmem:[%s6 + $0x28] sm:$0xff]
  %v283 = vld [vmem:[%s6 + $0x30] sm:$0xff]
  %v284 = vld [vmem:[%s6 + $0x38] sm:$0xff]
  %v285 = vld [vmem:[%s6 + $0x40] sm:$0xff]
  %v286 = vld [vmem:[%s6 + $0x48] sm:$0xff]
  %v287 = vld [vmem:[%s6 + $0x50] sm:$0xff]
  %v288 = vld [vmem:[%s6 + $0x58] sm:$0xff]
  %v289 = vld [vmem:[%s6 + $0x60] sm:$0xff]
  %v290 = vld [vmem:[%s6 + $0x68] sm:$0xff]
  %v291 = vld [vmem:[%s6 + $0x70] sm:$0xff]
  %v292 = vld [vmem:[%s6 + $0x78] sm:$0xff]
  %v293 = vld [vmem:[%s6 + $0x80] sm:$0xff]
  %v294 = vld [vmem:[%s6 + $0x88] sm:$0xff]
  %v295 = vld [vmem:[%s6 + $0x90] sm:$0xff]
  %v296 = vld [vmem:[%s6 + $0x98] sm:$0xff]
  %v297 = vld [vmem:[%s6 + $0xa0] sm:$0xff]
  %v298 = vld [vmem:[%s6 + $0xa8] sm:$0xff]
  %v299 = vld [vmem:[%s6 + $0xb0] sm:$0xff]
  %v300 = vld [vmem:[%s6 + $0xb8] sm:$0xff]
  %v301 = vld [vmem:[%s6 + $0xc0] sm:$0xff]
  %v302 = vld [vmem:[%s6 + $0xc8] sm:$0xff]
  %v303 = vld [vmem:[%s6 + $0xd0] sm:$0xff]
  %v304 = vld [vmem:[%s6 + $0xd8] sm:$0xff]
  %v305 = vld [vmem:[%s6 + $0xe0] sm:$0xff]
  %v306 = vld [vmem:[%s6 + $0xe8] sm:$0xff]
  %v307 = vld [vmem:[%s6 + $0xf0] sm:$0xff]
  %v308 = vld [vmem:[%s6 + $0xf8] sm:$0xff]
  %309 = vmatprep.subr.mxu0 0.0
  %310 = vmatpush1.msra.mxu0 %v292
  %311 = vmatprep.subr.mxu0 0.0
  %312 = vmatpush1.msra.mxu0 %v291
  %313 = vmatprep.subr.mxu0 0.0
  %314 = vmatpush1.msra.mxu0 %v290
  %315 = vmatprep.subr.mxu0 0.0
  %316 = vmatpush1.msra.mxu0 %v289
  %317 = vmatprep.subr.mxu0 0.0
  %318 = vmatpush1.msra.mxu0 %v288
  %319 = vmatprep.subr.mxu0 0.0
  %320 = vmatpush1.msra.mxu0 %v287
  %321 = vmatprep.subr.mxu0 0.0
  %322 = vmatpush1.msra.mxu0 %v286
  %323 = vmatprep.subr.mxu0 0.0
  %324 = vmatpush1.msra.mxu0 %v285
  %325 = vmatprep.subr.mxu0 0.0
  %326 = vmatpush1.msra.mxu0 %v284
  %327 = vmatprep.subr.mxu0 0.0
  %328 = vmatpush1.msra.mxu0 %v283
  %329 = vmatprep.subr.mxu0 0.0
  %330 = vmatpush1.msra.mxu0 %v282
  %331 = vmatprep.subr.mxu0 0.0
  %332 = vmatpush1.msra.mxu0 %v281
  %333 = vmatprep.subr.mxu0 0.0
  %334 = vmatpush1.msra.mxu0 %v280
  %335 = vmatprep.subr.mxu0 0.0
  %336 = vmatpush1.msra.mxu0 %v279
  %337 = vmatprep.subr.mxu0 0.0
  %338 = vmatpush1.msra.mxu0 %v278
  %339 = vmatprep.subr.mxu0 0.0
  %340 = vmatpush1.msra.mxu0 %v277
  %341 = vmatprep.subr.mxu0 0.0
  %342 = vmatpush2.msra.mxu0 %v308
  %343 = vmatprep.subr.mxu0 0.0
  %344 = vmatpush2.msra.mxu0 %v307
  %345 = vmatprep.subr.mxu0 0.0
  %346 = vmatpush2.msra.mxu0 %v306
  %347 = vmatprep.subr.mxu0 0.0
  %348 = vmatpush2.msra.mxu0 %v305
  %349 = vmatprep.subr.mxu0 0.0
  %350 = vmatpush2.msra.mxu0 %v304
  %351 = vmatprep.subr.mxu0 0.0
  %352 = vmatpush2.msra.mxu0 %v303
  %353 = vmatprep.subr.mxu0 0.0
  %354 = vmatpush2.msra.mxu0 %v302
  %355 = vmatprep.subr.mxu0 0.0
  %356 = vmatpush2.msra.mxu0 %v301
  %357 = vmatprep.subr.mxu0 0.0
  %358 = vmatpush2.msra.mxu0 %v300
  %359 = vmatprep.subr.mxu0 0.0
  %360 = vmatpush2.msra.mxu0 %v299
  %361 = vmatprep.subr.mxu0 0.0
  %362 = vmatpush2.msra.mxu0 %v298
  %363 = vmatprep.subr.mxu0 0.0
  %364 = vmatpush2.msra.mxu0 %v297
  %365 = vmatprep.subr.mxu0 0.0
  %366 = vmatpush2.msra.mxu0 %v296
  %367 = vmatprep.subr.mxu0 0.0
  %368 = vmatpush2.msra.mxu0 %v295
  %369 = vmatprep.subr.mxu0 0.0
  %370 = vmatpush2.msra.mxu0 %v294
  %371 = vmatprep.subr.mxu0 0.0
  %372 = vmatpush2.msra.mxu0 %v293
  %373 = vmatprep.mubr.f32.mxu0 %v270
  %374 = vmatmul.mubr.f32.gmra.mxu0 %v269
  %v375 = vpop.f32.mrf.mxu0
  %v376 = vadd.f32 0.0, %v375
  %v377 = vpop.f32.mrf.mxu0
  %378 = vmatprep.mubr.f32.mxu0 %v272
  %379 = vmatmul.mubr.f32.gmra.mxu0 %v271
  %v380 = vpop.f32.mrf.mxu0
  %v381 = vadd.f32 0.0, %v380
  %v382 = vpop.f32.mrf.mxu0
  %383 = vmatprep.mubr.f32.mxu0 %v274
  %384 = vmatmul.mubr.f32.gmra.mxu0 %v273
  %v385 = vpop.f32.mrf.mxu0
  %v386 = vadd.f32 0.0, %v385
  %v387 = vpop.f32.mrf.mxu0
  %388 = vmatprep.mubr.f32.mxu0 %v276
  %389 = vmatmul.mubr.f32.gmra.mxu0 %v275
  %v390 = vpop.f32.mrf.mxu0
  %v391 = vadd.f32 0.0, %v390
  %v392 = vpop.f32.mrf.mxu0
  %393 = vdwg.mxu0
  %v394 = vld [vmem:[%s3] sm:$0xff]
  %v395 = vld [vmem:[%s3 + $0x8] sm:$0xff]
  %v396 = vld [vmem:[%s3 + $0x10] sm:$0xff]
  %v397 = vld [vmem:[%s3 + $0x18] sm:$0xff]
  %v398 = vld [vmem:[%s3 + $0x20] sm:$0xff]
  %v399 = vld [vmem:[%s3 + $0x28] sm:$0xff]
  %v400 = vld [vmem:[%s3 + $0x30] sm:$0xff]
  %v401 = vld [vmem:[%s3 + $0x38] sm:$0xff]
  %v402 = vld [vmem:[%s3 + $0x40] sm:$0xff]
  %v403 = vld [vmem:[%s3 + $0x48] sm:$0xff]
  %v404 = vld [vmem:[%s3 + $0x50] sm:$0xff]
  %v405 = vld [vmem:[%s3 + $0x58] sm:$0xff]
  %v406 = vld [vmem:[%s3 + $0x60] sm:$0xff]
  %v407 = vld [vmem:[%s3 + $0x68] sm:$0xff]
  %v408 = vld [vmem:[%s3 + $0x70] sm:$0xff]
  %v409 = vld [vmem:[%s3 + $0x78] sm:$0xff]
  %v410 = vld [vmem:[%s7] sm:$0xff]
  %v411 = vld [vmem:[%s7 + $0x8] sm:$0xff]
  %v412 = vld [vmem:[%s7 + $0x10] sm:$0xff]
  %v413 = vld [vmem:[%s7 + $0x18] sm:$0xff]
  %v414 = vld [vmem:[%s7 + $0x20] sm:$0xff]
  %v415 = vld [vmem:[%s7 + $0x28] sm:$0xff]
  %v416 = vld [vmem:[%s7 + $0x30] sm:$0xff]
  %v417 = vld [vmem:[%s7 + $0x38] sm:$0xff]
  %v418 = vld [vmem:[%s7 + $0x40] sm:$0xff]
  %v419 = vld [vmem:[%s7 + $0x48] sm:$0xff]
  %v420 = vld [vmem:[%s7 + $0x50] sm:$0xff]
  %v421 = vld [vmem:[%s7 + $0x58] sm:$0xff]
  %v422 = vld [vmem:[%s7 + $0x60] sm:$0xff]
  %v423 = vld [vmem:[%s7 + $0x68] sm:$0xff]
  %v424 = vld [vmem:[%s7 + $0x70] sm:$0xff]
  %v425 = vld [vmem:[%s7 + $0x78] sm:$0xff]
  %v426 = vld [vmem:[%s7 + $0x80] sm:$0xff]
  %v427 = vld [vmem:[%s7 + $0x88] sm:$0xff]
  %v428 = vld [vmem:[%s7 + $0x90] sm:$0xff]
  %v429 = vld [vmem:[%s7 + $0x98] sm:$0xff]
  %v430 = vld [vmem:[%s7 + $0xa0] sm:$0xff]
  %v431 = vld [vmem:[%s7 + $0xa8] sm:$0xff]
  %v432 = vld [vmem:[%s7 + $0xb0] sm:$0xff]
  %v433 = vld [vmem:[%s7 + $0xb8] sm:$0xff]
  %v434 = vld [vmem:[%s7 + $0xc0] sm:$0xff]
  %v435 = vld [vmem:[%s7 + $0xc8] sm:$0xff]
  %v436 = vld [vmem:[%s7 + $0xd0] sm:$0xff]
  %v437 = vld [vmem:[%s7 + $0xd8] sm:$0xff]
  %v438 = vld [vmem:[%s7 + $0xe0] sm:$0xff]
  %v439 = vld [vmem:[%s7 + $0xe8] sm:$0xff]
  %v440 = vld [vmem:[%s7 + $0xf0] sm:$0xff]
  %v441 = vld [vmem:[%s7 + $0xf8] sm:$0xff]
  %v442 = vld [vmem:[%s7 + $0x100] sm:$0xff]
  %v443 = vld [vmem:[%s7 + $0x108] sm:$0xff]
  %v444 = vld [vmem:[%s7 + $0x110] sm:$0xff]
  %v445 = vld [vmem:[%s7 + $0x118] sm:$0xff]
  %v446 = vld [vmem:[%s7 + $0x120] sm:$0xff]
  %v447 = vld [vmem:[%s7 + $0x128] sm:$0xff]
  %v448 = vld [vmem:[%s7 + $0x130] sm:$0xff]
  %v449 = vld [vmem:[%s7 + $0x138] sm:$0xff]
  %v450 = vld [vmem:[%s7 + $0x140] sm:$0xff]
  %v451 = vld [vmem:[%s7 + $0x148] sm:$0xff]
  %v452 = vld [vmem:[%s7 + $0x150] sm:$0xff]
  %v453 = vld [vmem:[%s7 + $0x158] sm:$0xff]
  %v454 = vld [vmem:[%s7 + $0x160] sm:$0xff]
  %v455 = vld [vmem:[%s7 + $0x168] sm:$0xff]
  %v456 = vld [vmem:[%s7 + $0x170] sm:$0xff]
  %v457 = vld [vmem:[%s7 + $0x178] sm:$0xff]
  %v458 = vld [vmem:[%s7 + $0x180] sm:$0xff]
  %v459 = vld [vmem:[%s7 + $0x188] sm:$0xff]
  %v460 = vld [vmem:[%s7 + $0x190] sm:$0xff]
  %v461 = vld [vmem:[%s7 + $0x198] sm:$0xff]
  %v462 = vld [vmem:[%s7 + $0x1a0] sm:$0xff]
  %v463 = vld [vmem:[%s7 + $0x1a8] sm:$0xff]
  %v464 = vld [vmem:[%s7 + $0x1b0] sm:$0xff]
  %v465 = vld [vmem:[%s7 + $0x1b8] sm:$0xff]
  %v466 = vld [vmem:[%s7 + $0x1c0] sm:$0xff]
  %v467 = vld [vmem:[%s7 + $0x1c8] sm:$0xff]
  %v468 = vld [vmem:[%s7 + $0x1d0] sm:$0xff]
  %v469 = vld [vmem:[%s7 + $0x1d8] sm:$0xff]
  %v470 = vld [vmem:[%s7 + $0x1e0] sm:$0xff]
  %v471 = vld [vmem:[%s7 + $0x1e8] sm:$0xff]
  %v472 = vld [vmem:[%s7 + $0x1f0] sm:$0xff]
  %v473 = vld [vmem:[%s7 + $0x1f8] sm:$0xff]
  %474 = vmatprep.subr.mxu0 0.0
  %475 = vmatpush1.msra.mxu0 %v425
  %476 = vmatprep.subr.mxu0 0.0
  %477 = vmatpush1.msra.mxu0 %v424
  %478 = vmatprep.subr.mxu0 0.0
  %479 = vmatpush1.msra.mxu0 %v423
  %480 = vmatprep.subr.mxu0 0.0
  %481 = vmatpush1.msra.mxu0 %v422
  %482 = vmatprep.subr.mxu0 0.0
  %483 = vmatpush1.msra.mxu0 %v421
  %484 = vmatprep.subr.mxu0 0.0
  %485 = vmatpush1.msra.mxu0 %v420
  %486 = vmatprep.subr.mxu0 0.0
  %487 = vmatpush1.msra.mxu0 %v419
  %488 = vmatprep.subr.mxu0 0.0
  %489 = vmatpush1.msra.mxu0 %v418
  %490 = vmatprep.subr.mxu0 0.0
  %491 = vmatpush1.msra.mxu0 %v417
  %492 = vmatprep.subr.mxu0 0.0
  %493 = vmatpush1.msra.mxu0 %v416
  %494 = vmatprep.subr.mxu0 0.0
  %495 = vmatpush1.msra.mxu0 %v415
  %496 = vmatprep.subr.mxu0 0.0
  %497 = vmatpush1.msra.mxu0 %v414
  %498 = vmatprep.subr.mxu0 0.0
  %499 = vmatpush1.msra.mxu0 %v413
  %500 = vmatprep.subr.mxu0 0.0
  %501 = vmatpush1.msra.mxu0 %v412
  %502 = vmatprep.subr.mxu0 0.0
  %503 = vmatpush1.msra.mxu0 %v411
  %504 = vmatprep.subr.mxu0 0.0
  %505 = vmatpush1.msra.mxu0 %v410
  %506 = vmatprep.subr.mxu0 0.0
  %507 = vmatpush2.msra.mxu0 %v441
  %508 = vmatprep.subr.mxu0 0.0
  %509 = vmatpush2.msra.mxu0 %v440
  %510 = vmatprep.subr.mxu0 0.0
  %511 = vmatpush2.msra.mxu0 %v439
  %512 = vmatprep.subr.mxu0 0.0
  %513 = vmatpush2.msra.mxu0 %v438
  %514 = vmatprep.subr.mxu0 0.0
  %515 = vmatpush2.msra.mxu0 %v437
  %516 = vmatprep.subr.mxu0 0.0
  %517 = vmatpush2.msra.mxu0 %v436
  %518 = vmatprep.subr.mxu0 0.0
  %519 = vmatpush2.msra.mxu0 %v435
  %520 = vmatprep.subr.mxu0 0.0
  %521 = vmatpush2.msra.mxu0 %v434
  %522 = vmatprep.subr.mxu0 0.0
  %523 = vmatpush2.msra.mxu0 %v433
  %524 = vmatprep.subr.mxu0 0.0
  %525 = vmatpush2.msra.mxu0 %v432
  %526 = vmatprep.subr.mxu0 0.0
  %527 = vmatpush2.msra.mxu0 %v431
  %528 = vmatprep.subr.mxu0 0.0
  %529 = vmatpush2.msra.mxu0 %v430
  %530 = vmatprep.subr.mxu0 0.0
  %531 = vmatpush2.msra.mxu0 %v429
  %532 = vmatprep.subr.mxu0 0.0
  %533 = vmatpush2.msra.mxu0 %v428
  %534 = vmatprep.subr.mxu0 0.0
  %535 = vmatpush2.msra.mxu0 %v427
  %536 = vmatprep.subr.mxu0 0.0
  %537 = vmatpush2.msra.mxu0 %v426
  %538 = vmatprep.mubr.f32.mxu0 %v395
  %539 = vmatmul.mubr.f32.gmra.mxu0 %v394
  %v540 = vpop.f32.mrf.mxu0
  %v541 = vadd.f32 0.0, %v540
  %v542 = vpop.f32.mrf.mxu0
  %543 = vmatprep.mubr.f32.mxu0 %v399
  %544 = vmatmul.mubr.f32.gmra.mxu0 %v398
  %v545 = vpop.f32.mrf.mxu0
  %v546 = vadd.f32 0.0, %v545
  %v547 = vpop.f32.mrf.mxu0
  %548 = vmatprep.mubr.f32.mxu0 %v403
  %549 = vmatmul.mubr.f32.gmra.mxu0 %v402
  %v550 = vpop.f32.mrf.mxu0
  %v551 = vadd.f32 0.0, %v550
  %v552 = vpop.f32.mrf.mxu0
  %553 = vmatprep.mubr.f32.mxu0 %v407
  %554 = vmatmul.mubr.f32.gmra.mxu0 %v406
  %v555 = vpop.f32.mrf.mxu0
  %v556 = vadd.f32 0.0, %v555
  %v557 = vpop.f32.mrf.mxu0
  %558 = vdwg.mxu0
  %559 = vmatprep.subr.mxu0 0.0
  %560 = vmatpush1.msra.mxu0 %v457
  %561 = vmatprep.subr.mxu0 0.0
  %562 = vmatpush1.msra.mxu0 %v456
  %563 = vmatprep.subr.mxu0 0.0
  %564 = vmatpush1.msra.mxu0 %v455
  %565 = vmatprep.subr.mxu0 0.0
  %566 = vmatpush1.msra.mxu0 %v454
  %567 = vmatprep.subr.mxu0 0.0
  %568 = vmatpush1.msra.mxu0 %v453
  %569 = vmatprep.subr.mxu0 0.0
  %570 = vmatpush1.msra.mxu0 %v452
  %571 = vmatprep.subr.mxu0 0.0
  %572 = vmatpush1.msra.mxu0 %v451
  %573 = vmatprep.subr.mxu0 0.0
  %574 = vmatpush1.msra.mxu0 %v450
  %575 = vmatprep.subr.mxu0 0.0
  %576 = vmatpush1.msra.mxu0 %v449
  %577 = vmatprep.subr.mxu0 0.0
  %578 = vmatpush1.msra.mxu0 %v448
  %579 = vmatprep.subr.mxu0 0.0
  %580 = vmatpush1.msra.mxu0 %v447
  %581 = vmatprep.subr.mxu0 0.0
  %582 = vmatpush1.msra.mxu0 %v446
  %583 = vmatprep.subr.mxu0 0.0
  %584 = vmatpush1.msra.mxu0 %v445
  %585 = vmatprep.subr.mxu0 0.0
  %586 = vmatpush1.msra.mxu0 %v444
  %587 = vmatprep.subr.mxu0 0.0
  %588 = vmatpush1.msra.mxu0 %v443
  %589 = vmatprep.subr.mxu0 0.0
  %590 = vmatpush1.msra.mxu0 %v442
  %591 = vmatprep.subr.mxu0 0.0
  %592 = vmatpush2.msra.mxu0 %v473
  %593 = vmatprep.subr.mxu0 0.0
  %594 = vmatpush2.msra.mxu0 %v472
  %595 = vmatprep.subr.mxu0 0.0
  %596 = vmatpush2.msra.mxu0 %v471
  %597 = vmatprep.subr.mxu0 0.0
  %598 = vmatpush2.msra.mxu0 %v470
  %599 = vmatprep.subr.mxu0 0.0
  %600 = vmatpush2.msra.mxu0 %v469
  %601 = vmatprep.subr.mxu0 0.0
  %602 = vmatpush2.msra.mxu0 %v468
  %603 = vmatprep.subr.mxu0 0.0
  %604 = vmatpush2.msra.mxu0 %v467
  %605 = vmatprep.subr.mxu0 0.0
  %606 = vmatpush2.msra.mxu0 %v466
  %607 = vmatprep.subr.mxu0 0.0
  %608 = vmatpush2.msra.mxu0 %v465
  %609 = vmatprep.subr.mxu0 0.0
  %610 = vmatpush2.msra.mxu0 %v464
  %611 = vmatprep.subr.mxu0 0.0
  %612 = vmatpush2.msra.mxu0 %v463
  %613 = vmatprep.subr.mxu0 0.0
  %614 = vmatpush2.msra.mxu0 %v462
  %615 = vmatprep.subr.mxu0 0.0
  %616 = vmatpush2.msra.mxu0 %v461
  %617 = vmatprep.subr.mxu0 0.0
  %618 = vmatpush2.msra.mxu0 %v460
  %619 = vmatprep.subr.mxu0 0.0
  %620 = vmatpush2.msra.mxu0 %v459
  %621 = vmatprep.subr.mxu0 0.0
  %622 = vmatpush2.msra.mxu0 %v458
  %623 = vmatprep.mubr.f32.mxu0 %v397
  %624 = vmatmul.mubr.f32.gmra.mxu0 %v396
  %v625 = vpop.f32.mrf.mxu0
  %v626 = vadd.f32 %v541, %v625
  %v627 = vpop.f32.mrf.mxu0
  %628 = vmatprep.mubr.f32.mxu0 %v401
  %629 = vmatmul.mubr.f32.gmra.mxu0 %v400
  %v630 = vpop.f32.mrf.mxu0
  %v631 = vadd.f32 %v546, %v630
  %v632 = vpop.f32.mrf.mxu0
  %633 = vmatprep.mubr.f32.mxu0 %v405
  %634 = vmatmul.mubr.f32.gmra.mxu0 %v404
  %v635 = vpop.f32.mrf.mxu0
  %v636 = vadd.f32 %v551, %v635
  %v637 = vpop.f32.mrf.mxu0
  %638 = vmatprep.mubr.f32.mxu0 %v409
  %639 = vmatmul.mubr.f32.gmra.mxu0 %v408
  %v640 = vpop.f32.mrf.mxu0
  %v641 = vadd.f32 %v556, %v640
  %v642 = vpop.f32.mrf.mxu0
  %643 = vdwg.mxu0
  %vm644 = vcmask 523264
  %v645 = vsel %vm644, %v126, 0.0
  %v646 = vsel %vm644, %v131, 0.0
  %v647 = vadd.f32 %v645, %v646
  %v648 = vsel %vm644, %v136, 0.0
  %v649 = vadd.f32 %v647, %v648
  %v650 = vsel %vm644, %v141, 0.0
  %v651 = vadd.f32 %v649, %v650
  %v652 = vrot.slane %v651, 4
  %v653 = vadd.f32 %v651, %v652
  %v654 = vrot.slane %v653, 2
  %v655 = vadd.f32 %v653, %v654
  %v656 = vrot.slane %v655, 1
  %v657 = vadd.f32 %v655, %v656
  %v658 = vsel %vm644, %v251, 0.0
  %v659 = vsel %vm644, %v256, 0.0
  %v660 = vadd.f32 %v658, %v659
  %v661 = vsel %vm644, %v261, 0.0
  %v662 = vadd.f32 %v660, %v661
  %v663 = vsel %vm644, %v266, 0.0
  %v664 = vadd.f32 %v662, %v663
  %v665 = vrot.slane %v664, 4
  %v666 = vadd.f32 %v664, %v665
  %v667 = vrot.slane %v666, 2
  %v668 = vadd.f32 %v666, %v667
  %v669 = vrot.slane %v668, 1
  %v670 = vadd.f32 %v668, %v669
  %v671 = vadd.f32 %v657, %v670
  %v672 = vsel %vm644, %v376, 0.0
  %v673 = vsel %vm644, %v381, 0.0
  %v674 = vadd.f32 %v672, %v673
  %v675 = vsel %vm644, %v386, 0.0
  %v676 = vadd.f32 %v674, %v675
  %v677 = vsel %vm644, %v391, 0.0
  %v678 = vadd.f32 %v676, %v677
  %v679 = vrot.slane %v678, 4
  %v680 = vadd.f32 %v678, %v679
  %v681 = vrot.slane %v680, 2
  %v682 = vadd.f32 %v680, %v681
  %v683 = vrot.slane %v682, 1
  %v684 = vadd.f32 %v682, %v683
  %v685 = vadd.f32 %v671, %v684
  %v686 = vsel %vm644, %v626, 0.0
  %v687 = vsel %vm644, %v631, 0.0
  %v688 = vadd.f32 %v686, %v687
  %v689 = vsel %vm644, %v636, 0.0
  %v690 = vadd.f32 %v688, %v689
  %v691 = vsel %vm644, %v641, 0.0
  %v692 = vadd.f32 %v690, %v691
  %v693 = vrot.slane %v692, 4
  %v694 = vadd.f32 %v692, %v693
  %v695 = vrot.slane %v694, 2
  %v696 = vadd.f32 %v694, %v695
  %v697 = vrot.slane %v696, 1
  %v698 = vadd.f32 %v696, %v697
  %v699 = vadd.f32 %v685, %v698
  %v700 = vrcp.pop 128.0
  %v701 = vmul.f32 %v699, %v700
  %v702 = vsub.f32 %v126, %v701
  %v703 = vsub.f32 %v131, %v701
  %v704 = vsub.f32 %v136, %v701
  %v705 = vsub.f32 %v141, %v701
  %v706 = vmul.f32 %v702, %v702
  %v707 = vmul.f32 %v703, %v703
  %v708 = vmul.f32 %v704, %v704
  %v709 = vmul.f32 %v705, %v705
  %v710 = vsel %vm644, %v706, 0.0
  %v711 = vsel %vm644, %v707, 0.0
  %v712 = vadd.f32 %v710, %v711
  %v713 = vsel %vm644, %v708, 0.0
  %v714 = vadd.f32 %v712, %v713
  %v715 = vsel %vm644, %v709, 0.0
  %v716 = vadd.f32 %v714, %v715
  %v717 = vrot.slane %v716, 4
  %v718 = vadd.f32 %v716, %v717
  %v719 = vrot.slane %v718, 2
  %v720 = vadd.f32 %v718, %v719
  %v721 = vrot.slane %v720, 1
  %v722 = vadd.f32 %v720, %v721
  %v723 = vsub.f32 %v251, %v701
  %v724 = vsub.f32 %v256, %v701
  %v725 = vsub.f32 %v261, %v701
  %v726 = vsub.f32 %v266, %v701
  %v727 = vmul.f32 %v723, %v723
  %v728 = vmul.f32 %v724, %v724
  %v729 = vmul.f32 %v725, %v725
  %v730 = vmul.f32 %v726, %v726
  %v731 = vsel %vm644, %v727, 0.0
  %v732 = vsel %vm644, %v728, 0.0
  %v733 = vadd.f32 %v731, %v732
  %v734 = vsel %vm644, %v729, 0.0
  %v735 = vadd.f32 %v733, %v734
  %v736 = vsel %vm644, %v730, 0.0
  %v737 = vadd.f32 %v735, %v736
  %v738 = vrot.slane %v737, 4
  %v739 = vadd.f32 %v737, %v738
  %v740 = vrot.slane %v739, 2
  %v741 = vadd.f32 %v739, %v740
  %v742 = vrot.slane %v741, 1
  %v743 = vadd.f32 %v741, %v742
  %v744 = vadd.f32 %v722, %v743
  %v745 = vsub.f32 %v376, %v701
  %v746 = vsub.f32 %v381, %v701
  %v747 = vsub.f32 %v386, %v701
  %v748 = vsub.f32 %v391, %v701
  %v749 = vmul.f32 %v745, %v745
  %v750 = vmul.f32 %v746, %v746
  %v751 = vmul.f32 %v747, %v747
  %v752 = vmul.f32 %v748, %v748
  %v753 = vsel %vm644, %v749, 0.0
  %v754 = vsel %vm644, %v750, 0.0
  %v755 = vadd.f32 %v753, %v754
  %v756 = vsel %vm644, %v751, 0.0
  %v757 = vadd.f32 %v755, %v756
  %v758 = vsel %vm644, %v752, 0.0
  %v759 = vadd.f32 %v757, %v758
  %v760 = vrot.slane %v759, 4
  %v761 = vadd.f32 %v759, %v760
  %v762 = vrot.slane %v761, 2
  %v763 = vadd.f32 %v761, %v762
  %v764 = vrot.slane %v763, 1
  %v765 = vadd.f32 %v763, %v764
  %v766 = vadd.f32 %v744, %v765
  %v767 = vsub.f32 %v626, %v701
  %v768 = vsub.f32 %v631, %v701
  %v769 = vsub.f32 %v636, %v701
  %v770 = vsub.f32 %v641, %v701
  %v771 = vmul.f32 %v767, %v767
  %v772 = vmul.f32 %v768, %v768
  %v773 = vmul.f32 %v769, %v769
  %v774 = vmul.f32 %v770, %v770
  %v775 = vsel %vm644, %v771, 0.0
  %v776 = vsel %vm644, %v772, 0.0
  %v777 = vadd.f32 %v775, %v776
  %v778 = vsel %vm644, %v773, 0.0
  %v779 = vadd.f32 %v777, %v778
  %v780 = vsel %vm644, %v774, 0.0
  %v781 = vadd.f32 %v779, %v780
  %v782 = vrot.slane %v781, 4
  %v783 = vadd.f32 %v781, %v782
  %v784 = vrot.slane %v783, 2
  %v785 = vadd.f32 %v783, %v784
  %v786 = vrot.slane %v785, 1
  %v787 = vadd.f32 %v785, %v786
  %v788 = vadd.f32 %v766, %v787
  %v789 = vmul.f32 %v788, %v700
  %v790 = vld [vmem:[%s8] sm:$0x1]
  %v791 = vadd.f32 %v789, 1e-05
  %v792 = vrsqrt.pop %v791
  %v793 = vmul.f32 %v790, %v792
  %v794 = vld [vmem:[%s9] sm:$0x1]
  %v795 = vmul.f32 %v701, %v793
  %v796 = vsub.f32 %v794, %v795
  %v798 = vlaneseq
  %v799 = vshrl.u32 %v798, 7
  %v800 = vsub.s32 0, %v799
  %v801 = vrot.slane %v793, %v800
  %v803 = vmul.f32 %v126, %v801
  %v804 = vmul.f32 %v131, %v801
  %v805 = vmul.f32 %v136, %v801
  %v806 = vmul.f32 %v141, %v801
  %v808 = vlaneseq
  %v809 = vshrl.u32 %v808, 7
  %v810 = vsub.s32 0, %v809
  %v811 = vrot.slane %v796, %v810
  %v813 = vadd.f32 %v803, %v811
  %v814 = vadd.f32 %v804, %v811
  %v815 = vadd.f32 %v805, %v811
  %v816 = vadd.f32 %v806, %v811
  %vm817 = vcmp.ge.f32.partialorder %v813, 0.0
  %vm818 = vcmp.ge.f32.partialorder %v814, 0.0
  %vm819 = vcmp.ge.f32.partialorder %v815, 0.0
  %vm820 = vcmp.ge.f32.partialorder %v816, 0.0
  %v821 = vmul.f32 %v813, 0.2
  %v822 = vmul.f32 %v814, 0.2
  %v823 = vmul.f32 %v815, 0.2
  %v824 = vmul.f32 %v816, 0.2
  %v825 = vsel %vm817, %v813, %v821
  %v826 = vsel %vm818, %v814, %v822
  %v827 = vsel %vm819, %v815, %v823
  %v828 = vsel %vm820, %v816, %v824
  %829 = vst.msk [vmem:[%s10] sm:$0xff] %vm644, %v825
  %830 = vst.msk [vmem:[%s10 + $0x8] sm:$0xff] %vm644, %v826
  %831 = vst.msk [vmem:[%s10 + $0x10] sm:$0xff] %vm644, %v827
  %832 = vst.msk [vmem:[%s10 + $0x18] sm:$0xff] %vm644, %v828
  %v833 = vmul.f32 %v251, %v801
  %v834 = vmul.f32 %v256, %v801
  %v835 = vmul.f32 %v261, %v801
  %v836 = vmul.f32 %v266, %v801
  %v837 = vadd.f32 %v833, %v811
  %v838 = vadd.f32 %v834, %v811
  %v839 = vadd.f32 %v835, %v811
  %v840 = vadd.f32 %v836, %v811
  %vm841 = vcmp.ge.f32.partialorder %v837, 0.0
  %vm842 = vcmp.ge.f32.partialorder %v838, 0.0
  %vm843 = vcmp.ge.f32.partialorder %v839, 0.0
  %vm844 = vcmp.ge.f32.partialorder %v840, 0.0
  %v845 = vmul.f32 %v837, 0.2
  %v846 = vmul.f32 %v838, 0.2
  %v847 = vmul.f32 %v839, 0.2
  %v848 = vmul.f32 %v840, 0.2
  %v849 = vsel %vm841, %v837, %v845
  %v850 = vsel %vm842, %v838, %v846
  %v851 = vsel %vm843, %v839, %v847
  %v852 = vsel %vm844, %v840, %v848
  %853 = vst.msk [vmem:[%s11] sm:$0xff] %vm644, %v849
  %854 = vst.msk [vmem:[%s11 + $0x8] sm:$0xff] %vm644, %v850
  %855 = vst.msk [vmem:[%s11 + $0x10] sm:$0xff] %vm644, %v851
  %856 = vst.msk [vmem:[%s11 + $0x18] sm:$0xff] %vm644, %v852
  %v857 = vmul.f32 %v376, %v801
  %v858 = vmul.f32 %v381, %v801
  %v859 = vmul.f32 %v386, %v801
  %v860 = vmul.f32 %v391, %v801
  %v861 = vadd.f32 %v857, %v811
  %v862 = vadd.f32 %v858, %v811
  %v863 = vadd.f32 %v859, %v811
  %v864 = vadd.f32 %v860, %v811
  %vm865 = vcmp.ge.f32.partialorder %v861, 0.0
  %vm866 = vcmp.ge.f32.partialorder %v862, 0.0
  %vm867 = vcmp.ge.f32.partialorder %v863, 0.0
  %vm868 = vcmp.ge.f32.partialorder %v864, 0.0
  %v869 = vmul.f32 %v861, 0.2
  %v870 = vmul.f32 %v862, 0.2
  %v871 = vmul.f32 %v863, 0.2
  %v872 = vmul.f32 %v864, 0.2
  %v873 = vsel %vm865, %v861, %v869
  %v874 = vsel %vm866, %v862, %v870
  %v875 = vsel %vm867, %v863, %v871
  %v876 = vsel %vm868, %v864, %v872
  %877 = vst.msk [vmem:[%s12] sm:$0xff] %vm644, %v873
  %878 = vst.msk [vmem:[%s12 + $0x8] sm:$0xff] %vm644, %v874
  %879 = vst.msk [vmem:[%s12 + $0x10] sm:$0xff] %vm644, %v875
  %880 = vst.msk [vmem:[%s12 + $0x18] sm:$0xff] %vm644, %v876
  %v881 = vmul.f32 %v626, %v801
  %v882 = vmul.f32 %v631, %v801
  %v883 = vmul.f32 %v636, %v801
  %v884 = vmul.f32 %v641, %v801
  %v885 = vadd.f32 %v881, %v811
  %v886 = vadd.f32 %v882, %v811
  %v887 = vadd.f32 %v883, %v811
  %v888 = vadd.f32 %v884, %v811
  %vm889 = vcmp.ge.f32.partialorder %v885, 0.0
  %vm890 = vcmp.ge.f32.partialorder %v886, 0.0
  %vm891 = vcmp.ge.f32.partialorder %v887, 0.0
  %vm892 = vcmp.ge.f32.partialorder %v888, 0.0
  %v893 = vmul.f32 %v885, 0.2
  %v894 = vmul.f32 %v886, 0.2
  %v895 = vmul.f32 %v887, 0.2
  %v896 = vmul.f32 %v888, 0.2
  %v897 = vsel %vm889, %v885, %v893
  %v898 = vsel %vm890, %v886, %v894
  %v899 = vsel %vm891, %v887, %v895
  %v900 = vsel %vm892, %v888, %v896
  %901 = vst.msk [vmem:[%s13] sm:$0xff] %vm644, %v897
  %902 = vst.msk [vmem:[%s13 + $0x8] sm:$0xff] %vm644, %v898
  %903 = vst.msk [vmem:[%s13 + $0x10] sm:$0xff] %vm644, %v899
  %904 = vst.msk [vmem:[%s13 + $0x18] sm:$0xff] %vm644, %v900
  // Predicated region
  $region42: #{vae_forward.12} parent=0 // pred_check
    _
  $region43: #{vae_forward.12} parent=0 // pred_check_branch
    %906 = sbr.rel (0) target = $region45
  $region44: #{vae_forward.12} parent=0 // pred_region
    _
  $region45: #{vae_forward.12} parent=0 // pred_fallthru
    _
  // Predicated region
  $region46: #{vae_forward.12} parent=0 // pred_check
    _
  $region47: #{vae_forward.12} parent=0 // pred_check_branch
    %908 = sbr.rel (0) target = $region49
  $region48: #{vae_forward.12} parent=0 // pred_region
    _
  $region49: #{vae_forward.12} parent=0 // pred_fallthru
    _
  // Predicated region
  $region50: #{vae_forward.12} parent=0 // pred_check
    _
  $region51: #{vae_forward.12} parent=0 // pred_check_branch
    %910 = sbr.rel (0) target = $region53
  $region52: #{vae_forward.12} parent=0 // pred_region
    _
  $region53: #{vae_forward.12} parent=0 // pred_fallthru
    _
  // Predicated region
  $region54: #{vae_forward.12} parent=0 // pred_check
    _
  $region55: #{vae_forward.12} parent=0 // pred_check_branch
    %912 = sbr.rel (0) target = $region57
  $region56: #{vae_forward.12} parent=0 // pred_region
    _
  $region57: #{vae_forward.12} parent=0 // pred_fallthru
    _
  // Predicated region
  $region58: #{vae_forward.12} parent=0 // pred_check
    _
  $region59: #{vae_forward.12} parent=0 // pred_check_branch
    %914 = sbr.rel (0) target = $region61
  $region60: #{vae_forward.12} parent=0 // pred_region
    _
  $region61: #{vae_forward.12} parent=0 // pred_fallthru
    _
  // Predicated region
  $region62: #{vae_forward.12} parent=0 // pred_check
    _
  $region63: #{vae_forward.12} parent=0 // pred_check_branch
    %916 = sbr.rel (0) target = $region65
  $region64: #{vae_forward.12} parent=0 // pred_region
    _
  $region65: #{vae_forward.12} parent=0 // pred_fallthru
    _
  // Predicated region
  $region66: #{vae_forward.12} parent=0 // pred_check
    _
  $region67: #{vae_forward.12} parent=0 // pred_check_branch
    %918 = sbr.rel (0) target = $region69
  $region68: #{vae_forward.12} parent=0 // pred_region
    _
  $region69: #{vae_forward.12} parent=0 // pred_fallthru
    _
  // Predicated region
  $region70: #{vae_forward.12} parent=0 // pred_check
    _
  $region71: #{vae_forward.12} parent=0 // pred_check_branch
    %920 = sbr.rel (0) target = $region73
  $region72: #{vae_forward.12} parent=0 // pred_region
    _
  $region73: #{vae_forward.12} parent=0 // pred_fallthru
    _

// kernel: vae_forward.13
$region0: #{vae_forward.13}
  #allocation0 [shape = 'u32[]', space=smem, size = 0x4, offset = 0x4, fixed_abs, tag = 'smem constant byte address 0x4 - core index']
  #allocation1 [shape = 'u32[144,128]{1,0:T(1,128)}', space=vmem, size = 0x12000, scoped, tag = 'internal scratch']
  %s0 = inlined_call_operand.vmem [shape: f32[128,64], index: 0, kind: input, shape index: {}]
  %s1 = inlined_call_operand.vmem [shape: f32[128,128], index: 1, kind: input, shape index: {}]
  %s2 = inlined_call_operand.vmem [shape: f32[128,128], index: 2, kind: input, shape index: {}]
  %s3 = inlined_call_operand.vmem [shape: f32[128,256], index: 3, kind: input, shape index: {}]
  %s4 = inlined_call_operand.vmem [shape: f32[64,3], index: 4, kind: input, shape index: {}]
  %s5 = inlined_call_operand.vmem [shape: f32[128,3], index: 5, kind: input, shape index: {}]
  %s6 = inlined_call_operand.vmem [shape: f32[128,3], index: 6, kind: input, shape index: {}]
  %s7 = inlined_call_operand.vmem [shape: f32[256,3], index: 7, kind: input, shape index: {}]
  %s8 = inlined_call_operand.vmem [shape: f32[1,3], index: 8, kind: input, shape index: {}]
  %s9 = inlined_call_operand.vmem [shape: f32[1,3], index: 9, kind: input, shape index: {}]
  %s10 = inlined_call_operand.vmem [shape: f32[128,3], index: 10, kind: output, shape index: {0}]
  %s11 = inlined_call_operand.vmem [shape: f32[128,3], index: 11, kind: output, shape index: {1}]
  %s12 = inlined_call_operand.vmem [shape: f32[128,3], index: 12, kind: output, shape index: {2}]
  %s13 = inlined_call_operand.vmem [shape: f32[128,3], index: 13, kind: output, shape index: {3}]
  %14 = xla_tuple %s10, %s11, %s12, %s13
  %s15 = sld [smem:[#allocation0]]
  $region74: #{vae_forward.13} parent=0
    _
  %s17 = ssub.s32 1, %s15
  %s18 = scalar_select 0, %s17, %s15
  // Predicated region
  $region2: #{vae_forward.13} parent=0 // pred_check
    _
  $region3: #{vae_forward.13} parent=0 // pred_check_branch
    %20 = sbr.rel (0) target = $region5
  $region4: #{vae_forward.13} parent=0 // pred_region
    _
  $region5: #{vae_forward.13} parent=0 // pred_fallthru
    _
  // Predicated region
  $region6: #{vae_forward.13} parent=0 // pred_check
    _
  $region7: #{vae_forward.13} parent=0 // pred_check_branch
    %22 = sbr.rel (0) target = $region9
  $region8: #{vae_forward.13} parent=0 // pred_region
    _
  $region9: #{vae_forward.13} parent=0 // pred_fallthru
    _
  // Predicated region
  $region10: #{vae_forward.13} parent=0 // pred_check
    _
  $region11: #{vae_forward.13} parent=0 // pred_check_branch
    %24 = sbr.rel (0) target = $region13
  $region12: #{vae_forward.13} parent=0 // pred_region
    _
  $region13: #{vae_forward.13} parent=0 // pred_fallthru
    _
  // Predicated region
  $region14: #{vae_forward.13} parent=0 // pred_check
    _
  $region15: #{vae_forward.13} parent=0 // pred_check_branch
    %26 = sbr.rel (0) target = $region17
  $region16: #{vae_forward.13} parent=0 // pred_region
    _
  $region17: #{vae_forward.13} parent=0 // pred_fallthru
    _
  // Predicated region
  $region18: #{vae_forward.13} parent=0 // pred_check
    _
  $region19: #{vae_forward.13} parent=0 // pred_check_branch
    %28 = sbr.rel (0) target = $region21
  $region20: #{vae_forward.13} parent=0 // pred_region
    _
  $region21: #{vae_forward.13} parent=0 // pred_fallthru
    _
  // Predicated region
  $region22: #{vae_forward.13} parent=0 // pred_check
    _
  $region23: #{vae_forward.13} parent=0 // pred_check_branch
    %30 = sbr.rel (0) target = $region25
  $region24: #{vae_forward.13} parent=0 // pred_region
    _
  $region25: #{vae_forward.13} parent=0 // pred_fallthru
    _
  // Predicated region
  $region26: #{vae_forward.13} parent=0 // pred_check
    _
  $region27: #{vae_forward.13} parent=0 // pred_check_branch
    %32 = sbr.rel (0) target = $region29
  $region28: #{vae_forward.13} parent=0 // pred_region
    _
  $region29: #{vae_forward.13} parent=0 // pred_fallthru
    _
  // Predicated region
  $region30: #{vae_forward.13} parent=0 // pred_check
    _
  $region31: #{vae_forward.13} parent=0 // pred_check_branch
    %34 = sbr.rel (0) target = $region33
  $region32: #{vae_forward.13} parent=0 // pred_region
    _
  $region33: #{vae_forward.13} parent=0 // pred_fallthru
    _
  // Predicated region
  $region34: #{vae_forward.13} parent=0 // pred_check
    _
  $region35: #{vae_forward.13} parent=0 // pred_check_branch
    %36 = sbr.rel (0) target = $region37
  $region36: #{vae_forward.13} parent=0 // pred_region
    _
  $region37: #{vae_forward.13} parent=0 // pred_fallthru
    _
  // Predicated region
  $region38: #{vae_forward.13} parent=0 // pred_check
    _
  $region39: #{vae_forward.13} parent=0 // pred_check_branch
    %38 = sbr.rel (0) target = $region41
  $region40: #{vae_forward.13} parent=0 // pred_region
    _
  $region41: #{vae_forward.13} parent=0 // pred_fallthru
    _
  %v39 = vld [vmem:[%s0] sm:$0xff]
  %v40 = vld [vmem:[%s0 + $0x8] sm:$0xff]
  %v41 = vld [vmem:[%s0 + $0x10] sm:$0xff]
  %v42 = vld [vmem:[%s0 + $0x18] sm:$0xff]
  %v43 = vld [vmem:[%s0 + $0x20] sm:$0xff]
  %v44 = vld [vmem:[%s0 + $0x28] sm:$0xff]
  %v45 = vld [vmem:[%s0 + $0x30] sm:$0xff]
  %v46 = vld [vmem:[%s0 + $0x38] sm:$0xff]
  %v47 = vld [vmem:[%s0 + $0x40] sm:$0xff]
  %v48 = vld [vmem:[%s0 + $0x48] sm:$0xff]
  %v49 = vld [vmem:[%s0 + $0x50] sm:$0xff]
  %v50 = vld [vmem:[%s0 + $0x58] sm:$0xff]
  %v51 = vld [vmem:[%s0 + $0x60] sm:$0xff]
  %v52 = vld [vmem:[%s0 + $0x68] sm:$0xff]
  %v53 = vld [vmem:[%s0 + $0x70] sm:$0xff]
  %v54 = vld [vmem:[%s0 + $0x78] sm:$0xff]
  %v55 = vld [vmem:[%s4] sm:$0xff]
  %v56 = vld [vmem:[%s4 + $0x8] sm:$0xff]
  %v57 = vld [vmem:[%s4 + $0x10] sm:$0xff]
  %v58 = vld [vmem:[%s4 + $0x18] sm:$0xff]
  %v59 = vld [vmem:[%s4 + $0x20] sm:$0xff]
  %v60 = vld [vmem:[%s4 + $0x28] sm:$0xff]
  %v61 = vld [vmem:[%s4 + $0x30] sm:$0xff]
  %v62 = vld [vmem:[%s4 + $0x38] sm:$0xff]
  %vm63 = vcmask 523264
  %v65 = vsel %vm63, %v39, 0
  %v68 = vsel %vm63, %v40, 0
  %v71 = vsel %vm63, %v41, 0
  %v74 = vsel %vm63, %v42, 0
  %v77 = vsel %vm63, %v43, 0
  %v80 = vsel %vm63, %v44, 0
  %v83 = vsel %vm63, %v45, 0
  %v86 = vsel %vm63, %v46, 0
  %v89 = vsel %vm63, %v47, 0
  %v92 = vsel %vm63, %v48, 0
  %v95 = vsel %vm63, %v49, 0
  %v98 = vsel %vm63, %v50, 0
  %v101 = vsel %vm63, %v51, 0
  %v104 = vsel %vm63, %v52, 0
  %v107 = vsel %vm63, %v53, 0
  %v110 = vsel %vm63, %v54, 0
  %112 = vmatprep.subr.mxu0 0.0
  %113 = vmatpush1.msra.mxu0 0.0
  %114 = vmatprep.subr.mxu0 0.0
  %115 = vmatpush1.msra.mxu0 0.0
  %116 = vmatprep.subr.mxu0 0.0
  %117 = vmatpush1.msra.mxu0 0.0
  %118 = vmatprep.subr.mxu0 0.0
  %119 = vmatpush1.msra.mxu0 0.0
  %120 = vmatprep.subr.mxu0 0.0
  %121 = vmatpush1.msra.mxu0 0.0
  %122 = vmatprep.subr.mxu0 0.0
  %123 = vmatpush1.msra.mxu0 0.0
  %124 = vmatprep.subr.mxu0 0.0
  %125 = vmatpush1.msra.mxu0 0.0
  %126 = vmatprep.subr.mxu0 0.0
  %127 = vmatpush1.msra.mxu0 0.0
  %128 = vmatprep.subr.mxu0 0.0
  %129 = vmatpush1.msra.mxu0 %v62
  %130 = vmatprep.subr.mxu0 0.0
  %131 = vmatpush1.msra.mxu0 %v61
  %132 = vmatprep.subr.mxu0 0.0
  %133 = vmatpush1.msra.mxu0 %v60
  %134 = vmatprep.subr.mxu0 0.0
  %135 = vmatpush1.msra.mxu0 %v59
  %136 = vmatprep.subr.mxu0 0.0
  %137 = vmatpush1.msra.mxu0 %v58
  %138 = vmatprep.subr.mxu0 0.0
  %139 = vmatpush1.msra.mxu0 %v57
  %140 = vmatprep.subr.mxu0 0.0
  %141 = vmatpush1.msra.mxu0 %v56
  %142 = vmatprep.subr.mxu0 0.0
  %143 = vmatpush1.msra.mxu0 %v55
  %144 = vmatprep.subr.mxu0 0.0
  %145 = vmatpush2.msra.mxu0 0.0
  %146 = vmatprep.subr.mxu0 0.0
  %147 = vmatpush2.msra.mxu0 0.0
  %148 = vmatprep.subr.mxu0 0.0
  %149 = vmatpush2.msra.mxu0 0.0
  %150 = vmatprep.subr.mxu0 0.0
  %151 = vmatpush2.msra.mxu0 0.0
  %152 = vmatprep.subr.mxu0 0.0
  %153 = vmatpush2.msra.mxu0 0.0
  %154 = vmatprep.subr.mxu0 0.0
  %155 = vmatpush2.msra.mxu0 0.0
  %156 = vmatprep.subr.mxu0 0.0
  %157 = vmatpush2.msra.mxu0 0.0
  %158 = vmatprep.subr.mxu0 0.0
  %159 = vmatpush2.msra.mxu0 0.0
  %160 = vmatprep.subr.mxu0 0.0
  %161 = vmatpush2.msra.mxu0 0.0
  %162 = vmatprep.subr.mxu0 0.0
  %163 = vmatpush2.msra.mxu0 0.0
  %164 = vmatprep.subr.mxu0 0.0
  %165 = vmatpush2.msra.mxu0 0.0
  %166 = vmatprep.subr.mxu0 0.0
  %167 = vmatpush2.msra.mxu0 0.0
  %168 = vmatprep.subr.mxu0 0.0
  %169 = vmatpush2.msra.mxu0 0.0
  %170 = vmatprep.subr.mxu0 0.0
  %171 = vmatpush2.msra.mxu0 0.0
  %172 = vmatprep.subr.mxu0 0.0
  %173 = vmatpush2.msra.mxu0 0.0
  %174 = vmatprep.subr.mxu0 0.0
  %175 = vmatpush2.msra.mxu0 0.0
  %176 = vmatprep.mubr.f32.mxu0 0.0
  %177 = vmatmul.mubr.f32.gmra.mxu0 %v65
  %v178 = vpop.f32.mrf.mxu0
  %v179 = vadd.f32 0.0, %v178
  %v180 = vpop.f32.mrf.mxu0
  %181 = vmatprep.mubr.f32.mxu0 0.0
  %182 = vmatmul.mubr.f32.gmra.mxu0 %v68
  %v183 = vpop.f32.mrf.mxu0
  %v184 = vadd.f32 0.0, %v183
  %v185 = vpop.f32.mrf.mxu0
  %186 = vmatprep.mubr.f32.mxu0 0.0
  %187 = vmatmul.mubr.f32.gmra.mxu0 %v71
  %v188 = vpop.f32.mrf.mxu0
  %v189 = vadd.f32 0.0, %v188
  %v190 = vpop.f32.mrf.mxu0
  %191 = vmatprep.mubr.f32.mxu0 0.0
  %192 = vmatmul.mubr.f32.gmra.mxu0 %v74
  %v193 = vpop.f32.mrf.mxu0
  %v194 = vadd.f32 0.0, %v193
  %v195 = vpop.f32.mrf.mxu0
  %196 = vmatprep.mubr.f32.mxu0 0.0
  %197 = vmatmul.mubr.f32.gmra.mxu0 %v77
  %v198 = vpop.f32.mrf.mxu0
  %v199 = vadd.f32 0.0, %v198
  %v200 = vpop.f32.mrf.mxu0
  %201 = vmatprep.mubr.f32.mxu0 0.0
  %202 = vmatmul.mubr.f32.gmra.mxu0 %v80
  %v203 = vpop.f32.mrf.mxu0
  %v204 = vadd.f32 0.0, %v203
  %v205 = vpop.f32.mrf.mxu0
  %206 = vmatprep.mubr.f32.mxu0 0.0
  %207 = vmatmul.mubr.f32.gmra.mxu0 %v83
  %v208 = vpop.f32.mrf.mxu0
  %v209 = vadd.f32 0.0, %v208
  %v210 = vpop.f32.mrf.mxu0
  %211 = vmatprep.mubr.f32.mxu0 0.0
  %212 = vmatmul.mubr.f32.gmra.mxu0 %v86
  %v213 = vpop.f32.mrf.mxu0
  %v214 = vadd.f32 0.0, %v213
  %v215 = vpop.f32.mrf.mxu0
  %216 = vmatprep.mubr.f32.mxu0 0.0
  %217 = vmatmul.mubr.f32.gmra.mxu0 %v89
  %v218 = vpop.f32.mrf.mxu0
  %v219 = vadd.f32 0.0, %v218
  %v220 = vpop.f32.mrf.mxu0
  %221 = vmatprep.mubr.f32.mxu0 0.0
  %222 = vmatmul.mubr.f32.gmra.mxu0 %v92
  %v223 = vpop.f32.mrf.mxu0
  %v224 = vadd.f32 0.0, %v223
  %v225 = vpop.f32.mrf.mxu0
  %226 = vmatprep.mubr.f32.mxu0 0.0
  %227 = vmatmul.mubr.f32.gmra.mxu0 %v95
  %v228 = vpop.f32.mrf.mxu0
  %v229 = vadd.f32 0.0, %v228
  %v230 = vpop.f32.mrf.mxu0
  %231 = vmatprep.mubr.f32.mxu0 0.0
  %232 = vmatmul.mubr.f32.gmra.mxu0 %v98
  %v233 = vpop.f32.mrf.mxu0
  %v234 = vadd.f32 0.0, %v233
  %v235 = vpop.f32.mrf.mxu0
  %236 = vmatprep.mubr.f32.mxu0 0.0
  %237 = vmatmul.mubr.f32.gmra.mxu0 %v101
  %v238 = vpop.f32.mrf.mxu0
  %v239 = vadd.f32 0.0, %v238
  %v240 = vpop.f32.mrf.mxu0
  %241 = vmatprep.mubr.f32.mxu0 0.0
  %242 = vmatmul.mubr.f32.gmra.mxu0 %v104
  %v243 = vpop.f32.mrf.mxu0
  %v244 = vadd.f32 0.0, %v243
  %v245 = vpop.f32.mrf.mxu0
  %246 = vmatprep.mubr.f32.mxu0 0.0
  %247 = vmatmul.mubr.f32.gmra.mxu0 %v107
  %v248 = vpop.f32.mrf.mxu0
  %v249 = vadd.f32 0.0, %v248
  %v250 = vpop.f32.mrf.mxu0
  %251 = vmatprep.mubr.f32.mxu0 0.0
  %252 = vmatmul.mubr.f32.gmra.mxu0 %v110
  %v253 = vpop.f32.mrf.mxu0
  %v254 = vadd.f32 0.0, %v253
  %v255 = vpop.f32.mrf.mxu0
  %256 = vdwg.mxu0
  %v257 = vld [vmem:[%s1] sm:$0xff]
  %v258 = vld [vmem:[%s1 + $0x8] sm:$0xff]
  %v259 = vld [vmem:[%s1 + $0x10] sm:$0xff]
  %v260 = vld [vmem:[%s1 + $0x18] sm:$0xff]
  %v261 = vld [vmem:[%s1 + $0x20] sm:$0xff]
  %v262 = vld [vmem:[%s1 + $0x28] sm:$0xff]
  %v263 = vld [vmem:[%s1 + $0x30] sm:$0xff]
  %v264 = vld [vmem:[%s1 + $0x38] sm:$0xff]
  %v265 = vld [vmem:[%s1 + $0x40] sm:$0xff]
  %v266 = vld [vmem:[%s1 + $0x48] sm:$0xff]
  %v267 = vld [vmem:[%s1 + $0x50] sm:$0xff]
  %v268 = vld [vmem:[%s1 + $0x58] sm:$0xff]
  %v269 = vld [vmem:[%s1 + $0x60] sm:$0xff]
  %v270 = vld [vmem:[%s1 + $0x68] sm:$0xff]
  %v271 = vld [vmem:[%s1 + $0x70] sm:$0xff]
  %v272 = vld [vmem:[%s1 + $0x78] sm:$0xff]
  %v273 = vld [vmem:[%s5] sm:$0xff]
  %v274 = vld [vmem:[%s5 + $0x8] sm:$0xff]
  %v275 = vld [vmem:[%s5 + $0x10] sm:$0xff]
  %v276 = vld [vmem:[%s5 + $0x18] sm:$0xff]
  %v277 = vld [vmem:[%s5 + $0x20] sm:$0xff]
  %v278 = vld [vmem:[%s5 + $0x28] sm:$0xff]
  %v279 = vld [vmem:[%s5 + $0x30] sm:$0xff]
  %v280 = vld [vmem:[%s5 + $0x38] sm:$0xff]
  %v281 = vld [vmem:[%s5 + $0x40] sm:$0xff]
  %v282 = vld [vmem:[%s5 + $0x48] sm:$0xff]
  %v283 = vld [vmem:[%s5 + $0x50] sm:$0xff]
  %v284 = vld [vmem:[%s5 + $0x58] sm:$0xff]
  %v285 = vld [vmem:[%s5 + $0x60] sm:$0xff]
  %v286 = vld [vmem:[%s5 + $0x68] sm:$0xff]
  %v287 = vld [vmem:[%s5 + $0x70] sm:$0xff]
  %v288 = vld [vmem:[%s5 + $0x78] sm:$0xff]
  %289 = vmatprep.subr.mxu0 0.0
  %290 = vmatpush1.msra.mxu0 %v288
  %291 = vmatprep.subr.mxu0 0.0
  %292 = vmatpush1.msra.mxu0 %v287
  %293 = vmatprep.subr.mxu0 0.0
  %294 = vmatpush1.msra.mxu0 %v286
  %295 = vmatprep.subr.mxu0 0.0
  %296 = vmatpush1.msra.mxu0 %v285
  %297 = vmatprep.subr.mxu0 0.0
  %298 = vmatpush1.msra.mxu0 %v284
  %299 = vmatprep.subr.mxu0 0.0
  %300 = vmatpush1.msra.mxu0 %v283
  %301 = vmatprep.subr.mxu0 0.0
  %302 = vmatpush1.msra.mxu0 %v282
  %303 = vmatprep.subr.mxu0 0.0
  %304 = vmatpush1.msra.mxu0 %v281
  %305 = vmatprep.subr.mxu0 0.0
  %306 = vmatpush1.msra.mxu0 %v280
  %307 = vmatprep.subr.mxu0 0.0
  %308 = vmatpush1.msra.mxu0 %v279
  %309 = vmatprep.subr.mxu0 0.0
  %310 = vmatpush1.msra.mxu0 %v278
  %311 = vmatprep.subr.mxu0 0.0
  %312 = vmatpush1.msra.mxu0 %v277
  %313 = vmatprep.subr.mxu0 0.0
  %314 = vmatpush1.msra.mxu0 %v276
  %315 = vmatprep.subr.mxu0 0.0
  %316 = vmatpush1.msra.mxu0 %v275
  %317 = vmatprep.subr.mxu0 0.0
  %318 = vmatpush1.msra.mxu0 %v274
  %319 = vmatprep.subr.mxu0 0.0
  %320 = vmatpush1.msra.mxu0 %v273
  %321 = vmatprep.subr.mxu0 0.0
  %322 = vmatpush2.msra.mxu0 0.0
  %323 = vmatprep.subr.mxu0 0.0
  %324 = vmatpush2.msra.mxu0 0.0
  %325 = vmatprep.subr.mxu0 0.0
  %326 = vmatpush2.msra.mxu0 0.0
  %327 = vmatprep.subr.mxu0 0.0
  %328 = vmatpush2.msra.mxu0 0.0
  %329 = vmatprep.subr.mxu0 0.0
  %330 = vmatpush2.msra.mxu0 0.0
  %331 = vmatprep.subr.mxu0 0.0
  %332 = vmatpush2.msra.mxu0 0.0
  %333 = vmatprep.subr.mxu0 0.0
  %334 = vmatpush2.msra.mxu0 0.0
  %335 = vmatprep.subr.mxu0 0.0
  %336 = vmatpush2.msra.mxu0 0.0
  %337 = vmatprep.subr.mxu0 0.0
  %338 = vmatpush2.msra.mxu0 0.0
  %339 = vmatprep.subr.mxu0 0.0
  %340 = vmatpush2.msra.mxu0 0.0
  %341 = vmatprep.subr.mxu0 0.0
  %342 = vmatpush2.msra.mxu0 0.0
  %343 = vmatprep.subr.mxu0 0.0
  %344 = vmatpush2.msra.mxu0 0.0
  %345 = vmatprep.subr.mxu0 0.0
  %346 = vmatpush2.msra.mxu0 0.0
  %347 = vmatprep.subr.mxu0 0.0
  %348 = vmatpush2.msra.mxu0 0.0
  %349 = vmatprep.subr.mxu0 0.0
  %350 = vmatpush2.msra.mxu0 0.0
  %351 = vmatprep.subr.mxu0 0.0
  %352 = vmatpush2.msra.mxu0 0.0
  %353 = vmatprep.mubr.f32.mxu0 0.0
  %354 = vmatmul.mubr.f32.gmra.mxu0 %v257
  %v355 = vpop.f32.mrf.mxu0
  %v356 = vadd.f32 0.0, %v355
  %v357 = vpop.f32.mrf.mxu0
  %358 = vmatprep.mubr.f32.mxu0 0.0
  %359 = vmatmul.mubr.f32.gmra.mxu0 %v258
  %v360 = vpop.f32.mrf.mxu0
  %v361 = vadd.f32 0.0, %v360
  %v362 = vpop.f32.mrf.mxu0
  %363 = vmatprep.mubr.f32.mxu0 0.0
  %364 = vmatmul.mubr.f32.gmra.mxu0 %v259
  %v365 = vpop.f32.mrf.mxu0
  %v366 = vadd.f32 0.0, %v365
  %v367 = vpop.f32.mrf.mxu0
  %368 = vmatprep.mubr.f32.mxu0 0.0
  %369 = vmatmul.mubr.f32.gmra.mxu0 %v260
  %v370 = vpop.f32.mrf.mxu0
  %v371 = vadd.f32 0.0, %v370
  %v372 = vpop.f32.mrf.mxu0
  %373 = vmatprep.mubr.f32.mxu0 0.0
  %374 = vmatmul.mubr.f32.gmra.mxu0 %v261
  %v375 = vpop.f32.mrf.mxu0
  %v376 = vadd.f32 0.0, %v375
  %v377 = vpop.f32.mrf.mxu0
  %378 = vmatprep.mubr.f32.mxu0 0.0
  %379 = vmatmul.mubr.f32.gmra.mxu0 %v262
  %v380 = vpop.f32.mrf.mxu0
  %v381 = vadd.f32 0.0, %v380
  %v382 = vpop.f32.mrf.mxu0
  %383 = vmatprep.mubr.f32.mxu0 0.0
  %384 = vmatmul.mubr.f32.gmra.mxu0 %v263
  %v385 = vpop.f32.mrf.mxu0
  %v386 = vadd.f32 0.0, %v385
  %v387 = vpop.f32.mrf.mxu0
  %388 = vmatprep.mubr.f32.mxu0 0.0
  %389 = vmatmul.mubr.f32.gmra.mxu0 %v264
  %v390 = vpop.f32.mrf.mxu0
  %v391 = vadd.f32 0.0, %v390
  %v392 = vpop.f32.mrf.mxu0
  %393 = vmatprep.mubr.f32.mxu0 0.0
  %394 = vmatmul.mubr.f32.gmra.mxu0 %v265
  %v395 = vpop.f32.mrf.mxu0
  %v396 = vadd.f32 0.0, %v395
  %v397 = vpop.f32.mrf.mxu0
  %398 = vmatprep.mubr.f32.mxu0 0.0
  %399 = vmatmul.mubr.f32.gmra.mxu0 %v266
  %v400 = vpop.f32.mrf.mxu0
  %v401 = vadd.f32 0.0, %v400
  %v402 = vpop.f32.mrf.mxu0
  %403 = vmatprep.mubr.f32.mxu0 0.0
  %404 = vmatmul.mubr.f32.gmra.mxu0 %v267
  %v405 = vpop.f32.mrf.mxu0
  %v406 = vadd.f32 0.0, %v405
  %v407 = vpop.f32.mrf.mxu0
  %408 = vmatprep.mubr.f32.mxu0 0.0
  %409 = vmatmul.mubr.f32.gmra.mxu0 %v268
  %v410 = vpop.f32.mrf.mxu0
  %v411 = vadd.f32 0.0, %v410
  %v412 = vpop.f32.mrf.mxu0
  %413 = vmatprep.mubr.f32.mxu0 0.0
  %414 = vmatmul.mubr.f32.gmra.mxu0 %v269
  %v415 = vpop.f32.mrf.mxu0
  %v416 = vadd.f32 0.0, %v415
  %v417 = vpop.f32.mrf.mxu0
  %418 = vmatprep.mubr.f32.mxu0 0.0
  %419 = vmatmul.mubr.f32.gmra.mxu0 %v270
  %v420 = vpop.f32.mrf.mxu0
  %v421 = vadd.f32 0.0, %v420
  %v422 = vpop.f32.mrf.mxu0
  %423 = vmatprep.mubr.f32.mxu0 0.0
  %424 = vmatmul.mubr.f32.gmra.mxu0 %v271
  %v425 = vpop.f32.mrf.mxu0
  %v426 = vadd.f32 0.0, %v425
  %v427 = vpop.f32.mrf.mxu0
  %428 = vmatprep.mubr.f32.mxu0 0.0
  %429 = vmatmul.mubr.f32.gmra.mxu0 %v272
  %v430 = vpop.f32.mrf.mxu0
  %v431 = vadd.f32 0.0, %v430
  %v432 = vpop.f32.mrf.mxu0
  %433 = vdwg.mxu0
  %v434 = vld [vmem:[%s2] sm:$0xff]
  %v435 = vld [vmem:[%s2 + $0x8] sm:$0xff]
  %v436 = vld [vmem:[%s2 + $0x10] sm:$0xff]
  %v437 = vld [vmem:[%s2 + $0x18] sm:$0xff]
  %v438 = vld [vmem:[%s2 + $0x20] sm:$0xff]
  %v439 = vld [vmem:[%s2 + $0x28] sm:$0xff]
  %v440 = vld [vmem:[%s2 + $0x30] sm:$0xff]
  %v441 = vld [vmem:[%s2 + $0x38] sm:$0xff]
  %v442 = vld [vmem:[%s2 + $0x40] sm:$0xff]
  %v443 = vld [vmem:[%s2 + $0x48] sm:$0xff]
  %v444 = vld [vmem:[%s2 + $0x50] sm:$0xff]
  %v445 = vld [vmem:[%s2 + $0x58] sm:$0xff]
  %v446 = vld [vmem:[%s2 + $0x60] sm:$0xff]
  %v447 = vld [vmem:[%s2 + $0x68] sm:$0xff]
  %v448 = vld [vmem:[%s2 + $0x70] sm:$0xff]
  %v449 = vld [vmem:[%s2 + $0x78] sm:$0xff]
  %v450 = vld [vmem:[%s6] sm:$0xff]
  %v451 = vld [vmem:[%s6 + $0x8] sm:$0xff]
  %v452 = vld [vmem:[%s6 + $0x10] sm:$0xff]
  %v453 = vld [vmem:[%s6 + $0x18] sm:$0xff]
  %v454 = vld [vmem:[%s6 + $0x20] sm:$0xff]
  %v455 = vld [vmem:[%s6 + $0x28] sm:$0xff]
  %v456 = vld [vmem:[%s6 + $0x30] sm:$0xff]
  %v457 = vld [vmem:[%s6 + $0x38] sm:$0xff]
  %v458 = vld [vmem:[%s6 + $0x40] sm:$0xff]
  %v459 = vld [vmem:[%s6 + $0x48] sm:$0xff]
  %v460 = vld [vmem:[%s6 + $0x50] sm:$0xff]
  %v461 = vld [vmem:[%s6 + $0x58] sm:$0xff]
  %v462 = vld [vmem:[%s6 + $0x60] sm:$0xff]
  %v463 = vld [vmem:[%s6 + $0x68] sm:$0xff]
  %v464 = vld [vmem:[%s6 + $0x70] sm:$0xff]
  %v465 = vld [vmem:[%s6 + $0x78] sm:$0xff]
  %466 = vmatprep.subr.mxu0 0.0
  %467 = vmatpush1.msra.mxu0 %v465
  %468 = vmatprep.subr.mxu0 0.0
  %469 = vmatpush1.msra.mxu0 %v464
  %470 = vmatprep.subr.mxu0 0.0
  %471 = vmatpush1.msra.mxu0 %v463
  %472 = vmatprep.subr.mxu0 0.0
  %473 = vmatpush1.msra.mxu0 %v462
  %474 = vmatprep.subr.mxu0 0.0
  %475 = vmatpush1.msra.mxu0 %v461
  %476 = vmatprep.subr.mxu0 0.0
  %477 = vmatpush1.msra.mxu0 %v460
  %478 = vmatprep.subr.mxu0 0.0
  %479 = vmatpush1.msra.mxu0 %v459
  %480 = vmatprep.subr.mxu0 0.0
  %481 = vmatpush1.msra.mxu0 %v458
  %482 = vmatprep.subr.mxu0 0.0
  %483 = vmatpush1.msra.mxu0 %v457
  %484 = vmatprep.subr.mxu0 0.0
  %485 = vmatpush1.msra.mxu0 %v456
  %486 = vmatprep.subr.mxu0 0.0
  %487 = vmatpush1.msra.mxu0 %v455
  %488 = vmatprep.subr.mxu0 0.0
  %489 = vmatpush1.msra.mxu0 %v454
  %490 = vmatprep.subr.mxu0 0.0
  %491 = vmatpush1.msra.mxu0 %v453
  %492 = vmatprep.subr.mxu0 0.0
  %493 = vmatpush1.msra.mxu0 %v452
  %494 = vmatprep.subr.mxu0 0.0
  %495 = vmatpush1.msra.mxu0 %v451
  %496 = vmatprep.subr.mxu0 0.0
  %497 = vmatpush1.msra.mxu0 %v450
  %498 = vmatprep.subr.mxu0 0.0
  %499 = vmatpush2.msra.mxu0 0.0
  %500 = vmatprep.subr.mxu0 0.0
  %501 = vmatpush2.msra.mxu0 0.0
  %502 = vmatprep.subr.mxu0 0.0
  %503 = vmatpush2.msra.mxu0 0.0
  %504 = vmatprep.subr.mxu0 0.0
  %505 = vmatpush2.msra.mxu0 0.0
  %506 = vmatprep.subr.mxu0 0.0
  %507 = vmatpush2.msra.mxu0 0.0
  %508 = vmatprep.subr.mxu0 0.0
  %509 = vmatpush2.msra.mxu0 0.0
  %510 = vmatprep.subr.mxu0 0.0
  %511 = vmatpush2.msra.mxu0 0.0
  %512 = vmatprep.subr.mxu0 0.0
  %513 = vmatpush2.msra.mxu0 0.0
  %514 = vmatprep.subr.mxu0 0.0
  %515 = vmatpush2.msra.mxu0 0.0
  %516 = vmatprep.subr.mxu0 0.0
  %517 = vmatpush2.msra.mxu0 0.0
  %518 = vmatprep.subr.mxu0 0.0
  %519 = vmatpush2.msra.mxu0 0.0
  %520 = vmatprep.subr.mxu0 0.0
  %521 = vmatpush2.msra.mxu0 0.0
  %522 = vmatprep.subr.mxu0 0.0
  %523 = vmatpush2.msra.mxu0 0.0
  %524 = vmatprep.subr.mxu0 0.0
  %525 = vmatpush2.msra.mxu0 0.0
  %526 = vmatprep.subr.mxu0 0.0
  %527 = vmatpush2.msra.mxu0 0.0
  %528 = vmatprep.subr.mxu0 0.0
  %529 = vmatpush2.msra.mxu0 0.0
  %530 = vmatprep.mubr.f32.mxu0 0.0
  %531 = vmatmul.mubr.f32.gmra.mxu0 %v434
  %v532 = vpop.f32.mrf.mxu0
  %v533 = vadd.f32 0.0, %v532
  %v534 = vpop.f32.mrf.mxu0
  %535 = vmatprep.mubr.f32.mxu0 0.0
  %536 = vmatmul.mubr.f32.gmra.mxu0 %v435
  %v537 = vpop.f32.mrf.mxu0
  %v538 = vadd.f32 0.0, %v537
  %v539 = vpop.f32.mrf.mxu0
  %540 = vmatprep.mubr.f32.mxu0 0.0
  %541 = vmatmul.mubr.f32.gmra.mxu0 %v436
  %v542 = vpop.f32.mrf.mxu0
  %v543 = vadd.f32 0.0, %v542
  %v544 = vpop.f32.mrf.mxu0
  %545 = vmatprep.mubr.f32.mxu0 0.0
  %546 = vmatmul.mubr.f32.gmra.mxu0 %v437
  %v547 = vpop.f32.mrf.mxu0
  %v548 = vadd.f32 0.0, %v547
  %v549 = vpop.f32.mrf.mxu0
  %550 = vmatprep.mubr.f32.mxu0 0.0
  %551 = vmatmul.mubr.f32.gmra.mxu0 %v438
  %v552 = vpop.f32.mrf.mxu0
  %v553 = vadd.f32 0.0, %v552
  %v554 = vpop.f32.mrf.mxu0
  %555 = vmatprep.mubr.f32.mxu0 0.0
  %556 = vmatmul.mubr.f32.gmra.mxu0 %v439
  %v557 = vpop.f32.mrf.mxu0
  %v558 = vadd.f32 0.0, %v557
  %v559 = vpop.f32.mrf.mxu0
  %560 = vmatprep.mubr.f32.mxu0 0.0
  %561 = vmatmul.mubr.f32.gmra.mxu0 %v440
  %v562 = vpop.f32.mrf.mxu0
  %v563 = vadd.f32 0.0, %v562
  %v564 = vpop.f32.mrf.mxu0
  %565 = vmatprep.mubr.f32.mxu0 0.0
  %566 = vmatmul.mubr.f32.gmra.mxu0 %v441
  %v567 = vpop.f32.mrf.mxu0
  %v568 = vadd.f32 0.0, %v567
  %v569 = vpop.f32.mrf.mxu0
  %570 = vmatprep.mubr.f32.mxu0 0.0
  %571 = vmatmul.mubr.f32.gmra.mxu0 %v442
  %v572 = vpop.f32.mrf.mxu0
  %v573 = vadd.f32 0.0, %v572
  %v574 = vpop.f32.mrf.mxu0
  %575 = vmatprep.mubr.f32.mxu0 0.0
  %576 = vmatmul.mubr.f32.gmra.mxu0 %v443
  %v577 = vpop.f32.mrf.mxu0
  %v578 = vadd.f32 0.0, %v577
  %v579 = vpop.f32.mrf.mxu0
  %580 = vmatprep.mubr.f32.mxu0 0.0
  %581 = vmatmul.mubr.f32.gmra.mxu0 %v444
  %v582 = vpop.f32.mrf.mxu0
  %v583 = vadd.f32 0.0, %v582
  %v584 = vpop.f32.mrf.mxu0
  %585 = vmatprep.mubr.f32.mxu0 0.0
  %586 = vmatmul.mubr.f32.gmra.mxu0 %v445
  %v587 = vpop.f32.mrf.mxu0
  %v588 = vadd.f32 0.0, %v587
  %v589 = vpop.f32.mrf.mxu0
  %590 = vmatprep.mubr.f32.mxu0 0.0
  %591 = vmatmul.mubr.f32.gmra.mxu0 %v446
  %v592 = vpop.f32.mrf.mxu0
  %v593 = vadd.f32 0.0, %v592
  %v594 = vpop.f32.mrf.mxu0
  %595 = vmatprep.mubr.f32.mxu0 0.0
  %596 = vmatmul.mubr.f32.gmra.mxu0 %v447
  %v597 = vpop.f32.mrf.mxu0
  %v598 = vadd.f32 0.0, %v597
  %v599 = vpop.f32.mrf.mxu0
  %600 = vmatprep.mubr.f32.mxu0 0.0
  %601 = vmatmul.mubr.f32.gmra.mxu0 %v448
  %v602 = vpop.f32.mrf.mxu0
  %v603 = vadd.f32 0.0, %v602
  %v604 = vpop.f32.mrf.mxu0
  %605 = vmatprep.mubr.f32.mxu0 0.0
  %606 = vmatmul.mubr.f32.gmra.mxu0 %v449
  %v607 = vpop.f32.mrf.mxu0
  %v608 = vadd.f32 0.0, %v607
  %v609 = vpop.f32.mrf.mxu0
  %610 = vdwg.mxu0
  %v611 = vld [vmem:[%s3] sm:$0xff]
  %v612 = vld [vmem:[%s3 + $0x8] sm:$0xff]
  %v613 = vld [vmem:[%s3 + $0x10] sm:$0xff]
  %v614 = vld [vmem:[%s3 + $0x18] sm:$0xff]
  %v615 = vld [vmem:[%s3 + $0x20] sm:$0xff]
  %v616 = vld [vmem:[%s3 + $0x28] sm:$0xff]
  %v617 = vld [vmem:[%s3 + $0x30] sm:$0xff]
  %v618 = vld [vmem:[%s3 + $0x38] sm:$0xff]
  %v619 = vld [vmem:[%s3 + $0x40] sm:$0xff]
  %v620 = vld [vmem:[%s3 + $0x48] sm:$0xff]
  %v621 = vld [vmem:[%s3 + $0x50] sm:$0xff]
  %v622 = vld [vmem:[%s3 + $0x58] sm:$0xff]
  %v623 = vld [vmem:[%s3 + $0x60] sm:$0xff]
  %v624 = vld [vmem:[%s3 + $0x68] sm:$0xff]
  %v625 = vld [vmem:[%s3 + $0x70] sm:$0xff]
  %v626 = vld [vmem:[%s3 + $0x78] sm:$0xff]
  %v627 = vld [vmem:[%s3 + $0x80] sm:$0xff]
  %v628 = vld [vmem:[%s3 + $0x88] sm:$0xff]
  %v629 = vld [vmem:[%s3 + $0x90] sm:$0xff]
  %v630 = vld [vmem:[%s3 + $0x98] sm:$0xff]
  %v631 = vld [vmem:[%s3 + $0xa0] sm:$0xff]
  %v632 = vld [vmem:[%s3 + $0xa8] sm:$0xff]
  %v633 = vld [vmem:[%s3 + $0xb0] sm:$0xff]
  %v634 = vld [vmem:[%s3 + $0xb8] sm:$0xff]
  %v635 = vld [vmem:[%s3 + $0xc0] sm:$0xff]
  %v636 = vld [vmem:[%s3 + $0xc8] sm:$0xff]
  %v637 = vld [vmem:[%s3 + $0xd0] sm:$0xff]
  %v638 = vld [vmem:[%s3 + $0xd8] sm:$0xff]
  %v639 = vld [vmem:[%s3 + $0xe0] sm:$0xff]
  %v640 = vld [vmem:[%s3 + $0xe8] sm:$0xff]
  %v641 = vld [vmem:[%s3 + $0xf0] sm:$0xff]
  %v642 = vld [vmem:[%s3 + $0xf8] sm:$0xff]
  %v643 = vld [vmem:[%s7] sm:$0xff]
  %v644 = vld [vmem:[%s7 + $0x8] sm:$0xff]
  %v645 = vld [vmem:[%s7 + $0x10] sm:$0xff]
  %v646 = vld [vmem:[%s7 + $0x18] sm:$0xff]
  %v647 = vld [vmem:[%s7 + $0x20] sm:$0xff]
  %v648 = vld [vmem:[%s7 + $0x28] sm:$0xff]
  %v649 = vld [vmem:[%s7 + $0x30] sm:$0xff]
  %v650 = vld [vmem:[%s7 + $0x38] sm:$0xff]
  %v651 = vld [vmem:[%s7 + $0x40] sm:$0xff]
  %v652 = vld [vmem:[%s7 + $0x48] sm:$0xff]
  %v653 = vld [vmem:[%s7 + $0x50] sm:$0xff]
  %v654 = vld [vmem:[%s7 + $0x58] sm:$0xff]
  %v655 = vld [vmem:[%s7 + $0x60] sm:$0xff]
  %v656 = vld [vmem:[%s7 + $0x68] sm:$0xff]
  %v657 = vld [vmem:[%s7 + $0x70] sm:$0xff]
  %v658 = vld [vmem:[%s7 + $0x78] sm:$0xff]
  %v659 = vld [vmem:[%s7 + $0x80] sm:$0xff]
  %v660 = vld [vmem:[%s7 + $0x88] sm:$0xff]
  %v661 = vld [vmem:[%s7 + $0x90] sm:$0xff]
  %v662 = vld [vmem:[%s7 + $0x98] sm:$0xff]
  %v663 = vld [vmem:[%s7 + $0xa0] sm:$0xff]
  %v664 = vld [vmem:[%s7 + $0xa8] sm:$0xff]
  %v665 = vld [vmem:[%s7 + $0xb0] sm:$0xff]
  %v666 = vld [vmem:[%s7 + $0xb8] sm:$0xff]
  %v667 = vld [vmem:[%s7 + $0xc0] sm:$0xff]
  %v668 = vld [vmem:[%s7 + $0xc8] sm:$0xff]
  %v669 = vld [vmem:[%s7 + $0xd0] sm:$0xff]
  %v670 = vld [vmem:[%s7 + $0xd8] sm:$0xff]
  %v671 = vld [vmem:[%s7 + $0xe0] sm:$0xff]
  %v672 = vld [vmem:[%s7 + $0xe8] sm:$0xff]
  %v673 = vld [vmem:[%s7 + $0xf0] sm:$0xff]
  %v674 = vld [vmem:[%s7 + $0xf8] sm:$0xff]
  %675 = vmatprep.subr.mxu0 0.0
  %676 = vmatpush1.msra.mxu0 %v658
  %677 = vmatprep.subr.mxu0 0.0
  %678 = vmatpush1.msra.mxu0 %v657
  %679 = vmatprep.subr.mxu0 0.0
  %680 = vmatpush1.msra.mxu0 %v656
  %681 = vmatprep.subr.mxu0 0.0
  %682 = vmatpush1.msra.mxu0 %v655
  %683 = vmatprep.subr.mxu0 0.0
  %684 = vmatpush1.msra.mxu0 %v654
  %685 = vmatprep.subr.mxu0 0.0
  %686 = vmatpush1.msra.mxu0 %v653
  %687 = vmatprep.subr.mxu0 0.0
  %688 = vmatpush1.msra.mxu0 %v652
  %689 = vmatprep.subr.mxu0 0.0
  %690 = vmatpush1.msra.mxu0 %v651
  %691 = vmatprep.subr.mxu0 0.0
  %692 = vmatpush1.msra.mxu0 %v650
  %693 = vmatprep.subr.mxu0 0.0
  %694 = vmatpush1.msra.mxu0 %v649
  %695 = vmatprep.subr.mxu0 0.0
  %696 = vmatpush1.msra.mxu0 %v648
  %697 = vmatprep.subr.mxu0 0.0
  %698 = vmatpush1.msra.mxu0 %v647
  %699 = vmatprep.subr.mxu0 0.0
  %700 = vmatpush1.msra.mxu0 %v646
  %701 = vmatprep.subr.mxu0 0.0
  %702 = vmatpush1.msra.mxu0 %v645
  %703 = vmatprep.subr.mxu0 0.0
  %704 = vmatpush1.msra.mxu0 %v644
  %705 = vmatprep.subr.mxu0 0.0
  %706 = vmatpush1.msra.mxu0 %v643
  %707 = vmatprep.subr.mxu0 0.0
  %708 = vmatpush2.msra.mxu0 %v674
  %709 = vmatprep.subr.mxu0 0.0
  %710 = vmatpush2.msra.mxu0 %v673
  %711 = vmatprep.subr.mxu0 0.0
  %712 = vmatpush2.msra.mxu0 %v672
  %713 = vmatprep.subr.mxu0 0.0
  %714 = vmatpush2.msra.mxu0 %v671
  %715 = vmatprep.subr.mxu0 0.0
  %716 = vmatpush2.msra.mxu0 %v670
  %717 = vmatprep.subr.mxu0 0.0
  %718 = vmatpush2.msra.mxu0 %v669
  %719 = vmatprep.subr.mxu0 0.0
  %720 = vmatpush2.msra.mxu0 %v668
  %721 = vmatprep.subr.mxu0 0.0
  %722 = vmatpush2.msra.mxu0 %v667
  %723 = vmatprep.subr.mxu0 0.0
  %724 = vmatpush2.msra.mxu0 %v666
  %725 = vmatprep.subr.mxu0 0.0
  %726 = vmatpush2.msra.mxu0 %v665
  %727 = vmatprep.subr.mxu0 0.0
  %728 = vmatpush2.msra.mxu0 %v664
  %729 = vmatprep.subr.mxu0 0.0
  %730 = vmatpush2.msra.mxu0 %v663
  %731 = vmatprep.subr.mxu0 0.0
  %732 = vmatpush2.msra.mxu0 %v662
  %733 = vmatprep.subr.mxu0 0.0
  %734 = vmatpush2.msra.mxu0 %v661
  %735 = vmatprep.subr.mxu0 0.0
  %736 = vmatpush2.msra.mxu0 %v660
  %737 = vmatprep.subr.mxu0 0.0
  %738 = vmatpush2.msra.mxu0 %v659
  %739 = vmatprep.mubr.f32.mxu0 %v612
  %740 = vmatmul.mubr.f32.gmra.mxu0 %v611
  %v741 = vpop.f32.mrf.mxu0
  %v742 = vadd.f32 0.0, %v741
  %v743 = vpop.f32.mrf.mxu0
  %744 = vmatprep.mubr.f32.mxu0 %v614
  %745 = vmatmul.mubr.f32.gmra.mxu0 %v613
  %v746 = vpop.f32.mrf.mxu0
  %v747 = vadd.f32 0.0, %v746
  %v748 = vpop.f32.mrf.mxu0
  %749 = vmatprep.mubr.f32.mxu0 %v616
  %750 = vmatmul.mubr.f32.gmra.mxu0 %v615
  %v751 = vpop.f32.mrf.mxu0
  %v752 = vadd.f32 0.0, %v751
  %v753 = vpop.f32.mrf.mxu0
  %754 = vmatprep.mubr.f32.mxu0 %v618
  %755 = vmatmul.mubr.f32.gmra.mxu0 %v617
  %v756 = vpop.f32.mrf.mxu0
  %v757 = vadd.f32 0.0, %v756
  %v758 = vpop.f32.mrf.mxu0
  %759 = vmatprep.mubr.f32.mxu0 %v620
  %760 = vmatmul.mubr.f32.gmra.mxu0 %v619
  %v761 = vpop.f32.mrf.mxu0
  %v762 = vadd.f32 0.0, %v761
  %v763 = vpop.f32.mrf.mxu0
  %764 = vmatprep.mubr.f32.mxu0 %v622
  %765 = vmatmul.mubr.f32.gmra.mxu0 %v621
  %v766 = vpop.f32.mrf.mxu0
  %v767 = vadd.f32 0.0, %v766
  %v768 = vpop.f32.mrf.mxu0
  %769 = vmatprep.mubr.f32.mxu0 %v624
  %770 = vmatmul.mubr.f32.gmra.mxu0 %v623
  %v771 = vpop.f32.mrf.mxu0
  %v772 = vadd.f32 0.0, %v771
  %v773 = vpop.f32.mrf.mxu0
  %774 = vmatprep.mubr.f32.mxu0 %v626
  %775 = vmatmul.mubr.f32.gmra.mxu0 %v625
  %v776 = vpop.f32.mrf.mxu0
  %v777 = vadd.f32 0.0, %v776
  %v778 = vpop.f32.mrf.mxu0
  %779 = vmatprep.mubr.f32.mxu0 %v628
  %780 = vmatmul.mubr.f32.gmra.mxu0 %v627
  %v781 = vpop.f32.mrf.mxu0
  %v782 = vadd.f32 0.0, %v781
  %v783 = vpop.f32.mrf.mxu0
  %784 = vmatprep.mubr.f32.mxu0 %v630
  %785 = vmatmul.mubr.f32.gmra.mxu0 %v629
  %v786 = vpop.f32.mrf.mxu0
  %v787 = vadd.f32 0.0, %v786
  %v788 = vpop.f32.mrf.mxu0
  %789 = vmatprep.mubr.f32.mxu0 %v632
  %790 = vmatmul.mubr.f32.gmra.mxu0 %v631
  %v791 = vpop.f32.mrf.mxu0
  %v792 = vadd.f32 0.0, %v791
  %v793 = vpop.f32.mrf.mxu0
  %794 = vmatprep.mubr.f32.mxu0 %v634
  %795 = vmatmul.mubr.f32.gmra.mxu0 %v633
  %v796 = vpop.f32.mrf.mxu0
  %v797 = vadd.f32 0.0, %v796
  %v798 = vpop.f32.mrf.mxu0
  %799 = vmatprep.mubr.f32.mxu0 %v636
  %800 = vmatmul.mubr.f32.gmra.mxu0 %v635
  %v801 = vpop.f32.mrf.mxu0
  %v802 = vadd.f32 0.0, %v801
  %v803 = vpop.f32.mrf.mxu0
  %804 = vmatprep.mubr.f32.mxu0 %v638
  %805 = vmatmul.mubr.f32.gmra.mxu0 %v637
  %v806 = vpop.f32.mrf.mxu0
  %v807 = vadd.f32 0.0, %v806
  %v808 = vpop.f32.mrf.mxu0
  %809 = vmatprep.mubr.f32.mxu0 %v640
  %810 = vmatmul.mubr.f32.gmra.mxu0 %v639
  %v811 = vpop.f32.mrf.mxu0
  %v812 = vadd.f32 0.0, %v811
  %v813 = vpop.f32.mrf.mxu0
  %814 = vmatprep.mubr.f32.mxu0 %v642
  %815 = vmatmul.mubr.f32.gmra.mxu0 %v641
  %v816 = vpop.f32.mrf.mxu0
  %v817 = vadd.f32 0.0, %v816
  %v818 = vpop.f32.mrf.mxu0
  %819 = vdwg.mxu0
  %vm820 = vcmask 23552
  %v821 = vsel %vm820, %v179, 0.0
  %v822 = vsel %vm820, %v184, 0.0
  %v823 = vadd.f32 %v821, %v822
  %v824 = vsel %vm820, %v189, 0.0
  %v825 = vadd.f32 %v823, %v824
  %v826 = vsel %vm820, %v194, 0.0
  %v827 = vadd.f32 %v825, %v826
  %v828 = vsel %vm820, %v199, 0.0
  %v829 = vadd.f32 %v827, %v828
  %v830 = vsel %vm820, %v204, 0.0
  %v831 = vadd.f32 %v829, %v830
  %v832 = vsel %vm820, %v209, 0.0
  %v833 = vadd.f32 %v831, %v832
  %v834 = vsel %vm820, %v214, 0.0
  %v835 = vadd.f32 %v833, %v834
  %v836 = vsel %vm820, %v219, 0.0
  %v837 = vadd.f32 %v835, %v836
  %v838 = vsel %vm820, %v224, 0.0
  %v839 = vadd.f32 %v837, %v838
  %v840 = vsel %vm820, %v229, 0.0
  %v841 = vadd.f32 %v839, %v840
  %v842 = vsel %vm820, %v234, 0.0
  %v843 = vadd.f32 %v841, %v842
  %v844 = vsel %vm820, %v239, 0.0
  %v845 = vadd.f32 %v843, %v844
  %v846 = vsel %vm820, %v244, 0.0
  %v847 = vadd.f32 %v845, %v846
  %v848 = vsel %vm820, %v249, 0.0
  %v849 = vadd.f32 %v847, %v848
  %v850 = vsel %vm820, %v254, 0.0
  %v851 = vadd.f32 %v849, %v850
  %v852 = vrot.slane %v851, 4
  %v853 = vadd.f32 %v851, %v852
  %v854 = vrot.slane %v853, 2
  %v855 = vadd.f32 %v853, %v854
  %v856 = vrot.slane %v855, 1
  %v857 = vadd.f32 %v855, %v856
  %v858 = vsel %vm820, %v356, 0.0
  %v859 = vsel %vm820, %v361, 0.0
  %v860 = vadd.f32 %v858, %v859
  %v861 = vsel %vm820, %v366, 0.0
  %v862 = vadd.f32 %v860, %v861
  %v863 = vsel %vm820, %v371, 0.0
  %v864 = vadd.f32 %v862, %v863
  %v865 = vsel %vm820, %v376, 0.0
  %v866 = vadd.f32 %v864, %v865
  %v867 = vsel %vm820, %v381, 0.0
  %v868 = vadd.f32 %v866, %v867
  %v869 = vsel %vm820, %v386, 0.0
  %v870 = vadd.f32 %v868, %v869
  %v871 = vsel %vm820, %v391, 0.0
  %v872 = vadd.f32 %v870, %v871
  %v873 = vsel %vm820, %v396, 0.0
  %v874 = vadd.f32 %v872, %v873
  %v875 = vsel %vm820, %v401, 0.0
  %v876 = vadd.f32 %v874, %v875
  %v877 = vsel %vm820, %v406, 0.0
  %v878 = vadd.f32 %v876, %v877
  %v879 = vsel %vm820, %v411, 0.0
  %v880 = vadd.f32 %v878, %v879
  %v881 = vsel %vm820, %v416, 0.0
  %v882 = vadd.f32 %v880, %v881
  %v883 = vsel %vm820, %v421, 0.0
  %v884 = vadd.f32 %v882, %v883
  %v885 = vsel %vm820, %v426, 0.0
  %v886 = vadd.f32 %v884, %v885
  %v887 = vsel %vm820, %v431, 0.0
  %v888 = vadd.f32 %v886, %v887
  %v889 = vrot.slane %v888, 4
  %v890 = vadd.f32 %v888, %v889
  %v891 = vrot.slane %v890, 2
  %v892 = vadd.f32 %v890, %v891
  %v893 = vrot.slane %v892, 1
  %v894 = vadd.f32 %v892, %v893
  %v895 = vadd.f32 %v857, %v894
  %v896 = vsel %vm820, %v533, 0.0
  %v897 = vsel %vm820, %v538, 0.0
  %v898 = vadd.f32 %v896, %v897
  %v899 = vsel %vm820, %v543, 0.0
  %v900 = vadd.f32 %v898, %v899
  %v901 = vsel %vm820, %v548, 0.0
  %v902 = vadd.f32 %v900, %v901
  %v903 = vsel %vm820, %v553, 0.0
  %v904 = vadd.f32 %v902, %v903
  %v905 = vsel %vm820, %v558, 0.0
  %v906 = vadd.f32 %v904, %v905
  %v907 = vsel %vm820, %v563, 0.0
  %v908 = vadd.f32 %v906, %v907
  %v909 = vsel %vm820, %v568, 0.0
  %v910 = vadd.f32 %v908, %v909
  %v911 = vsel %vm820, %v573, 0.0
  %v912 = vadd.f32 %v910, %v911
  %v913 = vsel %vm820, %v578, 0.0
  %v914 = vadd.f32 %v912, %v913
  %v915 = vsel %vm820, %v583, 0.0
  %v916 = vadd.f32 %v914, %v915
  %v917 = vsel %vm820, %v588, 0.0
  %v918 = vadd.f32 %v916, %v917
  %v919 = vsel %vm820, %v593, 0.0
  %v920 = vadd.f32 %v918, %v919
  %v921 = vsel %vm820, %v598, 0.0
  %v922 = vadd.f32 %v920, %v921
  %v923 = vsel %vm820, %v603, 0.0
  %v924 = vadd.f32 %v922, %v923
  %v925 = vsel %vm820, %v608, 0.0
  %v926 = vadd.f32 %v924, %v925
  %v927 = vrot.slane %v926, 4
  %v928 = vadd.f32 %v926, %v927
  %v929 = vrot.slane %v928, 2
  %v930 = vadd.f32 %v928, %v929
  %v931 = vrot.slane %v930, 1
  %v932 = vadd.f32 %v930, %v931
  %v933 = vadd.f32 %v895, %v932
  %v934 = vsel %vm820, %v742, 0.0
  %v935 = vsel %vm820, %v747, 0.0
  %v936 = vadd.f32 %v934, %v935
  %v937 = vsel %vm820, %v752, 0.0
  %v938 = vadd.f32 %v936, %v937
  %v939 = vsel %vm820, %v757, 0.0
  %v940 = vadd.f32 %v938, %v939
  %v941 = vsel %vm820, %v762, 0.0
  %v942 = vadd.f32 %v940, %v941
  %v943 = vsel %vm820, %v767, 0.0
  %v944 = vadd.f32 %v942, %v943
  %v945 = vsel %vm820, %v772, 0.0
  %v946 = vadd.f32 %v944, %v945
  %v947 = vsel %vm820, %v777, 0.0
  %v948 = vadd.f32 %v946, %v947
  %v949 = vsel %vm820, %v782, 0.0
  %v950 = vadd.f32 %v948, %v949
  %v951 = vsel %vm820, %v787, 0.0
  %v952 = vadd.f32 %v950, %v951
  %v953 = vsel %vm820, %v792, 0.0
  %v954 = vadd.f32 %v952, %v953
  %v955 = vsel %vm820, %v797, 0.0
  %v956 = vadd.f32 %v954, %v955
  %v957 = vsel %vm820, %v802, 0.0
  %v958 = vadd.f32 %v956, %v957
  %v959 = vsel %vm820, %v807, 0.0
  %v960 = vadd.f32 %v958, %v959
  %v961 = vsel %vm820, %v812, 0.0
  %v962 = vadd.f32 %v960, %v961
  %v963 = vsel %vm820, %v817, 0.0
  %v964 = vadd.f32 %v962, %v963
  %v965 = vrot.slane %v964, 4
  %v966 = vadd.f32 %v964, %v965
  %v967 = vrot.slane %v966, 2
  %v968 = vadd.f32 %v966, %v967
  %v969 = vrot.slane %v968, 1
  %v970 = vadd.f32 %v968, %v969
  %v971 = vadd.f32 %v933, %v970
  %v972 = vrcp.pop 512.0
  %v973 = vmul.f32 %v971, %v972
  %v974 = vsub.f32 %v179, %v973
  %v975 = vsub.f32 %v184, %v973
  %v976 = vsub.f32 %v189, %v973
  %v977 = vsub.f32 %v194, %v973
  %v978 = vsub.f32 %v199, %v973
  %v979 = vsub.f32 %v204, %v973
  %v980 = vsub.f32 %v209, %v973
  %v981 = vsub.f32 %v214, %v973
  %v982 = vsub.f32 %v219, %v973
  %v983 = vsub.f32 %v224, %v973
  %v984 = vsub.f32 %v229, %v973
  %v985 = vsub.f32 %v234, %v973
  %v986 = vsub.f32 %v239, %v973
  %v987 = vsub.f32 %v244, %v973
  %v988 = vsub.f32 %v249, %v973
  %v989 = vsub.f32 %v254, %v973
  %v990 = vmul.f32 %v974, %v974
  %v991 = vmul.f32 %v975, %v975
  %v992 = vmul.f32 %v976, %v976
  %v993 = vmul.f32 %v977, %v977
  %v994 = vmul.f32 %v978, %v978
  %v995 = vmul.f32 %v979, %v979
  %v996 = vmul.f32 %v980, %v980
  %v997 = vmul.f32 %v981, %v981
  %v998 = vmul.f32 %v982, %v982
  %v999 = vmul.f32 %v983, %v983
  %v1000 = vmul.f32 %v984, %v984
  %v1001 = vmul.f32 %v985, %v985
  %v1002 = vmul.f32 %v986, %v986
  %v1003 = vmul.f32 %v987, %v987
  %v1004 = vmul.f32 %v988, %v988
  %v1005 = vmul.f32 %v989, %v989
  %v1006 = vsel %vm820, %v990, 0.0
  %v1007 = vsel %vm820, %v991, 0.0
  %v1008 = vadd.f32 %v1006, %v1007
  %v1009 = vsel %vm820, %v992, 0.0
  %v1010 = vadd.f32 %v1008, %v1009
  %v1011 = vsel %vm820, %v993, 0.0
  %v1012 = vadd.f32 %v1010, %v1011
  %v1013 = vsel %vm820, %v994, 0.0
  %v1014 = vadd.f32 %v1012, %v1013
  %v1015 = vsel %vm820, %v995, 0.0
  %v1016 = vadd.f32 %v1014, %v1015
  %v1017 = vsel %vm820, %v996, 0.0
  %v1018 = vadd.f32 %v1016, %v1017
  %v1019 = vsel %vm820, %v997, 0.0
  %v1020 = vadd.f32 %v1018, %v1019
  %v1021 = vsel %vm820, %v998, 0.0
  %v1022 = vadd.f32 %v1020, %v1021
  %v1023 = vsel %vm820, %v999, 0.0
  %v1024 = vadd.f32 %v1022, %v1023
  %v1025 = vsel %vm820, %v1000, 0.0
  %v1026 = vadd.f32 %v1024, %v1025
  %v1027 = vsel %vm820, %v1001, 0.0
  %v1028 = vadd.f32 %v1026, %v1027
  %v1029 = vsel %vm820, %v1002, 0.0
  %v1030 = vadd.f32 %v1028, %v1029
  %v1031 = vsel %vm820, %v1003, 0.0
  %v1032 = vadd.f32 %v1030, %v1031
  %v1033 = vsel %vm820, %v1004, 0.0
  %v1034 = vadd.f32 %v1032, %v1033
  %v1035 = vsel %vm820, %v1005, 0.0
  %v1036 = vadd.f32 %v1034, %v1035
  %v1037 = vrot.slane %v1036, 4
  %v1038 = vadd.f32 %v1036, %v1037
  %v1039 = vrot.slane %v1038, 2
  %v1040 = vadd.f32 %v1038, %v1039
  %v1041 = vrot.slane %v1040, 1
  %v1042 = vadd.f32 %v1040, %v1041
  %v1043 = vsub.f32 %v356, %v973
  %v1044 = vsub.f32 %v361, %v973
  %v1045 = vsub.f32 %v366, %v973
  %v1046 = vsub.f32 %v371, %v973
  %v1047 = vsub.f32 %v376, %v973
  %v1048 = vsub.f32 %v381, %v973
  %v1049 = vsub.f32 %v386, %v973
  %v1050 = vsub.f32 %v391, %v973
  %v1051 = vsub.f32 %v396, %v973
  %v1052 = vsub.f32 %v401, %v973
  %v1053 = vsub.f32 %v406, %v973
  %v1054 = vsub.f32 %v411, %v973
  %v1055 = vsub.f32 %v416, %v973
  %v1056 = vsub.f32 %v421, %v973
  %v1057 = vsub.f32 %v426, %v973
  %v1058 = vsub.f32 %v431, %v973
  %v1059 = vmul.f32 %v1043, %v1043
  %v1060 = vmul.f32 %v1044, %v1044
  %v1061 = vmul.f32 %v1045, %v1045
  %v1062 = vmul.f32 %v1046, %v1046
  %v1063 = vmul.f32 %v1047, %v1047
  %v1064 = vmul.f32 %v1048, %v1048
  %v1065 = vmul.f32 %v1049, %v1049
  %v1066 = vmul.f32 %v1050, %v1050
  %v1067 = vmul.f32 %v1051, %v1051
  %v1068 = vmul.f32 %v1052, %v1052
  %v1069 = vmul.f32 %v1053, %v1053
  %v1070 = vmul.f32 %v1054, %v1054
  %v1071 = vmul.f32 %v1055, %v1055
  %v1072 = vmul.f32 %v1056, %v1056
  %v1073 = vmul.f32 %v1057, %v1057
  %v1074 = vmul.f32 %v1058, %v1058
  %v1075 = vsel %vm820, %v1059, 0.0
  %v1076 = vsel %vm820, %v1060, 0.0
  %v1077 = vadd.f32 %v1075, %v1076
  %v1078 = vsel %vm820, %v1061, 0.0
  %v1079 = vadd.f32 %v1077, %v1078
  %v1080 = vsel %vm820, %v1062, 0.0
  %v1081 = vadd.f32 %v1079, %v1080
  %v1082 = vsel %vm820, %v1063, 0.0
  %v1083 = vadd.f32 %v1081, %v1082
  %v1084 = vsel %vm820, %v1064, 0.0
  %v1085 = vadd.f32 %v1083, %v1084
  %v1086 = vsel %vm820, %v1065, 0.0
  %v1087 = vadd.f32 %v1085, %v1086
  %v1088 = vsel %vm820, %v1066, 0.0
  %v1089 = vadd.f32 %v1087, %v1088
  %v1090 = vsel %vm820, %v1067, 0.0
  %v1091 = vadd.f32 %v1089, %v1090
  %v1092 = vsel %vm820, %v1068, 0.0
  %v1093 = vadd.f32 %v1091, %v1092
  %v1094 = vsel %vm820, %v1069, 0.0
  %v1095 = vadd.f32 %v1093, %v1094
  %v1096 = vsel %vm820, %v1070, 0.0
  %v1097 = vadd.f32 %v1095, %v1096
  %v1098 = vsel %vm820, %v1071, 0.0
  %v1099 = vadd.f32 %v1097, %v1098
  %v1100 = vsel %vm820, %v1072, 0.0
  %v1101 = vadd.f32 %v1099, %v1100
  %v1102 = vsel %vm820, %v1073, 0.0
  %v1103 = vadd.f32 %v1101, %v1102
  %v1104 = vsel %vm820, %v1074, 0.0
  %v1105 = vadd.f32 %v1103, %v1104
  %v1106 = vrot.slane %v1105, 4
  %v1107 = vadd.f32 %v1105, %v1106
  %v1108 = vrot.slane %v1107, 2
  %v1109 = vadd.f32 %v1107, %v1108
  %v1110 = vrot.slane %v1109, 1
  %v1111 = vadd.f32 %v1109, %v1110
  %v1112 = vadd.f32 %v1042, %v1111
  %v1113 = vsub.f32 %v533, %v973
  %v1114 = vsub.f32 %v538, %v973
  %v1115 = vsub.f32 %v543, %v973
  %v1116 = vsub.f32 %v548, %v973
  %v1117 = vsub.f32 %v553, %v973
  %v1118 = vsub.f32 %v558, %v973
  %v1119 = vsub.f32 %v563, %v973
  %v1120 = vsub.f32 %v568, %v973
  %v1121 = vsub.f32 %v573, %v973
  %v1122 = vsub.f32 %v578, %v973
  %v1123 = vsub.f32 %v583, %v973
  %v1124 = vsub.f32 %v588, %v973
  %v1125 = vsub.f32 %v593, %v973
  %v1126 = vsub.f32 %v598, %v973
  %v1127 = vsub.f32 %v603, %v973
  %v1128 = vsub.f32 %v608, %v973
  %v1129 = vmul.f32 %v1113, %v1113
  %v1130 = vmul.f32 %v1114, %v1114
  %v1131 = vmul.f32 %v1115, %v1115
  %v1132 = vmul.f32 %v1116, %v1116
  %v1133 = vmul.f32 %v1117, %v1117
  %v1134 = vmul.f32 %v1118, %v1118
  %v1135 = vmul.f32 %v1119, %v1119
  %v1136 = vmul.f32 %v1120, %v1120
  %v1137 = vmul.f32 %v1121, %v1121
  %v1138 = vmul.f32 %v1122, %v1122
  %v1139 = vmul.f32 %v1123, %v1123
  %v1140 = vmul.f32 %v1124, %v1124
  %v1141 = vmul.f32 %v1125, %v1125
  %v1142 = vmul.f32 %v1126, %v1126
  %v1143 = vmul.f32 %v1127, %v1127
  %v1144 = vmul.f32 %v1128, %v1128
  %v1145 = vsel %vm820, %v1129, 0.0
  %v1146 = vsel %vm820, %v1130, 0.0
  %v1147 = vadd.f32 %v1145, %v1146
  %v1148 = vsel %vm820, %v1131, 0.0
  %v1149 = vadd.f32 %v1147, %v1148
  %v1150 = vsel %vm820, %v1132, 0.0
  %v1151 = vadd.f32 %v1149, %v1150
  %v1152 = vsel %vm820, %v1133, 0.0
  %v1153 = vadd.f32 %v1151, %v1152
  %v1154 = vsel %vm820, %v1134, 0.0
  %v1155 = vadd.f32 %v1153, %v1154
  %v1156 = vsel %vm820, %v1135, 0.0
  %v1157 = vadd.f32 %v1155, %v1156
  %v1158 = vsel %vm820, %v1136, 0.0
  %v1159 = vadd.f32 %v1157, %v1158
  %v1160 = vsel %vm820, %v1137, 0.0
  %v1161 = vadd.f32 %v1159, %v1160
  %v1162 = vsel %vm820, %v1138, 0.0
  %v1163 = vadd.f32 %v1161, %v1162
  %v1164 = vsel %vm820, %v1139, 0.0
  %v1165 = vadd.f32 %v1163, %v1164
  %v1166 = vsel %vm820, %v1140, 0.0
  %v1167 = vadd.f32 %v1165, %v1166
  %v1168 = vsel %vm820, %v1141, 0.0
  %v1169 = vadd.f32 %v1167, %v1168
  %v1170 = vsel %vm820, %v1142, 0.0
  %v1171 = vadd.f32 %v1169, %v1170
  %v1172 = vsel %vm820, %v1143, 0.0
  %v1173 = vadd.f32 %v1171, %v1172
  %v1174 = vsel %vm820, %v1144, 0.0
  %v1175 = vadd.f32 %v1173, %v1174
  %v1176 = vrot.slane %v1175, 4
  %v1177 = vadd.f32 %v1175, %v1176
  %v1178 = vrot.slane %v1177, 2
  %v1179 = vadd.f32 %v1177, %v1178
  %v1180 = vrot.slane %v1179, 1
  %v1181 = vadd.f32 %v1179, %v1180
  %v1182 = vadd.f32 %v1112, %v1181
  %v1183 = vsub.f32 %v742, %v973
  %v1184 = vsub.f32 %v747, %v973
  %v1185 = vsub.f32 %v752, %v973
  %v1186 = vsub.f32 %v757, %v973
  %v1187 = vsub.f32 %v762, %v973
  %v1188 = vsub.f32 %v767, %v973
  %v1189 = vsub.f32 %v772, %v973
  %v1190 = vsub.f32 %v777, %v973
  %v1191 = vsub.f32 %v782, %v973
  %v1192 = vsub.f32 %v787, %v973
  %v1193 = vsub.f32 %v792, %v973
  %v1194 = vsub.f32 %v797, %v973
  %v1195 = vsub.f32 %v802, %v973
  %v1196 = vsub.f32 %v807, %v973
  %v1197 = vsub.f32 %v812, %v973
  %v1198 = vsub.f32 %v817, %v973
  %v1199 = vmul.f32 %v1183, %v1183
  %v1200 = vmul.f32 %v1184, %v1184
  %v1201 = vmul.f32 %v1185, %v1185
  %v1202 = vmul.f32 %v1186, %v1186
  %v1203 = vmul.f32 %v1187, %v1187
  %v1204 = vmul.f32 %v1188, %v1188
  %v1205 = vmul.f32 %v1189, %v1189
  %v1206 = vmul.f32 %v1190, %v1190
  %v1207 = vmul.f32 %v1191, %v1191
  %v1208 = vmul.f32 %v1192, %v1192
  %v1209 = vmul.f32 %v1193, %v1193
  %v1210 = vmul.f32 %v1194, %v1194
  %v1211 = vmul.f32 %v1195, %v1195
  %v1212 = vmul.f32 %v1196, %v1196
  %v1213 = vmul.f32 %v1197, %v1197
  %v1214 = vmul.f32 %v1198, %v1198
  %v1215 = vsel %vm820, %v1199, 0.0
  %v1216 = vsel %vm820, %v1200, 0.0
  %v1217 = vadd.f32 %v1215, %v1216
  %v1218 = vsel %vm820, %v1201, 0.0
  %v1219 = vadd.f32 %v1217, %v1218
  %v1220 = vsel %vm820, %v1202, 0.0
  %v1221 = vadd.f32 %v1219, %v1220
  %v1222 = vsel %vm820, %v1203, 0.0
  %v1223 = vadd.f32 %v1221, %v1222
  %v1224 = vsel %vm820, %v1204, 0.0
  %v1225 = vadd.f32 %v1223, %v1224
  %v1226 = vsel %vm820, %v1205, 0.0
  %v1227 = vadd.f32 %v1225, %v1226
  %v1228 = vsel %vm820, %v1206, 0.0
  %v1229 = vadd.f32 %v1227, %v1228
  %v1230 = vsel %vm820, %v1207, 0.0
  %v1231 = vadd.f32 %v1229, %v1230
  %v1232 = vsel %vm820, %v1208, 0.0
  %v1233 = vadd.f32 %v1231, %v1232
  %v1234 = vsel %vm820, %v1209, 0.0
  %v1235 = vadd.f32 %v1233, %v1234
  %v1236 = vsel %vm820, %v1210, 0.0
  %v1237 = vadd.f32 %v1235, %v1236
  %v1238 = vsel %vm820, %v1211, 0.0
  %v1239 = vadd.f32 %v1237, %v1238
  %v1240 = vsel %vm820, %v1212, 0.0
  %v1241 = vadd.f32 %v1239, %v1240
  %v1242 = vsel %vm820, %v1213, 0.0
  %v1243 = vadd.f32 %v1241, %v1242
  %v1244 = vsel %vm820, %v1214, 0.0
  %v1245 = vadd.f32 %v1243, %v1244
  %v1246 = vrot.slane %v1245, 4
  %v1247 = vadd.f32 %v1245, %v1246
  %v1248 = vrot.slane %v1247, 2
  %v1249 = vadd.f32 %v1247, %v1248
  %v1250 = vrot.slane %v1249, 1
  %v1251 = vadd.f32 %v1249, %v1250
  %v1252 = vadd.f32 %v1182, %v1251
  %v1253 = vmul.f32 %v1252, %v972
  %v1254 = vld [vmem:[%s8] sm:$0x1]
  %v1255 = vadd.f32 %v1253, 1e-05
  %v1256 = vrsqrt.pop %v1255
  %v1257 = vmul.f32 %v1254, %v1256
  %v1258 = vld [vmem:[%s9] sm:$0x1]
  %v1259 = vmul.f32 %v973, %v1257
  %v1260 = vsub.f32 %v1258, %v1259
  %v1262 = vlaneseq
  %v1263 = vshrl.u32 %v1262, 7
  %v1264 = vsub.s32 0, %v1263
  %v1265 = vrot.slane %v1257, %v1264
  %v1267 = vmul.f32 %v179, %v1265
  %v1268 = vmul.f32 %v184, %v1265
  %v1269 = vmul.f32 %v189, %v1265
  %v1270 = vmul.f32 %v194, %v1265
  %v1271 = vmul.f32 %v199, %v1265
  %v1272 = vmul.f32 %v204, %v1265
  %v1273 = vmul.f32 %v209, %v1265
  %v1274 = vmul.f32 %v214, %v1265
  %v1275 = vmul.f32 %v219, %v1265
  %v1276 = vmul.f32 %v224, %v1265
  %v1277 = vmul.f32 %v229, %v1265
  %v1278 = vmul.f32 %v234, %v1265
  %v1279 = vmul.f32 %v239, %v1265
  %v1280 = vmul.f32 %v244, %v1265
  %v1281 = vmul.f32 %v249, %v1265
  %v1282 = vmul.f32 %v254, %v1265
  %v1284 = vlaneseq
  %v1285 = vshrl.u32 %v1284, 7
  %v1286 = vsub.s32 0, %v1285
  %v1287 = vrot.slane %v1260, %v1286
  %v1289 = vadd.f32 %v1267, %v1287
  %v1290 = vadd.f32 %v1268, %v1287
  %v1291 = vadd.f32 %v1269, %v1287
  %v1292 = vadd.f32 %v1270, %v1287
  %v1293 = vadd.f32 %v1271, %v1287
  %v1294 = vadd.f32 %v1272, %v1287
  %v1295 = vadd.f32 %v1273, %v1287
  %v1296 = vadd.f32 %v1274, %v1287
  %v1297 = vadd.f32 %v1275, %v1287
  %v1298 = vadd.f32 %v1276, %v1287
  %v1299 = vadd.f32 %v1277, %v1287
  %v1300 = vadd.f32 %v1278, %v1287
  %v1301 = vadd.f32 %v1279, %v1287
  %v1302 = vadd.f32 %v1280, %v1287
  %v1303 = vadd.f32 %v1281, %v1287
  %v1304 = vadd.f32 %v1282, %v1287
  %vm1305 = vcmp.ge.f32.partialorder %v1289, 0.0
  %vm1306 = vcmp.ge.f32.partialorder %v1290, 0.0
  %vm1307 = vcmp.ge.f32.partialorder %v1291, 0.0
  %vm1308 = vcmp.ge.f32.partialorder %v1292, 0.0
  %vm1309 = vcmp.ge.f32.partialorder %v1293, 0.0
  %vm1310 = vcmp.ge.f32.partialorder %v1294, 0.0
  %vm1311 = vcmp.ge.f32.partialorder %v1295, 0.0
  %vm1312 = vcmp.ge.f32.partialorder %v1296, 0.0
  %vm1313 = vcmp.ge.f32.partialorder %v1297, 0.0
  %vm1314 = vcmp.ge.f32.partialorder %v1298, 0.0
  %vm1315 = vcmp.ge.f32.partialorder %v1299, 0.0
  %vm1316 = vcmp.ge.f32.partialorder %v1300, 0.0
  %vm1317 = vcmp.ge.f32.partialorder %v1301, 0.0
  %vm1318 = vcmp.ge.f32.partialorder %v1302, 0.0
  %vm1319 = vcmp.ge.f32.partialorder %v1303, 0.0
  %vm1320 = vcmp.ge.f32.partialorder %v1304, 0.0
  %v1321 = vmul.f32 %v1289, 0.2
  %v1322 = vmul.f32 %v1290, 0.2
  %v1323 = vmul.f32 %v1291, 0.2
  %v1324 = vmul.f32 %v1292, 0.2
  %v1325 = vmul.f32 %v1293, 0.2
  %v1326 = vmul.f32 %v1294, 0.2
  %v1327 = vmul.f32 %v1295, 0.2
  %v1328 = vmul.f32 %v1296, 0.2
  %v1329 = vmul.f32 %v1297, 0.2
  %v1330 = vmul.f32 %v1298, 0.2
  %v1331 = vmul.f32 %v1299, 0.2
  %v1332 = vmul.f32 %v1300, 0.2
  %v1333 = vmul.f32 %v1301, 0.2
  %v1334 = vmul.f32 %v1302, 0.2
  %v1335 = vmul.f32 %v1303, 0.2
  %v1336 = vmul.f32 %v1304, 0.2
  %v1337 = vsel %vm1305, %v1289, %v1321
  %v1338 = vsel %vm1306, %v1290, %v1322
  %v1339 = vsel %vm1307, %v1291, %v1323
  %v1340 = vsel %vm1308, %v1292, %v1324
  %v1341 = vsel %vm1309, %v1293, %v1325
  %v1342 = vsel %vm1310, %v1294, %v1326
  %v1343 = vsel %vm1311, %v1295, %v1327
  %v1344 = vsel %vm1312, %v1296, %v1328
  %v1345 = vsel %vm1313, %v1297, %v1329
  %v1346 = vsel %vm1314, %v1298, %v1330
  %v1347 = vsel %vm1315, %v1299, %v1331
  %v1348 = vsel %vm1316, %v1300, %v1332
  %v1349 = vsel %vm1317, %v1301, %v1333
  %v1350 = vsel %vm1318, %v1302, %v1334
  %v1351 = vsel %vm1319, %v1303, %v1335
  %v1352 = vsel %vm1320, %v1304, %v1336
  %v1353 = vtanh.pop %v1337
  %v1354 = vtanh.pop %v1338
  %v1355 = vtanh.pop %v1339
  %v1356 = vtanh.pop %v1340
  %v1357 = vtanh.pop %v1341
  %v1358 = vtanh.pop %v1342
  %v1359 = vtanh.pop %v1343
  %v1360 = vtanh.pop %v1344
  %v1361 = vtanh.pop %v1345
  %v1362 = vtanh.pop %v1346
  %v1363 = vtanh.pop %v1347
  %v1364 = vtanh.pop %v1348
  %v1365 = vtanh.pop %v1349
  %v1366 = vtanh.pop %v1350
  %v1367 = vtanh.pop %v1351
  %v1368 = vtanh.pop %v1352
  %1369 = vst.msk [vmem:[%s10] sm:$0xff] %vm820, %v1353
  %1370 = vst.msk [vmem:[%s10 + $0x8] sm:$0xff] %vm820, %v1354
  %1371 = vst.msk [vmem:[%s10 + $0x10] sm:$0xff] %vm820, %v1355
  %1372 = vst.msk [vmem:[%s10 + $0x18] sm:$0xff] %vm820, %v1356
  %1373 = vst.msk [vmem:[%s10 + $0x20] sm:$0xff] %vm820, %v1357
  %1374 = vst.msk [vmem:[%s10 + $0x28] sm:$0xff] %vm820, %v1358
  %1375 = vst.msk [vmem:[%s10 + $0x30] sm:$0xff] %vm820, %v1359
  %1376 = vst.msk [vmem:[%s10 + $0x38] sm:$0xff] %vm820, %v1360
  %1377 = vst.msk [vmem:[%s10 + $0x40] sm:$0xff] %vm820, %v1361
  %1378 = vst.msk [vmem:[%s10 + $0x48] sm:$0xff] %vm820, %v1362
  %1379 = vst.msk [vmem:[%s10 + $0x50] sm:$0xff] %vm820, %v1363
  %1380 = vst.msk [vmem:[%s10 + $0x58] sm:$0xff] %vm820, %v1364
  %1381 = vst.msk [vmem:[%s10 + $0x60] sm:$0xff] %vm820, %v1365
  %1382 = vst.msk [vmem:[%s10 + $0x68] sm:$0xff] %vm820, %v1366
  %1383 = vst.msk [vmem:[%s10 + $0x70] sm:$0xff] %vm820, %v1367
  %1384 = vst.msk [vmem:[%s10 + $0x78] sm:$0xff] %vm820, %v1368
  %v1385 = vmul.f32 %v356, %v1265
  %v1386 = vmul.f32 %v361, %v1265
  %v1387 = vmul.f32 %v366, %v1265
  %v1388 = vmul.f32 %v371, %v1265
  %v1389 = vmul.f32 %v376, %v1265
  %v1390 = vmul.f32 %v381, %v1265
  %v1391 = vmul.f32 %v386, %v1265
  %v1392 = vmul.f32 %v391, %v1265
  %v1393 = vmul.f32 %v396, %v1265
  %v1394 = vmul.f32 %v401, %v1265
  %v1395 = vmul.f32 %v406, %v1265
  %v1396 = vmul.f32 %v411, %v1265
  %v1397 = vmul.f32 %v416, %v1265
  %v1398 = vmul.f32 %v421, %v1265
  %v1399 = vmul.f32 %v426, %v1265
  %v1400 = vmul.f32 %v431, %v1265
  %v1401 = vadd.f32 %v1385, %v1287
  %v1402 = vadd.f32 %v1386, %v1287
  %v1403 = vadd.f32 %v1387, %v1287
  %v1404 = vadd.f32 %v1388, %v1287
  %v1405 = vadd.f32 %v1389, %v1287
  %v1406 = vadd.f32 %v1390, %v1287
  %v1407 = vadd.f32 %v1391, %v1287
  %v1408 = vadd.f32 %v1392, %v1287
  %v1409 = vadd.f32 %v1393, %v1287
  %v1410 = vadd.f32 %v1394, %v1287
  %v1411 = vadd.f32 %v1395, %v1287
  %v1412 = vadd.f32 %v1396, %v1287
  %v1413 = vadd.f32 %v1397, %v1287
  %v1414 = vadd.f32 %v1398, %v1287
  %v1415 = vadd.f32 %v1399, %v1287
  %v1416 = vadd.f32 %v1400, %v1287
  %vm1417 = vcmp.ge.f32.partialorder %v1401, 0.0
  %vm1418 = vcmp.ge.f32.partialorder %v1402, 0.0
  %vm1419 = vcmp.ge.f32.partialorder %v1403, 0.0
  %vm1420 = vcmp.ge.f32.partialorder %v1404, 0.0
  %vm1421 = vcmp.ge.f32.partialorder %v1405, 0.0
  %vm1422 = vcmp.ge.f32.partialorder %v1406, 0.0
  %vm1423 = vcmp.ge.f32.partialorder %v1407, 0.0
  %vm1424 = vcmp.ge.f32.partialorder %v1408, 0.0
  %vm1425 = vcmp.ge.f32.partialorder %v1409, 0.0
  %vm1426 = vcmp.ge.f32.partialorder %v1410, 0.0
  %vm1427 = vcmp.ge.f32.partialorder %v1411, 0.0
  %vm1428 = vcmp.ge.f32.partialorder %v1412, 0.0
  %vm1429 = vcmp.ge.f32.partialorder %v1413, 0.0
  %vm1430 = vcmp.ge.f32.partialorder %v1414, 0.0
  %vm1431 = vcmp.ge.f32.partialorder %v1415, 0.0
  %vm1432 = vcmp.ge.f32.partialorder %v1416, 0.0
  %v1433 = vmul.f32 %v1401, 0.2
  %v1434 = vmul.f32 %v1402, 0.2
  %v1435 = vmul.f32 %v1403, 0.2
  %v1436 = vmul.f32 %v1404, 0.2
  %v1437 = vmul.f32 %v1405, 0.2
  %v1438 = vmul.f32 %v1406, 0.2
  %v1439 = vmul.f32 %v1407, 0.2
  %v1440 = vmul.f32 %v1408, 0.2
  %v1441 = vmul.f32 %v1409, 0.2
  %v1442 = vmul.f32 %v1410, 0.2
  %v1443 = vmul.f32 %v1411, 0.2
  %v1444 = vmul.f32 %v1412, 0.2
  %v1445 = vmul.f32 %v1413, 0.2
  %v1446 = vmul.f32 %v1414, 0.2
  %v1447 = vmul.f32 %v1415, 0.2
  %v1448 = vmul.f32 %v1416, 0.2
  %v1449 = vsel %vm1417, %v1401, %v1433
  %v1450 = vsel %vm1418, %v1402, %v1434
  %v1451 = vsel %vm1419, %v1403, %v1435
  %v1452 = vsel %vm1420, %v1404, %v1436
  %v1453 = vsel %vm1421, %v1405, %v1437
  %v1454 = vsel %vm1422, %v1406, %v1438
  %v1455 = vsel %vm1423, %v1407, %v1439
  %v1456 = vsel %vm1424, %v1408, %v1440
  %v1457 = vsel %vm1425, %v1409, %v1441
  %v1458 = vsel %vm1426, %v1410, %v1442
  %v1459 = vsel %vm1427, %v1411, %v1443
  %v1460 = vsel %vm1428, %v1412, %v1444
  %v1461 = vsel %vm1429, %v1413, %v1445
  %v1462 = vsel %vm1430, %v1414, %v1446
  %v1463 = vsel %vm1431, %v1415, %v1447
  %v1464 = vsel %vm1432, %v1416, %v1448
  %v1465 = vtanh.pop %v1449
  %v1466 = vtanh.pop %v1450
  %v1467 = vtanh.pop %v1451
  %v1468 = vtanh.pop %v1452
  %v1469 = vtanh.pop %v1453
  %v1470 = vtanh.pop %v1454
  %v1471 = vtanh.pop %v1455
  %v1472 = vtanh.pop %v1456
  %v1473 = vtanh.pop %v1457
  %v1474 = vtanh.pop %v1458
  %v1475 = vtanh.pop %v1459
  %v1476 = vtanh.pop %v1460
  %v1477 = vtanh.pop %v1461
  %v1478 = vtanh.pop %v1462
  %v1479 = vtanh.pop %v1463
  %v1480 = vtanh.pop %v1464
  %1481 = vst.msk [vmem:[%s11] sm:$0xff] %vm820, %v1465
  %1482 = vst.msk [vmem:[%s11 + $0x8] sm:$0xff] %vm820, %v1466
  %1483 = vst.msk [vmem:[%s11 + $0x10] sm:$0xff] %vm820, %v1467
  %1484 = vst.msk [vmem:[%s11 + $0x18] sm:$0xff] %vm820, %v1468
  %1485 = vst.msk [vmem:[%s11 + $0x20] sm:$0xff] %vm820, %v1469
  %1486 = vst.msk [vmem:[%s11 + $0x28] sm:$0xff] %vm820, %v1470
  %1487 = vst.msk [vmem:[%s11 + $0x30] sm:$0xff] %vm820, %v1471
  %1488 = vst.msk [vmem:[%s11 + $0x38] sm:$0xff] %vm820, %v1472
  %1489 = vst.msk [vmem:[%s11 + $0x40] sm:$0xff] %vm820, %v1473
  %1490 = vst.msk [vmem:[%s11 + $0x48] sm:$0xff] %vm820, %v1474
  %1491 = vst.msk [vmem:[%s11 + $0x50] sm:$0xff] %vm820, %v1475
  %1492 = vst.msk [vmem:[%s11 + $0x58] sm:$0xff] %vm820, %v1476
  %1493 = vst.msk [vmem:[%s11 + $0x60] sm:$0xff] %vm820, %v1477
  %1494 = vst.msk [vmem:[%s11 + $0x68] sm:$0xff] %vm820, %v1478
  %1495 = vst.msk [vmem:[%s11 + $0x70] sm:$0xff] %vm820, %v1479
  %1496 = vst.msk [vmem:[%s11 + $0x78] sm:$0xff] %vm820, %v1480
  %v1497 = vmul.f32 %v533, %v1265
  %v1498 = vmul.f32 %v538, %v1265
  %v1499 = vmul.f32 %v543, %v1265
  %v1500 = vmul.f32 %v548, %v1265
  %v1501 = vmul.f32 %v553, %v1265
  %v1502 = vmul.f32 %v558, %v1265
  %v1503 = vmul.f32 %v563, %v1265
  %v1504 = vmul.f32 %v568, %v1265
  %v1505 = vmul.f32 %v573, %v1265
  %v1506 = vmul.f32 %v578, %v1265
  %v1507 = vmul.f32 %v583, %v1265
  %v1508 = vmul.f32 %v588, %v1265
  %v1509 = vmul.f32 %v593, %v1265
  %v1510 = vmul.f32 %v598, %v1265
  %v1511 = vmul.f32 %v603, %v1265
  %v1512 = vmul.f32 %v608, %v1265
  %v1513 = vadd.f32 %v1497, %v1287
  %v1514 = vadd.f32 %v1498, %v1287
  %v1515 = vadd.f32 %v1499, %v1287
  %v1516 = vadd.f32 %v1500, %v1287
  %v1517 = vadd.f32 %v1501, %v1287
  %v1518 = vadd.f32 %v1502, %v1287
  %v1519 = vadd.f32 %v1503, %v1287
  %v1520 = vadd.f32 %v1504, %v1287
  %v1521 = vadd.f32 %v1505, %v1287
  %v1522 = vadd.f32 %v1506, %v1287
  %v1523 = vadd.f32 %v1507, %v1287
  %v1524 = vadd.f32 %v1508, %v1287
  %v1525 = vadd.f32 %v1509, %v1287
  %v1526 = vadd.f32 %v1510, %v1287
  %v1527 = vadd.f32 %v1511, %v1287
  %v1528 = vadd.f32 %v1512, %v1287
  %vm1529 = vcmp.ge.f32.partialorder %v1513, 0.0
  %vm1530 = vcmp.ge.f32.partialorder %v1514, 0.0
  %vm1531 = vcmp.ge.f32.partialorder %v1515, 0.0
  %vm1532 = vcmp.ge.f32.partialorder %v1516, 0.0
  %vm1533 = vcmp.ge.f32.partialorder %v1517, 0.0
  %vm1534 = vcmp.ge.f32.partialorder %v1518, 0.0
  %vm1535 = vcmp.ge.f32.partialorder %v1519, 0.0
  %vm1536 = vcmp.ge.f32.partialorder %v1520, 0.0
  %vm1537 = vcmp.ge.f32.partialorder %v1521, 0.0
  %vm1538 = vcmp.ge.f32.partialorder %v1522, 0.0
  %vm1539 = vcmp.ge.f32.partialorder %v1523, 0.0
  %vm1540 = vcmp.ge.f32.partialorder %v1524, 0.0
  %vm1541 = vcmp.ge.f32.partialorder %v1525, 0.0
  %vm1542 = vcmp.ge.f32.partialorder %v1526, 0.0
  %vm1543 = vcmp.ge.f32.partialorder %v1527, 0.0
  %vm1544 = vcmp.ge.f32.partialorder %v1528, 0.0
  %v1545 = vmul.f32 %v1513, 0.2
  %v1546 = vmul.f32 %v1514, 0.2
  %v1547 = vmul.f32 %v1515, 0.2
  %v1548 = vmul.f32 %v1516, 0.2
  %v1549 = vmul.f32 %v1517, 0.2
  %v1550 = vmul.f32 %v1518, 0.2
  %v1551 = vmul.f32 %v1519, 0.2
  %v1552 = vmul.f32 %v1520, 0.2
  %v1553 = vmul.f32 %v1521, 0.2
  %v1554 = vmul.f32 %v1522, 0.2
  %v1555 = vmul.f32 %v1523, 0.2
  %v1556 = vmul.f32 %v1524, 0.2
  %v1557 = vmul.f32 %v1525, 0.2
  %v1558 = vmul.f32 %v1526, 0.2
  %v1559 = vmul.f32 %v1527, 0.2
  %v1560 = vmul.f32 %v1528, 0.2
  %v1561 = vsel %vm1529, %v1513, %v1545
  %v1562 = vsel %vm1530, %v1514, %v1546
  %v1563 = vsel %vm1531, %v1515, %v1547
  %v1564 = vsel %vm1532, %v1516, %v1548
  %v1565 = vsel %vm1533, %v1517, %v1549
  %v1566 = vsel %vm1534, %v1518, %v1550
  %v1567 = vsel %vm1535, %v1519, %v1551
  %v1568 = vsel %vm1536, %v1520, %v1552
  %v1569 = vsel %vm1537, %v1521, %v1553
  %v1570 = vsel %vm1538, %v1522, %v1554
  %v1571 = vsel %vm1539, %v1523, %v1555
  %v1572 = vsel %vm1540, %v1524, %v1556
  %v1573 = vsel %vm1541, %v1525, %v1557
  %v1574 = vsel %vm1542, %v1526, %v1558
  %v1575 = vsel %vm1543, %v1527, %v1559
  %v1576 = vsel %vm1544, %v1528, %v1560
  %v1577 = vtanh.pop %v1561
  %v1578 = vtanh.pop %v1562
  %v1579 = vtanh.pop %v1563
  %v1580 = vtanh.pop %v1564
  %v1581 = vtanh.pop %v1565
  %v1582 = vtanh.pop %v1566
  %v1583 = vtanh.pop %v1567
  %v1584 = vtanh.pop %v1568
  %v1585 = vtanh.pop %v1569
  %v1586 = vtanh.pop %v1570
  %v1587 = vtanh.pop %v1571
  %v1588 = vtanh.pop %v1572
  %v1589 = vtanh.pop %v1573
  %v1590 = vtanh.pop %v1574
  %v1591 = vtanh.pop %v1575
  %v1592 = vtanh.pop %v1576
  %1593 = vst.msk [vmem:[%s12] sm:$0xff] %vm820, %v1577
  %1594 = vst.msk [vmem:[%s12 + $0x8] sm:$0xff] %vm820, %v1578
  %1595 = vst.msk [vmem:[%s12 + $0x10] sm:$0xff] %vm820, %v1579
  %1596 = vst.msk [vmem:[%s12 + $0x18] sm:$0xff] %vm820, %v1580
  %1597 = vst.msk [vmem:[%s12 + $0x20] sm:$0xff] %vm820, %v1581
  %1598 = vst.msk [vmem:[%s12 + $0x28] sm:$0xff] %vm820, %v1582
  %1599 = vst.msk [vmem:[%s12 + $0x30] sm:$0xff] %vm820, %v1583
  %1600 = vst.msk [vmem:[%s12 + $0x38] sm:$0xff] %vm820, %v1584
  %1601 = vst.msk [vmem:[%s12 + $0x40] sm:$0xff] %vm820, %v1585
  %1602 = vst.msk [vmem:[%s12 + $0x48] sm:$0xff] %vm820, %v1586
  %1603 = vst.msk [vmem:[%s12 + $0x50] sm:$0xff] %vm820, %v1587
  %1604 = vst.msk [vmem:[%s12 + $0x58] sm:$0xff] %vm820, %v1588
  %1605 = vst.msk [vmem:[%s12 + $0x60] sm:$0xff] %vm820, %v1589
  %1606 = vst.msk [vmem:[%s12 + $0x68] sm:$0xff] %vm820, %v1590
  %1607 = vst.msk [vmem:[%s12 + $0x70] sm:$0xff] %vm820, %v1591
  %1608 = vst.msk [vmem:[%s12 + $0x78] sm:$0xff] %vm820, %v1592
  %v1609 = vmul.f32 %v742, %v1265
  %v1610 = vmul.f32 %v747, %v1265
  %v1611 = vmul.f32 %v752, %v1265
  %v1612 = vmul.f32 %v757, %v1265
  %v1613 = vmul.f32 %v762, %v1265
  %v1614 = vmul.f32 %v767, %v1265
  %v1615 = vmul.f32 %v772, %v1265
  %v1616 = vmul.f32 %v777, %v1265
  %v1617 = vmul.f32 %v782, %v1265
  %v1618 = vmul.f32 %v787, %v1265
  %v1619 = vmul.f32 %v792, %v1265
  %v1620 = vmul.f32 %v797, %v1265
  %v1621 = vmul.f32 %v802, %v1265
  %v1622 = vmul.f32 %v807, %v1265
  %v1623 = vmul.f32 %v812, %v1265
  %v1624 = vmul.f32 %v817, %v1265
  %v1625 = vadd.f32 %v1609, %v1287
  %v1626 = vadd.f32 %v1610, %v1287
  %v1627 = vadd.f32 %v1611, %v1287
  %v1628 = vadd.f32 %v1612, %v1287
  %v1629 = vadd.f32 %v1613, %v1287
  %v1630 = vadd.f32 %v1614, %v1287
  %v1631 = vadd.f32 %v1615, %v1287
  %v1632 = vadd.f32 %v1616, %v1287
  %v1633 = vadd.f32 %v1617, %v1287
  %v1634 = vadd.f32 %v1618, %v1287
  %v1635 = vadd.f32 %v1619, %v1287
  %v1636 = vadd.f32 %v1620, %v1287
  %v1637 = vadd.f32 %v1621, %v1287
  %v1638 = vadd.f32 %v1622, %v1287
  %v1639 = vadd.f32 %v1623, %v1287
  %v1640 = vadd.f32 %v1624, %v1287
  %vm1641 = vcmp.ge.f32.partialorder %v1625, 0.0
  %vm1642 = vcmp.ge.f32.partialorder %v1626, 0.0
  %vm1643 = vcmp.ge.f32.partialorder %v1627, 0.0
  %vm1644 = vcmp.ge.f32.partialorder %v1628, 0.0
  %vm1645 = vcmp.ge.f32.partialorder %v1629, 0.0
  %vm1646 = vcmp.ge.f32.partialorder %v1630, 0.0
  %vm1647 = vcmp.ge.f32.partialorder %v1631, 0.0
  %vm1648 = vcmp.ge.f32.partialorder %v1632, 0.0
  %vm1649 = vcmp.ge.f32.partialorder %v1633, 0.0
  %vm1650 = vcmp.ge.f32.partialorder %v1634, 0.0
  %vm1651 = vcmp.ge.f32.partialorder %v1635, 0.0
  %vm1652 = vcmp.ge.f32.partialorder %v1636, 0.0
  %vm1653 = vcmp.ge.f32.partialorder %v1637, 0.0
  %vm1654 = vcmp.ge.f32.partialorder %v1638, 0.0
  %vm1655 = vcmp.ge.f32.partialorder %v1639, 0.0
  %vm1656 = vcmp.ge.f32.partialorder %v1640, 0.0
  %v1657 = vmul.f32 %v1625, 0.2
  %v1658 = vmul.f32 %v1626, 0.2
  %v1659 = vmul.f32 %v1627, 0.2
  %v1660 = vmul.f32 %v1628, 0.2
  %v1661 = vmul.f32 %v1629, 0.2
  %v1662 = vmul.f32 %v1630, 0.2
  %v1663 = vmul.f32 %v1631, 0.2
  %v1664 = vmul.f32 %v1632, 0.2
  %v1665 = vmul.f32 %v1633, 0.2
  %v1666 = vmul.f32 %v1634, 0.2
  %v1667 = vmul.f32 %v1635, 0.2
  %v1668 = vmul.f32 %v1636, 0.2
  %v1669 = vmul.f32 %v1637, 0.2
  %v1670 = vmul.f32 %v1638, 0.2
  %v1671 = vmul.f32 %v1639, 0.2
  %v1672 = vmul.f32 %v1640, 0.2
  %v1673 = vsel %vm1641, %v1625, %v1657
  %v1674 = vsel %vm1642, %v1626, %v1658
  %v1675 = vsel %vm1643, %v1627, %v1659
  %v1676 = vsel %vm1644, %v1628, %v1660
  %v1677 = vsel %vm1645, %v1629, %v1661
  %v1678 = vsel %vm1646, %v1630, %v1662
  %v1679 = vsel %vm1647, %v1631, %v1663
  %v1680 = vsel %vm1648, %v1632, %v1664
  %v1681 = vsel %vm1649, %v1633, %v1665
  %v1682 = vsel %vm1650, %v1634, %v1666
  %v1683 = vsel %vm1651, %v1635, %v1667
  %v1684 = vsel %vm1652, %v1636, %v1668
  %v1685 = vsel %vm1653, %v1637, %v1669
  %v1686 = vsel %vm1654, %v1638, %v1670
  %v1687 = vsel %vm1655, %v1639, %v1671
  %v1688 = vsel %vm1656, %v1640, %v1672
  %v1689 = vtanh.pop %v1673
  %v1690 = vtanh.pop %v1674
  %v1691 = vtanh.pop %v1675
  %v1692 = vtanh.pop %v1676
  %v1693 = vtanh.pop %v1677
  %v1694 = vtanh.pop %v1678
  %v1695 = vtanh.pop %v1679
  %v1696 = vtanh.pop %v1680
  %v1697 = vtanh.pop %v1681
  %v1698 = vtanh.pop %v1682
  %v1699 = vtanh.pop %v1683
  %v1700 = vtanh.pop %v1684
  %v1701 = vtanh.pop %v1685
  %v1702 = vtanh.pop %v1686
  %v1703 = vtanh.pop %v1687
  %v1704 = vtanh.pop %v1688
  %1705 = vst.msk [vmem:[%s13] sm:$0xff] %vm820, %v1689
  %1706 = vst.msk [vmem:[%s13 + $0x8] sm:$0xff] %vm820, %v1690
  %1707 = vst.msk [vmem:[%s13 + $0x10] sm:$0xff] %vm820, %v1691
  %1708 = vst.msk [vmem:[%s13 + $0x18] sm:$0xff] %vm820, %v1692
  %1709 = vst.msk [vmem:[%s13 + $0x20] sm:$0xff] %vm820, %v1693
  %1710 = vst.msk [vmem:[%s13 + $0x28] sm:$0xff] %vm820, %v1694
  %1711 = vst.msk [vmem:[%s13 + $0x30] sm:$0xff] %vm820, %v1695
  %1712 = vst.msk [vmem:[%s13 + $0x38] sm:$0xff] %vm820, %v1696
  %1713 = vst.msk [vmem:[%s13 + $0x40] sm:$0xff] %vm820, %v1697
  %1714 = vst.msk [vmem:[%s13 + $0x48] sm:$0xff] %vm820, %v1698
  %1715 = vst.msk [vmem:[%s13 + $0x50] sm:$0xff] %vm820, %v1699
  %1716 = vst.msk [vmem:[%s13 + $0x58] sm:$0xff] %vm820, %v1700
  %1717 = vst.msk [vmem:[%s13 + $0x60] sm:$0xff] %vm820, %v1701
  %1718 = vst.msk [vmem:[%s13 + $0x68] sm:$0xff] %vm820, %v1702
  %1719 = vst.msk [vmem:[%s13 + $0x70] sm:$0xff] %vm820, %v1703
  %1720 = vst.msk [vmem:[%s13 + $0x78] sm:$0xff] %vm820, %v1704
  // Predicated region
  $region42: #{vae_forward.13} parent=0 // pred_check
    _
  $region43: #{vae_forward.13} parent=0 // pred_check_branch
    %1722 = sbr.rel (0) target = $region45
  $region44: #{vae_forward.13} parent=0 // pred_region
    _
  $region45: #{vae_forward.13} parent=0 // pred_fallthru
    _
  // Predicated region
  $region46: #{vae_forward.13} parent=0 // pred_check
    _
  $region47: #{vae_forward.13} parent=0 // pred_check_branch
    %1724 = sbr.rel (0) target = $region49
  $region48: #{vae_forward.13} parent=0 // pred_region
    _
  $region49: #{vae_forward.13} parent=0 // pred_fallthru
    _
  // Predicated region
  $region50: #{vae_forward.13} parent=0 // pred_check
    _
  $region51: #{vae_forward.13} parent=0 // pred_check_branch
    %1726 = sbr.rel (0) target = $region53
  $region52: #{vae_forward.13} parent=0 // pred_region
    _
  $region53: #{vae_forward.13} parent=0 // pred_fallthru
    _
  // Predicated region
  $region54: #{vae_forward.13} parent=0 // pred_check
    _
  $region55: #{vae_forward.13} parent=0 // pred_check_branch
    %1728 = sbr.rel (0) target = $region57
  $region56: #{vae_forward.13} parent=0 // pred_region
    _
  $region57: #{vae_forward.13} parent=0 // pred_fallthru
    _
  // Predicated region
  $region58: #{vae_forward.13} parent=0 // pred_check
    _
  $region59: #{vae_forward.13} parent=0 // pred_check_branch
    %1730 = sbr.rel (0) target = $region61
  $region60: #{vae_forward.13} parent=0 // pred_region
    _
  $region61: #{vae_forward.13} parent=0 // pred_fallthru
    _
  // Predicated region
  $region62: #{vae_forward.13} parent=0 // pred_check
    _
  $region63: #{vae_forward.13} parent=0 // pred_check_branch
    %1732 = sbr.rel (0) target = $region65
  $region64: #{vae_forward.13} parent=0 // pred_region
    _
  $region65: #{vae_forward.13} parent=0 // pred_fallthru
    _
  // Predicated region
  $region66: #{vae_forward.13} parent=0 // pred_check
    _
  $region67: #{vae_forward.13} parent=0 // pred_check_branch
    %1734 = sbr.rel (0) target = $region69
  $region68: #{vae_forward.13} parent=0 // pred_region
    _
  $region69: #{vae_forward.13} parent=0 // pred_fallthru
    _
  // Predicated region
  $region70: #{vae_forward.13} parent=0 // pred_check
    _
  $region71: #{vae_forward.13} parent=0 // pred_check_branch
    %1736 = sbr.rel (0) target = $region73
  $region72: #{vae_forward.13} parent=0 // pred_region
    _
  $region73: #{vae_forward.13} parent=0 // pred_fallthru
    _

</llo_original>
